<compile_context>
chip_gen: v6e
topology: v6e:2x2x1
jax: 0.10.0
libtpu: 0.0.40
codegen_flags: <defaults>
</compile_context>

<pallas_src>
import functools

import jax
import jax.numpy as jnp
from jax import lax
from jax.experimental import pallas as pl
from jax.experimental.pallas import tpu as pltpu


def _residual_block_kernel(xpad_ref, w1_ref, w2_ref, s1_ref, b1_ref,
                           s2_ref, b2_ref, alpha_ref, o_ref, mid_ref,
                           *, H, W, Cp, mid_base):
    # xpad_ref : (1, (H+3)*(W+2), Cp)  flattened zero-padded input (read once)
    # w1/w2    : (9, Cp, Cp)           3x3 weights, tap t = kh*3+kw, (Cin, Cout)
    # s*/b*    : (1, Cp)               folded BatchNorm scale / bias
    # alpha    : (1,) in SMEM          PReLU slope (single shared parameter)
    # o_ref    : (1, H*(W+2), Cp)      "wide" output (junk cols x>=W cropped in
    #                                  the wrapper) -> lane-dense full store
    # mid_ref  : (mid_base + (H+3)*(W+2), Cp) VMEM scratch: padded conv2 input
    Wp2 = W + 2
    Lw = H * Wp2

    def conv3x3(load_tap, w_ref):
        # 9 shifted contiguous slices -> 9 MXU matmuls, f32 accumulation.
        acc = jnp.dot(load_tap(0), w_ref[0], preferred_element_type=jnp.float32)
        for t in range(1, 9):
            acc = acc + jnp.dot(load_tap(t), w_ref[t],
                                preferred_element_type=jnp.float32)
        return acc

    # ---- conv1 (3x3, stride 1, pad 1, no bias) ------------------------------
    def tap1(t):
        kh, kw = divmod(t, 3)
        return xpad_ref[0, pl.ds(kh * Wp2 + kw, Lw), :]

    y = conv3x3(tap1, w1_ref)

    # ---- BatchNorm (folded, inference) + PReLU ------------------------------
    y = y * s1_ref[0] + b1_ref[0]
    a = alpha_ref[0]
    y = jnp.where(y >= 0.0, y, a * y)

    # Zero the wide-layout junk columns (x >= W): in the flat padded layout of
    # conv2's input they are exactly its left/right zero padding.
    col = lax.broadcasted_iota(jnp.int32, (Lw, Cp), 0) % Wp2
    y = jnp.where(col < W, y, 0.0)

    # ---- stage intermediate into padded VMEM scratch (conv2 input) ----------
    head = mid_base + Wp2 + 1                      # 8-aligned interior start
    tail = mid_ref.shape[0] - head - Lw
    mid_ref[0:head, :] = jnp.zeros((head, Cp), jnp.float32)        # top halo
    mid_ref[head + Lw:, :] = jnp.zeros((tail, Cp), jnp.float32)    # bottom halo
    mid_ref[pl.ds(head, Lw), :] = y                                # interior

    # ---- conv2 (3x3, stride 1, pad 1, no bias) ------------------------------
    def tap2(t):
        kh, kw = divmod(t, 3)
        return mid_ref[pl.ds(mid_base + kh * Wp2 + kw, Lw), :]

    z = conv3x3(tap2, w2_ref)

    # ---- BatchNorm (folded, inference) ---------------------------------------
    z = z * s2_ref[0] + b2_ref[0]

    # ---- residual add: x in the same wide layout is xpad[Wp2+1 : Wp2+1+Lw] ---
    out = xpad_ref[0, pl.ds(Wp2 + 1, Lw), :] + z
    o_ref[0] = out.astype(o_ref.dtype)


def residual_block_pallas(x_nchw, w1, w2, s1, b1, s2, b2, alpha):
    N, C, H, W = x_nchw.shape
    Cp = max(128, ((C + 127) // 128) * 128)   # lane-dense channel padding
    Wp2 = W + 2
    Lp = (H + 3) * Wp2            # flat padded length (+1 slack row for overrun)
    Lw = H * Wp2                  # flat "wide" output length
    mid_base = (-(Wp2 + 1)) % 8   # aligns the interior scratch store to 8 rows

    f32 = jnp.float32
    # NCHW -> NHWC with 1px zero halo (+1 extra slack row at the bottom) and
    # channel padding, fused into the single layout pass we need anyway.
    x = jnp.transpose(x_nchw, (0, 2, 3, 1)).astype(f32)
    xpad = jnp.pad(x, ((0, 0), (1, 2), (1, 1), (0, Cp - C)))
    xpad = xpad.reshape(N, Lp, Cp)

    # PyTorch conv weight (Cout, Cin, 3, 3) -> (kh*3+kw, Cin, Cout), zero-padded.
    def prep_w(w):
        wt = jnp.transpose(w, (2, 3, 1, 0)).reshape(9, C, C)
        return jnp.pad(wt, ((0, 0), (0, Cp - C), (0, Cp - C))).astype(f32)

    w1t, w2t = prep_w(w1), prep_w(w2)

    def prep_vec(v):
        return jnp.pad(v.reshape(1, C).astype(f32), ((0, 0), (0, Cp - C)))

    s1p, b1p, s2p, b2p = map(prep_vec, (s1, b1, s2, b2))
    alpha_sc = alpha.reshape(1).astype(f32)

    kernel = functools.partial(_residual_block_kernel,
                               H=H, W=W, Cp=Cp, mid_base=mid_base)

    out_wide = pl.pallas_call(
        kernel,
        out_shape=jax.ShapeDtypeStruct((N, Lw, Cp), f32),
        grid_spec=pltpu.PrefetchScalarGridSpec(
            num_scalar_prefetch=0,
            grid=(N,),
            in_specs=[
                pl.BlockSpec((1, Lp, Cp), lambda n: (n, 0, 0)),
                pl.BlockSpec((9, Cp, Cp), lambda n: (0, 0, 0)),
                pl.BlockSpec((9, Cp, Cp), lambda n: (0, 0, 0)),
                pl.BlockSpec((1, Cp), lambda n: (0, 0)),
                pl.BlockSpec((1, Cp), lambda n: (0, 0)),
                pl.BlockSpec((1, Cp), lambda n: (0, 0)),
                pl.BlockSpec((1, Cp), lambda n: (0, 0)),
                pl.BlockSpec(memory_space=pltpu.MemorySpace.SMEM),
            ],
            out_specs=pl.BlockSpec((1, Lw, Cp), lambda n: (n, 0, 0)),
            scratch_shapes=[pltpu.VMEM((mid_base + Lp, Cp), f32)],
        ),
        compiler_params=pltpu.CompilerParams(
            dimension_semantics=("parallel",)),
    )(xpad, w1t, w2t, s1p, b1p, s2p, b2p, alpha_sc)

    # (N, H*(W+2), Cp) -> (N, H, W+2, Cp) -> crop junk cols / padded channels.
    out = out_wide.reshape(N, H, Wp2, Cp)[:, :, :W, :C]
    return jnp.transpose(out, (0, 3, 1, 2)).astype(x_nchw.dtype)


def residual_block_ref(x, w1, w2, g1, be1, m1, v1, g2, be2, m2, v2, alpha,
                       eps=1e-5):
    """Pure-JAX reference matching the PyTorch module (eval-mode BN)."""
    dn = lax.conv_dimension_numbers(x.shape, w1.shape, ('NCHW', 'OIHW', 'NCHW'))

    def bn(y, g, b, m, v):
        return (g[None, :, None, None] * (y - m[None, :, None, None])
                * lax.rsqrt(v + eps)[None, :, None, None]
                + b[None, :, None, None])

    y = lax.conv_general_dilated(x, w1, (1, 1), ((1, 1), (1, 1)),
                                 dimension_numbers=dn)
    y = bn(y, g1, be1, m1, v1)
    y = jnp.where(y >= 0, y, alpha * y)
    y = lax.conv_general_dilated(y, w2, (1, 1), ((1, 1), (1, 1)),
                                 dimension_numbers=dn)
    y = bn(y, g2, be2, m2, v2)
    return x + y


if __name__ == "__main__":
    N, C, H, W = 2, 4, 16, 16
    eps = 1e-5

    key = jax.random.PRNGKey(0)
    keys = jax.random.split(key, 10)
    x = jax.random.normal(keys[0], (N, C, H, W), jnp.float32)
    w1 = jax.random.normal(keys[1], (C, C, 3, 3), jnp.float32) * 0.1
    w2 = jax.random.normal(keys[2], (C, C, 3, 3), jnp.float32) * 0.1
    g1 = jax.random.uniform(keys[3], (C,), jnp.float32, 0.5, 1.5)
    be1 = jax.random.normal(keys[4], (C,), jnp.float32) * 0.1
    m1 = jax.random.normal(keys[5], (C,), jnp.float32) * 0.1
    v1 = jax.random.uniform(keys[6], (C,), jnp.float32, 0.5, 1.5)
    g2 = jax.random.uniform(keys[7], (C,), jnp.float32, 0.5, 1.5)
    be2 = jax.random.normal(keys[8], (C,), jnp.float32) * 0.1
    m2 = jax.random.normal(keys[9], (C,), jnp.float32) * 0.1
    v2 = jnp.full((C,), 1.0, jnp.float32)
    alpha = jnp.full((1,), 0.25, jnp.float32)        # nn.PReLU() default

    # Fold BN (running stats) into per-channel scale/bias.
    s1 = g1 * lax.rsqrt(v1 + eps)
    b1 = be1 - m1 * s1
    s2 = g2 * lax.rsqrt(v2 + eps)
    b2 = be2 - m2 * s2

    out = residual_block_pallas(x, w1, w2, s1, b1, s2, b2, alpha)
    out = jax.block_until_ready(out)

    ref = residual_block_ref(x, w1, w2, g1, be1, m1, v1, g2, be2, m2, v2,
                             alpha[0], eps)
    assert out.shape == (N, C, H, W) and out.dtype == jnp.float32
    assert jnp.allclose(out, ref, atol=1e-2, rtol=1e-2), (
        float(jnp.max(jnp.abs(out - ref))))

    print("KERNEL_OK")
</pallas_src>

<mosaic_0001>
module attributes {stable_mosaic.version = 11 : i64} {
  func.func @_residual_block_kernel(%arg0: i32, %arg1: memref<1x342x128xf32, #tpu.memory_space<vmem>>, %arg2: memref<9x128x128xf32, #tpu.memory_space<vmem>>, %arg3: memref<9x128x128xf32, #tpu.memory_space<vmem>>, %arg4: memref<1x128xf32, #tpu.memory_space<vmem>>, %arg5: memref<1x128xf32, #tpu.memory_space<vmem>>, %arg6: memref<1x128xf32, #tpu.memory_space<vmem>>, %arg7: memref<1x128xf32, #tpu.memory_space<vmem>>, %arg8: memref<1xf32, #tpu.memory_space<smem>>, %arg9: memref<1x288x128xf32, #tpu.memory_space<vmem>>, %arg10: memref<347x128xf32, #tpu.memory_space<vmem>>) attributes {dimension_semantics = [#tpu.dimension_semantics<parallel>], iteration_bounds = array<i64: 2>, scalar_prefetch = 0 : i64, scratch_operands = 1 : i64, tpu.core_type = #tpu.core_type<tc>, window_params = [{transform_indices = @transform_0, window_bounds = array<i64: 1, 342, 128>}, {pipeline_mode = #tpu.pipeline_mode<synchronous>, transform_indices = @transform_1, window_bounds = array<i64: 9, 128, 128>}, {pipeline_mode = #tpu.pipeline_mode<synchronous>, transform_indices = @transform_2, window_bounds = array<i64: 9, 128, 128>}, {pipeline_mode = #tpu.pipeline_mode<synchronous>, transform_indices = @transform_3, window_bounds = array<i64: 1, 128>}, {pipeline_mode = #tpu.pipeline_mode<synchronous>, transform_indices = @transform_4, window_bounds = array<i64: 1, 128>}, {pipeline_mode = #tpu.pipeline_mode<synchronous>, transform_indices = @transform_5, window_bounds = array<i64: 1, 128>}, {pipeline_mode = #tpu.pipeline_mode<synchronous>, transform_indices = @transform_6, window_bounds = array<i64: 1, 128>}, {transform_indices = @transform_7, window_bounds = array<i64: 1>}, {transform_indices = @transform_8, window_bounds = array<i64: 1, 288, 128>}]} {
    %c0 = arith.constant 0 : index
    %c0_0 = arith.constant 0 : index
    %c0_1 = arith.constant 0 : index
    %0 = vector.load %arg1[%c0, %c0_0, %c0_1] : memref<1x342x128xf32, #tpu.memory_space<vmem>>, vector<1x288x128xf32>
    %1 = vector.shape_cast %0 : vector<1x288x128xf32> to vector<288x128xf32>
    %c0_2 = arith.constant 0 : index
    %c0_3 = arith.constant 0 : index
    %c0_4 = arith.constant 0 : index
    %2 = vector.load %arg2[%c0_2, %c0_3, %c0_4] : memref<9x128x128xf32, #tpu.memory_space<vmem>>, vector<1x128x128xf32>
    %3 = vector.shape_cast %2 : vector<1x128x128xf32> to vector<128x128xf32>
    %cst = arith.constant dense<0.000000e+00> : vector<288x128xf32>
    %4 = tpu.matmul %1, %3, %cst {dimension_numbers = #tpu.dot_dimension_numbers<[1], [0], [0], [1], [0, 0, 1, 1], [], []>} : vector<288x128xf32>, vector<128x128xf32>, vector<288x128xf32> -> vector<288x128xf32>
    %c0_5 = arith.constant 0 : index
    %c1 = arith.constant 1 : index
    %c0_6 = arith.constant 0 : index
    %5 = vector.load %arg1[%c0_5, %c1, %c0_6] : memref<1x342x128xf32, #tpu.memory_space<vmem>>, vector<1x288x128xf32>
    %6 = vector.shape_cast %5 : vector<1x288x128xf32> to vector<288x128xf32>
    %c1_7 = arith.constant 1 : index
    %c0_8 = arith.constant 0 : index
    %c0_9 = arith.constant 0 : index
    %7 = vector.load %arg2[%c1_7, %c0_8, %c0_9] : memref<9x128x128xf32, #tpu.memory_space<vmem>>, vector<1x128x128xf32>
    %8 = vector.shape_cast %7 : vector<1x128x128xf32> to vector<128x128xf32>
    %cst_10 = arith.constant dense<0.000000e+00> : vector<288x128xf32>
    %9 = tpu.matmul %6, %8, %cst_10 {dimension_numbers = #tpu.dot_dimension_numbers<[1], [0], [0], [1], [0, 0, 1, 1], [], []>} : vector<288x128xf32>, vector<128x128xf32>, vector<288x128xf32> -> vector<288x128xf32>
    %10 = arith.addf %4, %9 : vector<288x128xf32>
    %c0_11 = arith.constant 0 : index
    %c2 = arith.constant 2 : index
    %c0_12 = arith.constant 0 : index
    %11 = vector.load %arg1[%c0_11, %c2, %c0_12] : memref<1x342x128xf32, #tpu.memory_space<vmem>>, vector<1x288x128xf32>
    %12 = vector.shape_cast %11 : vector<1x288x128xf32> to vector<288x128xf32>
    %c2_13 = arith.constant 2 : index
    %c0_14 = arith.constant 0 : index
    %c0_15 = arith.constant 0 : index
    %13 = vector.load %arg2[%c2_13, %c0_14, %c0_15] : memref<9x128x128xf32, #tpu.memory_space<vmem>>, vector<1x128x128xf32>
    %14 = vector.shape_cast %13 : vector<1x128x128xf32> to vector<128x128xf32>
    %cst_16 = arith.constant dense<0.000000e+00> : vector<288x128xf32>
    %15 = tpu.matmul %12, %14, %cst_16 {dimension_numbers = #tpu.dot_dimension_numbers<[1], [0], [0], [1], [0, 0, 1, 1], [], []>} : vector<288x128xf32>, vector<128x128xf32>, vector<288x128xf32> -> vector<288x128xf32>
    %16 = arith.addf %10, %15 : vector<288x128xf32>
    %c0_17 = arith.constant 0 : index
    %c18 = arith.constant 18 : index
    %c0_18 = arith.constant 0 : index
    %17 = vector.load %arg1[%c0_17, %c18, %c0_18] : memref<1x342x128xf32, #tpu.memory_space<vmem>>, vector<1x288x128xf32>
    %18 = vector.shape_cast %17 : vector<1x288x128xf32> to vector<288x128xf32>
    %c3 = arith.constant 3 : index
    %c0_19 = arith.constant 0 : index
    %c0_20 = arith.constant 0 : index
    %19 = vector.load %arg2[%c3, %c0_19, %c0_20] : memref<9x128x128xf32, #tpu.memory_space<vmem>>, vector<1x128x128xf32>
    %20 = vector.shape_cast %19 : vector<1x128x128xf32> to vector<128x128xf32>
    %cst_21 = arith.constant dense<0.000000e+00> : vector<288x128xf32>
    %21 = tpu.matmul %18, %20, %cst_21 {dimension_numbers = #tpu.dot_dimension_numbers<[1], [0], [0], [1], [0, 0, 1, 1], [], []>} : vector<288x128xf32>, vector<128x128xf32>, vector<288x128xf32> -> vector<288x128xf32>
    %22 = arith.addf %16, %21 : vector<288x128xf32>
    %c0_22 = arith.constant 0 : index
    %c19 = arith.constant 19 : index
    %c0_23 = arith.constant 0 : index
    %23 = vector.load %arg1[%c0_22, %c19, %c0_23] : memref<1x342x128xf32, #tpu.memory_space<vmem>>, vector<1x288x128xf32>
    %24 = vector.shape_cast %23 : vector<1x288x128xf32> to vector<288x128xf32>
    %c4 = arith.constant 4 : index
    %c0_24 = arith.constant 0 : index
    %c0_25 = arith.constant 0 : index
    %25 = vector.load %arg2[%c4, %c0_24, %c0_25] : memref<9x128x128xf32, #tpu.memory_space<vmem>>, vector<1x128x128xf32>
    %26 = vector.shape_cast %25 : vector<1x128x128xf32> to vector<128x128xf32>
    %cst_26 = arith.constant dense<0.000000e+00> : vector<288x128xf32>
    %27 = tpu.matmul %24, %26, %cst_26 {dimension_numbers = #tpu.dot_dimension_numbers<[1], [0], [0], [1], [0, 0, 1, 1], [], []>} : vector<288x128xf32>, vector<128x128xf32>, vector<288x128xf32> -> vector<288x128xf32>
    %28 = arith.addf %22, %27 : vector<288x128xf32>
    %c0_27 = arith.constant 0 : index
    %c20 = arith.constant 20 : index
    %c0_28 = arith.constant 0 : index
    %29 = vector.load %arg1[%c0_27, %c20, %c0_28] : memref<1x342x128xf32, #tpu.memory_space<vmem>>, vector<1x288x128xf32>
    %30 = vector.shape_cast %29 : vector<1x288x128xf32> to vector<288x128xf32>
    %c5 = arith.constant 5 : index
    %c0_29 = arith.constant 0 : index
    %c0_30 = arith.constant 0 : index
    %31 = vector.load %arg2[%c5, %c0_29, %c0_30] : memref<9x128x128xf32, #tpu.memory_space<vmem>>, vector<1x128x128xf32>
    %32 = vector.shape_cast %31 : vector<1x128x128xf32> to vector<128x128xf32>
    %cst_31 = arith.constant dense<0.000000e+00> : vector<288x128xf32>
    %33 = tpu.matmul %30, %32, %cst_31 {dimension_numbers = #tpu.dot_dimension_numbers<[1], [0], [0], [1], [0, 0, 1, 1], [], []>} : vector<288x128xf32>, vector<128x128xf32>, vector<288x128xf32> -> vector<288x128xf32>
    %34 = arith.addf %28, %33 : vector<288x128xf32>
    %c0_32 = arith.constant 0 : index
    %c36 = arith.constant 36 : index
    %c0_33 = arith.constant 0 : index
    %35 = vector.load %arg1[%c0_32, %c36, %c0_33] : memref<1x342x128xf32, #tpu.memory_space<vmem>>, vector<1x288x128xf32>
    %36 = vector.shape_cast %35 : vector<1x288x128xf32> to vector<288x128xf32>
    %c6 = arith.constant 6 : index
    %c0_34 = arith.constant 0 : index
    %c0_35 = arith.constant 0 : index
    %37 = vector.load %arg2[%c6, %c0_34, %c0_35] : memref<9x128x128xf32, #tpu.memory_space<vmem>>, vector<1x128x128xf32>
    %38 = vector.shape_cast %37 : vector<1x128x128xf32> to vector<128x128xf32>
    %cst_36 = arith.constant dense<0.000000e+00> : vector<288x128xf32>
    %39 = tpu.matmul %36, %38, %cst_36 {dimension_numbers = #tpu.dot_dimension_numbers<[1], [0], [0], [1], [0, 0, 1, 1], [], []>} : vector<288x128xf32>, vector<128x128xf32>, vector<288x128xf32> -> vector<288x128xf32>
    %40 = arith.addf %34, %39 : vector<288x128xf32>
    %c0_37 = arith.constant 0 : index
    %c37 = arith.constant 37 : index
    %c0_38 = arith.constant 0 : index
    %41 = vector.load %arg1[%c0_37, %c37, %c0_38] : memref<1x342x128xf32, #tpu.memory_space<vmem>>, vector<1x288x128xf32>
    %42 = vector.shape_cast %41 : vector<1x288x128xf32> to vector<288x128xf32>
    %c7 = arith.constant 7 : index
    %c0_39 = arith.constant 0 : index
    %c0_40 = arith.constant 0 : index
    %43 = vector.load %arg2[%c7, %c0_39, %c0_40] : memref<9x128x128xf32, #tpu.memory_space<vmem>>, vector<1x128x128xf32>
    %44 = vector.shape_cast %43 : vector<1x128x128xf32> to vector<128x128xf32>
    %cst_41 = arith.constant dense<0.000000e+00> : vector<288x128xf32>
    %45 = tpu.matmul %42, %44, %cst_41 {dimension_numbers = #tpu.dot_dimension_numbers<[1], [0], [0], [1], [0, 0, 1, 1], [], []>} : vector<288x128xf32>, vector<128x128xf32>, vector<288x128xf32> -> vector<288x128xf32>
    %46 = arith.addf %40, %45 : vector<288x128xf32>
    %c0_42 = arith.constant 0 : index
    %c38 = arith.constant 38 : index
    %c0_43 = arith.constant 0 : index
    %47 = vector.load %arg1[%c0_42, %c38, %c0_43] : memref<1x342x128xf32, #tpu.memory_space<vmem>>, vector<1x288x128xf32>
    %48 = vector.shape_cast %47 : vector<1x288x128xf32> to vector<288x128xf32>
    %c8 = arith.constant 8 : index
    %c0_44 = arith.constant 0 : index
    %c0_45 = arith.constant 0 : index
    %49 = vector.load %arg2[%c8, %c0_44, %c0_45] : memref<9x128x128xf32, #tpu.memory_space<vmem>>, vector<1x128x128xf32>
    %50 = vector.shape_cast %49 : vector<1x128x128xf32> to vector<128x128xf32>
    %cst_46 = arith.constant dense<0.000000e+00> : vector<288x128xf32>
    %51 = tpu.matmul %48, %50, %cst_46 {dimension_numbers = #tpu.dot_dimension_numbers<[1], [0], [0], [1], [0, 0, 1, 1], [], []>} : vector<288x128xf32>, vector<128x128xf32>, vector<288x128xf32> -> vector<288x128xf32>
    %52 = arith.addf %46, %51 : vector<288x128xf32>
    %c0_47 = arith.constant 0 : index
    %c0_48 = arith.constant 0 : index
    %53 = vector.load %arg4[%c0_47, %c0_48] : memref<1x128xf32, #tpu.memory_space<vmem>>, vector<1x128xf32>
    %54 = vector.shape_cast %53 : vector<1x128xf32> to vector<128xf32>
    %55 = vector.shape_cast %54 : vector<128xf32> to vector<1x128xf32>
    %56 = vector.broadcast %55 : vector<1x128xf32> to vector<288x128xf32>
    %57 = arith.mulf %52, %56 : vector<288x128xf32>
    %c0_49 = arith.constant 0 : index
    %c0_50 = arith.constant 0 : index
    %58 = vector.load %arg5[%c0_49, %c0_50] : memref<1x128xf32, #tpu.memory_space<vmem>>, vector<1x128xf32>
    %59 = vector.shape_cast %58 : vector<1x128xf32> to vector<128xf32>
    %60 = vector.shape_cast %59 : vector<128xf32> to vector<1x128xf32>
    %61 = vector.broadcast %60 : vector<1x128xf32> to vector<288x128xf32>
    %62 = arith.addf %57, %61 : vector<288x128xf32>
    %c0_51 = arith.constant 0 : index
    %63 = memref.load %arg8[%c0_51] : memref<1xf32, #tpu.memory_space<smem>>
    %cst_52 = arith.constant 0.000000e+00 : f32
    %64 = vector.broadcast %cst_52 : f32 to vector<288x128xf32>
    %65 = arith.cmpf oge, %62, %64 : vector<288x128xf32>
    %66 = vector.broadcast %63 : f32 to vector<288x128xf32>
    %67 = arith.mulf %66, %62 : vector<288x128xf32>
    %68 = arith.select %65, %62, %67 : vector<288x128xi1>, vector<288x128xf32>
    %69 = tpu.iota {dimensions = array<i32: 0>} : vector<288x128xi32>
    %c18_i32 = arith.constant 18 : i32
    %c0_i32 = arith.constant 0 : i32
    %70 = arith.cmpi eq, %c18_i32, %c0_i32 : i32
    %c1_i32 = arith.constant 1 : i32
    %71 = arith.select %70, %c1_i32, %c18_i32 : i32
    %72 = vector.broadcast %71 : i32 to vector<288x128xi32>
    %73 = arith.remsi %69, %72 : vector<288x128xi32>
    %c0_i32_53 = arith.constant 0 : i32
    %74 = vector.broadcast %c0_i32_53 : i32 to vector<288x128xi32>
    %75 = arith.cmpi ne, %73, %74 : vector<288x128xi32>
    %c0_i32_54 = arith.constant 0 : i32
    %76 = vector.broadcast %c0_i32_54 : i32 to vector<288x128xi32>
    %77 = arith.cmpi slt, %73, %76 : vector<288x128xi32>
    %c0_i32_55 = arith.constant 0 : i32
    %78 = arith.cmpi slt, %71, %c0_i32_55 : i32
    %79 = vector.broadcast %78 : i1 to vector<288x128xi1>
    %80 = vector.broadcast %79 : vector<288x128xi1> to vector<288x128xi1>
    %81 = arith.xori %77, %80 : vector<288x128xi1>
    %82 = arith.andi %81, %75 : vector<288x128xi1>
    %83 = vector.broadcast %71 : i32 to vector<288x128xi32>
    %84 = arith.addi %73, %83 : vector<288x128xi32>
    %85 = arith.select %82, %84, %73 : vector<288x128xi1>, vector<288x128xi32>
    %c16_i32 = arith.constant 16 : i32
    %86 = vector.broadcast %c16_i32 : i32 to vector<288x128xi32>
    %87 = arith.cmpi slt, %85, %86 : vector<288x128xi32>
    %cst_56 = arith.constant 0.000000e+00 : f32
    %88 = vector.broadcast %cst_56 : f32 to vector<288x128xf32>
    %89 = arith.select %87, %68, %88 : vector<288x128xi1>, vector<288x128xf32>
    %cst_57 = arith.constant 0.000000e+00 : f32
    %90 = vector.broadcast %cst_57 : f32 to vector<24x128xf32>
    %c0_58 = arith.constant 0 : index
    %c0_59 = arith.constant 0 : index
    %91 = vector.load %arg10[%c0_58, %c0_59] : memref<347x128xf32, #tpu.memory_space<vmem>>, vector<24x128xf32>
    tpu.vector_store %arg10[%c0_58, %c0_59], %90 {strides = array<i32>} : memref<347x128xf32, #tpu.memory_space<vmem>>, vector<24x128xf32>,
    %cst_60 = arith.constant 0.000000e+00 : f32
    %92 = vector.broadcast %cst_60 : f32 to vector<35x128xf32>
    %c312 = arith.constant 312 : index
    %c0_61 = arith.constant 0 : index
    %93 = vector.load %arg10[%c312, %c0_61] : memref<347x128xf32, #tpu.memory_space<vmem>>, vector<35x128xf32>
    tpu.vector_store %arg10[%c312, %c0_61], %92 {strides = array<i32>} : memref<347x128xf32, #tpu.memory_space<vmem>>, vector<35x128xf32>,
    %c24 = arith.constant 24 : index
    %c0_62 = arith.constant 0 : index
    %94 = vector.load %arg10[%c24, %c0_62] : memref<347x128xf32, #tpu.memory_space<vmem>>, vector<288x128xf32>
    tpu.vector_store %arg10[%c24, %c0_62], %89 {strides = array<i32>} : memref<347x128xf32, #tpu.memory_space<vmem>>, vector<288x128xf32>,
    %c5_63 = arith.constant 5 : index
    %c0_64 = arith.constant 0 : index
    %95 = vector.load %arg10[%c5_63, %c0_64] : memref<347x128xf32, #tpu.memory_space<vmem>>, vector<288x128xf32>
    %c0_65 = arith.constant 0 : index
    %c0_66 = arith.constant 0 : index
    %c0_67 = arith.constant 0 : index
    %96 = vector.load %arg3[%c0_65, %c0_66, %c0_67] : memref<9x128x128xf32, #tpu.memory_space<vmem>>, vector<1x128x128xf32>
    %97 = vector.shape_cast %96 : vector<1x128x128xf32> to vector<128x128xf32>
    %cst_68 = arith.constant dense<0.000000e+00> : vector<288x128xf32>
    %98 = tpu.matmul %95, %97, %cst_68 {dimension_numbers = #tpu.dot_dimension_numbers<[1], [0], [0], [1], [0, 0, 1, 1], [], []>} : vector<288x128xf32>, vector<128x128xf32>, vector<288x128xf32> -> vector<288x128xf32>
    %c6_69 = arith.constant 6 : index
    %c0_70 = arith.constant 0 : index
    %99 = vector.load %arg10[%c6_69, %c0_70] : memref<347x128xf32, #tpu.memory_space<vmem>>, vector<288x128xf32>
    %c1_71 = arith.constant 1 : index
    %c0_72 = arith.constant 0 : index
    %c0_73 = arith.constant 0 : index
    %100 = vector.load %arg3[%c1_71, %c0_72, %c0_73] : memref<9x128x128xf32, #tpu.memory_space<vmem>>, vector<1x128x128xf32>
    %101 = vector.shape_cast %100 : vector<1x128x128xf32> to vector<128x128xf32>
    %cst_74 = arith.constant dense<0.000000e+00> : vector<288x128xf32>
    %102 = tpu.matmul %99, %101, %cst_74 {dimension_numbers = #tpu.dot_dimension_numbers<[1], [0], [0], [1], [0, 0, 1, 1], [], []>} : vector<288x128xf32>, vector<128x128xf32>, vector<288x128xf32> -> vector<288x128xf32>
    %103 = arith.addf %98, %102 : vector<288x128xf32>
    %c7_75 = arith.constant 7 : index
    %c0_76 = arith.constant 0 : index
    %104 = vector.load %arg10[%c7_75, %c0_76] : memref<347x128xf32, #tpu.memory_space<vmem>>, vector<288x128xf32>
    %c2_77 = arith.constant 2 : index
    %c0_78 = arith.constant 0 : index
    %c0_79 = arith.constant 0 : index
    %105 = vector.load %arg3[%c2_77, %c0_78, %c0_79] : memref<9x128x128xf32, #tpu.memory_space<vmem>>, vector<1x128x128xf32>
    %106 = vector.shape_cast %105 : vector<1x128x128xf32> to vector<128x128xf32>
    %cst_80 = arith.constant dense<0.000000e+00> : vector<288x128xf32>
    %107 = tpu.matmul %104, %106, %cst_80 {dimension_numbers = #tpu.dot_dimension_numbers<[1], [0], [0], [1], [0, 0, 1, 1], [], []>} : vector<288x128xf32>, vector<128x128xf32>, vector<288x128xf32> -> vector<288x128xf32>
    %108 = arith.addf %103, %107 : vector<288x128xf32>
    %c23 = arith.constant 23 : index
    %c0_81 = arith.constant 0 : index
    %109 = vector.load %arg10[%c23, %c0_81] : memref<347x128xf32, #tpu.memory_space<vmem>>, vector<288x128xf32>
    %c3_82 = arith.constant 3 : index
    %c0_83 = arith.constant 0 : index
    %c0_84 = arith.constant 0 : index
    %110 = vector.load %arg3[%c3_82, %c0_83, %c0_84] : memref<9x128x128xf32, #tpu.memory_space<vmem>>, vector<1x128x128xf32>
    %111 = vector.shape_cast %110 : vector<1x128x128xf32> to vector<128x128xf32>
    %cst_85 = arith.constant dense<0.000000e+00> : vector<288x128xf32>
    %112 = tpu.matmul %109, %111, %cst_85 {dimension_numbers = #tpu.dot_dimension_numbers<[1], [0], [0], [1], [0, 0, 1, 1], [], []>} : vector<288x128xf32>, vector<128x128xf32>, vector<288x128xf32> -> vector<288x128xf32>
    %113 = arith.addf %108, %112 : vector<288x128xf32>
    %c24_86 = arith.constant 24 : index
    %c0_87 = arith.constant 0 : index
    %114 = vector.load %arg10[%c24_86, %c0_87] : memref<347x128xf32, #tpu.memory_space<vmem>>, vector<288x128xf32>
    %c4_88 = arith.constant 4 : index
    %c0_89 = arith.constant 0 : index
    %c0_90 = arith.constant 0 : index
    %115 = vector.load %arg3[%c4_88, %c0_89, %c0_90] : memref<9x128x128xf32, #tpu.memory_space<vmem>>, vector<1x128x128xf32>
    %116 = vector.shape_cast %115 : vector<1x128x128xf32> to vector<128x128xf32>
    %cst_91 = arith.constant dense<0.000000e+00> : vector<288x128xf32>
    %117 = tpu.matmul %114, %116, %cst_91 {dimension_numbers = #tpu.dot_dimension_numbers<[1], [0], [0], [1], [0, 0, 1, 1], [], []>} : vector<288x128xf32>, vector<128x128xf32>, vector<288x128xf32> -> vector<288x128xf32>
    %118 = arith.addf %113, %117 : vector<288x128xf32>
    %c25 = arith.constant 25 : index
    %c0_92 = arith.constant 0 : index
    %119 = vector.load %arg10[%c25, %c0_92] : memref<347x128xf32, #tpu.memory_space<vmem>>, vector<288x128xf32>
    %c5_93 = arith.constant 5 : index
    %c0_94 = arith.constant 0 : index
    %c0_95 = arith.constant 0 : index
    %120 = vector.load %arg3[%c5_93, %c0_94, %c0_95] : memref<9x128x128xf32, #tpu.memory_space<vmem>>, vector<1x128x128xf32>
    %121 = vector.shape_cast %120 : vector<1x128x128xf32> to vector<128x128xf32>
    %cst_96 = arith.constant dense<0.000000e+00> : vector<288x128xf32>
    %122 = tpu.matmul %119, %121, %cst_96 {dimension_numbers = #tpu.dot_dimension_numbers<[1], [0], [0], [1], [0, 0, 1, 1], [], []>} : vector<288x128xf32>, vector<128x128xf32>, vector<288x128xf32> -> vector<288x128xf32>
    %123 = arith.addf %118, %122 : vector<288x128xf32>
    %c41 = arith.constant 41 : index
    %c0_97 = arith.constant 0 : index
    %124 = vector.load %arg10[%c41, %c0_97] : memref<347x128xf32, #tpu.memory_space<vmem>>, vector<288x128xf32>
    %c6_98 = arith.constant 6 : index
    %c0_99 = arith.constant 0 : index
    %c0_100 = arith.constant 0 : index
    %125 = vector.load %arg3[%c6_98, %c0_99, %c0_100] : memref<9x128x128xf32, #tpu.memory_space<vmem>>, vector<1x128x128xf32>
    %126 = vector.shape_cast %125 : vector<1x128x128xf32> to vector<128x128xf32>
    %cst_101 = arith.constant dense<0.000000e+00> : vector<288x128xf32>
    %127 = tpu.matmul %124, %126, %cst_101 {dimension_numbers = #tpu.dot_dimension_numbers<[1], [0], [0], [1], [0, 0, 1, 1], [], []>} : vector<288x128xf32>, vector<128x128xf32>, vector<288x128xf32> -> vector<288x128xf32>
    %128 = arith.addf %123, %127 : vector<288x128xf32>
    %c42 = arith.constant 42 : index
    %c0_102 = arith.constant 0 : index
    %129 = vector.load %arg10[%c42, %c0_102] : memref<347x128xf32, #tpu.memory_space<vmem>>, vector<288x128xf32>
    %c7_103 = arith.constant 7 : index
    %c0_104 = arith.constant 0 : index
    %c0_105 = arith.constant 0 : index
    %130 = vector.load %arg3[%c7_103, %c0_104, %c0_105] : memref<9x128x128xf32, #tpu.memory_space<vmem>>, vector<1x128x128xf32>
    %131 = vector.shape_cast %130 : vector<1x128x128xf32> to vector<128x128xf32>
    %cst_106 = arith.constant dense<0.000000e+00> : vector<288x128xf32>
    %132 = tpu.matmul %129, %131, %cst_106 {dimension_numbers = #tpu.dot_dimension_numbers<[1], [0], [0], [1], [0, 0, 1, 1], [], []>} : vector<288x128xf32>, vector<128x128xf32>, vector<288x128xf32> -> vector<288x128xf32>
    %133 = arith.addf %128, %132 : vector<288x128xf32>
    %c43 = arith.constant 43 : index
    %c0_107 = arith.constant 0 : index
    %134 = vector.load %arg10[%c43, %c0_107] : memref<347x128xf32, #tpu.memory_space<vmem>>, vector<288x128xf32>
    %c8_108 = arith.constant 8 : index
    %c0_109 = arith.constant 0 : index
    %c0_110 = arith.constant 0 : index
    %135 = vector.load %arg3[%c8_108, %c0_109, %c0_110] : memref<9x128x128xf32, #tpu.memory_space<vmem>>, vector<1x128x128xf32>
    %136 = vector.shape_cast %135 : vector<1x128x128xf32> to vector<128x128xf32>
    %cst_111 = arith.constant dense<0.000000e+00> : vector<288x128xf32>
    %137 = tpu.matmul %134, %136, %cst_111 {dimension_numbers = #tpu.dot_dimension_numbers<[1], [0], [0], [1], [0, 0, 1, 1], [], []>} : vector<288x128xf32>, vector<128x128xf32>, vector<288x128xf32> -> vector<288x128xf32>
    %138 = arith.addf %133, %137 : vector<288x128xf32>
    %c0_112 = arith.constant 0 : index
    %c0_113 = arith.constant 0 : index
    %139 = vector.load %arg6[%c0_112, %c0_113] : memref<1x128xf32, #tpu.memory_space<vmem>>, vector<1x128xf32>
    %140 = vector.shape_cast %139 : vector<1x128xf32> to vector<128xf32>
    %141 = vector.shape_cast %140 : vector<128xf32> to vector<1x128xf32>
    %142 = vector.broadcast %141 : vector<1x128xf32> to vector<288x128xf32>
    %143 = arith.mulf %138, %142 : vector<288x128xf32>
    %c0_114 = arith.constant 0 : index
    %c0_115 = arith.constant 0 : index
    %144 = vector.load %arg7[%c0_114, %c0_115] : memref<1x128xf32, #tpu.memory_space<vmem>>, vector<1x128xf32>
    %145 = vector.shape_cast %144 : vector<1x128xf32> to vector<128xf32>
    %146 = vector.shape_cast %145 : vector<128xf32> to vector<1x128xf32>
    %147 = vector.broadcast %146 : vector<1x128xf32> to vector<288x128xf32>
    %148 = arith.addf %143, %147 : vector<288x128xf32>
    %c0_116 = arith.constant 0 : index
    %c19_117 = arith.constant 19 : index
    %c0_118 = arith.constant 0 : index
    %149 = vector.load %arg1[%c0_116, %c19_117, %c0_118] : memref<1x342x128xf32, #tpu.memory_space<vmem>>, vector<1x288x128xf32>
    %150 = vector.shape_cast %149 : vector<1x288x128xf32> to vector<288x128xf32>
    %151 = arith.addf %150, %148 : vector<288x128xf32>
    %c0_119 = arith.constant 0 : index
    %c0_120 = arith.constant 0 : index
    %c0_121 = arith.constant 0 : index
    %152 = vector.load %arg9[%c0_119, %c0_120, %c0_121] : memref<1x288x128xf32, #tpu.memory_space<vmem>>, vector<1x288x128xf32>
    %153 = vector.shape_cast %152 : vector<1x288x128xf32> to vector<288x128xf32>
    %154 = vector.shape_cast %151 : vector<288x128xf32> to vector<1x288x128xf32>
    tpu.vector_store %arg9[%c0_119, %c0_120, %c0_121], %154 {strides = array<i32>} : memref<1x288x128xf32, #tpu.memory_space<vmem>>, vector<1x288x128xf32>,
    return
  }
  func.func @transform_0(%arg0: i32) -> (i32, i32, i32) {
    %c0_i32 = arith.constant 0 : i32
    %c0_i32_0 = arith.constant 0 : i32
    %c0_i32_1 = arith.constant 0 : i32
    return %arg0, %c0_i32, %c0_i32_0 : i32, i32, i32
  }
  func.func @transform_1(%arg0: i32) -> (i32, i32, i32) {
    %c0_i32 = arith.constant 0 : i32
    %c0_i32_0 = arith.constant 0 : i32
    %c0_i32_1 = arith.constant 0 : i32
    %c0_i32_2 = arith.constant 0 : i32
    return %c0_i32, %c0_i32_0, %c0_i32_1 : i32, i32, i32
  }
  func.func @transform_2(%arg0: i32) -> (i32, i32, i32) {
    %c0_i32 = arith.constant 0 : i32
    %c0_i32_0 = arith.constant 0 : i32
    %c0_i32_1 = arith.constant 0 : i32
    %c0_i32_2 = arith.constant 0 : i32
    return %c0_i32, %c0_i32_0, %c0_i32_1 : i32, i32, i32
  }
  func.func @transform_3(%arg0: i32) -> (i32, i32) {
    %c0_i32 = arith.constant 0 : i32
    %c0_i32_0 = arith.constant 0 : i32
    %c0_i32_1 = arith.constant 0 : i32
    return %c0_i32, %c0_i32_0 : i32, i32
  }
  func.func @transform_4(%arg0: i32) -> (i32, i32) {
    %c0_i32 = arith.constant 0 : i32
    %c0_i32_0 = arith.constant 0 : i32
    %c0_i32_1 = arith.constant 0 : i32
    return %c0_i32, %c0_i32_0 : i32, i32
  }
  func.func @transform_5(%arg0: i32) -> (i32, i32) {
    %c0_i32 = arith.constant 0 : i32
    %c0_i32_0 = arith.constant 0 : i32
    %c0_i32_1 = arith.constant 0 : i32
    return %c0_i32, %c0_i32_0 : i32, i32
  }
  func.func @transform_6(%arg0: i32) -> (i32, i32) {
    %c0_i32 = arith.constant 0 : i32
    %c0_i32_0 = arith.constant 0 : i32
    %c0_i32_1 = arith.constant 0 : i32
    return %c0_i32, %c0_i32_0 : i32, i32
  }
  func.func @transform_7(%arg0: i32) -> i32 {
    %c0_i32 = arith.constant 0 : i32
    %c0_i32_0 = arith.constant 0 : i32
    return %c0_i32 : i32
  }
  func.func @transform_8(%arg0: i32) -> (i32, i32, i32) {
    %c0_i32 = arith.constant 0 : i32
    %c0_i32_0 = arith.constant 0 : i32
    %c0_i32_1 = arith.constant 0 : i32
    return %arg0, %c0_i32, %c0_i32_0 : i32, i32, i32
  }
}

</mosaic_0001>

<llo_original>
// kernel: tpu_custom_call.1
$region0: #{tpu_custom_call.1}
  #allocation0 [shape = 'u32[]', space=smem, size = 0x4, offset = 0x4, fixed_abs, tag = 'smem constant byte address 0x4 - core index']
  #allocation1 [shape = 'u32[144,128]{1,0:T(1,128)}', space=vmem, size = 0x12000, scoped, tag = 'internal scratch']
  #allocation2 [shape = 'f32[347,128]{1,0:T(8,128)}', space=vmem, size = 0x2c000, scoped, tag = 'scratch operand']
  #allocation3 [shape = 'f32[1]{0:T(128)S(6)}', space=smem, size = 0x200, scoped, tag = 'scoped memory for tpu_custom_call.1']
  %s0 = inlined_call_operand.vmem [shape: f32[2,342,128], index: 0, kind: input, shape index: {}]
  %s1 = inlined_call_operand.vmem [shape: f32[9,128,128], index: 1, kind: input, shape index: {}]
  %s2 = inlined_call_operand.hbm [shape: f32[9,128,128], index: 2, kind: input, shape index: {}]
  %s3 = inlined_call_operand.vmem [shape: f32[1,128], index: 3, kind: input, shape index: {}]
  %s4 = inlined_call_operand.vmem [shape: f32[1,128], index: 4, kind: input, shape index: {}]
  %s5 = inlined_call_operand.vmem [shape: f32[1,128], index: 5, kind: input, shape index: {}]
  %s6 = inlined_call_operand.vmem [shape: f32[1,128], index: 6, kind: input, shape index: {}]
  %s7 = inlined_call_operand.<no memory space> [shape: f32[1], index: 7, kind: input, shape index: {}]
  %s8 = inlined_call_operand.hbm [shape: f32[2,288,128], index: 8, kind: output, shape index: {}]
  %s9 = sld [smem:[#allocation0]]
  $region69: #{tpu_custom_call.1} parent=0
    _
  %s11 = ssub.s32 1, %s9
  %s12 = scalar_select 0, %s11, %s9
  %13 = sst [smem:[#allocation3]] %s7
  $region1: #{tpu_custom_call.1} parent=0
    #allocation4 [shape = 'u8[589824]{0}', space=vmem, size = 0x90000, scoped, tag = 'input window, operand 2, single buffered']
    #allocation5 [shape = 's32[2]{0}', space=sflag, size = 0x8, scoped, tag = 'scoped memory for tpu_custom_call.1']
    #allocation6 [shape = 's32[2]{0}', space=sflag, size = 0x8, scoped, tag = 'scoped memory for tpu_custom_call.1']
    #allocation7 [shape = 'u8[294912]{0}', space=vmem, size = 0x48000, scoped, tag = 'output window, operand 0']
    %14 = vsyncpa [#allocation5], 0
    %15 = vsyncpa [#allocation6], 0
    %s16 = scalar_lea.sflag [#allocation6], 1
    %17 = vsyncpa %s16, 0
    loop: start=0, step=1, limit=4
    $region2: #{tpu_custom_call.1} parent=1 // loop_pre_header
      _
    $region3: #{tpu_custom_call.1} parent=1 // loop_header
      %s19 = sphi 0, %s23
      %p20 = scmp.ge.s32.totalorder %s19, 4
      %s29 = sphi 0, %s31
      %s32 = sphi 0, %s29
      %s33 = sphi 0, %s32
      %s49 = sphi 0, %s33
      %s53 = sphi 0, %s53
      %s55 = sphi 0, %s53
      %s56 = sphi 0, %s55
      %s70 = sphi 0, %s56
      %s74 = sphi 0, %s74
      %s76 = sphi 0, %s74
      %s77 = sphi 0, %s76
      %s91 = sphi 0, %s77
      %s95 = sphi 0, %s95
      %s97 = sphi 0, %s95
      %s98 = sphi 0, %s97
      %s112 = sphi 0, %s98
      %s116 = sphi 0, %s116
      %s118 = sphi 0, %s116
      %s119 = sphi 0, %s118
      %s133 = sphi 0, %s119
      %s137 = sphi 0, %s137
      %s139 = sphi 0, %s137
      %s140 = sphi 0, %s139
      %s154 = sphi 0, %s140
      %s158 = sphi 0, %s158
      %s160 = sphi 0, %s158
      %s161 = sphi 0, %s160
      %s175 = sphi 0, %s161
      %s179 = sphi 0, %s179
      %s181 = sphi 0, %s179
      %s182 = sphi 0, %s181
      %s196 = sphi 0, %s182
      %s202 = sphi 0, %s204
      %s205 = sphi 0, %s202
      %s206 = sphi 0, %s205
      %s222 = sphi 0, %s206
    $region4: #{tpu_custom_call.1} parent=1 // loop_header_branch
      %22 = sbr.rel (%p20) target = $region8
    $region5: #{tpu_custom_call.1} parent=1 // loop_body
      %s24 = ssub.s32 %s19, 1
      %s25 = ssub.s32 %s19, 2
      %s26 = sadd.s32 %s19, 1
      %s27 = ssub.s32 %s19, %s26
      %p28 = scmp.eq.s32.totalorder %s27, 0
      %s30 = sadd.s32 %s29, 1
      %s31 = scalar_select %p28, %s29, %s30
      %p34 = pneg %p28
      %p35 = scmp.eq.s32.totalorder %s19, 1
      %p36 = por %p34, %p35
      %p37 = scmp.ne.s32.totalorder %s29, %s32
      %p38 = scmp.eq.s32.totalorder %s19, 0
      %p39 = por %p37, %p38
      %p40 = scmp.ne.s32.totalorder %s29, %s32
      %p41 = scmp.eq.s32.totalorder %s24, 1
      %p42 = por %p40, %p41
      %p43 = scmp.ne.s32.totalorder %s32, %s33
      %p44 = scmp.eq.s32.totalorder %s24, 0
      %p45 = por %p43, %p44
      %p46 = scmp.ne.s32.totalorder %s32, %s33
      %p47 = scmp.eq.s32.totalorder %s25, 1
      %p48 = por %p46, %p47
      %p50 = scmp.ne.s32.totalorder %s33, %s49
      %p51 = scmp.eq.s32.totalorder %s25, 0
      %p52 = por %p50, %p51
      %s54 = sadd.s32 %s53, 1
      %p57 = scmp.eq.s32.totalorder %s19, 1
      %p58 = scmp.ne.s32.totalorder %s53, %s55
      %p59 = scmp.eq.s32.totalorder %s19, 0
      %p60 = por %p58, %p59
      %p61 = scmp.ne.s32.totalorder %s53, %s55
      %p62 = scmp.eq.s32.totalorder %s24, 1
      %p63 = por %p61, %p62
      %p64 = scmp.ne.s32.totalorder %s55, %s56
      %p65 = scmp.eq.s32.totalorder %s24, 0
      %p66 = por %p64, %p65
      %p67 = scmp.ne.s32.totalorder %s55, %s56
      %p68 = scmp.eq.s32.totalorder %s25, 1
      %p69 = por %p67, %p68
      %p71 = scmp.ne.s32.totalorder %s56, %s70
      %p72 = scmp.eq.s32.totalorder %s25, 0
      %p73 = por %p71, %p72
      %s75 = sadd.s32 %s74, 1
      %p78 = scmp.eq.s32.totalorder %s19, 1
      %p79 = scmp.ne.s32.totalorder %s74, %s76
      %p80 = scmp.eq.s32.totalorder %s19, 0
      %p81 = por %p79, %p80
      %p82 = scmp.ne.s32.totalorder %s74, %s76
      %p83 = scmp.eq.s32.totalorder %s24, 1
      %p84 = por %p82, %p83
      %p85 = scmp.ne.s32.totalorder %s76, %s77
      %p86 = scmp.eq.s32.totalorder %s24, 0
      %p87 = por %p85, %p86
      %p88 = scmp.ne.s32.totalorder %s76, %s77
      %p89 = scmp.eq.s32.totalorder %s25, 1
      %p90 = por %p88, %p89
      %p92 = scmp.ne.s32.totalorder %s77, %s91
      %p93 = scmp.eq.s32.totalorder %s25, 0
      %p94 = por %p92, %p93
      %s96 = sadd.s32 %s95, 1
      %p99 = scmp.eq.s32.totalorder %s19, 1
      %p100 = scmp.ne.s32.totalorder %s95, %s97
      %p101 = scmp.eq.s32.totalorder %s19, 0
      %p102 = por %p100, %p101
      %p103 = scmp.ne.s32.totalorder %s95, %s97
      %p104 = scmp.eq.s32.totalorder %s24, 1
      %p105 = por %p103, %p104
      %p106 = scmp.ne.s32.totalorder %s97, %s98
      %p107 = scmp.eq.s32.totalorder %s24, 0
      %p108 = por %p106, %p107
      %p109 = scmp.ne.s32.totalorder %s97, %s98
      %p110 = scmp.eq.s32.totalorder %s25, 1
      %p111 = por %p109, %p110
      %p113 = scmp.ne.s32.totalorder %s98, %s112
      %p114 = scmp.eq.s32.totalorder %s25, 0
      %p115 = por %p113, %p114
      %s117 = sadd.s32 %s116, 1
      %p120 = scmp.eq.s32.totalorder %s19, 1
      %p121 = scmp.ne.s32.totalorder %s116, %s118
      %p122 = scmp.eq.s32.totalorder %s19, 0
      %p123 = por %p121, %p122
      %p124 = scmp.ne.s32.totalorder %s116, %s118
      %p125 = scmp.eq.s32.totalorder %s24, 1
      %p126 = por %p124, %p125
      %p127 = scmp.ne.s32.totalorder %s118, %s119
      %p128 = scmp.eq.s32.totalorder %s24, 0
      %p129 = por %p127, %p128
      %p130 = scmp.ne.s32.totalorder %s118, %s119
      %p131 = scmp.eq.s32.totalorder %s25, 1
      %p132 = por %p130, %p131
      %p134 = scmp.ne.s32.totalorder %s119, %s133
      %p135 = scmp.eq.s32.totalorder %s25, 0
      %p136 = por %p134, %p135
      %s138 = sadd.s32 %s137, 1
      %p141 = scmp.eq.s32.totalorder %s19, 1
      %p142 = scmp.ne.s32.totalorder %s137, %s139
      %p143 = scmp.eq.s32.totalorder %s19, 0
      %p144 = por %p142, %p143
      %p145 = scmp.ne.s32.totalorder %s137, %s139
      %p146 = scmp.eq.s32.totalorder %s24, 1
      %p147 = por %p145, %p146
      %p148 = scmp.ne.s32.totalorder %s139, %s140
      %p149 = scmp.eq.s32.totalorder %s24, 0
      %p150 = por %p148, %p149
      %p151 = scmp.ne.s32.totalorder %s139, %s140
      %p152 = scmp.eq.s32.totalorder %s25, 1
      %p153 = por %p151, %p152
      %p155 = scmp.ne.s32.totalorder %s140, %s154
      %p156 = scmp.eq.s32.totalorder %s25, 0
      %p157 = por %p155, %p156
      %s159 = sadd.s32 %s158, 1
      %p162 = scmp.eq.s32.totalorder %s19, 1
      %p163 = scmp.ne.s32.totalorder %s158, %s160
      %p164 = scmp.eq.s32.totalorder %s19, 0
      %p165 = por %p163, %p164
      %p166 = scmp.ne.s32.totalorder %s158, %s160
      %p167 = scmp.eq.s32.totalorder %s24, 1
      %p168 = por %p166, %p167
      %p169 = scmp.ne.s32.totalorder %s160, %s161
      %p170 = scmp.eq.s32.totalorder %s24, 0
      %p171 = por %p169, %p170
      %p172 = scmp.ne.s32.totalorder %s160, %s161
      %p173 = scmp.eq.s32.totalorder %s25, 1
      %p174 = por %p172, %p173
      %p176 = scmp.ne.s32.totalorder %s161, %s175
      %p177 = scmp.eq.s32.totalorder %s25, 0
      %p178 = por %p176, %p177
      %s180 = sadd.s32 %s179, 1
      %p183 = scmp.eq.s32.totalorder %s19, 1
      %p184 = scmp.ne.s32.totalorder %s179, %s181
      %p185 = scmp.eq.s32.totalorder %s19, 0
      %p186 = por %p184, %p185
      %p187 = scmp.ne.s32.totalorder %s179, %s181
      %p188 = scmp.eq.s32.totalorder %s24, 1
      %p189 = por %p187, %p188
      %p190 = scmp.ne.s32.totalorder %s181, %s182
      %p191 = scmp.eq.s32.totalorder %s24, 0
      %p192 = por %p190, %p191
      %p193 = scmp.ne.s32.totalorder %s181, %s182
      %p194 = scmp.eq.s32.totalorder %s25, 1
      %p195 = por %p193, %p194
      %p197 = scmp.ne.s32.totalorder %s182, %s196
      %p198 = scmp.eq.s32.totalorder %s25, 0
      %p199 = por %p197, %p198
      %s200 = ssub.s32 %s19, %s26
      %p201 = scmp.eq.s32.totalorder %s200, 0
      %s203 = sadd.s32 %s202, 1
      %s204 = scalar_select %p201, %s202, %s203
      %p207 = pneg %p201
      %p208 = scmp.eq.s32.totalorder %s19, 1
      %p209 = por %p207, %p208
      %p210 = scmp.ne.s32.totalorder %s202, %s205
      %p211 = scmp.eq.s32.totalorder %s19, 0
      %p212 = por %p210, %p211
      %p213 = scmp.ne.s32.totalorder %s202, %s205
      %p214 = scmp.eq.s32.totalorder %s24, 1
      %p215 = por %p213, %p214
      %p216 = scmp.ne.s32.totalorder %s205, %s206
      %p217 = scmp.eq.s32.totalorder %s24, 0
      %p218 = por %p216, %p217
      %p219 = scmp.ne.s32.totalorder %s205, %s206
      %p220 = scmp.eq.s32.totalorder %s25, 1
      %p221 = por %p219, %p220
      %p223 = scmp.ne.s32.totalorder %s206, %s222
      %p224 = scmp.eq.s32.totalorder %s25, 0
      %p225 = por %p223, %p224
      %p226 = scmp.le.s32.totalorder 1, %s19
      %p227 = scmp.lt.s32.totalorder %s19, 3
      %p228 = pnand %p226, %p227
      %p229 = pneg %p228
      // Predicated region
      $region9: #{tpu_custom_call.1} parent=5 // pred_check
        _
      $region10: #{tpu_custom_call.1} parent=5 // pred_check_branch
        %231 = sbr.rel (%p228) target = $region12
      $region11: #{tpu_custom_call.1} parent=5 // pred_region
        %s232 = ssub.s32 %s19, 1
        // Predicated region
        $region13: #{tpu_custom_call.1} parent=11 // pred_check
          %p233 = pneg %p66
        $region14: #{tpu_custom_call.1} parent=11 // pred_check_branch
          %235 = sbr.rel (%p233) target = $region16
        $region15: #{tpu_custom_call.1} parent=11 // pred_region
          _
        $region16: #{tpu_custom_call.1} parent=11 // pred_fallthru
          _
        // Predicated region
        $region17: #{tpu_custom_call.1} parent=11 // pred_check
          %p236 = pneg %p87
        $region18: #{tpu_custom_call.1} parent=11 // pred_check_branch
          %238 = sbr.rel (%p236) target = $region20
        $region19: #{tpu_custom_call.1} parent=11 // pred_region
          %s240 = ssub.s32 18432, 18432
          %241 = vsyncadd [#allocation5], %s240
          %s242 = sshll.u32 [#allocation4], 4
          %s243 = int_to_ptr.vmem [resolvable:$true] %s242
          %248 = dma.hbm_to_vmem [thread:$0]  %s2, 18432, %s243, [#allocation5], 128, 128, 8
        $region20: #{tpu_custom_call.1} parent=11 // pred_fallthru
          _
        // Predicated region
        $region21: #{tpu_custom_call.1} parent=11 // pred_check
          %p249 = pneg %p108
        $region22: #{tpu_custom_call.1} parent=11 // pred_check_branch
          %251 = sbr.rel (%p249) target = $region24
        $region23: #{tpu_custom_call.1} parent=11 // pred_region
          _
        $region24: #{tpu_custom_call.1} parent=11 // pred_fallthru
          _
        // Predicated region
        $region25: #{tpu_custom_call.1} parent=11 // pred_check
          %p252 = pneg %p129
        $region26: #{tpu_custom_call.1} parent=11 // pred_check_branch
          %254 = sbr.rel (%p252) target = $region28
        $region27: #{tpu_custom_call.1} parent=11 // pred_region
          _
        $region28: #{tpu_custom_call.1} parent=11 // pred_fallthru
          _
        // Predicated region
        $region29: #{tpu_custom_call.1} parent=11 // pred_check
          %p255 = pneg %p150
        $region30: #{tpu_custom_call.1} parent=11 // pred_check_branch
          %257 = sbr.rel (%p255) target = $region32
        $region31: #{tpu_custom_call.1} parent=11 // pred_region
          _
        $region32: #{tpu_custom_call.1} parent=11 // pred_fallthru
          _
        // Predicated region
        $region33: #{tpu_custom_call.1} parent=11 // pred_check
          %p258 = pneg %p171
        $region34: #{tpu_custom_call.1} parent=11 // pred_check_branch
          %260 = sbr.rel (%p258) target = $region36
        $region35: #{tpu_custom_call.1} parent=11 // pred_region
          _
        $region36: #{tpu_custom_call.1} parent=11 // pred_fallthru
          _
        // Predicated region
        $region37: #{tpu_custom_call.1} parent=11 // pred_check
          %p261 = pneg %p192
        $region38: #{tpu_custom_call.1} parent=11 // pred_check_branch
          %263 = sbr.rel (%p261) target = $region40
        $region39: #{tpu_custom_call.1} parent=11 // pred_region
          _
        $region40: #{tpu_custom_call.1} parent=11 // pred_fallthru
          _
      $region12: #{tpu_custom_call.1} parent=5 // pred_fallthru
        _
      %p264 = scmp.lt.s32.totalorder %s19, 2
      // Predicated region
      $region41: #{tpu_custom_call.1} parent=5 // pred_check
        %p265 = pneg %p264
      $region42: #{tpu_custom_call.1} parent=5 // pred_check_branch
        %267 = sbr.rel (%p265) target = $region44
      $region43: #{tpu_custom_call.1} parent=5 // pred_region
        // Predicated region
        $region45: #{tpu_custom_call.1} parent=43 // pred_check
          %p268 = pneg %p39
        $region46: #{tpu_custom_call.1} parent=43 // pred_check_branch
          %270 = sbr.rel (%p268) target = $region48
        $region47: #{tpu_custom_call.1} parent=43 // pred_region
          %p271 = scmp.lt.s32.totalorder %s19, 1
          %s272 = scalar_select %p271, %s19, 1
          %s273 = smul.addr %s272, 43
          %s274 = smul.addr %s273, 8
          %s275 = scalar_lea.vmem %s0, %s274
        $region48: #{tpu_custom_call.1} parent=43 // pred_fallthru
          _
      $region44: #{tpu_custom_call.1} parent=5 // pred_fallthru
        _
      %p276 = scmp.le.s32.totalorder 1, %s19
      %p277 = scmp.lt.s32.totalorder %s19, 3
      %p278 = pnand %p276, %p277
      %p279 = pneg %p278
      // Predicated region
      $region49: #{tpu_custom_call.1} parent=5 // pred_check
        _
      $region50: #{tpu_custom_call.1} parent=5 // pred_check_branch
        %281 = sbr.rel (%p278) target = $region52
      $region51: #{tpu_custom_call.1} parent=5 // pred_region
        %s282 = ssub.s32 %s19, 1
        // Predicated region
        $region53: #{tpu_custom_call.1} parent=51 // pred_check
          %p283 = pneg %p87
        $region54: #{tpu_custom_call.1} parent=51 // pred_check_branch
          %285 = sbr.rel (%p283) target = $region56
        $region55: #{tpu_custom_call.1} parent=51 // pred_region
          %286 = dma.done [#allocation5], 18432
        $region56: #{tpu_custom_call.1} parent=51 // pred_fallthru
          _
        %p287 = scmp.lt.s32.totalorder %s24, 1
        %s288 = scalar_select %p287, %s24, 1
        %s289 = smul.addr %s288, 43
        %s290 = smul.addr %s289, 8
        %s291 = scalar_lea.vmem %s0, %s290
        %p292 = pneg %p45
        %p293 = pneg %p42
        %p294 = pneg %p66
        %p295 = pneg %p63
        %p296 = pneg %p87
        %p297 = pneg %p84
        %p298 = pneg %p108
        %p299 = pneg %p105
        %p300 = pneg %p129
        %p301 = pneg %p126
        %p302 = pneg %p150
        %p303 = pneg %p147
        %p304 = pneg %p171
        %p305 = pneg %p168
        %p306 = pneg %p192
        %p307 = pneg %p189
        %p308 = pneg %p218
        %p309 = pneg %p215
        %s310 = sand.u32 %s205, 1
        %s311 = scalar_lea.sflag [#allocation6], %s310
        %s312 = sand.u32 %s205, 1
        %s313 = smul.addr %s312, 288
        %s314 = scalar_lea.vmem [#allocation7], %s313
        %p315 = scmp.lt.s32.totalorder %s24, 1
        %s316 = scalar_select %p315, %s24, 1
        %s317 = smul.addr %s316, 43
        %s318 = smul.addr %s317, 8
        %s319 = scalar_lea.vmem %s0, %s318
        %v320 = vld [vmem:[%s319] sm:$0xff]
        %v321 = vld [vmem:[%s319 + $0x8] sm:$0xff]
        %v322 = vld [vmem:[%s319 + $0x10] sm:$0xff]
        %v323 = vld [vmem:[%s319 + $0x18] sm:$0xff]
        %v324 = vld [vmem:[%s319 + $0x20] sm:$0xff]
        %v325 = vld [vmem:[%s319 + $0x28] sm:$0xff]
        %v326 = vld [vmem:[%s319 + $0x30] sm:$0xff]
        %v327 = vld [vmem:[%s319 + $0x38] sm:$0xff]
        %v328 = vld [vmem:[%s319 + $0x40] sm:$0xff]
        %v329 = vld [vmem:[%s319 + $0x48] sm:$0xff]
        %v330 = vld [vmem:[%s319 + $0x50] sm:$0xff]
        %v331 = vld [vmem:[%s319 + $0x58] sm:$0xff]
        %v332 = vld [vmem:[%s319 + $0x60] sm:$0xff]
        %v333 = vld [vmem:[%s319 + $0x68] sm:$0xff]
        %v334 = vld [vmem:[%s319 + $0x70] sm:$0xff]
        %v335 = vld [vmem:[%s319 + $0x78] sm:$0xff]
        %v336 = vld [vmem:[%s319 + $0x80] sm:$0xff]
        %v337 = vld [vmem:[%s319 + $0x88] sm:$0xff]
        %v338 = vld [vmem:[%s319 + $0x90] sm:$0xff]
        %v339 = vld [vmem:[%s319 + $0x98] sm:$0xff]
        %v340 = vld [vmem:[%s319 + $0xa0] sm:$0xff]
        %v341 = vld [vmem:[%s319 + $0xa8] sm:$0xff]
        %v342 = vld [vmem:[%s319 + $0xb0] sm:$0xff]
        %v343 = vld [vmem:[%s319 + $0xb8] sm:$0xff]
        %v344 = vld [vmem:[%s319 + $0xc0] sm:$0xff]
        %v345 = vld [vmem:[%s319 + $0xc8] sm:$0xff]
        %v346 = vld [vmem:[%s319 + $0xd0] sm:$0xff]
        %v347 = vld [vmem:[%s319 + $0xd8] sm:$0xff]
        %v348 = vld [vmem:[%s319 + $0xe0] sm:$0xff]
        %v349 = vld [vmem:[%s319 + $0xe8] sm:$0xff]
        %v350 = vld [vmem:[%s319 + $0xf0] sm:$0xff]
        %v351 = vld [vmem:[%s319 + $0xf8] sm:$0xff]
        %v352 = vld [vmem:[%s319 + $0x100] sm:$0xff]
        %v353 = vld [vmem:[%s319 + $0x108] sm:$0xff]
        %v354 = vld [vmem:[%s319 + $0x110] sm:$0xff]
        %v355 = vld [vmem:[%s319 + $0x118] sm:$0xff]
        %v356 = vld [vmem:[%s1] sm:$0xff]
        %v357 = vld [vmem:[%s1 + $0x8] sm:$0xff]
        %v358 = vld [vmem:[%s1 + $0x10] sm:$0xff]
        %v359 = vld [vmem:[%s1 + $0x18] sm:$0xff]
        %v360 = vld [vmem:[%s1 + $0x20] sm:$0xff]
        %v361 = vld [vmem:[%s1 + $0x28] sm:$0xff]
        %v362 = vld [vmem:[%s1 + $0x30] sm:$0xff]
        %v363 = vld [vmem:[%s1 + $0x38] sm:$0xff]
        %v364 = vld [vmem:[%s1 + $0x40] sm:$0xff]
        %v365 = vld [vmem:[%s1 + $0x48] sm:$0xff]
        %v366 = vld [vmem:[%s1 + $0x50] sm:$0xff]
        %v367 = vld [vmem:[%s1 + $0x58] sm:$0xff]
        %v368 = vld [vmem:[%s1 + $0x60] sm:$0xff]
        %v369 = vld [vmem:[%s1 + $0x68] sm:$0xff]
        %v370 = vld [vmem:[%s1 + $0x70] sm:$0xff]
        %v371 = vld [vmem:[%s1 + $0x78] sm:$0xff]
        %v372 = vld [vmem:[%s319 + $0x1] sm:$0xff]
        %v373 = vld [vmem:[%s319 + $0x9] sm:$0xff]
        %v374 = vld [vmem:[%s319 + $0x11] sm:$0xff]
        %v375 = vld [vmem:[%s319 + $0x19] sm:$0xff]
        %v376 = vld [vmem:[%s319 + $0x21] sm:$0xff]
        %v377 = vld [vmem:[%s319 + $0x29] sm:$0xff]
        %v378 = vld [vmem:[%s319 + $0x31] sm:$0xff]
        %v379 = vld [vmem:[%s319 + $0x39] sm:$0xff]
        %v380 = vld [vmem:[%s319 + $0x41] sm:$0xff]
        %v381 = vld [vmem:[%s319 + $0x49] sm:$0xff]
        %v382 = vld [vmem:[%s319 + $0x51] sm:$0xff]
        %v383 = vld [vmem:[%s319 + $0x59] sm:$0xff]
        %v384 = vld [vmem:[%s319 + $0x61] sm:$0xff]
        %v385 = vld [vmem:[%s319 + $0x69] sm:$0xff]
        %v386 = vld [vmem:[%s319 + $0x71] sm:$0xff]
        %v387 = vld [vmem:[%s319 + $0x79] sm:$0xff]
        %v388 = vld [vmem:[%s319 + $0x81] sm:$0xff]
        %v389 = vld [vmem:[%s319 + $0x89] sm:$0xff]
        %v390 = vld [vmem:[%s319 + $0x91] sm:$0xff]
        %v391 = vld [vmem:[%s319 + $0x99] sm:$0xff]
        %v392 = vld [vmem:[%s319 + $0xa1] sm:$0xff]
        %v393 = vld [vmem:[%s319 + $0xa9] sm:$0xff]
        %v394 = vld [vmem:[%s319 + $0xb1] sm:$0xff]
        %v395 = vld [vmem:[%s319 + $0xb9] sm:$0xff]
        %v396 = vld [vmem:[%s319 + $0xc1] sm:$0xff]
        %v397 = vld [vmem:[%s319 + $0xc9] sm:$0xff]
        %v398 = vld [vmem:[%s319 + $0xd1] sm:$0xff]
        %v399 = vld [vmem:[%s319 + $0xd9] sm:$0xff]
        %v400 = vld [vmem:[%s319 + $0xe1] sm:$0xff]
        %v401 = vld [vmem:[%s319 + $0xe9] sm:$0xff]
        %v402 = vld [vmem:[%s319 + $0xf1] sm:$0xff]
        %v403 = vld [vmem:[%s319 + $0xf9] sm:$0xff]
        %v404 = vld [vmem:[%s319 + $0x101] sm:$0xff]
        %v405 = vld [vmem:[%s319 + $0x109] sm:$0xff]
        %v406 = vld [vmem:[%s319 + $0x111] sm:$0xff]
        %v407 = vld [vmem:[%s319 + $0x119] sm:$0xff]
        %s408 = scalar_lea.vmem %s1, 128
        %v409 = vld [vmem:[%s408] sm:$0xff]
        %v410 = vld [vmem:[%s408 + $0x8] sm:$0xff]
        %v411 = vld [vmem:[%s408 + $0x10] sm:$0xff]
        %v412 = vld [vmem:[%s408 + $0x18] sm:$0xff]
        %v413 = vld [vmem:[%s408 + $0x20] sm:$0xff]
        %v414 = vld [vmem:[%s408 + $0x28] sm:$0xff]
        %v415 = vld [vmem:[%s408 + $0x30] sm:$0xff]
        %v416 = vld [vmem:[%s408 + $0x38] sm:$0xff]
        %v417 = vld [vmem:[%s408 + $0x40] sm:$0xff]
        %v418 = vld [vmem:[%s408 + $0x48] sm:$0xff]
        %v419 = vld [vmem:[%s408 + $0x50] sm:$0xff]
        %v420 = vld [vmem:[%s408 + $0x58] sm:$0xff]
        %v421 = vld [vmem:[%s408 + $0x60] sm:$0xff]
        %v422 = vld [vmem:[%s408 + $0x68] sm:$0xff]
        %v423 = vld [vmem:[%s408 + $0x70] sm:$0xff]
        %v424 = vld [vmem:[%s408 + $0x78] sm:$0xff]
        %425 = vmatprep.subr.mxu0 0.0
        %426 = vmatpush1.msra.mxu0 %v424
        %427 = vmatprep.subr.mxu0 0.0
        %428 = vmatpush1.msra.mxu0 %v423
        %429 = vmatprep.subr.mxu0 0.0
        %430 = vmatpush1.msra.mxu0 %v422
        %431 = vmatprep.subr.mxu0 0.0
        %432 = vmatpush1.msra.mxu0 %v421
        %433 = vmatprep.subr.mxu0 0.0
        %434 = vmatpush1.msra.mxu0 %v420
        %435 = vmatprep.subr.mxu0 0.0
        %436 = vmatpush1.msra.mxu0 %v419
        %437 = vmatprep.subr.mxu0 0.0
        %438 = vmatpush1.msra.mxu0 %v418
        %439 = vmatprep.subr.mxu0 0.0
        %440 = vmatpush1.msra.mxu0 %v417
        %441 = vmatprep.subr.mxu0 0.0
        %442 = vmatpush1.msra.mxu0 %v416
        %443 = vmatprep.subr.mxu0 0.0
        %444 = vmatpush1.msra.mxu0 %v415
        %445 = vmatprep.subr.mxu0 0.0
        %446 = vmatpush1.msra.mxu0 %v414
        %447 = vmatprep.subr.mxu0 0.0
        %448 = vmatpush1.msra.mxu0 %v413
        %449 = vmatprep.subr.mxu0 0.0
        %450 = vmatpush1.msra.mxu0 %v412
        %451 = vmatprep.subr.mxu0 0.0
        %452 = vmatpush1.msra.mxu0 %v411
        %453 = vmatprep.subr.mxu0 0.0
        %454 = vmatpush1.msra.mxu0 %v410
        %455 = vmatprep.subr.mxu0 0.0
        %456 = vmatpush1.msra.mxu0 %v409
        %457 = vmatprep.subr.mxu0 0.0
        %458 = vmatpush2.msra.mxu0 0.0
        %459 = vmatprep.subr.mxu0 0.0
        %460 = vmatpush2.msra.mxu0 0.0
        %461 = vmatprep.subr.mxu0 0.0
        %462 = vmatpush2.msra.mxu0 0.0
        %463 = vmatprep.subr.mxu0 0.0
        %464 = vmatpush2.msra.mxu0 0.0
        %465 = vmatprep.subr.mxu0 0.0
        %466 = vmatpush2.msra.mxu0 0.0
        %467 = vmatprep.subr.mxu0 0.0
        %468 = vmatpush2.msra.mxu0 0.0
        %469 = vmatprep.subr.mxu0 0.0
        %470 = vmatpush2.msra.mxu0 0.0
        %471 = vmatprep.subr.mxu0 0.0
        %472 = vmatpush2.msra.mxu0 0.0
        %473 = vmatprep.subr.mxu0 0.0
        %474 = vmatpush2.msra.mxu0 0.0
        %475 = vmatprep.subr.mxu0 0.0
        %476 = vmatpush2.msra.mxu0 0.0
        %477 = vmatprep.subr.mxu0 0.0
        %478 = vmatpush2.msra.mxu0 0.0
        %479 = vmatprep.subr.mxu0 0.0
        %480 = vmatpush2.msra.mxu0 0.0
        %481 = vmatprep.subr.mxu0 0.0
        %482 = vmatpush2.msra.mxu0 0.0
        %483 = vmatprep.subr.mxu0 0.0
        %484 = vmatpush2.msra.mxu0 0.0
        %485 = vmatprep.subr.mxu0 0.0
        %486 = vmatpush2.msra.mxu0 0.0
        %487 = vmatprep.subr.mxu0 0.0
        %488 = vmatpush2.msra.mxu0 0.0
        %489 = vmatprep.mubr.f32.mxu0 0.0
        %490 = vmatmul.mubr.f32.gmra.mxu0 %v372
        %v491 = vpop.f32.mrf.mxu0
        %v492 = vadd.f32 0.0, %v491
        %v493 = vpop.f32.mrf.mxu0
        %494 = vmatprep.mubr.f32.mxu0 0.0
        %495 = vmatmul.mubr.f32.gmra.mxu0 %v373
        %v496 = vpop.f32.mrf.mxu0
        %v497 = vadd.f32 0.0, %v496
        %v498 = vpop.f32.mrf.mxu0
        %499 = vmatprep.mubr.f32.mxu0 0.0
        %500 = vmatmul.mubr.f32.gmra.mxu0 %v374
        %v501 = vpop.f32.mrf.mxu0
        %v502 = vadd.f32 0.0, %v501
        %v503 = vpop.f32.mrf.mxu0
        %504 = vmatprep.mubr.f32.mxu0 0.0
        %505 = vmatmul.mubr.f32.gmra.mxu0 %v375
        %v506 = vpop.f32.mrf.mxu0
        %v507 = vadd.f32 0.0, %v506
        %v508 = vpop.f32.mrf.mxu0
        %509 = vmatprep.mubr.f32.mxu0 0.0
        %510 = vmatmul.mubr.f32.gmra.mxu0 %v376
        %v511 = vpop.f32.mrf.mxu0
        %v512 = vadd.f32 0.0, %v511
        %v513 = vpop.f32.mrf.mxu0
        %514 = vmatprep.mubr.f32.mxu0 0.0
        %515 = vmatmul.mubr.f32.gmra.mxu0 %v377
        %v516 = vpop.f32.mrf.mxu0
        %v517 = vadd.f32 0.0, %v516
        %v518 = vpop.f32.mrf.mxu0
        %519 = vmatprep.mubr.f32.mxu0 0.0
        %520 = vmatmul.mubr.f32.gmra.mxu0 %v378
        %v521 = vpop.f32.mrf.mxu0
        %v522 = vadd.f32 0.0, %v521
        %v523 = vpop.f32.mrf.mxu0
        %524 = vmatprep.mubr.f32.mxu0 0.0
        %525 = vmatmul.mubr.f32.gmra.mxu0 %v379
        %v526 = vpop.f32.mrf.mxu0
        %v527 = vadd.f32 0.0, %v526
        %v528 = vpop.f32.mrf.mxu0
        %529 = vmatprep.mubr.f32.mxu0 0.0
        %530 = vmatmul.mubr.f32.gmra.mxu0 %v380
        %v531 = vpop.f32.mrf.mxu0
        %v532 = vadd.f32 0.0, %v531
        %v533 = vpop.f32.mrf.mxu0
        %534 = vmatprep.mubr.f32.mxu0 0.0
        %535 = vmatmul.mubr.f32.gmra.mxu0 %v381
        %v536 = vpop.f32.mrf.mxu0
        %v537 = vadd.f32 0.0, %v536
        %v538 = vpop.f32.mrf.mxu0
        %539 = vmatprep.mubr.f32.mxu0 0.0
        %540 = vmatmul.mubr.f32.gmra.mxu0 %v382
        %v541 = vpop.f32.mrf.mxu0
        %v542 = vadd.f32 0.0, %v541
        %v543 = vpop.f32.mrf.mxu0
        %544 = vmatprep.mubr.f32.mxu0 0.0
        %545 = vmatmul.mubr.f32.gmra.mxu0 %v383
        %v546 = vpop.f32.mrf.mxu0
        %v547 = vadd.f32 0.0, %v546
        %v548 = vpop.f32.mrf.mxu0
        %549 = vmatprep.mubr.f32.mxu0 0.0
        %550 = vmatmul.mubr.f32.gmra.mxu0 %v384
        %v551 = vpop.f32.mrf.mxu0
        %v552 = vadd.f32 0.0, %v551
        %v553 = vpop.f32.mrf.mxu0
        %554 = vmatprep.mubr.f32.mxu0 0.0
        %555 = vmatmul.mubr.f32.gmra.mxu0 %v385
        %v556 = vpop.f32.mrf.mxu0
        %v557 = vadd.f32 0.0, %v556
        %v558 = vpop.f32.mrf.mxu0
        %559 = vmatprep.mubr.f32.mxu0 0.0
        %560 = vmatmul.mubr.f32.gmra.mxu0 %v386
        %v561 = vpop.f32.mrf.mxu0
        %v562 = vadd.f32 0.0, %v561
        %v563 = vpop.f32.mrf.mxu0
        %564 = vmatprep.mubr.f32.mxu0 0.0
        %565 = vmatmul.mubr.f32.gmra.mxu0 %v387
        %v566 = vpop.f32.mrf.mxu0
        %v567 = vadd.f32 0.0, %v566
        %v568 = vpop.f32.mrf.mxu0
        %569 = vmatprep.mubr.f32.mxu0 0.0
        %570 = vmatmul.mubr.f32.gmra.mxu0 %v388
        %v571 = vpop.f32.mrf.mxu0
        %v572 = vadd.f32 0.0, %v571
        %v573 = vpop.f32.mrf.mxu0
        %574 = vmatprep.mubr.f32.mxu0 0.0
        %575 = vmatmul.mubr.f32.gmra.mxu0 %v389
        %v576 = vpop.f32.mrf.mxu0
        %v577 = vadd.f32 0.0, %v576
        %v578 = vpop.f32.mrf.mxu0
        %579 = vmatprep.mubr.f32.mxu0 0.0
        %580 = vmatmul.mubr.f32.gmra.mxu0 %v390
        %v581 = vpop.f32.mrf.mxu0
        %v582 = vadd.f32 0.0, %v581
        %v583 = vpop.f32.mrf.mxu0
        %584 = vmatprep.mubr.f32.mxu0 0.0
        %585 = vmatmul.mubr.f32.gmra.mxu0 %v391
        %v586 = vpop.f32.mrf.mxu0
        %v587 = vadd.f32 0.0, %v586
        %v588 = vpop.f32.mrf.mxu0
        %589 = vmatprep.mubr.f32.mxu0 0.0
        %590 = vmatmul.mubr.f32.gmra.mxu0 %v392
        %v591 = vpop.f32.mrf.mxu0
        %v592 = vadd.f32 0.0, %v591
        %v593 = vpop.f32.mrf.mxu0
        %594 = vmatprep.mubr.f32.mxu0 0.0
        %595 = vmatmul.mubr.f32.gmra.mxu0 %v393
        %v596 = vpop.f32.mrf.mxu0
        %v597 = vadd.f32 0.0, %v596
        %v598 = vpop.f32.mrf.mxu0
        %599 = vmatprep.mubr.f32.mxu0 0.0
        %600 = vmatmul.mubr.f32.gmra.mxu0 %v394
        %v601 = vpop.f32.mrf.mxu0
        %v602 = vadd.f32 0.0, %v601
        %v603 = vpop.f32.mrf.mxu0
        %604 = vmatprep.mubr.f32.mxu0 0.0
        %605 = vmatmul.mubr.f32.gmra.mxu0 %v395
        %v606 = vpop.f32.mrf.mxu0
        %v607 = vadd.f32 0.0, %v606
        %v608 = vpop.f32.mrf.mxu0
        %609 = vmatprep.mubr.f32.mxu0 0.0
        %610 = vmatmul.mubr.f32.gmra.mxu0 %v396
        %v611 = vpop.f32.mrf.mxu0
        %v612 = vadd.f32 0.0, %v611
        %v613 = vpop.f32.mrf.mxu0
        %614 = vmatprep.mubr.f32.mxu0 0.0
        %615 = vmatmul.mubr.f32.gmra.mxu0 %v397
        %v616 = vpop.f32.mrf.mxu0
        %v617 = vadd.f32 0.0, %v616
        %v618 = vpop.f32.mrf.mxu0
        %619 = vmatprep.mubr.f32.mxu0 0.0
        %620 = vmatmul.mubr.f32.gmra.mxu0 %v398
        %v621 = vpop.f32.mrf.mxu0
        %v622 = vadd.f32 0.0, %v621
        %v623 = vpop.f32.mrf.mxu0
        %624 = vmatprep.mubr.f32.mxu0 0.0
        %625 = vmatmul.mubr.f32.gmra.mxu0 %v399
        %v626 = vpop.f32.mrf.mxu0
        %v627 = vadd.f32 0.0, %v626
        %v628 = vpop.f32.mrf.mxu0
        %629 = vmatprep.mubr.f32.mxu0 0.0
        %630 = vmatmul.mubr.f32.gmra.mxu0 %v400
        %v631 = vpop.f32.mrf.mxu0
        %v632 = vadd.f32 0.0, %v631
        %v633 = vpop.f32.mrf.mxu0
        %634 = vmatprep.mubr.f32.mxu0 0.0
        %635 = vmatmul.mubr.f32.gmra.mxu0 %v401
        %v636 = vpop.f32.mrf.mxu0
        %v637 = vadd.f32 0.0, %v636
        %v638 = vpop.f32.mrf.mxu0
        %639 = vmatprep.mubr.f32.mxu0 0.0
        %640 = vmatmul.mubr.f32.gmra.mxu0 %v402
        %v641 = vpop.f32.mrf.mxu0
        %v642 = vadd.f32 0.0, %v641
        %v643 = vpop.f32.mrf.mxu0
        %644 = vmatprep.mubr.f32.mxu0 0.0
        %645 = vmatmul.mubr.f32.gmra.mxu0 %v403
        %v646 = vpop.f32.mrf.mxu0
        %v647 = vadd.f32 0.0, %v646
        %v648 = vpop.f32.mrf.mxu0
        %649 = vmatprep.mubr.f32.mxu0 0.0
        %650 = vmatmul.mubr.f32.gmra.mxu0 %v404
        %v651 = vpop.f32.mrf.mxu0
        %v652 = vadd.f32 0.0, %v651
        %v653 = vpop.f32.mrf.mxu0
        %654 = vmatprep.mubr.f32.mxu0 0.0
        %655 = vmatmul.mubr.f32.gmra.mxu0 %v405
        %v656 = vpop.f32.mrf.mxu0
        %v657 = vadd.f32 0.0, %v656
        %v658 = vpop.f32.mrf.mxu0
        %659 = vmatprep.mubr.f32.mxu0 0.0
        %660 = vmatmul.mubr.f32.gmra.mxu0 %v406
        %v661 = vpop.f32.mrf.mxu0
        %v662 = vadd.f32 0.0, %v661
        %v663 = vpop.f32.mrf.mxu0
        %664 = vmatprep.mubr.f32.mxu0 0.0
        %665 = vmatmul.mubr.f32.gmra.mxu0 %v407
        %v666 = vpop.f32.mrf.mxu0
        %v667 = vadd.f32 0.0, %v666
        %v668 = vpop.f32.mrf.mxu0
        %669 = vdwg.mxu0
        %670 = vmatprep.subr.mxu0 0.0
        %671 = vmatpush1.msra.mxu0 %v371
        %672 = vmatprep.subr.mxu0 0.0
        %673 = vmatpush1.msra.mxu0 %v370
        %674 = vmatprep.subr.mxu0 0.0
        %675 = vmatpush1.msra.mxu0 %v369
        %676 = vmatprep.subr.mxu0 0.0
        %677 = vmatpush1.msra.mxu0 %v368
        %678 = vmatprep.subr.mxu0 0.0
        %679 = vmatpush1.msra.mxu0 %v367
        %680 = vmatprep.subr.mxu0 0.0
        %681 = vmatpush1.msra.mxu0 %v366
        %682 = vmatprep.subr.mxu0 0.0
        %683 = vmatpush1.msra.mxu0 %v365
        %684 = vmatprep.subr.mxu0 0.0
        %685 = vmatpush1.msra.mxu0 %v364
        %686 = vmatprep.subr.mxu0 0.0
        %687 = vmatpush1.msra.mxu0 %v363
        %688 = vmatprep.subr.mxu0 0.0
        %689 = vmatpush1.msra.mxu0 %v362
        %690 = vmatprep.subr.mxu0 0.0
        %691 = vmatpush1.msra.mxu0 %v361
        %692 = vmatprep.subr.mxu0 0.0
        %693 = vmatpush1.msra.mxu0 %v360
        %694 = vmatprep.subr.mxu0 0.0
        %695 = vmatpush1.msra.mxu0 %v359
        %696 = vmatprep.subr.mxu0 0.0
        %697 = vmatpush1.msra.mxu0 %v358
        %698 = vmatprep.subr.mxu0 0.0
        %699 = vmatpush1.msra.mxu0 %v357
        %700 = vmatprep.subr.mxu0 0.0
        %701 = vmatpush1.msra.mxu0 %v356
        %702 = vmatprep.subr.mxu0 0.0
        %703 = vmatpush2.msra.mxu0 0.0
        %704 = vmatprep.subr.mxu0 0.0
        %705 = vmatpush2.msra.mxu0 0.0
        %706 = vmatprep.subr.mxu0 0.0
        %707 = vmatpush2.msra.mxu0 0.0
        %708 = vmatprep.subr.mxu0 0.0
        %709 = vmatpush2.msra.mxu0 0.0
        %710 = vmatprep.subr.mxu0 0.0
        %711 = vmatpush2.msra.mxu0 0.0
        %712 = vmatprep.subr.mxu0 0.0
        %713 = vmatpush2.msra.mxu0 0.0
        %714 = vmatprep.subr.mxu0 0.0
        %715 = vmatpush2.msra.mxu0 0.0
        %716 = vmatprep.subr.mxu0 0.0
        %717 = vmatpush2.msra.mxu0 0.0
        %718 = vmatprep.subr.mxu0 0.0
        %719 = vmatpush2.msra.mxu0 0.0
        %720 = vmatprep.subr.mxu0 0.0
        %721 = vmatpush2.msra.mxu0 0.0
        %722 = vmatprep.subr.mxu0 0.0
        %723 = vmatpush2.msra.mxu0 0.0
        %724 = vmatprep.subr.mxu0 0.0
        %725 = vmatpush2.msra.mxu0 0.0
        %726 = vmatprep.subr.mxu0 0.0
        %727 = vmatpush2.msra.mxu0 0.0
        %728 = vmatprep.subr.mxu0 0.0
        %729 = vmatpush2.msra.mxu0 0.0
        %730 = vmatprep.subr.mxu0 0.0
        %731 = vmatpush2.msra.mxu0 0.0
        %732 = vmatprep.subr.mxu0 0.0
        %733 = vmatpush2.msra.mxu0 0.0
        %734 = vmatprep.mubr.f32.mxu0 0.0
        %735 = vmatmul.mubr.f32.gmra.mxu0 %v320
        %v736 = vpop.f32.mrf.mxu0
        %v737 = vadd.f32 %v492, %v736
        %v738 = vpop.f32.mrf.mxu0
        %739 = vmatprep.mubr.f32.mxu0 0.0
        %740 = vmatmul.mubr.f32.gmra.mxu0 %v321
        %v741 = vpop.f32.mrf.mxu0
        %v742 = vadd.f32 %v497, %v741
        %v743 = vpop.f32.mrf.mxu0
        %744 = vmatprep.mubr.f32.mxu0 0.0
        %745 = vmatmul.mubr.f32.gmra.mxu0 %v322
        %v746 = vpop.f32.mrf.mxu0
        %v747 = vadd.f32 %v502, %v746
        %v748 = vpop.f32.mrf.mxu0
        %749 = vmatprep.mubr.f32.mxu0 0.0
        %750 = vmatmul.mubr.f32.gmra.mxu0 %v323
        %v751 = vpop.f32.mrf.mxu0
        %v752 = vadd.f32 %v507, %v751
        %v753 = vpop.f32.mrf.mxu0
        %754 = vmatprep.mubr.f32.mxu0 0.0
        %755 = vmatmul.mubr.f32.gmra.mxu0 %v324
        %v756 = vpop.f32.mrf.mxu0
        %v757 = vadd.f32 %v512, %v756
        %v758 = vpop.f32.mrf.mxu0
        %759 = vmatprep.mubr.f32.mxu0 0.0
        %760 = vmatmul.mubr.f32.gmra.mxu0 %v325
        %v761 = vpop.f32.mrf.mxu0
        %v762 = vadd.f32 %v517, %v761
        %v763 = vpop.f32.mrf.mxu0
        %764 = vmatprep.mubr.f32.mxu0 0.0
        %765 = vmatmul.mubr.f32.gmra.mxu0 %v326
        %v766 = vpop.f32.mrf.mxu0
        %v767 = vadd.f32 %v522, %v766
        %v768 = vpop.f32.mrf.mxu0
        %769 = vmatprep.mubr.f32.mxu0 0.0
        %770 = vmatmul.mubr.f32.gmra.mxu0 %v327
        %v771 = vpop.f32.mrf.mxu0
        %v772 = vadd.f32 %v527, %v771
        %v773 = vpop.f32.mrf.mxu0
        %774 = vmatprep.mubr.f32.mxu0 0.0
        %775 = vmatmul.mubr.f32.gmra.mxu0 %v328
        %v776 = vpop.f32.mrf.mxu0
        %v777 = vadd.f32 %v532, %v776
        %v778 = vpop.f32.mrf.mxu0
        %779 = vmatprep.mubr.f32.mxu0 0.0
        %780 = vmatmul.mubr.f32.gmra.mxu0 %v329
        %v781 = vpop.f32.mrf.mxu0
        %v782 = vadd.f32 %v537, %v781
        %v783 = vpop.f32.mrf.mxu0
        %784 = vmatprep.mubr.f32.mxu0 0.0
        %785 = vmatmul.mubr.f32.gmra.mxu0 %v330
        %v786 = vpop.f32.mrf.mxu0
        %v787 = vadd.f32 %v542, %v786
        %v788 = vpop.f32.mrf.mxu0
        %789 = vmatprep.mubr.f32.mxu0 0.0
        %790 = vmatmul.mubr.f32.gmra.mxu0 %v331
        %v791 = vpop.f32.mrf.mxu0
        %v792 = vadd.f32 %v547, %v791
        %v793 = vpop.f32.mrf.mxu0
        %794 = vmatprep.mubr.f32.mxu0 0.0
        %795 = vmatmul.mubr.f32.gmra.mxu0 %v332
        %v796 = vpop.f32.mrf.mxu0
        %v797 = vadd.f32 %v552, %v796
        %v798 = vpop.f32.mrf.mxu0
        %799 = vmatprep.mubr.f32.mxu0 0.0
        %800 = vmatmul.mubr.f32.gmra.mxu0 %v333
        %v801 = vpop.f32.mrf.mxu0
        %v802 = vadd.f32 %v557, %v801
        %v803 = vpop.f32.mrf.mxu0
        %804 = vmatprep.mubr.f32.mxu0 0.0
        %805 = vmatmul.mubr.f32.gmra.mxu0 %v334
        %v806 = vpop.f32.mrf.mxu0
        %v807 = vadd.f32 %v562, %v806
        %v808 = vpop.f32.mrf.mxu0
        %809 = vmatprep.mubr.f32.mxu0 0.0
        %810 = vmatmul.mubr.f32.gmra.mxu0 %v335
        %v811 = vpop.f32.mrf.mxu0
        %v812 = vadd.f32 %v567, %v811
        %v813 = vpop.f32.mrf.mxu0
        %814 = vmatprep.mubr.f32.mxu0 0.0
        %815 = vmatmul.mubr.f32.gmra.mxu0 %v336
        %v816 = vpop.f32.mrf.mxu0
        %v817 = vadd.f32 %v572, %v816
        %v818 = vpop.f32.mrf.mxu0
        %819 = vmatprep.mubr.f32.mxu0 0.0
        %820 = vmatmul.mubr.f32.gmra.mxu0 %v337
        %v821 = vpop.f32.mrf.mxu0
        %v822 = vadd.f32 %v577, %v821
        %v823 = vpop.f32.mrf.mxu0
        %824 = vmatprep.mubr.f32.mxu0 0.0
        %825 = vmatmul.mubr.f32.gmra.mxu0 %v338
        %v826 = vpop.f32.mrf.mxu0
        %v827 = vadd.f32 %v582, %v826
        %v828 = vpop.f32.mrf.mxu0
        %829 = vmatprep.mubr.f32.mxu0 0.0
        %830 = vmatmul.mubr.f32.gmra.mxu0 %v339
        %v831 = vpop.f32.mrf.mxu0
        %v832 = vadd.f32 %v587, %v831
        %v833 = vpop.f32.mrf.mxu0
        %834 = vmatprep.mubr.f32.mxu0 0.0
        %835 = vmatmul.mubr.f32.gmra.mxu0 %v340
        %v836 = vpop.f32.mrf.mxu0
        %v837 = vadd.f32 %v592, %v836
        %v838 = vpop.f32.mrf.mxu0
        %839 = vmatprep.mubr.f32.mxu0 0.0
        %840 = vmatmul.mubr.f32.gmra.mxu0 %v341
        %v841 = vpop.f32.mrf.mxu0
        %v842 = vadd.f32 %v597, %v841
        %v843 = vpop.f32.mrf.mxu0
        %844 = vmatprep.mubr.f32.mxu0 0.0
        %845 = vmatmul.mubr.f32.gmra.mxu0 %v342
        %v846 = vpop.f32.mrf.mxu0
        %v847 = vadd.f32 %v602, %v846
        %v848 = vpop.f32.mrf.mxu0
        %849 = vmatprep.mubr.f32.mxu0 0.0
        %850 = vmatmul.mubr.f32.gmra.mxu0 %v343
        %v851 = vpop.f32.mrf.mxu0
        %v852 = vadd.f32 %v607, %v851
        %v853 = vpop.f32.mrf.mxu0
        %854 = vmatprep.mubr.f32.mxu0 0.0
        %855 = vmatmul.mubr.f32.gmra.mxu0 %v344
        %v856 = vpop.f32.mrf.mxu0
        %v857 = vadd.f32 %v612, %v856
        %v858 = vpop.f32.mrf.mxu0
        %859 = vmatprep.mubr.f32.mxu0 0.0
        %860 = vmatmul.mubr.f32.gmra.mxu0 %v345
        %v861 = vpop.f32.mrf.mxu0
        %v862 = vadd.f32 %v617, %v861
        %v863 = vpop.f32.mrf.mxu0
        %864 = vmatprep.mubr.f32.mxu0 0.0
        %865 = vmatmul.mubr.f32.gmra.mxu0 %v346
        %v866 = vpop.f32.mrf.mxu0
        %v867 = vadd.f32 %v622, %v866
        %v868 = vpop.f32.mrf.mxu0
        %869 = vmatprep.mubr.f32.mxu0 0.0
        %870 = vmatmul.mubr.f32.gmra.mxu0 %v347
        %v871 = vpop.f32.mrf.mxu0
        %v872 = vadd.f32 %v627, %v871
        %v873 = vpop.f32.mrf.mxu0
        %874 = vmatprep.mubr.f32.mxu0 0.0
        %875 = vmatmul.mubr.f32.gmra.mxu0 %v348
        %v876 = vpop.f32.mrf.mxu0
        %v877 = vadd.f32 %v632, %v876
        %v878 = vpop.f32.mrf.mxu0
        %879 = vmatprep.mubr.f32.mxu0 0.0
        %880 = vmatmul.mubr.f32.gmra.mxu0 %v349
        %v881 = vpop.f32.mrf.mxu0
        %v882 = vadd.f32 %v637, %v881
        %v883 = vpop.f32.mrf.mxu0
        %884 = vmatprep.mubr.f32.mxu0 0.0
        %885 = vmatmul.mubr.f32.gmra.mxu0 %v350
        %v886 = vpop.f32.mrf.mxu0
        %v887 = vadd.f32 %v642, %v886
        %v888 = vpop.f32.mrf.mxu0
        %889 = vmatprep.mubr.f32.mxu0 0.0
        %890 = vmatmul.mubr.f32.gmra.mxu0 %v351
        %v891 = vpop.f32.mrf.mxu0
        %v892 = vadd.f32 %v647, %v891
        %v893 = vpop.f32.mrf.mxu0
        %894 = vmatprep.mubr.f32.mxu0 0.0
        %895 = vmatmul.mubr.f32.gmra.mxu0 %v352
        %v896 = vpop.f32.mrf.mxu0
        %v897 = vadd.f32 %v652, %v896
        %v898 = vpop.f32.mrf.mxu0
        %899 = vmatprep.mubr.f32.mxu0 0.0
        %900 = vmatmul.mubr.f32.gmra.mxu0 %v353
        %v901 = vpop.f32.mrf.mxu0
        %v902 = vadd.f32 %v657, %v901
        %v903 = vpop.f32.mrf.mxu0
        %904 = vmatprep.mubr.f32.mxu0 0.0
        %905 = vmatmul.mubr.f32.gmra.mxu0 %v354
        %v906 = vpop.f32.mrf.mxu0
        %v907 = vadd.f32 %v662, %v906
        %v908 = vpop.f32.mrf.mxu0
        %909 = vmatprep.mubr.f32.mxu0 0.0
        %910 = vmatmul.mubr.f32.gmra.mxu0 %v355
        %v911 = vpop.f32.mrf.mxu0
        %v912 = vadd.f32 %v667, %v911
        %v913 = vpop.f32.mrf.mxu0
        %914 = vdwg.mxu0
        %v915 = vld [vmem:[%s319 + $0x2] sm:$0xff]
        %v916 = vld [vmem:[%s319 + $0xa] sm:$0xff]
        %v917 = vld [vmem:[%s319 + $0x12] sm:$0xff]
        %v918 = vld [vmem:[%s319 + $0x1a] sm:$0xff]
        %v919 = vld [vmem:[%s319 + $0x22] sm:$0xff]
        %v920 = vld [vmem:[%s319 + $0x2a] sm:$0xff]
        %v921 = vld [vmem:[%s319 + $0x32] sm:$0xff]
        %v922 = vld [vmem:[%s319 + $0x3a] sm:$0xff]
        %v923 = vld [vmem:[%s319 + $0x42] sm:$0xff]
        %v924 = vld [vmem:[%s319 + $0x4a] sm:$0xff]
        %v925 = vld [vmem:[%s319 + $0x52] sm:$0xff]
        %v926 = vld [vmem:[%s319 + $0x5a] sm:$0xff]
        %v927 = vld [vmem:[%s319 + $0x62] sm:$0xff]
        %v928 = vld [vmem:[%s319 + $0x6a] sm:$0xff]
        %v929 = vld [vmem:[%s319 + $0x72] sm:$0xff]
        %v930 = vld [vmem:[%s319 + $0x7a] sm:$0xff]
        %v931 = vld [vmem:[%s319 + $0x82] sm:$0xff]
        %v932 = vld [vmem:[%s319 + $0x8a] sm:$0xff]
        %v933 = vld [vmem:[%s319 + $0x92] sm:$0xff]
        %v934 = vld [vmem:[%s319 + $0x9a] sm:$0xff]
        %v935 = vld [vmem:[%s319 + $0xa2] sm:$0xff]
        %v936 = vld [vmem:[%s319 + $0xaa] sm:$0xff]
        %v937 = vld [vmem:[%s319 + $0xb2] sm:$0xff]
        %v938 = vld [vmem:[%s319 + $0xba] sm:$0xff]
        %v939 = vld [vmem:[%s319 + $0xc2] sm:$0xff]
        %v940 = vld [vmem:[%s319 + $0xca] sm:$0xff]
        %v941 = vld [vmem:[%s319 + $0xd2] sm:$0xff]
        %v942 = vld [vmem:[%s319 + $0xda] sm:$0xff]
        %v943 = vld [vmem:[%s319 + $0xe2] sm:$0xff]
        %v944 = vld [vmem:[%s319 + $0xea] sm:$0xff]
        %v945 = vld [vmem:[%s319 + $0xf2] sm:$0xff]
        %v946 = vld [vmem:[%s319 + $0xfa] sm:$0xff]
        %v947 = vld [vmem:[%s319 + $0x102] sm:$0xff]
        %v948 = vld [vmem:[%s319 + $0x10a] sm:$0xff]
        %v949 = vld [vmem:[%s319 + $0x112] sm:$0xff]
        %v950 = vld [vmem:[%s319 + $0x11a] sm:$0xff]
        %s951 = scalar_lea.vmem %s1, 256
        %v952 = vld [vmem:[%s951] sm:$0xff]
        %v953 = vld [vmem:[%s951 + $0x8] sm:$0xff]
        %v954 = vld [vmem:[%s951 + $0x10] sm:$0xff]
        %v955 = vld [vmem:[%s951 + $0x18] sm:$0xff]
        %v956 = vld [vmem:[%s951 + $0x20] sm:$0xff]
        %v957 = vld [vmem:[%s951 + $0x28] sm:$0xff]
        %v958 = vld [vmem:[%s951 + $0x30] sm:$0xff]
        %v959 = vld [vmem:[%s951 + $0x38] sm:$0xff]
        %v960 = vld [vmem:[%s951 + $0x40] sm:$0xff]
        %v961 = vld [vmem:[%s951 + $0x48] sm:$0xff]
        %v962 = vld [vmem:[%s951 + $0x50] sm:$0xff]
        %v963 = vld [vmem:[%s951 + $0x58] sm:$0xff]
        %v964 = vld [vmem:[%s951 + $0x60] sm:$0xff]
        %v965 = vld [vmem:[%s951 + $0x68] sm:$0xff]
        %v966 = vld [vmem:[%s951 + $0x70] sm:$0xff]
        %v967 = vld [vmem:[%s951 + $0x78] sm:$0xff]
        %968 = vmatprep.subr.mxu0 0.0
        %969 = vmatpush1.msra.mxu0 %v967
        %970 = vmatprep.subr.mxu0 0.0
        %971 = vmatpush1.msra.mxu0 %v966
        %972 = vmatprep.subr.mxu0 0.0
        %973 = vmatpush1.msra.mxu0 %v965
        %974 = vmatprep.subr.mxu0 0.0
        %975 = vmatpush1.msra.mxu0 %v964
        %976 = vmatprep.subr.mxu0 0.0
        %977 = vmatpush1.msra.mxu0 %v963
        %978 = vmatprep.subr.mxu0 0.0
        %979 = vmatpush1.msra.mxu0 %v962
        %980 = vmatprep.subr.mxu0 0.0
        %981 = vmatpush1.msra.mxu0 %v961
        %982 = vmatprep.subr.mxu0 0.0
        %983 = vmatpush1.msra.mxu0 %v960
        %984 = vmatprep.subr.mxu0 0.0
        %985 = vmatpush1.msra.mxu0 %v959
        %986 = vmatprep.subr.mxu0 0.0
        %987 = vmatpush1.msra.mxu0 %v958
        %988 = vmatprep.subr.mxu0 0.0
        %989 = vmatpush1.msra.mxu0 %v957
        %990 = vmatprep.subr.mxu0 0.0
        %991 = vmatpush1.msra.mxu0 %v956
        %992 = vmatprep.subr.mxu0 0.0
        %993 = vmatpush1.msra.mxu0 %v955
        %994 = vmatprep.subr.mxu0 0.0
        %995 = vmatpush1.msra.mxu0 %v954
        %996 = vmatprep.subr.mxu0 0.0
        %997 = vmatpush1.msra.mxu0 %v953
        %998 = vmatprep.subr.mxu0 0.0
        %999 = vmatpush1.msra.mxu0 %v952
        %1000 = vmatprep.subr.mxu0 0.0
        %1001 = vmatpush2.msra.mxu0 0.0
        %1002 = vmatprep.subr.mxu0 0.0
        %1003 = vmatpush2.msra.mxu0 0.0
        %1004 = vmatprep.subr.mxu0 0.0
        %1005 = vmatpush2.msra.mxu0 0.0
        %1006 = vmatprep.subr.mxu0 0.0
        %1007 = vmatpush2.msra.mxu0 0.0
        %1008 = vmatprep.subr.mxu0 0.0
        %1009 = vmatpush2.msra.mxu0 0.0
        %1010 = vmatprep.subr.mxu0 0.0
        %1011 = vmatpush2.msra.mxu0 0.0
        %1012 = vmatprep.subr.mxu0 0.0
        %1013 = vmatpush2.msra.mxu0 0.0
        %1014 = vmatprep.subr.mxu0 0.0
        %1015 = vmatpush2.msra.mxu0 0.0
        %1016 = vmatprep.subr.mxu0 0.0
        %1017 = vmatpush2.msra.mxu0 0.0
        %1018 = vmatprep.subr.mxu0 0.0
        %1019 = vmatpush2.msra.mxu0 0.0
        %1020 = vmatprep.subr.mxu0 0.0
        %1021 = vmatpush2.msra.mxu0 0.0
        %1022 = vmatprep.subr.mxu0 0.0
        %1023 = vmatpush2.msra.mxu0 0.0
        %1024 = vmatprep.subr.mxu0 0.0
        %1025 = vmatpush2.msra.mxu0 0.0
        %1026 = vmatprep.subr.mxu0 0.0
        %1027 = vmatpush2.msra.mxu0 0.0
        %1028 = vmatprep.subr.mxu0 0.0
        %1029 = vmatpush2.msra.mxu0 0.0
        %1030 = vmatprep.subr.mxu0 0.0
        %1031 = vmatpush2.msra.mxu0 0.0
        %1032 = vmatprep.mubr.f32.mxu0 0.0
        %1033 = vmatmul.mubr.f32.gmra.mxu0 %v915
        %v1034 = vpop.f32.mrf.mxu0
        %v1035 = vadd.f32 0.0, %v1034
        %v1036 = vpop.f32.mrf.mxu0
        %1037 = vmatprep.mubr.f32.mxu0 0.0
        %1038 = vmatmul.mubr.f32.gmra.mxu0 %v916
        %v1039 = vpop.f32.mrf.mxu0
        %v1040 = vadd.f32 0.0, %v1039
        %v1041 = vpop.f32.mrf.mxu0
        %1042 = vmatprep.mubr.f32.mxu0 0.0
        %1043 = vmatmul.mubr.f32.gmra.mxu0 %v917
        %v1044 = vpop.f32.mrf.mxu0
        %v1045 = vadd.f32 0.0, %v1044
        %v1046 = vpop.f32.mrf.mxu0
        %1047 = vmatprep.mubr.f32.mxu0 0.0
        %1048 = vmatmul.mubr.f32.gmra.mxu0 %v918
        %v1049 = vpop.f32.mrf.mxu0
        %v1050 = vadd.f32 0.0, %v1049
        %v1051 = vpop.f32.mrf.mxu0
        %1052 = vmatprep.mubr.f32.mxu0 0.0
        %1053 = vmatmul.mubr.f32.gmra.mxu0 %v919
        %v1054 = vpop.f32.mrf.mxu0
        %v1055 = vadd.f32 0.0, %v1054
        %v1056 = vpop.f32.mrf.mxu0
        %1057 = vmatprep.mubr.f32.mxu0 0.0
        %1058 = vmatmul.mubr.f32.gmra.mxu0 %v920
        %v1059 = vpop.f32.mrf.mxu0
        %v1060 = vadd.f32 0.0, %v1059
        %v1061 = vpop.f32.mrf.mxu0
        %1062 = vmatprep.mubr.f32.mxu0 0.0
        %1063 = vmatmul.mubr.f32.gmra.mxu0 %v921
        %v1064 = vpop.f32.mrf.mxu0
        %v1065 = vadd.f32 0.0, %v1064
        %v1066 = vpop.f32.mrf.mxu0
        %1067 = vmatprep.mubr.f32.mxu0 0.0
        %1068 = vmatmul.mubr.f32.gmra.mxu0 %v922
        %v1069 = vpop.f32.mrf.mxu0
        %v1070 = vadd.f32 0.0, %v1069
        %v1071 = vpop.f32.mrf.mxu0
        %1072 = vmatprep.mubr.f32.mxu0 0.0
        %1073 = vmatmul.mubr.f32.gmra.mxu0 %v923
        %v1074 = vpop.f32.mrf.mxu0
        %v1075 = vadd.f32 0.0, %v1074
        %v1076 = vpop.f32.mrf.mxu0
        %1077 = vmatprep.mubr.f32.mxu0 0.0
        %1078 = vmatmul.mubr.f32.gmra.mxu0 %v924
        %v1079 = vpop.f32.mrf.mxu0
        %v1080 = vadd.f32 0.0, %v1079
        %v1081 = vpop.f32.mrf.mxu0
        %1082 = vmatprep.mubr.f32.mxu0 0.0
        %1083 = vmatmul.mubr.f32.gmra.mxu0 %v925
        %v1084 = vpop.f32.mrf.mxu0
        %v1085 = vadd.f32 0.0, %v1084
        %v1086 = vpop.f32.mrf.mxu0
        %1087 = vmatprep.mubr.f32.mxu0 0.0
        %1088 = vmatmul.mubr.f32.gmra.mxu0 %v926
        %v1089 = vpop.f32.mrf.mxu0
        %v1090 = vadd.f32 0.0, %v1089
        %v1091 = vpop.f32.mrf.mxu0
        %1092 = vmatprep.mubr.f32.mxu0 0.0
        %1093 = vmatmul.mubr.f32.gmra.mxu0 %v927
        %v1094 = vpop.f32.mrf.mxu0
        %v1095 = vadd.f32 0.0, %v1094
        %v1096 = vpop.f32.mrf.mxu0
        %1097 = vmatprep.mubr.f32.mxu0 0.0
        %1098 = vmatmul.mubr.f32.gmra.mxu0 %v928
        %v1099 = vpop.f32.mrf.mxu0
        %v1100 = vadd.f32 0.0, %v1099
        %v1101 = vpop.f32.mrf.mxu0
        %1102 = vmatprep.mubr.f32.mxu0 0.0
        %1103 = vmatmul.mubr.f32.gmra.mxu0 %v929
        %v1104 = vpop.f32.mrf.mxu0
        %v1105 = vadd.f32 0.0, %v1104
        %v1106 = vpop.f32.mrf.mxu0
        %1107 = vmatprep.mubr.f32.mxu0 0.0
        %1108 = vmatmul.mubr.f32.gmra.mxu0 %v930
        %v1109 = vpop.f32.mrf.mxu0
        %v1110 = vadd.f32 0.0, %v1109
        %v1111 = vpop.f32.mrf.mxu0
        %1112 = vmatprep.mubr.f32.mxu0 0.0
        %1113 = vmatmul.mubr.f32.gmra.mxu0 %v931
        %v1114 = vpop.f32.mrf.mxu0
        %v1115 = vadd.f32 0.0, %v1114
        %v1116 = vpop.f32.mrf.mxu0
        %1117 = vmatprep.mubr.f32.mxu0 0.0
        %1118 = vmatmul.mubr.f32.gmra.mxu0 %v932
        %v1119 = vpop.f32.mrf.mxu0
        %v1120 = vadd.f32 0.0, %v1119
        %v1121 = vpop.f32.mrf.mxu0
        %1122 = vmatprep.mubr.f32.mxu0 0.0
        %1123 = vmatmul.mubr.f32.gmra.mxu0 %v933
        %v1124 = vpop.f32.mrf.mxu0
        %v1125 = vadd.f32 0.0, %v1124
        %v1126 = vpop.f32.mrf.mxu0
        %1127 = vmatprep.mubr.f32.mxu0 0.0
        %1128 = vmatmul.mubr.f32.gmra.mxu0 %v934
        %v1129 = vpop.f32.mrf.mxu0
        %v1130 = vadd.f32 0.0, %v1129
        %v1131 = vpop.f32.mrf.mxu0
        %1132 = vmatprep.mubr.f32.mxu0 0.0
        %1133 = vmatmul.mubr.f32.gmra.mxu0 %v935
        %v1134 = vpop.f32.mrf.mxu0
        %v1135 = vadd.f32 0.0, %v1134
        %v1136 = vpop.f32.mrf.mxu0
        %1137 = vmatprep.mubr.f32.mxu0 0.0
        %1138 = vmatmul.mubr.f32.gmra.mxu0 %v936
        %v1139 = vpop.f32.mrf.mxu0
        %v1140 = vadd.f32 0.0, %v1139
        %v1141 = vpop.f32.mrf.mxu0
        %1142 = vmatprep.mubr.f32.mxu0 0.0
        %1143 = vmatmul.mubr.f32.gmra.mxu0 %v937
        %v1144 = vpop.f32.mrf.mxu0
        %v1145 = vadd.f32 0.0, %v1144
        %v1146 = vpop.f32.mrf.mxu0
        %1147 = vmatprep.mubr.f32.mxu0 0.0
        %1148 = vmatmul.mubr.f32.gmra.mxu0 %v938
        %v1149 = vpop.f32.mrf.mxu0
        %v1150 = vadd.f32 0.0, %v1149
        %v1151 = vpop.f32.mrf.mxu0
        %1152 = vmatprep.mubr.f32.mxu0 0.0
        %1153 = vmatmul.mubr.f32.gmra.mxu0 %v939
        %v1154 = vpop.f32.mrf.mxu0
        %v1155 = vadd.f32 0.0, %v1154
        %v1156 = vpop.f32.mrf.mxu0
        %1157 = vmatprep.mubr.f32.mxu0 0.0
        %1158 = vmatmul.mubr.f32.gmra.mxu0 %v940
        %v1159 = vpop.f32.mrf.mxu0
        %v1160 = vadd.f32 0.0, %v1159
        %v1161 = vpop.f32.mrf.mxu0
        %1162 = vmatprep.mubr.f32.mxu0 0.0
        %1163 = vmatmul.mubr.f32.gmra.mxu0 %v941
        %v1164 = vpop.f32.mrf.mxu0
        %v1165 = vadd.f32 0.0, %v1164
        %v1166 = vpop.f32.mrf.mxu0
        %1167 = vmatprep.mubr.f32.mxu0 0.0
        %1168 = vmatmul.mubr.f32.gmra.mxu0 %v942
        %v1169 = vpop.f32.mrf.mxu0
        %v1170 = vadd.f32 0.0, %v1169
        %v1171 = vpop.f32.mrf.mxu0
        %1172 = vmatprep.mubr.f32.mxu0 0.0
        %1173 = vmatmul.mubr.f32.gmra.mxu0 %v943
        %v1174 = vpop.f32.mrf.mxu0
        %v1175 = vadd.f32 0.0, %v1174
        %v1176 = vpop.f32.mrf.mxu0
        %1177 = vmatprep.mubr.f32.mxu0 0.0
        %1178 = vmatmul.mubr.f32.gmra.mxu0 %v944
        %v1179 = vpop.f32.mrf.mxu0
        %v1180 = vadd.f32 0.0, %v1179
        %v1181 = vpop.f32.mrf.mxu0
        %1182 = vmatprep.mubr.f32.mxu0 0.0
        %1183 = vmatmul.mubr.f32.gmra.mxu0 %v945
        %v1184 = vpop.f32.mrf.mxu0
        %v1185 = vadd.f32 0.0, %v1184
        %v1186 = vpop.f32.mrf.mxu0
        %1187 = vmatprep.mubr.f32.mxu0 0.0
        %1188 = vmatmul.mubr.f32.gmra.mxu0 %v946
        %v1189 = vpop.f32.mrf.mxu0
        %v1190 = vadd.f32 0.0, %v1189
        %v1191 = vpop.f32.mrf.mxu0
        %1192 = vmatprep.mubr.f32.mxu0 0.0
        %1193 = vmatmul.mubr.f32.gmra.mxu0 %v947
        %v1194 = vpop.f32.mrf.mxu0
        %v1195 = vadd.f32 0.0, %v1194
        %v1196 = vpop.f32.mrf.mxu0
        %1197 = vmatprep.mubr.f32.mxu0 0.0
        %1198 = vmatmul.mubr.f32.gmra.mxu0 %v948
        %v1199 = vpop.f32.mrf.mxu0
        %v1200 = vadd.f32 0.0, %v1199
        %v1201 = vpop.f32.mrf.mxu0
        %1202 = vmatprep.mubr.f32.mxu0 0.0
        %1203 = vmatmul.mubr.f32.gmra.mxu0 %v949
        %v1204 = vpop.f32.mrf.mxu0
        %v1205 = vadd.f32 0.0, %v1204
        %v1206 = vpop.f32.mrf.mxu0
        %1207 = vmatprep.mubr.f32.mxu0 0.0
        %1208 = vmatmul.mubr.f32.gmra.mxu0 %v950
        %v1209 = vpop.f32.mrf.mxu0
        %v1210 = vadd.f32 0.0, %v1209
        %v1211 = vpop.f32.mrf.mxu0
        %1212 = vdwg.mxu0
        %v1213 = vadd.f32 %v737, %v1035
        %v1214 = vadd.f32 %v742, %v1040
        %v1215 = vadd.f32 %v747, %v1045
        %v1216 = vadd.f32 %v752, %v1050
        %v1217 = vadd.f32 %v757, %v1055
        %v1218 = vadd.f32 %v762, %v1060
        %v1219 = vadd.f32 %v767, %v1065
        %v1220 = vadd.f32 %v772, %v1070
        %v1221 = vadd.f32 %v777, %v1075
        %v1222 = vadd.f32 %v782, %v1080
        %v1223 = vadd.f32 %v787, %v1085
        %v1224 = vadd.f32 %v792, %v1090
        %v1225 = vadd.f32 %v797, %v1095
        %v1226 = vadd.f32 %v802, %v1100
        %v1227 = vadd.f32 %v807, %v1105
        %v1228 = vadd.f32 %v812, %v1110
        %v1229 = vadd.f32 %v817, %v1115
        %v1230 = vadd.f32 %v822, %v1120
        %v1231 = vadd.f32 %v827, %v1125
        %v1232 = vadd.f32 %v832, %v1130
        %v1233 = vadd.f32 %v837, %v1135
        %v1234 = vadd.f32 %v842, %v1140
        %v1235 = vadd.f32 %v847, %v1145
        %v1236 = vadd.f32 %v852, %v1150
        %v1237 = vadd.f32 %v857, %v1155
        %v1238 = vadd.f32 %v862, %v1160
        %v1239 = vadd.f32 %v867, %v1165
        %v1240 = vadd.f32 %v872, %v1170
        %v1241 = vadd.f32 %v877, %v1175
        %v1242 = vadd.f32 %v882, %v1180
        %v1243 = vadd.f32 %v887, %v1185
        %v1244 = vadd.f32 %v892, %v1190
        %v1245 = vadd.f32 %v897, %v1195
        %v1246 = vadd.f32 %v902, %v1200
        %v1247 = vadd.f32 %v907, %v1205
        %v1248 = vadd.f32 %v912, %v1210
        %v1249 = vld [vmem:[%s319 + $0x12] sm:$0xff]
        %v1250 = vld [vmem:[%s319 + $0x1a] sm:$0xff]
        %v1251 = vld [vmem:[%s319 + $0x22] sm:$0xff]
        %v1252 = vld [vmem:[%s319 + $0x2a] sm:$0xff]
        %v1253 = vld [vmem:[%s319 + $0x32] sm:$0xff]
        %v1254 = vld [vmem:[%s319 + $0x3a] sm:$0xff]
        %v1255 = vld [vmem:[%s319 + $0x42] sm:$0xff]
        %v1256 = vld [vmem:[%s319 + $0x4a] sm:$0xff]
        %v1257 = vld [vmem:[%s319 + $0x52] sm:$0xff]
        %v1258 = vld [vmem:[%s319 + $0x5a] sm:$0xff]
        %v1259 = vld [vmem:[%s319 + $0x62] sm:$0xff]
        %v1260 = vld [vmem:[%s319 + $0x6a] sm:$0xff]
        %v1261 = vld [vmem:[%s319 + $0x72] sm:$0xff]
        %v1262 = vld [vmem:[%s319 + $0x7a] sm:$0xff]
        %v1263 = vld [vmem:[%s319 + $0x82] sm:$0xff]
        %v1264 = vld [vmem:[%s319 + $0x8a] sm:$0xff]
        %v1265 = vld [vmem:[%s319 + $0x92] sm:$0xff]
        %v1266 = vld [vmem:[%s319 + $0x9a] sm:$0xff]
        %v1267 = vld [vmem:[%s319 + $0xa2] sm:$0xff]
        %v1268 = vld [vmem:[%s319 + $0xaa] sm:$0xff]
        %v1269 = vld [vmem:[%s319 + $0xb2] sm:$0xff]
        %v1270 = vld [vmem:[%s319 + $0xba] sm:$0xff]
        %v1271 = vld [vmem:[%s319 + $0xc2] sm:$0xff]
        %v1272 = vld [vmem:[%s319 + $0xca] sm:$0xff]
        %v1273 = vld [vmem:[%s319 + $0xd2] sm:$0xff]
        %v1274 = vld [vmem:[%s319 + $0xda] sm:$0xff]
        %v1275 = vld [vmem:[%s319 + $0xe2] sm:$0xff]
        %v1276 = vld [vmem:[%s319 + $0xea] sm:$0xff]
        %v1277 = vld [vmem:[%s319 + $0xf2] sm:$0xff]
        %v1278 = vld [vmem:[%s319 + $0xfa] sm:$0xff]
        %v1279 = vld [vmem:[%s319 + $0x102] sm:$0xff]
        %v1280 = vld [vmem:[%s319 + $0x10a] sm:$0xff]
        %v1281 = vld [vmem:[%s319 + $0x112] sm:$0xff]
        %v1282 = vld [vmem:[%s319 + $0x11a] sm:$0xff]
        %v1283 = vld [vmem:[%s319 + $0x122] sm:$0xff]
        %v1284 = vld [vmem:[%s319 + $0x12a] sm:$0xff]
        %s1285 = scalar_lea.vmem %s1, 384
        %v1286 = vld [vmem:[%s1285] sm:$0xff]
        %v1287 = vld [vmem:[%s1285 + $0x8] sm:$0xff]
        %v1288 = vld [vmem:[%s1285 + $0x10] sm:$0xff]
        %v1289 = vld [vmem:[%s1285 + $0x18] sm:$0xff]
        %v1290 = vld [vmem:[%s1285 + $0x20] sm:$0xff]
        %v1291 = vld [vmem:[%s1285 + $0x28] sm:$0xff]
        %v1292 = vld [vmem:[%s1285 + $0x30] sm:$0xff]
        %v1293 = vld [vmem:[%s1285 + $0x38] sm:$0xff]
        %v1294 = vld [vmem:[%s1285 + $0x40] sm:$0xff]
        %v1295 = vld [vmem:[%s1285 + $0x48] sm:$0xff]
        %v1296 = vld [vmem:[%s1285 + $0x50] sm:$0xff]
        %v1297 = vld [vmem:[%s1285 + $0x58] sm:$0xff]
        %v1298 = vld [vmem:[%s1285 + $0x60] sm:$0xff]
        %v1299 = vld [vmem:[%s1285 + $0x68] sm:$0xff]
        %v1300 = vld [vmem:[%s1285 + $0x70] sm:$0xff]
        %v1301 = vld [vmem:[%s1285 + $0x78] sm:$0xff]
        %1302 = vmatprep.subr.mxu0 0.0
        %1303 = vmatpush1.msra.mxu0 %v1301
        %1304 = vmatprep.subr.mxu0 0.0
        %1305 = vmatpush1.msra.mxu0 %v1300
        %1306 = vmatprep.subr.mxu0 0.0
        %1307 = vmatpush1.msra.mxu0 %v1299
        %1308 = vmatprep.subr.mxu0 0.0
        %1309 = vmatpush1.msra.mxu0 %v1298
        %1310 = vmatprep.subr.mxu0 0.0
        %1311 = vmatpush1.msra.mxu0 %v1297
        %1312 = vmatprep.subr.mxu0 0.0
        %1313 = vmatpush1.msra.mxu0 %v1296
        %1314 = vmatprep.subr.mxu0 0.0
        %1315 = vmatpush1.msra.mxu0 %v1295
        %1316 = vmatprep.subr.mxu0 0.0
        %1317 = vmatpush1.msra.mxu0 %v1294
        %1318 = vmatprep.subr.mxu0 0.0
        %1319 = vmatpush1.msra.mxu0 %v1293
        %1320 = vmatprep.subr.mxu0 0.0
        %1321 = vmatpush1.msra.mxu0 %v1292
        %1322 = vmatprep.subr.mxu0 0.0
        %1323 = vmatpush1.msra.mxu0 %v1291
        %1324 = vmatprep.subr.mxu0 0.0
        %1325 = vmatpush1.msra.mxu0 %v1290
        %1326 = vmatprep.subr.mxu0 0.0
        %1327 = vmatpush1.msra.mxu0 %v1289
        %1328 = vmatprep.subr.mxu0 0.0
        %1329 = vmatpush1.msra.mxu0 %v1288
        %1330 = vmatprep.subr.mxu0 0.0
        %1331 = vmatpush1.msra.mxu0 %v1287
        %1332 = vmatprep.subr.mxu0 0.0
        %1333 = vmatpush1.msra.mxu0 %v1286
        %1334 = vmatprep.subr.mxu0 0.0
        %1335 = vmatpush2.msra.mxu0 0.0
        %1336 = vmatprep.subr.mxu0 0.0
        %1337 = vmatpush2.msra.mxu0 0.0
        %1338 = vmatprep.subr.mxu0 0.0
        %1339 = vmatpush2.msra.mxu0 0.0
        %1340 = vmatprep.subr.mxu0 0.0
        %1341 = vmatpush2.msra.mxu0 0.0
        %1342 = vmatprep.subr.mxu0 0.0
        %1343 = vmatpush2.msra.mxu0 0.0
        %1344 = vmatprep.subr.mxu0 0.0
        %1345 = vmatpush2.msra.mxu0 0.0
        %1346 = vmatprep.subr.mxu0 0.0
        %1347 = vmatpush2.msra.mxu0 0.0
        %1348 = vmatprep.subr.mxu0 0.0
        %1349 = vmatpush2.msra.mxu0 0.0
        %1350 = vmatprep.subr.mxu0 0.0
        %1351 = vmatpush2.msra.mxu0 0.0
        %1352 = vmatprep.subr.mxu0 0.0
        %1353 = vmatpush2.msra.mxu0 0.0
        %1354 = vmatprep.subr.mxu0 0.0
        %1355 = vmatpush2.msra.mxu0 0.0
        %1356 = vmatprep.subr.mxu0 0.0
        %1357 = vmatpush2.msra.mxu0 0.0
        %1358 = vmatprep.subr.mxu0 0.0
        %1359 = vmatpush2.msra.mxu0 0.0
        %1360 = vmatprep.subr.mxu0 0.0
        %1361 = vmatpush2.msra.mxu0 0.0
        %1362 = vmatprep.subr.mxu0 0.0
        %1363 = vmatpush2.msra.mxu0 0.0
        %1364 = vmatprep.subr.mxu0 0.0
        %1365 = vmatpush2.msra.mxu0 0.0
        %1366 = vmatprep.mubr.f32.mxu0 0.0
        %1367 = vmatmul.mubr.f32.gmra.mxu0 %v1249
        %v1368 = vpop.f32.mrf.mxu0
        %v1369 = vadd.f32 0.0, %v1368
        %v1370 = vpop.f32.mrf.mxu0
        %1371 = vmatprep.mubr.f32.mxu0 0.0
        %1372 = vmatmul.mubr.f32.gmra.mxu0 %v1250
        %v1373 = vpop.f32.mrf.mxu0
        %v1374 = vadd.f32 0.0, %v1373
        %v1375 = vpop.f32.mrf.mxu0
        %1376 = vmatprep.mubr.f32.mxu0 0.0
        %1377 = vmatmul.mubr.f32.gmra.mxu0 %v1251
        %v1378 = vpop.f32.mrf.mxu0
        %v1379 = vadd.f32 0.0, %v1378
        %v1380 = vpop.f32.mrf.mxu0
        %1381 = vmatprep.mubr.f32.mxu0 0.0
        %1382 = vmatmul.mubr.f32.gmra.mxu0 %v1252
        %v1383 = vpop.f32.mrf.mxu0
        %v1384 = vadd.f32 0.0, %v1383
        %v1385 = vpop.f32.mrf.mxu0
        %1386 = vmatprep.mubr.f32.mxu0 0.0
        %1387 = vmatmul.mubr.f32.gmra.mxu0 %v1253
        %v1388 = vpop.f32.mrf.mxu0
        %v1389 = vadd.f32 0.0, %v1388
        %v1390 = vpop.f32.mrf.mxu0
        %1391 = vmatprep.mubr.f32.mxu0 0.0
        %1392 = vmatmul.mubr.f32.gmra.mxu0 %v1254
        %v1393 = vpop.f32.mrf.mxu0
        %v1394 = vadd.f32 0.0, %v1393
        %v1395 = vpop.f32.mrf.mxu0
        %1396 = vmatprep.mubr.f32.mxu0 0.0
        %1397 = vmatmul.mubr.f32.gmra.mxu0 %v1255
        %v1398 = vpop.f32.mrf.mxu0
        %v1399 = vadd.f32 0.0, %v1398
        %v1400 = vpop.f32.mrf.mxu0
        %1401 = vmatprep.mubr.f32.mxu0 0.0
        %1402 = vmatmul.mubr.f32.gmra.mxu0 %v1256
        %v1403 = vpop.f32.mrf.mxu0
        %v1404 = vadd.f32 0.0, %v1403
        %v1405 = vpop.f32.mrf.mxu0
        %1406 = vmatprep.mubr.f32.mxu0 0.0
        %1407 = vmatmul.mubr.f32.gmra.mxu0 %v1257
        %v1408 = vpop.f32.mrf.mxu0
        %v1409 = vadd.f32 0.0, %v1408
        %v1410 = vpop.f32.mrf.mxu0
        %1411 = vmatprep.mubr.f32.mxu0 0.0
        %1412 = vmatmul.mubr.f32.gmra.mxu0 %v1258
        %v1413 = vpop.f32.mrf.mxu0
        %v1414 = vadd.f32 0.0, %v1413
        %v1415 = vpop.f32.mrf.mxu0
        %1416 = vmatprep.mubr.f32.mxu0 0.0
        %1417 = vmatmul.mubr.f32.gmra.mxu0 %v1259
        %v1418 = vpop.f32.mrf.mxu0
        %v1419 = vadd.f32 0.0, %v1418
        %v1420 = vpop.f32.mrf.mxu0
        %1421 = vmatprep.mubr.f32.mxu0 0.0
        %1422 = vmatmul.mubr.f32.gmra.mxu0 %v1260
        %v1423 = vpop.f32.mrf.mxu0
        %v1424 = vadd.f32 0.0, %v1423
        %v1425 = vpop.f32.mrf.mxu0
        %1426 = vmatprep.mubr.f32.mxu0 0.0
        %1427 = vmatmul.mubr.f32.gmra.mxu0 %v1261
        %v1428 = vpop.f32.mrf.mxu0
        %v1429 = vadd.f32 0.0, %v1428
        %v1430 = vpop.f32.mrf.mxu0
        %1431 = vmatprep.mubr.f32.mxu0 0.0
        %1432 = vmatmul.mubr.f32.gmra.mxu0 %v1262
        %v1433 = vpop.f32.mrf.mxu0
        %v1434 = vadd.f32 0.0, %v1433
        %v1435 = vpop.f32.mrf.mxu0
        %1436 = vmatprep.mubr.f32.mxu0 0.0
        %1437 = vmatmul.mubr.f32.gmra.mxu0 %v1263
        %v1438 = vpop.f32.mrf.mxu0
        %v1439 = vadd.f32 0.0, %v1438
        %v1440 = vpop.f32.mrf.mxu0
        %1441 = vmatprep.mubr.f32.mxu0 0.0
        %1442 = vmatmul.mubr.f32.gmra.mxu0 %v1264
        %v1443 = vpop.f32.mrf.mxu0
        %v1444 = vadd.f32 0.0, %v1443
        %v1445 = vpop.f32.mrf.mxu0
        %1446 = vmatprep.mubr.f32.mxu0 0.0
        %1447 = vmatmul.mubr.f32.gmra.mxu0 %v1265
        %v1448 = vpop.f32.mrf.mxu0
        %v1449 = vadd.f32 0.0, %v1448
        %v1450 = vpop.f32.mrf.mxu0
        %1451 = vmatprep.mubr.f32.mxu0 0.0
        %1452 = vmatmul.mubr.f32.gmra.mxu0 %v1266
        %v1453 = vpop.f32.mrf.mxu0
        %v1454 = vadd.f32 0.0, %v1453
        %v1455 = vpop.f32.mrf.mxu0
        %1456 = vmatprep.mubr.f32.mxu0 0.0
        %1457 = vmatmul.mubr.f32.gmra.mxu0 %v1267
        %v1458 = vpop.f32.mrf.mxu0
        %v1459 = vadd.f32 0.0, %v1458
        %v1460 = vpop.f32.mrf.mxu0
        %1461 = vmatprep.mubr.f32.mxu0 0.0
        %1462 = vmatmul.mubr.f32.gmra.mxu0 %v1268
        %v1463 = vpop.f32.mrf.mxu0
        %v1464 = vadd.f32 0.0, %v1463
        %v1465 = vpop.f32.mrf.mxu0
        %1466 = vmatprep.mubr.f32.mxu0 0.0
        %1467 = vmatmul.mubr.f32.gmra.mxu0 %v1269
        %v1468 = vpop.f32.mrf.mxu0
        %v1469 = vadd.f32 0.0, %v1468
        %v1470 = vpop.f32.mrf.mxu0
        %1471 = vmatprep.mubr.f32.mxu0 0.0
        %1472 = vmatmul.mubr.f32.gmra.mxu0 %v1270
        %v1473 = vpop.f32.mrf.mxu0
        %v1474 = vadd.f32 0.0, %v1473
        %v1475 = vpop.f32.mrf.mxu0
        %1476 = vmatprep.mubr.f32.mxu0 0.0
        %1477 = vmatmul.mubr.f32.gmra.mxu0 %v1271
        %v1478 = vpop.f32.mrf.mxu0
        %v1479 = vadd.f32 0.0, %v1478
        %v1480 = vpop.f32.mrf.mxu0
        %1481 = vmatprep.mubr.f32.mxu0 0.0
        %1482 = vmatmul.mubr.f32.gmra.mxu0 %v1272
        %v1483 = vpop.f32.mrf.mxu0
        %v1484 = vadd.f32 0.0, %v1483
        %v1485 = vpop.f32.mrf.mxu0
        %1486 = vmatprep.mubr.f32.mxu0 0.0
        %1487 = vmatmul.mubr.f32.gmra.mxu0 %v1273
        %v1488 = vpop.f32.mrf.mxu0
        %v1489 = vadd.f32 0.0, %v1488
        %v1490 = vpop.f32.mrf.mxu0
        %1491 = vmatprep.mubr.f32.mxu0 0.0
        %1492 = vmatmul.mubr.f32.gmra.mxu0 %v1274
        %v1493 = vpop.f32.mrf.mxu0
        %v1494 = vadd.f32 0.0, %v1493
        %v1495 = vpop.f32.mrf.mxu0
        %1496 = vmatprep.mubr.f32.mxu0 0.0
        %1497 = vmatmul.mubr.f32.gmra.mxu0 %v1275
        %v1498 = vpop.f32.mrf.mxu0
        %v1499 = vadd.f32 0.0, %v1498
        %v1500 = vpop.f32.mrf.mxu0
        %1501 = vmatprep.mubr.f32.mxu0 0.0
        %1502 = vmatmul.mubr.f32.gmra.mxu0 %v1276
        %v1503 = vpop.f32.mrf.mxu0
        %v1504 = vadd.f32 0.0, %v1503
        %v1505 = vpop.f32.mrf.mxu0
        %1506 = vmatprep.mubr.f32.mxu0 0.0
        %1507 = vmatmul.mubr.f32.gmra.mxu0 %v1277
        %v1508 = vpop.f32.mrf.mxu0
        %v1509 = vadd.f32 0.0, %v1508
        %v1510 = vpop.f32.mrf.mxu0
        %1511 = vmatprep.mubr.f32.mxu0 0.0
        %1512 = vmatmul.mubr.f32.gmra.mxu0 %v1278
        %v1513 = vpop.f32.mrf.mxu0
        %v1514 = vadd.f32 0.0, %v1513
        %v1515 = vpop.f32.mrf.mxu0
        %1516 = vmatprep.mubr.f32.mxu0 0.0
        %1517 = vmatmul.mubr.f32.gmra.mxu0 %v1279
        %v1518 = vpop.f32.mrf.mxu0
        %v1519 = vadd.f32 0.0, %v1518
        %v1520 = vpop.f32.mrf.mxu0
        %1521 = vmatprep.mubr.f32.mxu0 0.0
        %1522 = vmatmul.mubr.f32.gmra.mxu0 %v1280
        %v1523 = vpop.f32.mrf.mxu0
        %v1524 = vadd.f32 0.0, %v1523
        %v1525 = vpop.f32.mrf.mxu0
        %1526 = vmatprep.mubr.f32.mxu0 0.0
        %1527 = vmatmul.mubr.f32.gmra.mxu0 %v1281
        %v1528 = vpop.f32.mrf.mxu0
        %v1529 = vadd.f32 0.0, %v1528
        %v1530 = vpop.f32.mrf.mxu0
        %1531 = vmatprep.mubr.f32.mxu0 0.0
        %1532 = vmatmul.mubr.f32.gmra.mxu0 %v1282
        %v1533 = vpop.f32.mrf.mxu0
        %v1534 = vadd.f32 0.0, %v1533
        %v1535 = vpop.f32.mrf.mxu0
        %1536 = vmatprep.mubr.f32.mxu0 0.0
        %1537 = vmatmul.mubr.f32.gmra.mxu0 %v1283
        %v1538 = vpop.f32.mrf.mxu0
        %v1539 = vadd.f32 0.0, %v1538
        %v1540 = vpop.f32.mrf.mxu0
        %1541 = vmatprep.mubr.f32.mxu0 0.0
        %1542 = vmatmul.mubr.f32.gmra.mxu0 %v1284
        %v1543 = vpop.f32.mrf.mxu0
        %v1544 = vadd.f32 0.0, %v1543
        %v1545 = vpop.f32.mrf.mxu0
        %1546 = vdwg.mxu0
        %v1547 = vadd.f32 %v1213, %v1369
        %v1548 = vadd.f32 %v1214, %v1374
        %v1549 = vadd.f32 %v1215, %v1379
        %v1550 = vadd.f32 %v1216, %v1384
        %v1551 = vadd.f32 %v1217, %v1389
        %v1552 = vadd.f32 %v1218, %v1394
        %v1553 = vadd.f32 %v1219, %v1399
        %v1554 = vadd.f32 %v1220, %v1404
        %v1555 = vadd.f32 %v1221, %v1409
        %v1556 = vadd.f32 %v1222, %v1414
        %v1557 = vadd.f32 %v1223, %v1419
        %v1558 = vadd.f32 %v1224, %v1424
        %v1559 = vadd.f32 %v1225, %v1429
        %v1560 = vadd.f32 %v1226, %v1434
        %v1561 = vadd.f32 %v1227, %v1439
        %v1562 = vadd.f32 %v1228, %v1444
        %v1563 = vadd.f32 %v1229, %v1449
        %v1564 = vadd.f32 %v1230, %v1454
        %v1565 = vadd.f32 %v1231, %v1459
        %v1566 = vadd.f32 %v1232, %v1464
        %v1567 = vadd.f32 %v1233, %v1469
        %v1568 = vadd.f32 %v1234, %v1474
        %v1569 = vadd.f32 %v1235, %v1479
        %v1570 = vadd.f32 %v1236, %v1484
        %v1571 = vadd.f32 %v1237, %v1489
        %v1572 = vadd.f32 %v1238, %v1494
        %v1573 = vadd.f32 %v1239, %v1499
        %v1574 = vadd.f32 %v1240, %v1504
        %v1575 = vadd.f32 %v1241, %v1509
        %v1576 = vadd.f32 %v1242, %v1514
        %v1577 = vadd.f32 %v1243, %v1519
        %v1578 = vadd.f32 %v1244, %v1524
        %v1579 = vadd.f32 %v1245, %v1529
        %v1580 = vadd.f32 %v1246, %v1534
        %v1581 = vadd.f32 %v1247, %v1539
        %v1582 = vadd.f32 %v1248, %v1544
        %v1583 = vld [vmem:[%s319 + $0x13] sm:$0xff]
        %v1584 = vld [vmem:[%s319 + $0x1b] sm:$0xff]
        %v1585 = vld [vmem:[%s319 + $0x23] sm:$0xff]
        %v1586 = vld [vmem:[%s319 + $0x2b] sm:$0xff]
        %v1587 = vld [vmem:[%s319 + $0x33] sm:$0xff]
        %v1588 = vld [vmem:[%s319 + $0x3b] sm:$0xff]
        %v1589 = vld [vmem:[%s319 + $0x43] sm:$0xff]
        %v1590 = vld [vmem:[%s319 + $0x4b] sm:$0xff]
        %v1591 = vld [vmem:[%s319 + $0x53] sm:$0xff]
        %v1592 = vld [vmem:[%s319 + $0x5b] sm:$0xff]
        %v1593 = vld [vmem:[%s319 + $0x63] sm:$0xff]
        %v1594 = vld [vmem:[%s319 + $0x6b] sm:$0xff]
        %v1595 = vld [vmem:[%s319 + $0x73] sm:$0xff]
        %v1596 = vld [vmem:[%s319 + $0x7b] sm:$0xff]
        %v1597 = vld [vmem:[%s319 + $0x83] sm:$0xff]
        %v1598 = vld [vmem:[%s319 + $0x8b] sm:$0xff]
        %v1599 = vld [vmem:[%s319 + $0x93] sm:$0xff]
        %v1600 = vld [vmem:[%s319 + $0x9b] sm:$0xff]
        %v1601 = vld [vmem:[%s319 + $0xa3] sm:$0xff]
        %v1602 = vld [vmem:[%s319 + $0xab] sm:$0xff]
        %v1603 = vld [vmem:[%s319 + $0xb3] sm:$0xff]
        %v1604 = vld [vmem:[%s319 + $0xbb] sm:$0xff]
        %v1605 = vld [vmem:[%s319 + $0xc3] sm:$0xff]
        %v1606 = vld [vmem:[%s319 + $0xcb] sm:$0xff]
        %v1607 = vld [vmem:[%s319 + $0xd3] sm:$0xff]
        %v1608 = vld [vmem:[%s319 + $0xdb] sm:$0xff]
        %v1609 = vld [vmem:[%s319 + $0xe3] sm:$0xff]
        %v1610 = vld [vmem:[%s319 + $0xeb] sm:$0xff]
        %v1611 = vld [vmem:[%s319 + $0xf3] sm:$0xff]
        %v1612 = vld [vmem:[%s319 + $0xfb] sm:$0xff]
        %v1613 = vld [vmem:[%s319 + $0x103] sm:$0xff]
        %v1614 = vld [vmem:[%s319 + $0x10b] sm:$0xff]
        %v1615 = vld [vmem:[%s319 + $0x113] sm:$0xff]
        %v1616 = vld [vmem:[%s319 + $0x11b] sm:$0xff]
        %v1617 = vld [vmem:[%s319 + $0x123] sm:$0xff]
        %v1618 = vld [vmem:[%s319 + $0x12b] sm:$0xff]
        %s1619 = scalar_lea.vmem %s1, 512
        %v1620 = vld [vmem:[%s1619] sm:$0xff]
        %v1621 = vld [vmem:[%s1619 + $0x8] sm:$0xff]
        %v1622 = vld [vmem:[%s1619 + $0x10] sm:$0xff]
        %v1623 = vld [vmem:[%s1619 + $0x18] sm:$0xff]
        %v1624 = vld [vmem:[%s1619 + $0x20] sm:$0xff]
        %v1625 = vld [vmem:[%s1619 + $0x28] sm:$0xff]
        %v1626 = vld [vmem:[%s1619 + $0x30] sm:$0xff]
        %v1627 = vld [vmem:[%s1619 + $0x38] sm:$0xff]
        %v1628 = vld [vmem:[%s1619 + $0x40] sm:$0xff]
        %v1629 = vld [vmem:[%s1619 + $0x48] sm:$0xff]
        %v1630 = vld [vmem:[%s1619 + $0x50] sm:$0xff]
        %v1631 = vld [vmem:[%s1619 + $0x58] sm:$0xff]
        %v1632 = vld [vmem:[%s1619 + $0x60] sm:$0xff]
        %v1633 = vld [vmem:[%s1619 + $0x68] sm:$0xff]
        %v1634 = vld [vmem:[%s1619 + $0x70] sm:$0xff]
        %v1635 = vld [vmem:[%s1619 + $0x78] sm:$0xff]
        %1636 = vmatprep.subr.mxu0 0.0
        %1637 = vmatpush1.msra.mxu0 %v1635
        %1638 = vmatprep.subr.mxu0 0.0
        %1639 = vmatpush1.msra.mxu0 %v1634
        %1640 = vmatprep.subr.mxu0 0.0
        %1641 = vmatpush1.msra.mxu0 %v1633
        %1642 = vmatprep.subr.mxu0 0.0
        %1643 = vmatpush1.msra.mxu0 %v1632
        %1644 = vmatprep.subr.mxu0 0.0
        %1645 = vmatpush1.msra.mxu0 %v1631
        %1646 = vmatprep.subr.mxu0 0.0
        %1647 = vmatpush1.msra.mxu0 %v1630
        %1648 = vmatprep.subr.mxu0 0.0
        %1649 = vmatpush1.msra.mxu0 %v1629
        %1650 = vmatprep.subr.mxu0 0.0
        %1651 = vmatpush1.msra.mxu0 %v1628
        %1652 = vmatprep.subr.mxu0 0.0
        %1653 = vmatpush1.msra.mxu0 %v1627
        %1654 = vmatprep.subr.mxu0 0.0
        %1655 = vmatpush1.msra.mxu0 %v1626
        %1656 = vmatprep.subr.mxu0 0.0
        %1657 = vmatpush1.msra.mxu0 %v1625
        %1658 = vmatprep.subr.mxu0 0.0
        %1659 = vmatpush1.msra.mxu0 %v1624
        %1660 = vmatprep.subr.mxu0 0.0
        %1661 = vmatpush1.msra.mxu0 %v1623
        %1662 = vmatprep.subr.mxu0 0.0
        %1663 = vmatpush1.msra.mxu0 %v1622
        %1664 = vmatprep.subr.mxu0 0.0
        %1665 = vmatpush1.msra.mxu0 %v1621
        %1666 = vmatprep.subr.mxu0 0.0
        %1667 = vmatpush1.msra.mxu0 %v1620
        %1668 = vmatprep.subr.mxu0 0.0
        %1669 = vmatpush2.msra.mxu0 0.0
        %1670 = vmatprep.subr.mxu0 0.0
        %1671 = vmatpush2.msra.mxu0 0.0
        %1672 = vmatprep.subr.mxu0 0.0
        %1673 = vmatpush2.msra.mxu0 0.0
        %1674 = vmatprep.subr.mxu0 0.0
        %1675 = vmatpush2.msra.mxu0 0.0
        %1676 = vmatprep.subr.mxu0 0.0
        %1677 = vmatpush2.msra.mxu0 0.0
        %1678 = vmatprep.subr.mxu0 0.0
        %1679 = vmatpush2.msra.mxu0 0.0
        %1680 = vmatprep.subr.mxu0 0.0
        %1681 = vmatpush2.msra.mxu0 0.0
        %1682 = vmatprep.subr.mxu0 0.0
        %1683 = vmatpush2.msra.mxu0 0.0
        %1684 = vmatprep.subr.mxu0 0.0
        %1685 = vmatpush2.msra.mxu0 0.0
        %1686 = vmatprep.subr.mxu0 0.0
        %1687 = vmatpush2.msra.mxu0 0.0
        %1688 = vmatprep.subr.mxu0 0.0
        %1689 = vmatpush2.msra.mxu0 0.0
        %1690 = vmatprep.subr.mxu0 0.0
        %1691 = vmatpush2.msra.mxu0 0.0
        %1692 = vmatprep.subr.mxu0 0.0
        %1693 = vmatpush2.msra.mxu0 0.0
        %1694 = vmatprep.subr.mxu0 0.0
        %1695 = vmatpush2.msra.mxu0 0.0
        %1696 = vmatprep.subr.mxu0 0.0
        %1697 = vmatpush2.msra.mxu0 0.0
        %1698 = vmatprep.subr.mxu0 0.0
        %1699 = vmatpush2.msra.mxu0 0.0
        %1700 = vmatprep.mubr.f32.mxu0 0.0
        %1701 = vmatmul.mubr.f32.gmra.mxu0 %v1583
        %v1702 = vpop.f32.mrf.mxu0
        %v1703 = vadd.f32 0.0, %v1702
        %v1704 = vpop.f32.mrf.mxu0
        %1705 = vmatprep.mubr.f32.mxu0 0.0
        %1706 = vmatmul.mubr.f32.gmra.mxu0 %v1584
        %v1707 = vpop.f32.mrf.mxu0
        %v1708 = vadd.f32 0.0, %v1707
        %v1709 = vpop.f32.mrf.mxu0
        %1710 = vmatprep.mubr.f32.mxu0 0.0
        %1711 = vmatmul.mubr.f32.gmra.mxu0 %v1585
        %v1712 = vpop.f32.mrf.mxu0
        %v1713 = vadd.f32 0.0, %v1712
        %v1714 = vpop.f32.mrf.mxu0
        %1715 = vmatprep.mubr.f32.mxu0 0.0
        %1716 = vmatmul.mubr.f32.gmra.mxu0 %v1586
        %v1717 = vpop.f32.mrf.mxu0
        %v1718 = vadd.f32 0.0, %v1717
        %v1719 = vpop.f32.mrf.mxu0
        %1720 = vmatprep.mubr.f32.mxu0 0.0
        %1721 = vmatmul.mubr.f32.gmra.mxu0 %v1587
        %v1722 = vpop.f32.mrf.mxu0
        %v1723 = vadd.f32 0.0, %v1722
        %v1724 = vpop.f32.mrf.mxu0
        %1725 = vmatprep.mubr.f32.mxu0 0.0
        %1726 = vmatmul.mubr.f32.gmra.mxu0 %v1588
        %v1727 = vpop.f32.mrf.mxu0
        %v1728 = vadd.f32 0.0, %v1727
        %v1729 = vpop.f32.mrf.mxu0
        %1730 = vmatprep.mubr.f32.mxu0 0.0
        %1731 = vmatmul.mubr.f32.gmra.mxu0 %v1589
        %v1732 = vpop.f32.mrf.mxu0
        %v1733 = vadd.f32 0.0, %v1732
        %v1734 = vpop.f32.mrf.mxu0
        %1735 = vmatprep.mubr.f32.mxu0 0.0
        %1736 = vmatmul.mubr.f32.gmra.mxu0 %v1590
        %v1737 = vpop.f32.mrf.mxu0
        %v1738 = vadd.f32 0.0, %v1737
        %v1739 = vpop.f32.mrf.mxu0
        %1740 = vmatprep.mubr.f32.mxu0 0.0
        %1741 = vmatmul.mubr.f32.gmra.mxu0 %v1591
        %v1742 = vpop.f32.mrf.mxu0
        %v1743 = vadd.f32 0.0, %v1742
        %v1744 = vpop.f32.mrf.mxu0
        %1745 = vmatprep.mubr.f32.mxu0 0.0
        %1746 = vmatmul.mubr.f32.gmra.mxu0 %v1592
        %v1747 = vpop.f32.mrf.mxu0
        %v1748 = vadd.f32 0.0, %v1747
        %v1749 = vpop.f32.mrf.mxu0
        %1750 = vmatprep.mubr.f32.mxu0 0.0
        %1751 = vmatmul.mubr.f32.gmra.mxu0 %v1593
        %v1752 = vpop.f32.mrf.mxu0
        %v1753 = vadd.f32 0.0, %v1752
        %v1754 = vpop.f32.mrf.mxu0
        %1755 = vmatprep.mubr.f32.mxu0 0.0
        %1756 = vmatmul.mubr.f32.gmra.mxu0 %v1594
        %v1757 = vpop.f32.mrf.mxu0
        %v1758 = vadd.f32 0.0, %v1757
        %v1759 = vpop.f32.mrf.mxu0
        %1760 = vmatprep.mubr.f32.mxu0 0.0
        %1761 = vmatmul.mubr.f32.gmra.mxu0 %v1595
        %v1762 = vpop.f32.mrf.mxu0
        %v1763 = vadd.f32 0.0, %v1762
        %v1764 = vpop.f32.mrf.mxu0
        %1765 = vmatprep.mubr.f32.mxu0 0.0
        %1766 = vmatmul.mubr.f32.gmra.mxu0 %v1596
        %v1767 = vpop.f32.mrf.mxu0
        %v1768 = vadd.f32 0.0, %v1767
        %v1769 = vpop.f32.mrf.mxu0
        %1770 = vmatprep.mubr.f32.mxu0 0.0
        %1771 = vmatmul.mubr.f32.gmra.mxu0 %v1597
        %v1772 = vpop.f32.mrf.mxu0
        %v1773 = vadd.f32 0.0, %v1772
        %v1774 = vpop.f32.mrf.mxu0
        %1775 = vmatprep.mubr.f32.mxu0 0.0
        %1776 = vmatmul.mubr.f32.gmra.mxu0 %v1598
        %v1777 = vpop.f32.mrf.mxu0
        %v1778 = vadd.f32 0.0, %v1777
        %v1779 = vpop.f32.mrf.mxu0
        %1780 = vmatprep.mubr.f32.mxu0 0.0
        %1781 = vmatmul.mubr.f32.gmra.mxu0 %v1599
        %v1782 = vpop.f32.mrf.mxu0
        %v1783 = vadd.f32 0.0, %v1782
        %v1784 = vpop.f32.mrf.mxu0
        %1785 = vmatprep.mubr.f32.mxu0 0.0
        %1786 = vmatmul.mubr.f32.gmra.mxu0 %v1600
        %v1787 = vpop.f32.mrf.mxu0
        %v1788 = vadd.f32 0.0, %v1787
        %v1789 = vpop.f32.mrf.mxu0
        %1790 = vmatprep.mubr.f32.mxu0 0.0
        %1791 = vmatmul.mubr.f32.gmra.mxu0 %v1601
        %v1792 = vpop.f32.mrf.mxu0
        %v1793 = vadd.f32 0.0, %v1792
        %v1794 = vpop.f32.mrf.mxu0
        %1795 = vmatprep.mubr.f32.mxu0 0.0
        %1796 = vmatmul.mubr.f32.gmra.mxu0 %v1602
        %v1797 = vpop.f32.mrf.mxu0
        %v1798 = vadd.f32 0.0, %v1797
        %v1799 = vpop.f32.mrf.mxu0
        %1800 = vmatprep.mubr.f32.mxu0 0.0
        %1801 = vmatmul.mubr.f32.gmra.mxu0 %v1603
        %v1802 = vpop.f32.mrf.mxu0
        %v1803 = vadd.f32 0.0, %v1802
        %v1804 = vpop.f32.mrf.mxu0
        %1805 = vmatprep.mubr.f32.mxu0 0.0
        %1806 = vmatmul.mubr.f32.gmra.mxu0 %v1604
        %v1807 = vpop.f32.mrf.mxu0
        %v1808 = vadd.f32 0.0, %v1807
        %v1809 = vpop.f32.mrf.mxu0
        %1810 = vmatprep.mubr.f32.mxu0 0.0
        %1811 = vmatmul.mubr.f32.gmra.mxu0 %v1605
        %v1812 = vpop.f32.mrf.mxu0
        %v1813 = vadd.f32 0.0, %v1812
        %v1814 = vpop.f32.mrf.mxu0
        %1815 = vmatprep.mubr.f32.mxu0 0.0
        %1816 = vmatmul.mubr.f32.gmra.mxu0 %v1606
        %v1817 = vpop.f32.mrf.mxu0
        %v1818 = vadd.f32 0.0, %v1817
        %v1819 = vpop.f32.mrf.mxu0
        %1820 = vmatprep.mubr.f32.mxu0 0.0
        %1821 = vmatmul.mubr.f32.gmra.mxu0 %v1607
        %v1822 = vpop.f32.mrf.mxu0
        %v1823 = vadd.f32 0.0, %v1822
        %v1824 = vpop.f32.mrf.mxu0
        %1825 = vmatprep.mubr.f32.mxu0 0.0
        %1826 = vmatmul.mubr.f32.gmra.mxu0 %v1608
        %v1827 = vpop.f32.mrf.mxu0
        %v1828 = vadd.f32 0.0, %v1827
        %v1829 = vpop.f32.mrf.mxu0
        %1830 = vmatprep.mubr.f32.mxu0 0.0
        %1831 = vmatmul.mubr.f32.gmra.mxu0 %v1609
        %v1832 = vpop.f32.mrf.mxu0
        %v1833 = vadd.f32 0.0, %v1832
        %v1834 = vpop.f32.mrf.mxu0
        %1835 = vmatprep.mubr.f32.mxu0 0.0
        %1836 = vmatmul.mubr.f32.gmra.mxu0 %v1610
        %v1837 = vpop.f32.mrf.mxu0
        %v1838 = vadd.f32 0.0, %v1837
        %v1839 = vpop.f32.mrf.mxu0
        %1840 = vmatprep.mubr.f32.mxu0 0.0
        %1841 = vmatmul.mubr.f32.gmra.mxu0 %v1611
        %v1842 = vpop.f32.mrf.mxu0
        %v1843 = vadd.f32 0.0, %v1842
        %v1844 = vpop.f32.mrf.mxu0
        %1845 = vmatprep.mubr.f32.mxu0 0.0
        %1846 = vmatmul.mubr.f32.gmra.mxu0 %v1612
        %v1847 = vpop.f32.mrf.mxu0
        %v1848 = vadd.f32 0.0, %v1847
        %v1849 = vpop.f32.mrf.mxu0
        %1850 = vmatprep.mubr.f32.mxu0 0.0
        %1851 = vmatmul.mubr.f32.gmra.mxu0 %v1613
        %v1852 = vpop.f32.mrf.mxu0
        %v1853 = vadd.f32 0.0, %v1852
        %v1854 = vpop.f32.mrf.mxu0
        %1855 = vmatprep.mubr.f32.mxu0 0.0
        %1856 = vmatmul.mubr.f32.gmra.mxu0 %v1614
        %v1857 = vpop.f32.mrf.mxu0
        %v1858 = vadd.f32 0.0, %v1857
        %v1859 = vpop.f32.mrf.mxu0
        %1860 = vmatprep.mubr.f32.mxu0 0.0
        %1861 = vmatmul.mubr.f32.gmra.mxu0 %v1615
        %v1862 = vpop.f32.mrf.mxu0
        %v1863 = vadd.f32 0.0, %v1862
        %v1864 = vpop.f32.mrf.mxu0
        %1865 = vmatprep.mubr.f32.mxu0 0.0
        %1866 = vmatmul.mubr.f32.gmra.mxu0 %v1616
        %v1867 = vpop.f32.mrf.mxu0
        %v1868 = vadd.f32 0.0, %v1867
        %v1869 = vpop.f32.mrf.mxu0
        %1870 = vmatprep.mubr.f32.mxu0 0.0
        %1871 = vmatmul.mubr.f32.gmra.mxu0 %v1617
        %v1872 = vpop.f32.mrf.mxu0
        %v1873 = vadd.f32 0.0, %v1872
        %v1874 = vpop.f32.mrf.mxu0
        %1875 = vmatprep.mubr.f32.mxu0 0.0
        %1876 = vmatmul.mubr.f32.gmra.mxu0 %v1618
        %v1877 = vpop.f32.mrf.mxu0
        %v1878 = vadd.f32 0.0, %v1877
        %v1879 = vpop.f32.mrf.mxu0
        %1880 = vdwg.mxu0
        %v1881 = vadd.f32 %v1547, %v1703
        %v1882 = vadd.f32 %v1548, %v1708
        %v1883 = vadd.f32 %v1549, %v1713
        %v1884 = vadd.f32 %v1550, %v1718
        %v1885 = vadd.f32 %v1551, %v1723
        %v1886 = vadd.f32 %v1552, %v1728
        %v1887 = vadd.f32 %v1553, %v1733
        %v1888 = vadd.f32 %v1554, %v1738
        %v1889 = vadd.f32 %v1555, %v1743
        %v1890 = vadd.f32 %v1556, %v1748
        %v1891 = vadd.f32 %v1557, %v1753
        %v1892 = vadd.f32 %v1558, %v1758
        %v1893 = vadd.f32 %v1559, %v1763
        %v1894 = vadd.f32 %v1560, %v1768
        %v1895 = vadd.f32 %v1561, %v1773
        %v1896 = vadd.f32 %v1562, %v1778
        %v1897 = vadd.f32 %v1563, %v1783
        %v1898 = vadd.f32 %v1564, %v1788
        %v1899 = vadd.f32 %v1565, %v1793
        %v1900 = vadd.f32 %v1566, %v1798
        %v1901 = vadd.f32 %v1567, %v1803
        %v1902 = vadd.f32 %v1568, %v1808
        %v1903 = vadd.f32 %v1569, %v1813
        %v1904 = vadd.f32 %v1570, %v1818
        %v1905 = vadd.f32 %v1571, %v1823
        %v1906 = vadd.f32 %v1572, %v1828
        %v1907 = vadd.f32 %v1573, %v1833
        %v1908 = vadd.f32 %v1574, %v1838
        %v1909 = vadd.f32 %v1575, %v1843
        %v1910 = vadd.f32 %v1576, %v1848
        %v1911 = vadd.f32 %v1577, %v1853
        %v1912 = vadd.f32 %v1578, %v1858
        %v1913 = vadd.f32 %v1579, %v1863
        %v1914 = vadd.f32 %v1580, %v1868
        %v1915 = vadd.f32 %v1581, %v1873
        %v1916 = vadd.f32 %v1582, %v1878
        %v1917 = vld [vmem:[%s319 + $0x14] sm:$0xff]
        %v1918 = vld [vmem:[%s319 + $0x1c] sm:$0xff]
        %v1919 = vld [vmem:[%s319 + $0x24] sm:$0xff]
        %v1920 = vld [vmem:[%s319 + $0x2c] sm:$0xff]
        %v1921 = vld [vmem:[%s319 + $0x34] sm:$0xff]
        %v1922 = vld [vmem:[%s319 + $0x3c] sm:$0xff]
        %v1923 = vld [vmem:[%s319 + $0x44] sm:$0xff]
        %v1924 = vld [vmem:[%s319 + $0x4c] sm:$0xff]
        %v1925 = vld [vmem:[%s319 + $0x54] sm:$0xff]
        %v1926 = vld [vmem:[%s319 + $0x5c] sm:$0xff]
        %v1927 = vld [vmem:[%s319 + $0x64] sm:$0xff]
        %v1928 = vld [vmem:[%s319 + $0x6c] sm:$0xff]
        %v1929 = vld [vmem:[%s319 + $0x74] sm:$0xff]
        %v1930 = vld [vmem:[%s319 + $0x7c] sm:$0xff]
        %v1931 = vld [vmem:[%s319 + $0x84] sm:$0xff]
        %v1932 = vld [vmem:[%s319 + $0x8c] sm:$0xff]
        %v1933 = vld [vmem:[%s319 + $0x94] sm:$0xff]
        %v1934 = vld [vmem:[%s319 + $0x9c] sm:$0xff]
        %v1935 = vld [vmem:[%s319 + $0xa4] sm:$0xff]
        %v1936 = vld [vmem:[%s319 + $0xac] sm:$0xff]
        %v1937 = vld [vmem:[%s319 + $0xb4] sm:$0xff]
        %v1938 = vld [vmem:[%s319 + $0xbc] sm:$0xff]
        %v1939 = vld [vmem:[%s319 + $0xc4] sm:$0xff]
        %v1940 = vld [vmem:[%s319 + $0xcc] sm:$0xff]
        %v1941 = vld [vmem:[%s319 + $0xd4] sm:$0xff]
        %v1942 = vld [vmem:[%s319 + $0xdc] sm:$0xff]
        %v1943 = vld [vmem:[%s319 + $0xe4] sm:$0xff]
        %v1944 = vld [vmem:[%s319 + $0xec] sm:$0xff]
        %v1945 = vld [vmem:[%s319 + $0xf4] sm:$0xff]
        %v1946 = vld [vmem:[%s319 + $0xfc] sm:$0xff]
        %v1947 = vld [vmem:[%s319 + $0x104] sm:$0xff]
        %v1948 = vld [vmem:[%s319 + $0x10c] sm:$0xff]
        %v1949 = vld [vmem:[%s319 + $0x114] sm:$0xff]
        %v1950 = vld [vmem:[%s319 + $0x11c] sm:$0xff]
        %v1951 = vld [vmem:[%s319 + $0x124] sm:$0xff]
        %v1952 = vld [vmem:[%s319 + $0x12c] sm:$0xff]
        %s1953 = scalar_lea.vmem %s1, 640
        %v1954 = vld [vmem:[%s1953] sm:$0xff]
        %v1955 = vld [vmem:[%s1953 + $0x8] sm:$0xff]
        %v1956 = vld [vmem:[%s1953 + $0x10] sm:$0xff]
        %v1957 = vld [vmem:[%s1953 + $0x18] sm:$0xff]
        %v1958 = vld [vmem:[%s1953 + $0x20] sm:$0xff]
        %v1959 = vld [vmem:[%s1953 + $0x28] sm:$0xff]
        %v1960 = vld [vmem:[%s1953 + $0x30] sm:$0xff]
        %v1961 = vld [vmem:[%s1953 + $0x38] sm:$0xff]
        %v1962 = vld [vmem:[%s1953 + $0x40] sm:$0xff]
        %v1963 = vld [vmem:[%s1953 + $0x48] sm:$0xff]
        %v1964 = vld [vmem:[%s1953 + $0x50] sm:$0xff]
        %v1965 = vld [vmem:[%s1953 + $0x58] sm:$0xff]
        %v1966 = vld [vmem:[%s1953 + $0x60] sm:$0xff]
        %v1967 = vld [vmem:[%s1953 + $0x68] sm:$0xff]
        %v1968 = vld [vmem:[%s1953 + $0x70] sm:$0xff]
        %v1969 = vld [vmem:[%s1953 + $0x78] sm:$0xff]
        %1970 = vmatprep.subr.mxu0 0.0
        %1971 = vmatpush1.msra.mxu0 %v1969
        %1972 = vmatprep.subr.mxu0 0.0
        %1973 = vmatpush1.msra.mxu0 %v1968
        %1974 = vmatprep.subr.mxu0 0.0
        %1975 = vmatpush1.msra.mxu0 %v1967
        %1976 = vmatprep.subr.mxu0 0.0
        %1977 = vmatpush1.msra.mxu0 %v1966
        %1978 = vmatprep.subr.mxu0 0.0
        %1979 = vmatpush1.msra.mxu0 %v1965
        %1980 = vmatprep.subr.mxu0 0.0
        %1981 = vmatpush1.msra.mxu0 %v1964
        %1982 = vmatprep.subr.mxu0 0.0
        %1983 = vmatpush1.msra.mxu0 %v1963
        %1984 = vmatprep.subr.mxu0 0.0
        %1985 = vmatpush1.msra.mxu0 %v1962
        %1986 = vmatprep.subr.mxu0 0.0
        %1987 = vmatpush1.msra.mxu0 %v1961
        %1988 = vmatprep.subr.mxu0 0.0
        %1989 = vmatpush1.msra.mxu0 %v1960
        %1990 = vmatprep.subr.mxu0 0.0
        %1991 = vmatpush1.msra.mxu0 %v1959
        %1992 = vmatprep.subr.mxu0 0.0
        %1993 = vmatpush1.msra.mxu0 %v1958
        %1994 = vmatprep.subr.mxu0 0.0
        %1995 = vmatpush1.msra.mxu0 %v1957
        %1996 = vmatprep.subr.mxu0 0.0
        %1997 = vmatpush1.msra.mxu0 %v1956
        %1998 = vmatprep.subr.mxu0 0.0
        %1999 = vmatpush1.msra.mxu0 %v1955
        %2000 = vmatprep.subr.mxu0 0.0
        %2001 = vmatpush1.msra.mxu0 %v1954
        %2002 = vmatprep.subr.mxu0 0.0
        %2003 = vmatpush2.msra.mxu0 0.0
        %2004 = vmatprep.subr.mxu0 0.0
        %2005 = vmatpush2.msra.mxu0 0.0
        %2006 = vmatprep.subr.mxu0 0.0
        %2007 = vmatpush2.msra.mxu0 0.0
        %2008 = vmatprep.subr.mxu0 0.0
        %2009 = vmatpush2.msra.mxu0 0.0
        %2010 = vmatprep.subr.mxu0 0.0
        %2011 = vmatpush2.msra.mxu0 0.0
        %2012 = vmatprep.subr.mxu0 0.0
        %2013 = vmatpush2.msra.mxu0 0.0
        %2014 = vmatprep.subr.mxu0 0.0
        %2015 = vmatpush2.msra.mxu0 0.0
        %2016 = vmatprep.subr.mxu0 0.0
        %2017 = vmatpush2.msra.mxu0 0.0
        %2018 = vmatprep.subr.mxu0 0.0
        %2019 = vmatpush2.msra.mxu0 0.0
        %2020 = vmatprep.subr.mxu0 0.0
        %2021 = vmatpush2.msra.mxu0 0.0
        %2022 = vmatprep.subr.mxu0 0.0
        %2023 = vmatpush2.msra.mxu0 0.0
        %2024 = vmatprep.subr.mxu0 0.0
        %2025 = vmatpush2.msra.mxu0 0.0
        %2026 = vmatprep.subr.mxu0 0.0
        %2027 = vmatpush2.msra.mxu0 0.0
        %2028 = vmatprep.subr.mxu0 0.0
        %2029 = vmatpush2.msra.mxu0 0.0
        %2030 = vmatprep.subr.mxu0 0.0
        %2031 = vmatpush2.msra.mxu0 0.0
        %2032 = vmatprep.subr.mxu0 0.0
        %2033 = vmatpush2.msra.mxu0 0.0
        %2034 = vmatprep.mubr.f32.mxu0 0.0
        %2035 = vmatmul.mubr.f32.gmra.mxu0 %v1917
        %v2036 = vpop.f32.mrf.mxu0
        %v2037 = vadd.f32 0.0, %v2036
        %v2038 = vpop.f32.mrf.mxu0
        %2039 = vmatprep.mubr.f32.mxu0 0.0
        %2040 = vmatmul.mubr.f32.gmra.mxu0 %v1918
        %v2041 = vpop.f32.mrf.mxu0
        %v2042 = vadd.f32 0.0, %v2041
        %v2043 = vpop.f32.mrf.mxu0
        %2044 = vmatprep.mubr.f32.mxu0 0.0
        %2045 = vmatmul.mubr.f32.gmra.mxu0 %v1919
        %v2046 = vpop.f32.mrf.mxu0
        %v2047 = vadd.f32 0.0, %v2046
        %v2048 = vpop.f32.mrf.mxu0
        %2049 = vmatprep.mubr.f32.mxu0 0.0
        %2050 = vmatmul.mubr.f32.gmra.mxu0 %v1920
        %v2051 = vpop.f32.mrf.mxu0
        %v2052 = vadd.f32 0.0, %v2051
        %v2053 = vpop.f32.mrf.mxu0
        %2054 = vmatprep.mubr.f32.mxu0 0.0
        %2055 = vmatmul.mubr.f32.gmra.mxu0 %v1921
        %v2056 = vpop.f32.mrf.mxu0
        %v2057 = vadd.f32 0.0, %v2056
        %v2058 = vpop.f32.mrf.mxu0
        %2059 = vmatprep.mubr.f32.mxu0 0.0
        %2060 = vmatmul.mubr.f32.gmra.mxu0 %v1922
        %v2061 = vpop.f32.mrf.mxu0
        %v2062 = vadd.f32 0.0, %v2061
        %v2063 = vpop.f32.mrf.mxu0
        %2064 = vmatprep.mubr.f32.mxu0 0.0
        %2065 = vmatmul.mubr.f32.gmra.mxu0 %v1923
        %v2066 = vpop.f32.mrf.mxu0
        %v2067 = vadd.f32 0.0, %v2066
        %v2068 = vpop.f32.mrf.mxu0
        %2069 = vmatprep.mubr.f32.mxu0 0.0
        %2070 = vmatmul.mubr.f32.gmra.mxu0 %v1924
        %v2071 = vpop.f32.mrf.mxu0
        %v2072 = vadd.f32 0.0, %v2071
        %v2073 = vpop.f32.mrf.mxu0
        %2074 = vmatprep.mubr.f32.mxu0 0.0
        %2075 = vmatmul.mubr.f32.gmra.mxu0 %v1925
        %v2076 = vpop.f32.mrf.mxu0
        %v2077 = vadd.f32 0.0, %v2076
        %v2078 = vpop.f32.mrf.mxu0
        %2079 = vmatprep.mubr.f32.mxu0 0.0
        %2080 = vmatmul.mubr.f32.gmra.mxu0 %v1926
        %v2081 = vpop.f32.mrf.mxu0
        %v2082 = vadd.f32 0.0, %v2081
        %v2083 = vpop.f32.mrf.mxu0
        %2084 = vmatprep.mubr.f32.mxu0 0.0
        %2085 = vmatmul.mubr.f32.gmra.mxu0 %v1927
        %v2086 = vpop.f32.mrf.mxu0
        %v2087 = vadd.f32 0.0, %v2086
        %v2088 = vpop.f32.mrf.mxu0
        %2089 = vmatprep.mubr.f32.mxu0 0.0
        %2090 = vmatmul.mubr.f32.gmra.mxu0 %v1928
        %v2091 = vpop.f32.mrf.mxu0
        %v2092 = vadd.f32 0.0, %v2091
        %v2093 = vpop.f32.mrf.mxu0
        %2094 = vmatprep.mubr.f32.mxu0 0.0
        %2095 = vmatmul.mubr.f32.gmra.mxu0 %v1929
        %v2096 = vpop.f32.mrf.mxu0
        %v2097 = vadd.f32 0.0, %v2096
        %v2098 = vpop.f32.mrf.mxu0
        %2099 = vmatprep.mubr.f32.mxu0 0.0
        %2100 = vmatmul.mubr.f32.gmra.mxu0 %v1930
        %v2101 = vpop.f32.mrf.mxu0
        %v2102 = vadd.f32 0.0, %v2101
        %v2103 = vpop.f32.mrf.mxu0
        %2104 = vmatprep.mubr.f32.mxu0 0.0
        %2105 = vmatmul.mubr.f32.gmra.mxu0 %v1931
        %v2106 = vpop.f32.mrf.mxu0
        %v2107 = vadd.f32 0.0, %v2106
        %v2108 = vpop.f32.mrf.mxu0
        %2109 = vmatprep.mubr.f32.mxu0 0.0
        %2110 = vmatmul.mubr.f32.gmra.mxu0 %v1932
        %v2111 = vpop.f32.mrf.mxu0
        %v2112 = vadd.f32 0.0, %v2111
        %v2113 = vpop.f32.mrf.mxu0
        %2114 = vmatprep.mubr.f32.mxu0 0.0
        %2115 = vmatmul.mubr.f32.gmra.mxu0 %v1933
        %v2116 = vpop.f32.mrf.mxu0
        %v2117 = vadd.f32 0.0, %v2116
        %v2118 = vpop.f32.mrf.mxu0
        %2119 = vmatprep.mubr.f32.mxu0 0.0
        %2120 = vmatmul.mubr.f32.gmra.mxu0 %v1934
        %v2121 = vpop.f32.mrf.mxu0
        %v2122 = vadd.f32 0.0, %v2121
        %v2123 = vpop.f32.mrf.mxu0
        %2124 = vmatprep.mubr.f32.mxu0 0.0
        %2125 = vmatmul.mubr.f32.gmra.mxu0 %v1935
        %v2126 = vpop.f32.mrf.mxu0
        %v2127 = vadd.f32 0.0, %v2126
        %v2128 = vpop.f32.mrf.mxu0
        %2129 = vmatprep.mubr.f32.mxu0 0.0
        %2130 = vmatmul.mubr.f32.gmra.mxu0 %v1936
        %v2131 = vpop.f32.mrf.mxu0
        %v2132 = vadd.f32 0.0, %v2131
        %v2133 = vpop.f32.mrf.mxu0
        %2134 = vmatprep.mubr.f32.mxu0 0.0
        %2135 = vmatmul.mubr.f32.gmra.mxu0 %v1937
        %v2136 = vpop.f32.mrf.mxu0
        %v2137 = vadd.f32 0.0, %v2136
        %v2138 = vpop.f32.mrf.mxu0
        %2139 = vmatprep.mubr.f32.mxu0 0.0
        %2140 = vmatmul.mubr.f32.gmra.mxu0 %v1938
        %v2141 = vpop.f32.mrf.mxu0
        %v2142 = vadd.f32 0.0, %v2141
        %v2143 = vpop.f32.mrf.mxu0
        %2144 = vmatprep.mubr.f32.mxu0 0.0
        %2145 = vmatmul.mubr.f32.gmra.mxu0 %v1939
        %v2146 = vpop.f32.mrf.mxu0
        %v2147 = vadd.f32 0.0, %v2146
        %v2148 = vpop.f32.mrf.mxu0
        %2149 = vmatprep.mubr.f32.mxu0 0.0
        %2150 = vmatmul.mubr.f32.gmra.mxu0 %v1940
        %v2151 = vpop.f32.mrf.mxu0
        %v2152 = vadd.f32 0.0, %v2151
        %v2153 = vpop.f32.mrf.mxu0
        %2154 = vmatprep.mubr.f32.mxu0 0.0
        %2155 = vmatmul.mubr.f32.gmra.mxu0 %v1941
        %v2156 = vpop.f32.mrf.mxu0
        %v2157 = vadd.f32 0.0, %v2156
        %v2158 = vpop.f32.mrf.mxu0
        %2159 = vmatprep.mubr.f32.mxu0 0.0
        %2160 = vmatmul.mubr.f32.gmra.mxu0 %v1942
        %v2161 = vpop.f32.mrf.mxu0
        %v2162 = vadd.f32 0.0, %v2161
        %v2163 = vpop.f32.mrf.mxu0
        %2164 = vmatprep.mubr.f32.mxu0 0.0
        %2165 = vmatmul.mubr.f32.gmra.mxu0 %v1943
        %v2166 = vpop.f32.mrf.mxu0
        %v2167 = vadd.f32 0.0, %v2166
        %v2168 = vpop.f32.mrf.mxu0
        %2169 = vmatprep.mubr.f32.mxu0 0.0
        %2170 = vmatmul.mubr.f32.gmra.mxu0 %v1944
        %v2171 = vpop.f32.mrf.mxu0
        %v2172 = vadd.f32 0.0, %v2171
        %v2173 = vpop.f32.mrf.mxu0
        %2174 = vmatprep.mubr.f32.mxu0 0.0
        %2175 = vmatmul.mubr.f32.gmra.mxu0 %v1945
        %v2176 = vpop.f32.mrf.mxu0
        %v2177 = vadd.f32 0.0, %v2176
        %v2178 = vpop.f32.mrf.mxu0
        %2179 = vmatprep.mubr.f32.mxu0 0.0
        %2180 = vmatmul.mubr.f32.gmra.mxu0 %v1946
        %v2181 = vpop.f32.mrf.mxu0
        %v2182 = vadd.f32 0.0, %v2181
        %v2183 = vpop.f32.mrf.mxu0
        %2184 = vmatprep.mubr.f32.mxu0 0.0
        %2185 = vmatmul.mubr.f32.gmra.mxu0 %v1947
        %v2186 = vpop.f32.mrf.mxu0
        %v2187 = vadd.f32 0.0, %v2186
        %v2188 = vpop.f32.mrf.mxu0
        %2189 = vmatprep.mubr.f32.mxu0 0.0
        %2190 = vmatmul.mubr.f32.gmra.mxu0 %v1948
        %v2191 = vpop.f32.mrf.mxu0
        %v2192 = vadd.f32 0.0, %v2191
        %v2193 = vpop.f32.mrf.mxu0
        %2194 = vmatprep.mubr.f32.mxu0 0.0
        %2195 = vmatmul.mubr.f32.gmra.mxu0 %v1949
        %v2196 = vpop.f32.mrf.mxu0
        %v2197 = vadd.f32 0.0, %v2196
        %v2198 = vpop.f32.mrf.mxu0
        %2199 = vmatprep.mubr.f32.mxu0 0.0
        %2200 = vmatmul.mubr.f32.gmra.mxu0 %v1950
        %v2201 = vpop.f32.mrf.mxu0
        %v2202 = vadd.f32 0.0, %v2201
        %v2203 = vpop.f32.mrf.mxu0
        %2204 = vmatprep.mubr.f32.mxu0 0.0
        %2205 = vmatmul.mubr.f32.gmra.mxu0 %v1951
        %v2206 = vpop.f32.mrf.mxu0
        %v2207 = vadd.f32 0.0, %v2206
        %v2208 = vpop.f32.mrf.mxu0
        %2209 = vmatprep.mubr.f32.mxu0 0.0
        %2210 = vmatmul.mubr.f32.gmra.mxu0 %v1952
        %v2211 = vpop.f32.mrf.mxu0
        %v2212 = vadd.f32 0.0, %v2211
        %v2213 = vpop.f32.mrf.mxu0
        %2214 = vdwg.mxu0
        %v2215 = vadd.f32 %v1881, %v2037
        %v2216 = vadd.f32 %v1882, %v2042
        %v2217 = vadd.f32 %v1883, %v2047
        %v2218 = vadd.f32 %v1884, %v2052
        %v2219 = vadd.f32 %v1885, %v2057
        %v2220 = vadd.f32 %v1886, %v2062
        %v2221 = vadd.f32 %v1887, %v2067
        %v2222 = vadd.f32 %v1888, %v2072
        %v2223 = vadd.f32 %v1889, %v2077
        %v2224 = vadd.f32 %v1890, %v2082
        %v2225 = vadd.f32 %v1891, %v2087
        %v2226 = vadd.f32 %v1892, %v2092
        %v2227 = vadd.f32 %v1893, %v2097
        %v2228 = vadd.f32 %v1894, %v2102
        %v2229 = vadd.f32 %v1895, %v2107
        %v2230 = vadd.f32 %v1896, %v2112
        %v2231 = vadd.f32 %v1897, %v2117
        %v2232 = vadd.f32 %v1898, %v2122
        %v2233 = vadd.f32 %v1899, %v2127
        %v2234 = vadd.f32 %v1900, %v2132
        %v2235 = vadd.f32 %v1901, %v2137
        %v2236 = vadd.f32 %v1902, %v2142
        %v2237 = vadd.f32 %v1903, %v2147
        %v2238 = vadd.f32 %v1904, %v2152
        %v2239 = vadd.f32 %v1905, %v2157
        %v2240 = vadd.f32 %v1906, %v2162
        %v2241 = vadd.f32 %v1907, %v2167
        %v2242 = vadd.f32 %v1908, %v2172
        %v2243 = vadd.f32 %v1909, %v2177
        %v2244 = vadd.f32 %v1910, %v2182
        %v2245 = vadd.f32 %v1911, %v2187
        %v2246 = vadd.f32 %v1912, %v2192
        %v2247 = vadd.f32 %v1913, %v2197
        %v2248 = vadd.f32 %v1914, %v2202
        %v2249 = vadd.f32 %v1915, %v2207
        %v2250 = vadd.f32 %v1916, %v2212
        %v2251 = vld [vmem:[%s319 + $0x24] sm:$0xff]
        %v2252 = vld [vmem:[%s319 + $0x2c] sm:$0xff]
        %v2253 = vld [vmem:[%s319 + $0x34] sm:$0xff]
        %v2254 = vld [vmem:[%s319 + $0x3c] sm:$0xff]
        %v2255 = vld [vmem:[%s319 + $0x44] sm:$0xff]
        %v2256 = vld [vmem:[%s319 + $0x4c] sm:$0xff]
        %v2257 = vld [vmem:[%s319 + $0x54] sm:$0xff]
        %v2258 = vld [vmem:[%s319 + $0x5c] sm:$0xff]
        %v2259 = vld [vmem:[%s319 + $0x64] sm:$0xff]
        %v2260 = vld [vmem:[%s319 + $0x6c] sm:$0xff]
        %v2261 = vld [vmem:[%s319 + $0x74] sm:$0xff]
        %v2262 = vld [vmem:[%s319 + $0x7c] sm:$0xff]
        %v2263 = vld [vmem:[%s319 + $0x84] sm:$0xff]
        %v2264 = vld [vmem:[%s319 + $0x8c] sm:$0xff]
        %v2265 = vld [vmem:[%s319 + $0x94] sm:$0xff]
        %v2266 = vld [vmem:[%s319 + $0x9c] sm:$0xff]
        %v2267 = vld [vmem:[%s319 + $0xa4] sm:$0xff]
        %v2268 = vld [vmem:[%s319 + $0xac] sm:$0xff]
        %v2269 = vld [vmem:[%s319 + $0xb4] sm:$0xff]
        %v2270 = vld [vmem:[%s319 + $0xbc] sm:$0xff]
        %v2271 = vld [vmem:[%s319 + $0xc4] sm:$0xff]
        %v2272 = vld [vmem:[%s319 + $0xcc] sm:$0xff]
        %v2273 = vld [vmem:[%s319 + $0xd4] sm:$0xff]
        %v2274 = vld [vmem:[%s319 + $0xdc] sm:$0xff]
        %v2275 = vld [vmem:[%s319 + $0xe4] sm:$0xff]
        %v2276 = vld [vmem:[%s319 + $0xec] sm:$0xff]
        %v2277 = vld [vmem:[%s319 + $0xf4] sm:$0xff]
        %v2278 = vld [vmem:[%s319 + $0xfc] sm:$0xff]
        %v2279 = vld [vmem:[%s319 + $0x104] sm:$0xff]
        %v2280 = vld [vmem:[%s319 + $0x10c] sm:$0xff]
        %v2281 = vld [vmem:[%s319 + $0x114] sm:$0xff]
        %v2282 = vld [vmem:[%s319 + $0x11c] sm:$0xff]
        %v2283 = vld [vmem:[%s319 + $0x124] sm:$0xff]
        %v2284 = vld [vmem:[%s319 + $0x12c] sm:$0xff]
        %v2285 = vld [vmem:[%s319 + $0x134] sm:$0xff]
        %v2286 = vld [vmem:[%s319 + $0x13c] sm:$0xff]
        %s2287 = scalar_lea.vmem %s1, 768
        %v2288 = vld [vmem:[%s2287] sm:$0xff]
        %v2289 = vld [vmem:[%s2287 + $0x8] sm:$0xff]
        %v2290 = vld [vmem:[%s2287 + $0x10] sm:$0xff]
        %v2291 = vld [vmem:[%s2287 + $0x18] sm:$0xff]
        %v2292 = vld [vmem:[%s2287 + $0x20] sm:$0xff]
        %v2293 = vld [vmem:[%s2287 + $0x28] sm:$0xff]
        %v2294 = vld [vmem:[%s2287 + $0x30] sm:$0xff]
        %v2295 = vld [vmem:[%s2287 + $0x38] sm:$0xff]
        %v2296 = vld [vmem:[%s2287 + $0x40] sm:$0xff]
        %v2297 = vld [vmem:[%s2287 + $0x48] sm:$0xff]
        %v2298 = vld [vmem:[%s2287 + $0x50] sm:$0xff]
        %v2299 = vld [vmem:[%s2287 + $0x58] sm:$0xff]
        %v2300 = vld [vmem:[%s2287 + $0x60] sm:$0xff]
        %v2301 = vld [vmem:[%s2287 + $0x68] sm:$0xff]
        %v2302 = vld [vmem:[%s2287 + $0x70] sm:$0xff]
        %v2303 = vld [vmem:[%s2287 + $0x78] sm:$0xff]
        %2304 = vmatprep.subr.mxu0 0.0
        %2305 = vmatpush1.msra.mxu0 %v2303
        %2306 = vmatprep.subr.mxu0 0.0
        %2307 = vmatpush1.msra.mxu0 %v2302
        %2308 = vmatprep.subr.mxu0 0.0
        %2309 = vmatpush1.msra.mxu0 %v2301
        %2310 = vmatprep.subr.mxu0 0.0
        %2311 = vmatpush1.msra.mxu0 %v2300
        %2312 = vmatprep.subr.mxu0 0.0
        %2313 = vmatpush1.msra.mxu0 %v2299
        %2314 = vmatprep.subr.mxu0 0.0
        %2315 = vmatpush1.msra.mxu0 %v2298
        %2316 = vmatprep.subr.mxu0 0.0
        %2317 = vmatpush1.msra.mxu0 %v2297
        %2318 = vmatprep.subr.mxu0 0.0
        %2319 = vmatpush1.msra.mxu0 %v2296
        %2320 = vmatprep.subr.mxu0 0.0
        %2321 = vmatpush1.msra.mxu0 %v2295
        %2322 = vmatprep.subr.mxu0 0.0
        %2323 = vmatpush1.msra.mxu0 %v2294
        %2324 = vmatprep.subr.mxu0 0.0
        %2325 = vmatpush1.msra.mxu0 %v2293
        %2326 = vmatprep.subr.mxu0 0.0
        %2327 = vmatpush1.msra.mxu0 %v2292
        %2328 = vmatprep.subr.mxu0 0.0
        %2329 = vmatpush1.msra.mxu0 %v2291
        %2330 = vmatprep.subr.mxu0 0.0
        %2331 = vmatpush1.msra.mxu0 %v2290
        %2332 = vmatprep.subr.mxu0 0.0
        %2333 = vmatpush1.msra.mxu0 %v2289
        %2334 = vmatprep.subr.mxu0 0.0
        %2335 = vmatpush1.msra.mxu0 %v2288
        %2336 = vmatprep.subr.mxu0 0.0
        %2337 = vmatpush2.msra.mxu0 0.0
        %2338 = vmatprep.subr.mxu0 0.0
        %2339 = vmatpush2.msra.mxu0 0.0
        %2340 = vmatprep.subr.mxu0 0.0
        %2341 = vmatpush2.msra.mxu0 0.0
        %2342 = vmatprep.subr.mxu0 0.0
        %2343 = vmatpush2.msra.mxu0 0.0
        %2344 = vmatprep.subr.mxu0 0.0
        %2345 = vmatpush2.msra.mxu0 0.0
        %2346 = vmatprep.subr.mxu0 0.0
        %2347 = vmatpush2.msra.mxu0 0.0
        %2348 = vmatprep.subr.mxu0 0.0
        %2349 = vmatpush2.msra.mxu0 0.0
        %2350 = vmatprep.subr.mxu0 0.0
        %2351 = vmatpush2.msra.mxu0 0.0
        %2352 = vmatprep.subr.mxu0 0.0
        %2353 = vmatpush2.msra.mxu0 0.0
        %2354 = vmatprep.subr.mxu0 0.0
        %2355 = vmatpush2.msra.mxu0 0.0
        %2356 = vmatprep.subr.mxu0 0.0
        %2357 = vmatpush2.msra.mxu0 0.0
        %2358 = vmatprep.subr.mxu0 0.0
        %2359 = vmatpush2.msra.mxu0 0.0
        %2360 = vmatprep.subr.mxu0 0.0
        %2361 = vmatpush2.msra.mxu0 0.0
        %2362 = vmatprep.subr.mxu0 0.0
        %2363 = vmatpush2.msra.mxu0 0.0
        %2364 = vmatprep.subr.mxu0 0.0
        %2365 = vmatpush2.msra.mxu0 0.0
        %2366 = vmatprep.subr.mxu0 0.0
        %2367 = vmatpush2.msra.mxu0 0.0
        %2368 = vmatprep.mubr.f32.mxu0 0.0
        %2369 = vmatmul.mubr.f32.gmra.mxu0 %v2251
        %v2370 = vpop.f32.mrf.mxu0
        %v2371 = vadd.f32 0.0, %v2370
        %v2372 = vpop.f32.mrf.mxu0
        %2373 = vmatprep.mubr.f32.mxu0 0.0
        %2374 = vmatmul.mubr.f32.gmra.mxu0 %v2252
        %v2375 = vpop.f32.mrf.mxu0
        %v2376 = vadd.f32 0.0, %v2375
        %v2377 = vpop.f32.mrf.mxu0
        %2378 = vmatprep.mubr.f32.mxu0 0.0
        %2379 = vmatmul.mubr.f32.gmra.mxu0 %v2253
        %v2380 = vpop.f32.mrf.mxu0
        %v2381 = vadd.f32 0.0, %v2380
        %v2382 = vpop.f32.mrf.mxu0
        %2383 = vmatprep.mubr.f32.mxu0 0.0
        %2384 = vmatmul.mubr.f32.gmra.mxu0 %v2254
        %v2385 = vpop.f32.mrf.mxu0
        %v2386 = vadd.f32 0.0, %v2385
        %v2387 = vpop.f32.mrf.mxu0
        %2388 = vmatprep.mubr.f32.mxu0 0.0
        %2389 = vmatmul.mubr.f32.gmra.mxu0 %v2255
        %v2390 = vpop.f32.mrf.mxu0
        %v2391 = vadd.f32 0.0, %v2390
        %v2392 = vpop.f32.mrf.mxu0
        %2393 = vmatprep.mubr.f32.mxu0 0.0
        %2394 = vmatmul.mubr.f32.gmra.mxu0 %v2256
        %v2395 = vpop.f32.mrf.mxu0
        %v2396 = vadd.f32 0.0, %v2395
        %v2397 = vpop.f32.mrf.mxu0
        %2398 = vmatprep.mubr.f32.mxu0 0.0
        %2399 = vmatmul.mubr.f32.gmra.mxu0 %v2257
        %v2400 = vpop.f32.mrf.mxu0
        %v2401 = vadd.f32 0.0, %v2400
        %v2402 = vpop.f32.mrf.mxu0
        %2403 = vmatprep.mubr.f32.mxu0 0.0
        %2404 = vmatmul.mubr.f32.gmra.mxu0 %v2258
        %v2405 = vpop.f32.mrf.mxu0
        %v2406 = vadd.f32 0.0, %v2405
        %v2407 = vpop.f32.mrf.mxu0
        %2408 = vmatprep.mubr.f32.mxu0 0.0
        %2409 = vmatmul.mubr.f32.gmra.mxu0 %v2259
        %v2410 = vpop.f32.mrf.mxu0
        %v2411 = vadd.f32 0.0, %v2410
        %v2412 = vpop.f32.mrf.mxu0
        %2413 = vmatprep.mubr.f32.mxu0 0.0
        %2414 = vmatmul.mubr.f32.gmra.mxu0 %v2260
        %v2415 = vpop.f32.mrf.mxu0
        %v2416 = vadd.f32 0.0, %v2415
        %v2417 = vpop.f32.mrf.mxu0
        %2418 = vmatprep.mubr.f32.mxu0 0.0
        %2419 = vmatmul.mubr.f32.gmra.mxu0 %v2261
        %v2420 = vpop.f32.mrf.mxu0
        %v2421 = vadd.f32 0.0, %v2420
        %v2422 = vpop.f32.mrf.mxu0
        %2423 = vmatprep.mubr.f32.mxu0 0.0
        %2424 = vmatmul.mubr.f32.gmra.mxu0 %v2262
        %v2425 = vpop.f32.mrf.mxu0
        %v2426 = vadd.f32 0.0, %v2425
        %v2427 = vpop.f32.mrf.mxu0
        %2428 = vmatprep.mubr.f32.mxu0 0.0
        %2429 = vmatmul.mubr.f32.gmra.mxu0 %v2263
        %v2430 = vpop.f32.mrf.mxu0
        %v2431 = vadd.f32 0.0, %v2430
        %v2432 = vpop.f32.mrf.mxu0
        %2433 = vmatprep.mubr.f32.mxu0 0.0
        %2434 = vmatmul.mubr.f32.gmra.mxu0 %v2264
        %v2435 = vpop.f32.mrf.mxu0
        %v2436 = vadd.f32 0.0, %v2435
        %v2437 = vpop.f32.mrf.mxu0
        %2438 = vmatprep.mubr.f32.mxu0 0.0
        %2439 = vmatmul.mubr.f32.gmra.mxu0 %v2265
        %v2440 = vpop.f32.mrf.mxu0
        %v2441 = vadd.f32 0.0, %v2440
        %v2442 = vpop.f32.mrf.mxu0
        %2443 = vmatprep.mubr.f32.mxu0 0.0
        %2444 = vmatmul.mubr.f32.gmra.mxu0 %v2266
        %v2445 = vpop.f32.mrf.mxu0
        %v2446 = vadd.f32 0.0, %v2445
        %v2447 = vpop.f32.mrf.mxu0
        %2448 = vmatprep.mubr.f32.mxu0 0.0
        %2449 = vmatmul.mubr.f32.gmra.mxu0 %v2267
        %v2450 = vpop.f32.mrf.mxu0
        %v2451 = vadd.f32 0.0, %v2450
        %v2452 = vpop.f32.mrf.mxu0
        %2453 = vmatprep.mubr.f32.mxu0 0.0
        %2454 = vmatmul.mubr.f32.gmra.mxu0 %v2268
        %v2455 = vpop.f32.mrf.mxu0
        %v2456 = vadd.f32 0.0, %v2455
        %v2457 = vpop.f32.mrf.mxu0
        %2458 = vmatprep.mubr.f32.mxu0 0.0
        %2459 = vmatmul.mubr.f32.gmra.mxu0 %v2269
        %v2460 = vpop.f32.mrf.mxu0
        %v2461 = vadd.f32 0.0, %v2460
        %v2462 = vpop.f32.mrf.mxu0
        %2463 = vmatprep.mubr.f32.mxu0 0.0
        %2464 = vmatmul.mubr.f32.gmra.mxu0 %v2270
        %v2465 = vpop.f32.mrf.mxu0
        %v2466 = vadd.f32 0.0, %v2465
        %v2467 = vpop.f32.mrf.mxu0
        %2468 = vmatprep.mubr.f32.mxu0 0.0
        %2469 = vmatmul.mubr.f32.gmra.mxu0 %v2271
        %v2470 = vpop.f32.mrf.mxu0
        %v2471 = vadd.f32 0.0, %v2470
        %v2472 = vpop.f32.mrf.mxu0
        %2473 = vmatprep.mubr.f32.mxu0 0.0
        %2474 = vmatmul.mubr.f32.gmra.mxu0 %v2272
        %v2475 = vpop.f32.mrf.mxu0
        %v2476 = vadd.f32 0.0, %v2475
        %v2477 = vpop.f32.mrf.mxu0
        %2478 = vmatprep.mubr.f32.mxu0 0.0
        %2479 = vmatmul.mubr.f32.gmra.mxu0 %v2273
        %v2480 = vpop.f32.mrf.mxu0
        %v2481 = vadd.f32 0.0, %v2480
        %v2482 = vpop.f32.mrf.mxu0
        %2483 = vmatprep.mubr.f32.mxu0 0.0
        %2484 = vmatmul.mubr.f32.gmra.mxu0 %v2274
        %v2485 = vpop.f32.mrf.mxu0
        %v2486 = vadd.f32 0.0, %v2485
        %v2487 = vpop.f32.mrf.mxu0
        %2488 = vmatprep.mubr.f32.mxu0 0.0
        %2489 = vmatmul.mubr.f32.gmra.mxu0 %v2275
        %v2490 = vpop.f32.mrf.mxu0
        %v2491 = vadd.f32 0.0, %v2490
        %v2492 = vpop.f32.mrf.mxu0
        %2493 = vmatprep.mubr.f32.mxu0 0.0
        %2494 = vmatmul.mubr.f32.gmra.mxu0 %v2276
        %v2495 = vpop.f32.mrf.mxu0
        %v2496 = vadd.f32 0.0, %v2495
        %v2497 = vpop.f32.mrf.mxu0
        %2498 = vmatprep.mubr.f32.mxu0 0.0
        %2499 = vmatmul.mubr.f32.gmra.mxu0 %v2277
        %v2500 = vpop.f32.mrf.mxu0
        %v2501 = vadd.f32 0.0, %v2500
        %v2502 = vpop.f32.mrf.mxu0
        %2503 = vmatprep.mubr.f32.mxu0 0.0
        %2504 = vmatmul.mubr.f32.gmra.mxu0 %v2278
        %v2505 = vpop.f32.mrf.mxu0
        %v2506 = vadd.f32 0.0, %v2505
        %v2507 = vpop.f32.mrf.mxu0
        %2508 = vmatprep.mubr.f32.mxu0 0.0
        %2509 = vmatmul.mubr.f32.gmra.mxu0 %v2279
        %v2510 = vpop.f32.mrf.mxu0
        %v2511 = vadd.f32 0.0, %v2510
        %v2512 = vpop.f32.mrf.mxu0
        %2513 = vmatprep.mubr.f32.mxu0 0.0
        %2514 = vmatmul.mubr.f32.gmra.mxu0 %v2280
        %v2515 = vpop.f32.mrf.mxu0
        %v2516 = vadd.f32 0.0, %v2515
        %v2517 = vpop.f32.mrf.mxu0
        %2518 = vmatprep.mubr.f32.mxu0 0.0
        %2519 = vmatmul.mubr.f32.gmra.mxu0 %v2281
        %v2520 = vpop.f32.mrf.mxu0
        %v2521 = vadd.f32 0.0, %v2520
        %v2522 = vpop.f32.mrf.mxu0
        %2523 = vmatprep.mubr.f32.mxu0 0.0
        %2524 = vmatmul.mubr.f32.gmra.mxu0 %v2282
        %v2525 = vpop.f32.mrf.mxu0
        %v2526 = vadd.f32 0.0, %v2525
        %v2527 = vpop.f32.mrf.mxu0
        %2528 = vmatprep.mubr.f32.mxu0 0.0
        %2529 = vmatmul.mubr.f32.gmra.mxu0 %v2283
        %v2530 = vpop.f32.mrf.mxu0
        %v2531 = vadd.f32 0.0, %v2530
        %v2532 = vpop.f32.mrf.mxu0
        %2533 = vmatprep.mubr.f32.mxu0 0.0
        %2534 = vmatmul.mubr.f32.gmra.mxu0 %v2284
        %v2535 = vpop.f32.mrf.mxu0
        %v2536 = vadd.f32 0.0, %v2535
        %v2537 = vpop.f32.mrf.mxu0
        %2538 = vmatprep.mubr.f32.mxu0 0.0
        %2539 = vmatmul.mubr.f32.gmra.mxu0 %v2285
        %v2540 = vpop.f32.mrf.mxu0
        %v2541 = vadd.f32 0.0, %v2540
        %v2542 = vpop.f32.mrf.mxu0
        %2543 = vmatprep.mubr.f32.mxu0 0.0
        %2544 = vmatmul.mubr.f32.gmra.mxu0 %v2286
        %v2545 = vpop.f32.mrf.mxu0
        %v2546 = vadd.f32 0.0, %v2545
        %v2547 = vpop.f32.mrf.mxu0
        %2548 = vdwg.mxu0
        %v2549 = vadd.f32 %v2215, %v2371
        %v2550 = vadd.f32 %v2216, %v2376
        %v2551 = vadd.f32 %v2217, %v2381
        %v2552 = vadd.f32 %v2218, %v2386
        %v2553 = vadd.f32 %v2219, %v2391
        %v2554 = vadd.f32 %v2220, %v2396
        %v2555 = vadd.f32 %v2221, %v2401
        %v2556 = vadd.f32 %v2222, %v2406
        %v2557 = vadd.f32 %v2223, %v2411
        %v2558 = vadd.f32 %v2224, %v2416
        %v2559 = vadd.f32 %v2225, %v2421
        %v2560 = vadd.f32 %v2226, %v2426
        %v2561 = vadd.f32 %v2227, %v2431
        %v2562 = vadd.f32 %v2228, %v2436
        %v2563 = vadd.f32 %v2229, %v2441
        %v2564 = vadd.f32 %v2230, %v2446
        %v2565 = vadd.f32 %v2231, %v2451
        %v2566 = vadd.f32 %v2232, %v2456
        %v2567 = vadd.f32 %v2233, %v2461
        %v2568 = vadd.f32 %v2234, %v2466
        %v2569 = vadd.f32 %v2235, %v2471
        %v2570 = vadd.f32 %v2236, %v2476
        %v2571 = vadd.f32 %v2237, %v2481
        %v2572 = vadd.f32 %v2238, %v2486
        %v2573 = vadd.f32 %v2239, %v2491
        %v2574 = vadd.f32 %v2240, %v2496
        %v2575 = vadd.f32 %v2241, %v2501
        %v2576 = vadd.f32 %v2242, %v2506
        %v2577 = vadd.f32 %v2243, %v2511
        %v2578 = vadd.f32 %v2244, %v2516
        %v2579 = vadd.f32 %v2245, %v2521
        %v2580 = vadd.f32 %v2246, %v2526
        %v2581 = vadd.f32 %v2247, %v2531
        %v2582 = vadd.f32 %v2248, %v2536
        %v2583 = vadd.f32 %v2249, %v2541
        %v2584 = vadd.f32 %v2250, %v2546
        %v2585 = vld [vmem:[%s319 + $0x25] sm:$0xff]
        %v2586 = vld [vmem:[%s319 + $0x2d] sm:$0xff]
        %v2587 = vld [vmem:[%s319 + $0x35] sm:$0xff]
        %v2588 = vld [vmem:[%s319 + $0x3d] sm:$0xff]
        %v2589 = vld [vmem:[%s319 + $0x45] sm:$0xff]
        %v2590 = vld [vmem:[%s319 + $0x4d] sm:$0xff]
        %v2591 = vld [vmem:[%s319 + $0x55] sm:$0xff]
        %v2592 = vld [vmem:[%s319 + $0x5d] sm:$0xff]
        %v2593 = vld [vmem:[%s319 + $0x65] sm:$0xff]
        %v2594 = vld [vmem:[%s319 + $0x6d] sm:$0xff]
        %v2595 = vld [vmem:[%s319 + $0x75] sm:$0xff]
        %v2596 = vld [vmem:[%s319 + $0x7d] sm:$0xff]
        %v2597 = vld [vmem:[%s319 + $0x85] sm:$0xff]
        %v2598 = vld [vmem:[%s319 + $0x8d] sm:$0xff]
        %v2599 = vld [vmem:[%s319 + $0x95] sm:$0xff]
        %v2600 = vld [vmem:[%s319 + $0x9d] sm:$0xff]
        %v2601 = vld [vmem:[%s319 + $0xa5] sm:$0xff]
        %v2602 = vld [vmem:[%s319 + $0xad] sm:$0xff]
        %v2603 = vld [vmem:[%s319 + $0xb5] sm:$0xff]
        %v2604 = vld [vmem:[%s319 + $0xbd] sm:$0xff]
        %v2605 = vld [vmem:[%s319 + $0xc5] sm:$0xff]
        %v2606 = vld [vmem:[%s319 + $0xcd] sm:$0xff]
        %v2607 = vld [vmem:[%s319 + $0xd5] sm:$0xff]
        %v2608 = vld [vmem:[%s319 + $0xdd] sm:$0xff]
        %v2609 = vld [vmem:[%s319 + $0xe5] sm:$0xff]
        %v2610 = vld [vmem:[%s319 + $0xed] sm:$0xff]
        %v2611 = vld [vmem:[%s319 + $0xf5] sm:$0xff]
        %v2612 = vld [vmem:[%s319 + $0xfd] sm:$0xff]
        %v2613 = vld [vmem:[%s319 + $0x105] sm:$0xff]
        %v2614 = vld [vmem:[%s319 + $0x10d] sm:$0xff]
        %v2615 = vld [vmem:[%s319 + $0x115] sm:$0xff]
        %v2616 = vld [vmem:[%s319 + $0x11d] sm:$0xff]
        %v2617 = vld [vmem:[%s319 + $0x125] sm:$0xff]
        %v2618 = vld [vmem:[%s319 + $0x12d] sm:$0xff]
        %v2619 = vld [vmem:[%s319 + $0x135] sm:$0xff]
        %v2620 = vld [vmem:[%s319 + $0x13d] sm:$0xff]
        %s2621 = scalar_lea.vmem %s1, 896
        %v2622 = vld [vmem:[%s2621] sm:$0xff]
        %v2623 = vld [vmem:[%s2621 + $0x8] sm:$0xff]
        %v2624 = vld [vmem:[%s2621 + $0x10] sm:$0xff]
        %v2625 = vld [vmem:[%s2621 + $0x18] sm:$0xff]
        %v2626 = vld [vmem:[%s2621 + $0x20] sm:$0xff]
        %v2627 = vld [vmem:[%s2621 + $0x28] sm:$0xff]
        %v2628 = vld [vmem:[%s2621 + $0x30] sm:$0xff]
        %v2629 = vld [vmem:[%s2621 + $0x38] sm:$0xff]
        %v2630 = vld [vmem:[%s2621 + $0x40] sm:$0xff]
        %v2631 = vld [vmem:[%s2621 + $0x48] sm:$0xff]
        %v2632 = vld [vmem:[%s2621 + $0x50] sm:$0xff]
        %v2633 = vld [vmem:[%s2621 + $0x58] sm:$0xff]
        %v2634 = vld [vmem:[%s2621 + $0x60] sm:$0xff]
        %v2635 = vld [vmem:[%s2621 + $0x68] sm:$0xff]
        %v2636 = vld [vmem:[%s2621 + $0x70] sm:$0xff]
        %v2637 = vld [vmem:[%s2621 + $0x78] sm:$0xff]
        %2638 = vmatprep.subr.mxu0 0.0
        %2639 = vmatpush1.msra.mxu0 %v2637
        %2640 = vmatprep.subr.mxu0 0.0
        %2641 = vmatpush1.msra.mxu0 %v2636
        %2642 = vmatprep.subr.mxu0 0.0
        %2643 = vmatpush1.msra.mxu0 %v2635
        %2644 = vmatprep.subr.mxu0 0.0
        %2645 = vmatpush1.msra.mxu0 %v2634
        %2646 = vmatprep.subr.mxu0 0.0
        %2647 = vmatpush1.msra.mxu0 %v2633
        %2648 = vmatprep.subr.mxu0 0.0
        %2649 = vmatpush1.msra.mxu0 %v2632
        %2650 = vmatprep.subr.mxu0 0.0
        %2651 = vmatpush1.msra.mxu0 %v2631
        %2652 = vmatprep.subr.mxu0 0.0
        %2653 = vmatpush1.msra.mxu0 %v2630
        %2654 = vmatprep.subr.mxu0 0.0
        %2655 = vmatpush1.msra.mxu0 %v2629
        %2656 = vmatprep.subr.mxu0 0.0
        %2657 = vmatpush1.msra.mxu0 %v2628
        %2658 = vmatprep.subr.mxu0 0.0
        %2659 = vmatpush1.msra.mxu0 %v2627
        %2660 = vmatprep.subr.mxu0 0.0
        %2661 = vmatpush1.msra.mxu0 %v2626
        %2662 = vmatprep.subr.mxu0 0.0
        %2663 = vmatpush1.msra.mxu0 %v2625
        %2664 = vmatprep.subr.mxu0 0.0
        %2665 = vmatpush1.msra.mxu0 %v2624
        %2666 = vmatprep.subr.mxu0 0.0
        %2667 = vmatpush1.msra.mxu0 %v2623
        %2668 = vmatprep.subr.mxu0 0.0
        %2669 = vmatpush1.msra.mxu0 %v2622
        %2670 = vmatprep.subr.mxu0 0.0
        %2671 = vmatpush2.msra.mxu0 0.0
        %2672 = vmatprep.subr.mxu0 0.0
        %2673 = vmatpush2.msra.mxu0 0.0
        %2674 = vmatprep.subr.mxu0 0.0
        %2675 = vmatpush2.msra.mxu0 0.0
        %2676 = vmatprep.subr.mxu0 0.0
        %2677 = vmatpush2.msra.mxu0 0.0
        %2678 = vmatprep.subr.mxu0 0.0
        %2679 = vmatpush2.msra.mxu0 0.0
        %2680 = vmatprep.subr.mxu0 0.0
        %2681 = vmatpush2.msra.mxu0 0.0
        %2682 = vmatprep.subr.mxu0 0.0
        %2683 = vmatpush2.msra.mxu0 0.0
        %2684 = vmatprep.subr.mxu0 0.0
        %2685 = vmatpush2.msra.mxu0 0.0
        %2686 = vmatprep.subr.mxu0 0.0
        %2687 = vmatpush2.msra.mxu0 0.0
        %2688 = vmatprep.subr.mxu0 0.0
        %2689 = vmatpush2.msra.mxu0 0.0
        %2690 = vmatprep.subr.mxu0 0.0
        %2691 = vmatpush2.msra.mxu0 0.0
        %2692 = vmatprep.subr.mxu0 0.0
        %2693 = vmatpush2.msra.mxu0 0.0
        %2694 = vmatprep.subr.mxu0 0.0
        %2695 = vmatpush2.msra.mxu0 0.0
        %2696 = vmatprep.subr.mxu0 0.0
        %2697 = vmatpush2.msra.mxu0 0.0
        %2698 = vmatprep.subr.mxu0 0.0
        %2699 = vmatpush2.msra.mxu0 0.0
        %2700 = vmatprep.subr.mxu0 0.0
        %2701 = vmatpush2.msra.mxu0 0.0
        %2702 = vmatprep.mubr.f32.mxu0 0.0
        %2703 = vmatmul.mubr.f32.gmra.mxu0 %v2585
        %v2704 = vpop.f32.mrf.mxu0
        %v2705 = vadd.f32 0.0, %v2704
        %v2706 = vpop.f32.mrf.mxu0
        %2707 = vmatprep.mubr.f32.mxu0 0.0
        %2708 = vmatmul.mubr.f32.gmra.mxu0 %v2586
        %v2709 = vpop.f32.mrf.mxu0
        %v2710 = vadd.f32 0.0, %v2709
        %v2711 = vpop.f32.mrf.mxu0
        %2712 = vmatprep.mubr.f32.mxu0 0.0
        %2713 = vmatmul.mubr.f32.gmra.mxu0 %v2587
        %v2714 = vpop.f32.mrf.mxu0
        %v2715 = vadd.f32 0.0, %v2714
        %v2716 = vpop.f32.mrf.mxu0
        %2717 = vmatprep.mubr.f32.mxu0 0.0
        %2718 = vmatmul.mubr.f32.gmra.mxu0 %v2588
        %v2719 = vpop.f32.mrf.mxu0
        %v2720 = vadd.f32 0.0, %v2719
        %v2721 = vpop.f32.mrf.mxu0
        %2722 = vmatprep.mubr.f32.mxu0 0.0
        %2723 = vmatmul.mubr.f32.gmra.mxu0 %v2589
        %v2724 = vpop.f32.mrf.mxu0
        %v2725 = vadd.f32 0.0, %v2724
        %v2726 = vpop.f32.mrf.mxu0
        %2727 = vmatprep.mubr.f32.mxu0 0.0
        %2728 = vmatmul.mubr.f32.gmra.mxu0 %v2590
        %v2729 = vpop.f32.mrf.mxu0
        %v2730 = vadd.f32 0.0, %v2729
        %v2731 = vpop.f32.mrf.mxu0
        %2732 = vmatprep.mubr.f32.mxu0 0.0
        %2733 = vmatmul.mubr.f32.gmra.mxu0 %v2591
        %v2734 = vpop.f32.mrf.mxu0
        %v2735 = vadd.f32 0.0, %v2734
        %v2736 = vpop.f32.mrf.mxu0
        %2737 = vmatprep.mubr.f32.mxu0 0.0
        %2738 = vmatmul.mubr.f32.gmra.mxu0 %v2592
        %v2739 = vpop.f32.mrf.mxu0
        %v2740 = vadd.f32 0.0, %v2739
        %v2741 = vpop.f32.mrf.mxu0
        %2742 = vmatprep.mubr.f32.mxu0 0.0
        %2743 = vmatmul.mubr.f32.gmra.mxu0 %v2593
        %v2744 = vpop.f32.mrf.mxu0
        %v2745 = vadd.f32 0.0, %v2744
        %v2746 = vpop.f32.mrf.mxu0
        %2747 = vmatprep.mubr.f32.mxu0 0.0
        %2748 = vmatmul.mubr.f32.gmra.mxu0 %v2594
        %v2749 = vpop.f32.mrf.mxu0
        %v2750 = vadd.f32 0.0, %v2749
        %v2751 = vpop.f32.mrf.mxu0
        %2752 = vmatprep.mubr.f32.mxu0 0.0
        %2753 = vmatmul.mubr.f32.gmra.mxu0 %v2595
        %v2754 = vpop.f32.mrf.mxu0
        %v2755 = vadd.f32 0.0, %v2754
        %v2756 = vpop.f32.mrf.mxu0
        %2757 = vmatprep.mubr.f32.mxu0 0.0
        %2758 = vmatmul.mubr.f32.gmra.mxu0 %v2596
        %v2759 = vpop.f32.mrf.mxu0
        %v2760 = vadd.f32 0.0, %v2759
        %v2761 = vpop.f32.mrf.mxu0
        %2762 = vmatprep.mubr.f32.mxu0 0.0
        %2763 = vmatmul.mubr.f32.gmra.mxu0 %v2597
        %v2764 = vpop.f32.mrf.mxu0
        %v2765 = vadd.f32 0.0, %v2764
        %v2766 = vpop.f32.mrf.mxu0
        %2767 = vmatprep.mubr.f32.mxu0 0.0
        %2768 = vmatmul.mubr.f32.gmra.mxu0 %v2598
        %v2769 = vpop.f32.mrf.mxu0
        %v2770 = vadd.f32 0.0, %v2769
        %v2771 = vpop.f32.mrf.mxu0
        %2772 = vmatprep.mubr.f32.mxu0 0.0
        %2773 = vmatmul.mubr.f32.gmra.mxu0 %v2599
        %v2774 = vpop.f32.mrf.mxu0
        %v2775 = vadd.f32 0.0, %v2774
        %v2776 = vpop.f32.mrf.mxu0
        %2777 = vmatprep.mubr.f32.mxu0 0.0
        %2778 = vmatmul.mubr.f32.gmra.mxu0 %v2600
        %v2779 = vpop.f32.mrf.mxu0
        %v2780 = vadd.f32 0.0, %v2779
        %v2781 = vpop.f32.mrf.mxu0
        %2782 = vmatprep.mubr.f32.mxu0 0.0
        %2783 = vmatmul.mubr.f32.gmra.mxu0 %v2601
        %v2784 = vpop.f32.mrf.mxu0
        %v2785 = vadd.f32 0.0, %v2784
        %v2786 = vpop.f32.mrf.mxu0
        %2787 = vmatprep.mubr.f32.mxu0 0.0
        %2788 = vmatmul.mubr.f32.gmra.mxu0 %v2602
        %v2789 = vpop.f32.mrf.mxu0
        %v2790 = vadd.f32 0.0, %v2789
        %v2791 = vpop.f32.mrf.mxu0
        %2792 = vmatprep.mubr.f32.mxu0 0.0
        %2793 = vmatmul.mubr.f32.gmra.mxu0 %v2603
        %v2794 = vpop.f32.mrf.mxu0
        %v2795 = vadd.f32 0.0, %v2794
        %v2796 = vpop.f32.mrf.mxu0
        %2797 = vmatprep.mubr.f32.mxu0 0.0
        %2798 = vmatmul.mubr.f32.gmra.mxu0 %v2604
        %v2799 = vpop.f32.mrf.mxu0
        %v2800 = vadd.f32 0.0, %v2799
        %v2801 = vpop.f32.mrf.mxu0
        %2802 = vmatprep.mubr.f32.mxu0 0.0
        %2803 = vmatmul.mubr.f32.gmra.mxu0 %v2605
        %v2804 = vpop.f32.mrf.mxu0
        %v2805 = vadd.f32 0.0, %v2804
        %v2806 = vpop.f32.mrf.mxu0
        %2807 = vmatprep.mubr.f32.mxu0 0.0
        %2808 = vmatmul.mubr.f32.gmra.mxu0 %v2606
        %v2809 = vpop.f32.mrf.mxu0
        %v2810 = vadd.f32 0.0, %v2809
        %v2811 = vpop.f32.mrf.mxu0
        %2812 = vmatprep.mubr.f32.mxu0 0.0
        %2813 = vmatmul.mubr.f32.gmra.mxu0 %v2607
        %v2814 = vpop.f32.mrf.mxu0
        %v2815 = vadd.f32 0.0, %v2814
        %v2816 = vpop.f32.mrf.mxu0
        %2817 = vmatprep.mubr.f32.mxu0 0.0
        %2818 = vmatmul.mubr.f32.gmra.mxu0 %v2608
        %v2819 = vpop.f32.mrf.mxu0
        %v2820 = vadd.f32 0.0, %v2819
        %v2821 = vpop.f32.mrf.mxu0
        %2822 = vmatprep.mubr.f32.mxu0 0.0
        %2823 = vmatmul.mubr.f32.gmra.mxu0 %v2609
        %v2824 = vpop.f32.mrf.mxu0
        %v2825 = vadd.f32 0.0, %v2824
        %v2826 = vpop.f32.mrf.mxu0
        %2827 = vmatprep.mubr.f32.mxu0 0.0
        %2828 = vmatmul.mubr.f32.gmra.mxu0 %v2610
        %v2829 = vpop.f32.mrf.mxu0
        %v2830 = vadd.f32 0.0, %v2829
        %v2831 = vpop.f32.mrf.mxu0
        %2832 = vmatprep.mubr.f32.mxu0 0.0
        %2833 = vmatmul.mubr.f32.gmra.mxu0 %v2611
        %v2834 = vpop.f32.mrf.mxu0
        %v2835 = vadd.f32 0.0, %v2834
        %v2836 = vpop.f32.mrf.mxu0
        %2837 = vmatprep.mubr.f32.mxu0 0.0
        %2838 = vmatmul.mubr.f32.gmra.mxu0 %v2612
        %v2839 = vpop.f32.mrf.mxu0
        %v2840 = vadd.f32 0.0, %v2839
        %v2841 = vpop.f32.mrf.mxu0
        %2842 = vmatprep.mubr.f32.mxu0 0.0
        %2843 = vmatmul.mubr.f32.gmra.mxu0 %v2613
        %v2844 = vpop.f32.mrf.mxu0
        %v2845 = vadd.f32 0.0, %v2844
        %v2846 = vpop.f32.mrf.mxu0
        %2847 = vmatprep.mubr.f32.mxu0 0.0
        %2848 = vmatmul.mubr.f32.gmra.mxu0 %v2614
        %v2849 = vpop.f32.mrf.mxu0
        %v2850 = vadd.f32 0.0, %v2849
        %v2851 = vpop.f32.mrf.mxu0
        %2852 = vmatprep.mubr.f32.mxu0 0.0
        %2853 = vmatmul.mubr.f32.gmra.mxu0 %v2615
        %v2854 = vpop.f32.mrf.mxu0
        %v2855 = vadd.f32 0.0, %v2854
        %v2856 = vpop.f32.mrf.mxu0
        %2857 = vmatprep.mubr.f32.mxu0 0.0
        %2858 = vmatmul.mubr.f32.gmra.mxu0 %v2616
        %v2859 = vpop.f32.mrf.mxu0
        %v2860 = vadd.f32 0.0, %v2859
        %v2861 = vpop.f32.mrf.mxu0
        %2862 = vmatprep.mubr.f32.mxu0 0.0
        %2863 = vmatmul.mubr.f32.gmra.mxu0 %v2617
        %v2864 = vpop.f32.mrf.mxu0
        %v2865 = vadd.f32 0.0, %v2864
        %v2866 = vpop.f32.mrf.mxu0
        %2867 = vmatprep.mubr.f32.mxu0 0.0
        %2868 = vmatmul.mubr.f32.gmra.mxu0 %v2618
        %v2869 = vpop.f32.mrf.mxu0
        %v2870 = vadd.f32 0.0, %v2869
        %v2871 = vpop.f32.mrf.mxu0
        %2872 = vmatprep.mubr.f32.mxu0 0.0
        %2873 = vmatmul.mubr.f32.gmra.mxu0 %v2619
        %v2874 = vpop.f32.mrf.mxu0
        %v2875 = vadd.f32 0.0, %v2874
        %v2876 = vpop.f32.mrf.mxu0
        %2877 = vmatprep.mubr.f32.mxu0 0.0
        %2878 = vmatmul.mubr.f32.gmra.mxu0 %v2620
        %v2879 = vpop.f32.mrf.mxu0
        %v2880 = vadd.f32 0.0, %v2879
        %v2881 = vpop.f32.mrf.mxu0
        %2882 = vdwg.mxu0
        %v2883 = vadd.f32 %v2549, %v2705
        %v2884 = vadd.f32 %v2550, %v2710
        %v2885 = vadd.f32 %v2551, %v2715
        %v2886 = vadd.f32 %v2552, %v2720
        %v2887 = vadd.f32 %v2553, %v2725
        %v2888 = vadd.f32 %v2554, %v2730
        %v2889 = vadd.f32 %v2555, %v2735
        %v2890 = vadd.f32 %v2556, %v2740
        %v2891 = vadd.f32 %v2557, %v2745
        %v2892 = vadd.f32 %v2558, %v2750
        %v2893 = vadd.f32 %v2559, %v2755
        %v2894 = vadd.f32 %v2560, %v2760
        %v2895 = vadd.f32 %v2561, %v2765
        %v2896 = vadd.f32 %v2562, %v2770
        %v2897 = vadd.f32 %v2563, %v2775
        %v2898 = vadd.f32 %v2564, %v2780
        %v2899 = vadd.f32 %v2565, %v2785
        %v2900 = vadd.f32 %v2566, %v2790
        %v2901 = vadd.f32 %v2567, %v2795
        %v2902 = vadd.f32 %v2568, %v2800
        %v2903 = vadd.f32 %v2569, %v2805
        %v2904 = vadd.f32 %v2570, %v2810
        %v2905 = vadd.f32 %v2571, %v2815
        %v2906 = vadd.f32 %v2572, %v2820
        %v2907 = vadd.f32 %v2573, %v2825
        %v2908 = vadd.f32 %v2574, %v2830
        %v2909 = vadd.f32 %v2575, %v2835
        %v2910 = vadd.f32 %v2576, %v2840
        %v2911 = vadd.f32 %v2577, %v2845
        %v2912 = vadd.f32 %v2578, %v2850
        %v2913 = vadd.f32 %v2579, %v2855
        %v2914 = vadd.f32 %v2580, %v2860
        %v2915 = vadd.f32 %v2581, %v2865
        %v2916 = vadd.f32 %v2582, %v2870
        %v2917 = vadd.f32 %v2583, %v2875
        %v2918 = vadd.f32 %v2584, %v2880
        %v2919 = vld [vmem:[%s319 + $0x26] sm:$0xff]
        %v2920 = vld [vmem:[%s319 + $0x2e] sm:$0xff]
        %v2921 = vld [vmem:[%s319 + $0x36] sm:$0xff]
        %v2922 = vld [vmem:[%s319 + $0x3e] sm:$0xff]
        %v2923 = vld [vmem:[%s319 + $0x46] sm:$0xff]
        %v2924 = vld [vmem:[%s319 + $0x4e] sm:$0xff]
        %v2925 = vld [vmem:[%s319 + $0x56] sm:$0xff]
        %v2926 = vld [vmem:[%s319 + $0x5e] sm:$0xff]
        %v2927 = vld [vmem:[%s319 + $0x66] sm:$0xff]
        %v2928 = vld [vmem:[%s319 + $0x6e] sm:$0xff]
        %v2929 = vld [vmem:[%s319 + $0x76] sm:$0xff]
        %v2930 = vld [vmem:[%s319 + $0x7e] sm:$0xff]
        %v2931 = vld [vmem:[%s319 + $0x86] sm:$0xff]
        %v2932 = vld [vmem:[%s319 + $0x8e] sm:$0xff]
        %v2933 = vld [vmem:[%s319 + $0x96] sm:$0xff]
        %v2934 = vld [vmem:[%s319 + $0x9e] sm:$0xff]
        %v2935 = vld [vmem:[%s319 + $0xa6] sm:$0xff]
        %v2936 = vld [vmem:[%s319 + $0xae] sm:$0xff]
        %v2937 = vld [vmem:[%s319 + $0xb6] sm:$0xff]
        %v2938 = vld [vmem:[%s319 + $0xbe] sm:$0xff]
        %v2939 = vld [vmem:[%s319 + $0xc6] sm:$0xff]
        %v2940 = vld [vmem:[%s319 + $0xce] sm:$0xff]
        %v2941 = vld [vmem:[%s319 + $0xd6] sm:$0xff]
        %v2942 = vld [vmem:[%s319 + $0xde] sm:$0xff]
        %v2943 = vld [vmem:[%s319 + $0xe6] sm:$0xff]
        %v2944 = vld [vmem:[%s319 + $0xee] sm:$0xff]
        %v2945 = vld [vmem:[%s319 + $0xf6] sm:$0xff]
        %v2946 = vld [vmem:[%s319 + $0xfe] sm:$0xff]
        %v2947 = vld [vmem:[%s319 + $0x106] sm:$0xff]
        %v2948 = vld [vmem:[%s319 + $0x10e] sm:$0xff]
        %v2949 = vld [vmem:[%s319 + $0x116] sm:$0xff]
        %v2950 = vld [vmem:[%s319 + $0x11e] sm:$0xff]
        %v2951 = vld [vmem:[%s319 + $0x126] sm:$0xff]
        %v2952 = vld [vmem:[%s319 + $0x12e] sm:$0xff]
        %v2953 = vld [vmem:[%s319 + $0x136] sm:$0xff]
        %v2954 = vld [vmem:[%s319 + $0x13e] sm:$0xff]
        %s2955 = scalar_lea.vmem %s1, 1024
        %v2956 = vld [vmem:[%s2955] sm:$0xff]
        %v2957 = vld [vmem:[%s2955 + $0x8] sm:$0xff]
        %v2958 = vld [vmem:[%s2955 + $0x10] sm:$0xff]
        %v2959 = vld [vmem:[%s2955 + $0x18] sm:$0xff]
        %v2960 = vld [vmem:[%s2955 + $0x20] sm:$0xff]
        %v2961 = vld [vmem:[%s2955 + $0x28] sm:$0xff]
        %v2962 = vld [vmem:[%s2955 + $0x30] sm:$0xff]
        %v2963 = vld [vmem:[%s2955 + $0x38] sm:$0xff]
        %v2964 = vld [vmem:[%s2955 + $0x40] sm:$0xff]
        %v2965 = vld [vmem:[%s2955 + $0x48] sm:$0xff]
        %v2966 = vld [vmem:[%s2955 + $0x50] sm:$0xff]
        %v2967 = vld [vmem:[%s2955 + $0x58] sm:$0xff]
        %v2968 = vld [vmem:[%s2955 + $0x60] sm:$0xff]
        %v2969 = vld [vmem:[%s2955 + $0x68] sm:$0xff]
        %v2970 = vld [vmem:[%s2955 + $0x70] sm:$0xff]
        %v2971 = vld [vmem:[%s2955 + $0x78] sm:$0xff]
        %2972 = vmatprep.subr.mxu0 0.0
        %2973 = vmatpush1.msra.mxu0 %v2971
        %2974 = vmatprep.subr.mxu0 0.0
        %2975 = vmatpush1.msra.mxu0 %v2970
        %2976 = vmatprep.subr.mxu0 0.0
        %2977 = vmatpush1.msra.mxu0 %v2969
        %2978 = vmatprep.subr.mxu0 0.0
        %2979 = vmatpush1.msra.mxu0 %v2968
        %2980 = vmatprep.subr.mxu0 0.0
        %2981 = vmatpush1.msra.mxu0 %v2967
        %2982 = vmatprep.subr.mxu0 0.0
        %2983 = vmatpush1.msra.mxu0 %v2966
        %2984 = vmatprep.subr.mxu0 0.0
        %2985 = vmatpush1.msra.mxu0 %v2965
        %2986 = vmatprep.subr.mxu0 0.0
        %2987 = vmatpush1.msra.mxu0 %v2964
        %2988 = vmatprep.subr.mxu0 0.0
        %2989 = vmatpush1.msra.mxu0 %v2963
        %2990 = vmatprep.subr.mxu0 0.0
        %2991 = vmatpush1.msra.mxu0 %v2962
        %2992 = vmatprep.subr.mxu0 0.0
        %2993 = vmatpush1.msra.mxu0 %v2961
        %2994 = vmatprep.subr.mxu0 0.0
        %2995 = vmatpush1.msra.mxu0 %v2960
        %2996 = vmatprep.subr.mxu0 0.0
        %2997 = vmatpush1.msra.mxu0 %v2959
        %2998 = vmatprep.subr.mxu0 0.0
        %2999 = vmatpush1.msra.mxu0 %v2958
        %3000 = vmatprep.subr.mxu0 0.0
        %3001 = vmatpush1.msra.mxu0 %v2957
        %3002 = vmatprep.subr.mxu0 0.0
        %3003 = vmatpush1.msra.mxu0 %v2956
        %3004 = vmatprep.subr.mxu0 0.0
        %3005 = vmatpush2.msra.mxu0 0.0
        %3006 = vmatprep.subr.mxu0 0.0
        %3007 = vmatpush2.msra.mxu0 0.0
        %3008 = vmatprep.subr.mxu0 0.0
        %3009 = vmatpush2.msra.mxu0 0.0
        %3010 = vmatprep.subr.mxu0 0.0
        %3011 = vmatpush2.msra.mxu0 0.0
        %3012 = vmatprep.subr.mxu0 0.0
        %3013 = vmatpush2.msra.mxu0 0.0
        %3014 = vmatprep.subr.mxu0 0.0
        %3015 = vmatpush2.msra.mxu0 0.0
        %3016 = vmatprep.subr.mxu0 0.0
        %3017 = vmatpush2.msra.mxu0 0.0
        %3018 = vmatprep.subr.mxu0 0.0
        %3019 = vmatpush2.msra.mxu0 0.0
        %3020 = vmatprep.subr.mxu0 0.0
        %3021 = vmatpush2.msra.mxu0 0.0
        %3022 = vmatprep.subr.mxu0 0.0
        %3023 = vmatpush2.msra.mxu0 0.0
        %3024 = vmatprep.subr.mxu0 0.0
        %3025 = vmatpush2.msra.mxu0 0.0
        %3026 = vmatprep.subr.mxu0 0.0
        %3027 = vmatpush2.msra.mxu0 0.0
        %3028 = vmatprep.subr.mxu0 0.0
        %3029 = vmatpush2.msra.mxu0 0.0
        %3030 = vmatprep.subr.mxu0 0.0
        %3031 = vmatpush2.msra.mxu0 0.0
        %3032 = vmatprep.subr.mxu0 0.0
        %3033 = vmatpush2.msra.mxu0 0.0
        %3034 = vmatprep.subr.mxu0 0.0
        %3035 = vmatpush2.msra.mxu0 0.0
        %3036 = vmatprep.mubr.f32.mxu0 0.0
        %3037 = vmatmul.mubr.f32.gmra.mxu0 %v2919
        %v3038 = vpop.f32.mrf.mxu0
        %v3039 = vadd.f32 0.0, %v3038
        %v3040 = vpop.f32.mrf.mxu0
        %3041 = vmatprep.mubr.f32.mxu0 0.0
        %3042 = vmatmul.mubr.f32.gmra.mxu0 %v2920
        %v3043 = vpop.f32.mrf.mxu0
        %v3044 = vadd.f32 0.0, %v3043
        %v3045 = vpop.f32.mrf.mxu0
        %3046 = vmatprep.mubr.f32.mxu0 0.0
        %3047 = vmatmul.mubr.f32.gmra.mxu0 %v2921
        %v3048 = vpop.f32.mrf.mxu0
        %v3049 = vadd.f32 0.0, %v3048
        %v3050 = vpop.f32.mrf.mxu0
        %3051 = vmatprep.mubr.f32.mxu0 0.0
        %3052 = vmatmul.mubr.f32.gmra.mxu0 %v2922
        %v3053 = vpop.f32.mrf.mxu0
        %v3054 = vadd.f32 0.0, %v3053
        %v3055 = vpop.f32.mrf.mxu0
        %3056 = vmatprep.mubr.f32.mxu0 0.0
        %3057 = vmatmul.mubr.f32.gmra.mxu0 %v2923
        %v3058 = vpop.f32.mrf.mxu0
        %v3059 = vadd.f32 0.0, %v3058
        %v3060 = vpop.f32.mrf.mxu0
        %3061 = vmatprep.mubr.f32.mxu0 0.0
        %3062 = vmatmul.mubr.f32.gmra.mxu0 %v2924
        %v3063 = vpop.f32.mrf.mxu0
        %v3064 = vadd.f32 0.0, %v3063
        %v3065 = vpop.f32.mrf.mxu0
        %3066 = vmatprep.mubr.f32.mxu0 0.0
        %3067 = vmatmul.mubr.f32.gmra.mxu0 %v2925
        %v3068 = vpop.f32.mrf.mxu0
        %v3069 = vadd.f32 0.0, %v3068
        %v3070 = vpop.f32.mrf.mxu0
        %3071 = vmatprep.mubr.f32.mxu0 0.0
        %3072 = vmatmul.mubr.f32.gmra.mxu0 %v2926
        %v3073 = vpop.f32.mrf.mxu0
        %v3074 = vadd.f32 0.0, %v3073
        %v3075 = vpop.f32.mrf.mxu0
        %3076 = vmatprep.mubr.f32.mxu0 0.0
        %3077 = vmatmul.mubr.f32.gmra.mxu0 %v2927
        %v3078 = vpop.f32.mrf.mxu0
        %v3079 = vadd.f32 0.0, %v3078
        %v3080 = vpop.f32.mrf.mxu0
        %3081 = vmatprep.mubr.f32.mxu0 0.0
        %3082 = vmatmul.mubr.f32.gmra.mxu0 %v2928
        %v3083 = vpop.f32.mrf.mxu0
        %v3084 = vadd.f32 0.0, %v3083
        %v3085 = vpop.f32.mrf.mxu0
        %3086 = vmatprep.mubr.f32.mxu0 0.0
        %3087 = vmatmul.mubr.f32.gmra.mxu0 %v2929
        %v3088 = vpop.f32.mrf.mxu0
        %v3089 = vadd.f32 0.0, %v3088
        %v3090 = vpop.f32.mrf.mxu0
        %3091 = vmatprep.mubr.f32.mxu0 0.0
        %3092 = vmatmul.mubr.f32.gmra.mxu0 %v2930
        %v3093 = vpop.f32.mrf.mxu0
        %v3094 = vadd.f32 0.0, %v3093
        %v3095 = vpop.f32.mrf.mxu0
        %3096 = vmatprep.mubr.f32.mxu0 0.0
        %3097 = vmatmul.mubr.f32.gmra.mxu0 %v2931
        %v3098 = vpop.f32.mrf.mxu0
        %v3099 = vadd.f32 0.0, %v3098
        %v3100 = vpop.f32.mrf.mxu0
        %3101 = vmatprep.mubr.f32.mxu0 0.0
        %3102 = vmatmul.mubr.f32.gmra.mxu0 %v2932
        %v3103 = vpop.f32.mrf.mxu0
        %v3104 = vadd.f32 0.0, %v3103
        %v3105 = vpop.f32.mrf.mxu0
        %3106 = vmatprep.mubr.f32.mxu0 0.0
        %3107 = vmatmul.mubr.f32.gmra.mxu0 %v2933
        %v3108 = vpop.f32.mrf.mxu0
        %v3109 = vadd.f32 0.0, %v3108
        %v3110 = vpop.f32.mrf.mxu0
        %3111 = vmatprep.mubr.f32.mxu0 0.0
        %3112 = vmatmul.mubr.f32.gmra.mxu0 %v2934
        %v3113 = vpop.f32.mrf.mxu0
        %v3114 = vadd.f32 0.0, %v3113
        %v3115 = vpop.f32.mrf.mxu0
        %3116 = vmatprep.mubr.f32.mxu0 0.0
        %3117 = vmatmul.mubr.f32.gmra.mxu0 %v2935
        %v3118 = vpop.f32.mrf.mxu0
        %v3119 = vadd.f32 0.0, %v3118
        %v3120 = vpop.f32.mrf.mxu0
        %3121 = vmatprep.mubr.f32.mxu0 0.0
        %3122 = vmatmul.mubr.f32.gmra.mxu0 %v2936
        %v3123 = vpop.f32.mrf.mxu0
        %v3124 = vadd.f32 0.0, %v3123
        %v3125 = vpop.f32.mrf.mxu0
        %3126 = vmatprep.mubr.f32.mxu0 0.0
        %3127 = vmatmul.mubr.f32.gmra.mxu0 %v2937
        %v3128 = vpop.f32.mrf.mxu0
        %v3129 = vadd.f32 0.0, %v3128
        %v3130 = vpop.f32.mrf.mxu0
        %3131 = vmatprep.mubr.f32.mxu0 0.0
        %3132 = vmatmul.mubr.f32.gmra.mxu0 %v2938
        %v3133 = vpop.f32.mrf.mxu0
        %v3134 = vadd.f32 0.0, %v3133
        %v3135 = vpop.f32.mrf.mxu0
        %3136 = vmatprep.mubr.f32.mxu0 0.0
        %3137 = vmatmul.mubr.f32.gmra.mxu0 %v2939
        %v3138 = vpop.f32.mrf.mxu0
        %v3139 = vadd.f32 0.0, %v3138
        %v3140 = vpop.f32.mrf.mxu0
        %3141 = vmatprep.mubr.f32.mxu0 0.0
        %3142 = vmatmul.mubr.f32.gmra.mxu0 %v2940
        %v3143 = vpop.f32.mrf.mxu0
        %v3144 = vadd.f32 0.0, %v3143
        %v3145 = vpop.f32.mrf.mxu0
        %3146 = vmatprep.mubr.f32.mxu0 0.0
        %3147 = vmatmul.mubr.f32.gmra.mxu0 %v2941
        %v3148 = vpop.f32.mrf.mxu0
        %v3149 = vadd.f32 0.0, %v3148
        %v3150 = vpop.f32.mrf.mxu0
        %3151 = vmatprep.mubr.f32.mxu0 0.0
        %3152 = vmatmul.mubr.f32.gmra.mxu0 %v2942
        %v3153 = vpop.f32.mrf.mxu0
        %v3154 = vadd.f32 0.0, %v3153
        %v3155 = vpop.f32.mrf.mxu0
        %3156 = vmatprep.mubr.f32.mxu0 0.0
        %3157 = vmatmul.mubr.f32.gmra.mxu0 %v2943
        %v3158 = vpop.f32.mrf.mxu0
        %v3159 = vadd.f32 0.0, %v3158
        %v3160 = vpop.f32.mrf.mxu0
        %3161 = vmatprep.mubr.f32.mxu0 0.0
        %3162 = vmatmul.mubr.f32.gmra.mxu0 %v2944
        %v3163 = vpop.f32.mrf.mxu0
        %v3164 = vadd.f32 0.0, %v3163
        %v3165 = vpop.f32.mrf.mxu0
        %3166 = vmatprep.mubr.f32.mxu0 0.0
        %3167 = vmatmul.mubr.f32.gmra.mxu0 %v2945
        %v3168 = vpop.f32.mrf.mxu0
        %v3169 = vadd.f32 0.0, %v3168
        %v3170 = vpop.f32.mrf.mxu0
        %3171 = vmatprep.mubr.f32.mxu0 0.0
        %3172 = vmatmul.mubr.f32.gmra.mxu0 %v2946
        %v3173 = vpop.f32.mrf.mxu0
        %v3174 = vadd.f32 0.0, %v3173
        %v3175 = vpop.f32.mrf.mxu0
        %3176 = vmatprep.mubr.f32.mxu0 0.0
        %3177 = vmatmul.mubr.f32.gmra.mxu0 %v2947
        %v3178 = vpop.f32.mrf.mxu0
        %v3179 = vadd.f32 0.0, %v3178
        %v3180 = vpop.f32.mrf.mxu0
        %3181 = vmatprep.mubr.f32.mxu0 0.0
        %3182 = vmatmul.mubr.f32.gmra.mxu0 %v2948
        %v3183 = vpop.f32.mrf.mxu0
        %v3184 = vadd.f32 0.0, %v3183
        %v3185 = vpop.f32.mrf.mxu0
        %3186 = vmatprep.mubr.f32.mxu0 0.0
        %3187 = vmatmul.mubr.f32.gmra.mxu0 %v2949
        %v3188 = vpop.f32.mrf.mxu0
        %v3189 = vadd.f32 0.0, %v3188
        %v3190 = vpop.f32.mrf.mxu0
        %3191 = vmatprep.mubr.f32.mxu0 0.0
        %3192 = vmatmul.mubr.f32.gmra.mxu0 %v2950
        %v3193 = vpop.f32.mrf.mxu0
        %v3194 = vadd.f32 0.0, %v3193
        %v3195 = vpop.f32.mrf.mxu0
        %3196 = vmatprep.mubr.f32.mxu0 0.0
        %3197 = vmatmul.mubr.f32.gmra.mxu0 %v2951
        %v3198 = vpop.f32.mrf.mxu0
        %v3199 = vadd.f32 0.0, %v3198
        %v3200 = vpop.f32.mrf.mxu0
        %3201 = vmatprep.mubr.f32.mxu0 0.0
        %3202 = vmatmul.mubr.f32.gmra.mxu0 %v2952
        %v3203 = vpop.f32.mrf.mxu0
        %v3204 = vadd.f32 0.0, %v3203
        %v3205 = vpop.f32.mrf.mxu0
        %3206 = vmatprep.mubr.f32.mxu0 0.0
        %3207 = vmatmul.mubr.f32.gmra.mxu0 %v2953
        %v3208 = vpop.f32.mrf.mxu0
        %v3209 = vadd.f32 0.0, %v3208
        %v3210 = vpop.f32.mrf.mxu0
        %3211 = vmatprep.mubr.f32.mxu0 0.0
        %3212 = vmatmul.mubr.f32.gmra.mxu0 %v2954
        %v3213 = vpop.f32.mrf.mxu0
        %v3214 = vadd.f32 0.0, %v3213
        %v3215 = vpop.f32.mrf.mxu0
        %3216 = vdwg.mxu0
        %v3217 = vadd.f32 %v2883, %v3039
        %v3218 = vadd.f32 %v2884, %v3044
        %v3219 = vadd.f32 %v2885, %v3049
        %v3220 = vadd.f32 %v2886, %v3054
        %v3221 = vadd.f32 %v2887, %v3059
        %v3222 = vadd.f32 %v2888, %v3064
        %v3223 = vadd.f32 %v2889, %v3069
        %v3224 = vadd.f32 %v2890, %v3074
        %v3225 = vadd.f32 %v2891, %v3079
        %v3226 = vadd.f32 %v2892, %v3084
        %v3227 = vadd.f32 %v2893, %v3089
        %v3228 = vadd.f32 %v2894, %v3094
        %v3229 = vadd.f32 %v2895, %v3099
        %v3230 = vadd.f32 %v2896, %v3104
        %v3231 = vadd.f32 %v2897, %v3109
        %v3232 = vadd.f32 %v2898, %v3114
        %v3233 = vadd.f32 %v2899, %v3119
        %v3234 = vadd.f32 %v2900, %v3124
        %v3235 = vadd.f32 %v2901, %v3129
        %v3236 = vadd.f32 %v2902, %v3134
        %v3237 = vadd.f32 %v2903, %v3139
        %v3238 = vadd.f32 %v2904, %v3144
        %v3239 = vadd.f32 %v2905, %v3149
        %v3240 = vadd.f32 %v2906, %v3154
        %v3241 = vadd.f32 %v2907, %v3159
        %v3242 = vadd.f32 %v2908, %v3164
        %v3243 = vadd.f32 %v2909, %v3169
        %v3244 = vadd.f32 %v2910, %v3174
        %v3245 = vadd.f32 %v2911, %v3179
        %v3246 = vadd.f32 %v2912, %v3184
        %v3247 = vadd.f32 %v2913, %v3189
        %v3248 = vadd.f32 %v2914, %v3194
        %v3249 = vadd.f32 %v2915, %v3199
        %v3250 = vadd.f32 %v2916, %v3204
        %v3251 = vadd.f32 %v2917, %v3209
        %v3252 = vadd.f32 %v2918, %v3214
        %v3253 = vld [vmem:[%s3] sm:$0x1]
        %v3255 = vlaneseq
        %v3256 = vshrl.u32 %v3255, 7
        %v3257 = vsub.s32 0, %v3256
        %v3258 = vrot.slane %v3253, %v3257
        %v3260 = vmul.f32 %v3217, %v3258
        %v3261 = vmul.f32 %v3218, %v3258
        %v3262 = vmul.f32 %v3219, %v3258
        %v3263 = vmul.f32 %v3220, %v3258
        %v3264 = vmul.f32 %v3221, %v3258
        %v3265 = vmul.f32 %v3222, %v3258
        %v3266 = vmul.f32 %v3223, %v3258
        %v3267 = vmul.f32 %v3224, %v3258
        %v3268 = vmul.f32 %v3225, %v3258
        %v3269 = vmul.f32 %v3226, %v3258
        %v3270 = vmul.f32 %v3227, %v3258
        %v3271 = vmul.f32 %v3228, %v3258
        %v3272 = vmul.f32 %v3229, %v3258
        %v3273 = vmul.f32 %v3230, %v3258
        %v3274 = vmul.f32 %v3231, %v3258
        %v3275 = vmul.f32 %v3232, %v3258
        %v3276 = vmul.f32 %v3233, %v3258
        %v3277 = vmul.f32 %v3234, %v3258
        %v3278 = vmul.f32 %v3235, %v3258
        %v3279 = vmul.f32 %v3236, %v3258
        %v3280 = vmul.f32 %v3237, %v3258
        %v3281 = vmul.f32 %v3238, %v3258
        %v3282 = vmul.f32 %v3239, %v3258
        %v3283 = vmul.f32 %v3240, %v3258
        %v3284 = vmul.f32 %v3241, %v3258
        %v3285 = vmul.f32 %v3242, %v3258
        %v3286 = vmul.f32 %v3243, %v3258
        %v3287 = vmul.f32 %v3244, %v3258
        %v3288 = vmul.f32 %v3245, %v3258
        %v3289 = vmul.f32 %v3246, %v3258
        %v3290 = vmul.f32 %v3247, %v3258
        %v3291 = vmul.f32 %v3248, %v3258
        %v3292 = vmul.f32 %v3249, %v3258
        %v3293 = vmul.f32 %v3250, %v3258
        %v3294 = vmul.f32 %v3251, %v3258
        %v3295 = vmul.f32 %v3252, %v3258
        %v3296 = vld [vmem:[%s4] sm:$0x1]
        %v3298 = vlaneseq
        %v3299 = vshrl.u32 %v3298, 7
        %v3300 = vsub.s32 0, %v3299
        %v3301 = vrot.slane %v3296, %v3300
        %v3303 = vadd.f32 %v3260, %v3301
        %v3304 = vadd.f32 %v3261, %v3301
        %v3305 = vadd.f32 %v3262, %v3301
        %v3306 = vadd.f32 %v3263, %v3301
        %v3307 = vadd.f32 %v3264, %v3301
        %v3308 = vadd.f32 %v3265, %v3301
        %v3309 = vadd.f32 %v3266, %v3301
        %v3310 = vadd.f32 %v3267, %v3301
        %v3311 = vadd.f32 %v3268, %v3301
        %v3312 = vadd.f32 %v3269, %v3301
        %v3313 = vadd.f32 %v3270, %v3301
        %v3314 = vadd.f32 %v3271, %v3301
        %v3315 = vadd.f32 %v3272, %v3301
        %v3316 = vadd.f32 %v3273, %v3301
        %v3317 = vadd.f32 %v3274, %v3301
        %v3318 = vadd.f32 %v3275, %v3301
        %v3319 = vadd.f32 %v3276, %v3301
        %v3320 = vadd.f32 %v3277, %v3301
        %v3321 = vadd.f32 %v3278, %v3301
        %v3322 = vadd.f32 %v3279, %v3301
        %v3323 = vadd.f32 %v3280, %v3301
        %v3324 = vadd.f32 %v3281, %v3301
        %v3325 = vadd.f32 %v3282, %v3301
        %v3326 = vadd.f32 %v3283, %v3301
        %v3327 = vadd.f32 %v3284, %v3301
        %v3328 = vadd.f32 %v3285, %v3301
        %v3329 = vadd.f32 %v3286, %v3301
        %v3330 = vadd.f32 %v3287, %v3301
        %v3331 = vadd.f32 %v3288, %v3301
        %v3332 = vadd.f32 %v3289, %v3301
        %v3333 = vadd.f32 %v3290, %v3301
        %v3334 = vadd.f32 %v3291, %v3301
        %v3335 = vadd.f32 %v3292, %v3301
        %v3336 = vadd.f32 %v3293, %v3301
        %v3337 = vadd.f32 %v3294, %v3301
        %v3338 = vadd.f32 %v3295, %v3301
        %s3339 = sld [smem:[#allocation3]]
        %vm3340 = vcmp.ge.f32.partialorder %v3303, 0.0
        %vm3341 = vcmp.ge.f32.partialorder %v3304, 0.0
        %vm3342 = vcmp.ge.f32.partialorder %v3305, 0.0
        %vm3343 = vcmp.ge.f32.partialorder %v3306, 0.0
        %vm3344 = vcmp.ge.f32.partialorder %v3307, 0.0
        %vm3345 = vcmp.ge.f32.partialorder %v3308, 0.0
        %vm3346 = vcmp.ge.f32.partialorder %v3309, 0.0
        %vm3347 = vcmp.ge.f32.partialorder %v3310, 0.0
        %vm3348 = vcmp.ge.f32.partialorder %v3311, 0.0
        %vm3349 = vcmp.ge.f32.partialorder %v3312, 0.0
        %vm3350 = vcmp.ge.f32.partialorder %v3313, 0.0
        %vm3351 = vcmp.ge.f32.partialorder %v3314, 0.0
        %vm3352 = vcmp.ge.f32.partialorder %v3315, 0.0
        %vm3353 = vcmp.ge.f32.partialorder %v3316, 0.0
        %vm3354 = vcmp.ge.f32.partialorder %v3317, 0.0
        %vm3355 = vcmp.ge.f32.partialorder %v3318, 0.0
        %vm3356 = vcmp.ge.f32.partialorder %v3319, 0.0
        %vm3357 = vcmp.ge.f32.partialorder %v3320, 0.0
        %vm3358 = vcmp.ge.f32.partialorder %v3321, 0.0
        %vm3359 = vcmp.ge.f32.partialorder %v3322, 0.0
        %vm3360 = vcmp.ge.f32.partialorder %v3323, 0.0
        %vm3361 = vcmp.ge.f32.partialorder %v3324, 0.0
        %vm3362 = vcmp.ge.f32.partialorder %v3325, 0.0
        %vm3363 = vcmp.ge.f32.partialorder %v3326, 0.0
        %vm3364 = vcmp.ge.f32.partialorder %v3327, 0.0
        %vm3365 = vcmp.ge.f32.partialorder %v3328, 0.0
        %vm3366 = vcmp.ge.f32.partialorder %v3329, 0.0
        %vm3367 = vcmp.ge.f32.partialorder %v3330, 0.0
        %vm3368 = vcmp.ge.f32.partialorder %v3331, 0.0
        %vm3369 = vcmp.ge.f32.partialorder %v3332, 0.0
        %vm3370 = vcmp.ge.f32.partialorder %v3333, 0.0
        %vm3371 = vcmp.ge.f32.partialorder %v3334, 0.0
        %vm3372 = vcmp.ge.f32.partialorder %v3335, 0.0
        %vm3373 = vcmp.ge.f32.partialorder %v3336, 0.0
        %vm3374 = vcmp.ge.f32.partialorder %v3337, 0.0
        %vm3375 = vcmp.ge.f32.partialorder %v3338, 0.0
        %v3376 = vstv %s3339
        %v3377 = vmul.f32 %v3376, %v3303
        %v3378 = vmul.f32 %v3376, %v3304
        %v3379 = vmul.f32 %v3376, %v3305
        %v3380 = vmul.f32 %v3376, %v3306
        %v3381 = vmul.f32 %v3376, %v3307
        %v3382 = vmul.f32 %v3376, %v3308
        %v3383 = vmul.f32 %v3376, %v3309
        %v3384 = vmul.f32 %v3376, %v3310
        %v3385 = vmul.f32 %v3376, %v3311
        %v3386 = vmul.f32 %v3376, %v3312
        %v3387 = vmul.f32 %v3376, %v3313
        %v3388 = vmul.f32 %v3376, %v3314
        %v3389 = vmul.f32 %v3376, %v3315
        %v3390 = vmul.f32 %v3376, %v3316
        %v3391 = vmul.f32 %v3376, %v3317
        %v3392 = vmul.f32 %v3376, %v3318
        %v3393 = vmul.f32 %v3376, %v3319
        %v3394 = vmul.f32 %v3376, %v3320
        %v3395 = vmul.f32 %v3376, %v3321
        %v3396 = vmul.f32 %v3376, %v3322
        %v3397 = vmul.f32 %v3376, %v3323
        %v3398 = vmul.f32 %v3376, %v3324
        %v3399 = vmul.f32 %v3376, %v3325
        %v3400 = vmul.f32 %v3376, %v3326
        %v3401 = vmul.f32 %v3376, %v3327
        %v3402 = vmul.f32 %v3376, %v3328
        %v3403 = vmul.f32 %v3376, %v3329
        %v3404 = vmul.f32 %v3376, %v3330
        %v3405 = vmul.f32 %v3376, %v3331
        %v3406 = vmul.f32 %v3376, %v3332
        %v3407 = vmul.f32 %v3376, %v3333
        %v3408 = vmul.f32 %v3376, %v3334
        %v3409 = vmul.f32 %v3376, %v3335
        %v3410 = vmul.f32 %v3376, %v3336
        %v3411 = vmul.f32 %v3376, %v3337
        %v3412 = vmul.f32 %v3376, %v3338
        %v3413 = vsel %vm3340, %v3303, %v3377
        %v3414 = vsel %vm3341, %v3304, %v3378
        %v3415 = vsel %vm3342, %v3305, %v3379
        %v3416 = vsel %vm3343, %v3306, %v3380
        %v3417 = vsel %vm3344, %v3307, %v3381
        %v3418 = vsel %vm3345, %v3308, %v3382
        %v3419 = vsel %vm3346, %v3309, %v3383
        %v3420 = vsel %vm3347, %v3310, %v3384
        %v3421 = vsel %vm3348, %v3311, %v3385
        %v3422 = vsel %vm3349, %v3312, %v3386
        %v3423 = vsel %vm3350, %v3313, %v3387
        %v3424 = vsel %vm3351, %v3314, %v3388
        %v3425 = vsel %vm3352, %v3315, %v3389
        %v3426 = vsel %vm3353, %v3316, %v3390
        %v3427 = vsel %vm3354, %v3317, %v3391
        %v3428 = vsel %vm3355, %v3318, %v3392
        %v3429 = vsel %vm3356, %v3319, %v3393
        %v3430 = vsel %vm3357, %v3320, %v3394
        %v3431 = vsel %vm3358, %v3321, %v3395
        %v3432 = vsel %vm3359, %v3322, %v3396
        %v3433 = vsel %vm3360, %v3323, %v3397
        %v3434 = vsel %vm3361, %v3324, %v3398
        %v3435 = vsel %vm3362, %v3325, %v3399
        %v3436 = vsel %vm3363, %v3326, %v3400
        %v3437 = vsel %vm3364, %v3327, %v3401
        %v3438 = vsel %vm3365, %v3328, %v3402
        %v3439 = vsel %vm3366, %v3329, %v3403
        %v3440 = vsel %vm3367, %v3330, %v3404
        %v3441 = vsel %vm3368, %v3331, %v3405
        %v3442 = vsel %vm3369, %v3332, %v3406
        %v3443 = vsel %vm3370, %v3333, %v3407
        %v3444 = vsel %vm3371, %v3334, %v3408
        %v3445 = vsel %vm3372, %v3335, %v3409
        %v3446 = vsel %vm3373, %v3336, %v3410
        %v3447 = vsel %vm3374, %v3337, %v3411
        %v3448 = vsel %vm3375, %v3338, %v3412
        %v3449 = vlaneseq
        %v3450 = vshrl.u32 %v3449, 7
        %v3451 = vadd.s32 %v3450, 8
        %v3452 = vadd.s32 %v3450, 16
        %v3453 = vadd.s32 %v3450, 24
        %v3454 = vadd.s32 %v3450, 32
        %v3455 = vadd.s32 %v3450, 40
        %v3456 = vadd.s32 %v3450, 48
        %v3457 = vadd.s32 %v3450, 56
        %v3458 = vadd.s32 %v3450, 64
        %v3459 = vadd.s32 %v3450, 72
        %v3460 = vadd.s32 %v3450, 80
        %v3461 = vadd.s32 %v3450, 88
        %v3462 = vadd.s32 %v3450, 96
        %v3463 = vadd.s32 %v3450, 104
        %v3464 = vadd.s32 %v3450, 112
        %v3465 = vadd.s32 %v3450, 120
        %v3466 = vadd.s32 %v3450, 128
        %v3467 = vadd.s32 %v3450, 136
        %v3468 = vadd.s32 %v3450, 144
        %v3469 = vadd.s32 %v3450, 152
        %v3470 = vadd.s32 %v3450, 160
        %v3471 = vadd.s32 %v3450, 168
        %v3472 = vadd.s32 %v3450, 176
        %v3473 = vadd.s32 %v3450, 184
        %v3474 = vadd.s32 %v3450, 192
        %v3475 = vadd.s32 %v3450, 200
        %v3476 = vadd.s32 %v3450, 208
        %v3477 = vadd.s32 %v3450, 216
        %v3478 = vadd.s32 %v3450, 224
        %v3479 = vadd.s32 %v3450, 232
        %v3480 = vadd.s32 %v3450, 240
        %v3481 = vadd.s32 %v3450, 248
        %v3482 = vadd.s32 %v3450, 256
        %v3483 = vadd.s32 %v3450, 264
        %v3484 = vadd.s32 %v3450, 272
        %v3485 = vadd.s32 %v3450, 280
        %vm3486 = vcmp.lt.s32.totalorder %v3450, 0
        %v3487 = vsub.s32 0, %v3450
        %v3488 = vsel %vm3486, %v3487, %v3450
        %v3489 = vmul.u32.u64.compose %v3488, 3817748708
        %v3490 = vextract.low.u32 %v3489
        %v3491 = vextract.high.u32 %v3489
        %v3492 = vshrl.u32 %v3491, 4
        %v3493 = vmul.u32 %v3492, 18
        %v3494 = vsub.s32 %v3488, %v3493
        %v3495 = vsub.s32 0, %v3494
        %v3496 = vsel %vm3486, %v3495, %v3494
        %vm3497 = vcmp.lt.s32.totalorder %v3451, 0
        %v3498 = vsub.s32 0, %v3451
        %v3499 = vsel %vm3497, %v3498, %v3451
        %v3500 = vmul.u32.u64.compose %v3499, 3817748708
        %v3501 = vextract.low.u32 %v3500
        %v3502 = vextract.high.u32 %v3500
        %v3503 = vshrl.u32 %v3502, 4
        %v3504 = vmul.u32 %v3503, 18
        %v3505 = vsub.s32 %v3499, %v3504
        %v3506 = vsub.s32 0, %v3505
        %v3507 = vsel %vm3497, %v3506, %v3505
        %vm3508 = vcmp.lt.s32.totalorder %v3452, 0
        %v3509 = vsub.s32 0, %v3452
        %v3510 = vsel %vm3508, %v3509, %v3452
        %v3511 = vmul.u32.u64.compose %v3510, 3817748708
        %v3512 = vextract.low.u32 %v3511
        %v3513 = vextract.high.u32 %v3511
        %v3514 = vshrl.u32 %v3513, 4
        %v3515 = vmul.u32 %v3514, 18
        %v3516 = vsub.s32 %v3510, %v3515
        %v3517 = vsub.s32 0, %v3516
        %v3518 = vsel %vm3508, %v3517, %v3516
        %vm3519 = vcmp.lt.s32.totalorder %v3453, 0
        %v3520 = vsub.s32 0, %v3453
        %v3521 = vsel %vm3519, %v3520, %v3453
        %v3522 = vmul.u32.u64.compose %v3521, 3817748708
        %v3523 = vextract.low.u32 %v3522
        %v3524 = vextract.high.u32 %v3522
        %v3525 = vshrl.u32 %v3524, 4
        %v3526 = vmul.u32 %v3525, 18
        %v3527 = vsub.s32 %v3521, %v3526
        %v3528 = vsub.s32 0, %v3527
        %v3529 = vsel %vm3519, %v3528, %v3527
        %vm3530 = vcmp.lt.s32.totalorder %v3454, 0
        %v3531 = vsub.s32 0, %v3454
        %v3532 = vsel %vm3530, %v3531, %v3454
        %v3533 = vmul.u32.u64.compose %v3532, 3817748708
        %v3534 = vextract.low.u32 %v3533
        %v3535 = vextract.high.u32 %v3533
        %v3536 = vshrl.u32 %v3535, 4
        %v3537 = vmul.u32 %v3536, 18
        %v3538 = vsub.s32 %v3532, %v3537
        %v3539 = vsub.s32 0, %v3538
        %v3540 = vsel %vm3530, %v3539, %v3538
        %vm3541 = vcmp.lt.s32.totalorder %v3455, 0
        %v3542 = vsub.s32 0, %v3455
        %v3543 = vsel %vm3541, %v3542, %v3455
        %v3544 = vmul.u32.u64.compose %v3543, 3817748708
        %v3545 = vextract.low.u32 %v3544
        %v3546 = vextract.high.u32 %v3544
        %v3547 = vshrl.u32 %v3546, 4
        %v3548 = vmul.u32 %v3547, 18
        %v3549 = vsub.s32 %v3543, %v3548
        %v3550 = vsub.s32 0, %v3549
        %v3551 = vsel %vm3541, %v3550, %v3549
        %vm3552 = vcmp.lt.s32.totalorder %v3456, 0
        %v3553 = vsub.s32 0, %v3456
        %v3554 = vsel %vm3552, %v3553, %v3456
        %v3555 = vmul.u32.u64.compose %v3554, 3817748708
        %v3556 = vextract.low.u32 %v3555
        %v3557 = vextract.high.u32 %v3555
        %v3558 = vshrl.u32 %v3557, 4
        %v3559 = vmul.u32 %v3558, 18
        %v3560 = vsub.s32 %v3554, %v3559
        %v3561 = vsub.s32 0, %v3560
        %v3562 = vsel %vm3552, %v3561, %v3560
        %vm3563 = vcmp.lt.s32.totalorder %v3457, 0
        %v3564 = vsub.s32 0, %v3457
        %v3565 = vsel %vm3563, %v3564, %v3457
        %v3566 = vmul.u32.u64.compose %v3565, 3817748708
        %v3567 = vextract.low.u32 %v3566
        %v3568 = vextract.high.u32 %v3566
        %v3569 = vshrl.u32 %v3568, 4
        %v3570 = vmul.u32 %v3569, 18
        %v3571 = vsub.s32 %v3565, %v3570
        %v3572 = vsub.s32 0, %v3571
        %v3573 = vsel %vm3563, %v3572, %v3571
        %vm3574 = vcmp.lt.s32.totalorder %v3458, 0
        %v3575 = vsub.s32 0, %v3458
        %v3576 = vsel %vm3574, %v3575, %v3458
        %v3577 = vmul.u32.u64.compose %v3576, 3817748708
        %v3578 = vextract.low.u32 %v3577
        %v3579 = vextract.high.u32 %v3577
        %v3580 = vshrl.u32 %v3579, 4
        %v3581 = vmul.u32 %v3580, 18
        %v3582 = vsub.s32 %v3576, %v3581
        %v3583 = vsub.s32 0, %v3582
        %v3584 = vsel %vm3574, %v3583, %v3582
        %vm3585 = vcmp.lt.s32.totalorder %v3459, 0
        %v3586 = vsub.s32 0, %v3459
        %v3587 = vsel %vm3585, %v3586, %v3459
        %v3588 = vmul.u32.u64.compose %v3587, 3817748708
        %v3589 = vextract.low.u32 %v3588
        %v3590 = vextract.high.u32 %v3588
        %v3591 = vshrl.u32 %v3590, 4
        %v3592 = vmul.u32 %v3591, 18
        %v3593 = vsub.s32 %v3587, %v3592
        %v3594 = vsub.s32 0, %v3593
        %v3595 = vsel %vm3585, %v3594, %v3593
        %vm3596 = vcmp.lt.s32.totalorder %v3460, 0
        %v3597 = vsub.s32 0, %v3460
        %v3598 = vsel %vm3596, %v3597, %v3460
        %v3599 = vmul.u32.u64.compose %v3598, 3817748708
        %v3600 = vextract.low.u32 %v3599
        %v3601 = vextract.high.u32 %v3599
        %v3602 = vshrl.u32 %v3601, 4
        %v3603 = vmul.u32 %v3602, 18
        %v3604 = vsub.s32 %v3598, %v3603
        %v3605 = vsub.s32 0, %v3604
        %v3606 = vsel %vm3596, %v3605, %v3604
        %vm3607 = vcmp.lt.s32.totalorder %v3461, 0
        %v3608 = vsub.s32 0, %v3461
        %v3609 = vsel %vm3607, %v3608, %v3461
        %v3610 = vmul.u32.u64.compose %v3609, 3817748708
        %v3611 = vextract.low.u32 %v3610
        %v3612 = vextract.high.u32 %v3610
        %v3613 = vshrl.u32 %v3612, 4
        %v3614 = vmul.u32 %v3613, 18
        %v3615 = vsub.s32 %v3609, %v3614
        %v3616 = vsub.s32 0, %v3615
        %v3617 = vsel %vm3607, %v3616, %v3615
        %vm3618 = vcmp.lt.s32.totalorder %v3462, 0
        %v3619 = vsub.s32 0, %v3462
        %v3620 = vsel %vm3618, %v3619, %v3462
        %v3621 = vmul.u32.u64.compose %v3620, 3817748708
        %v3622 = vextract.low.u32 %v3621
        %v3623 = vextract.high.u32 %v3621
        %v3624 = vshrl.u32 %v3623, 4
        %v3625 = vmul.u32 %v3624, 18
        %v3626 = vsub.s32 %v3620, %v3625
        %v3627 = vsub.s32 0, %v3626
        %v3628 = vsel %vm3618, %v3627, %v3626
        %vm3629 = vcmp.lt.s32.totalorder %v3463, 0
        %v3630 = vsub.s32 0, %v3463
        %v3631 = vsel %vm3629, %v3630, %v3463
        %v3632 = vmul.u32.u64.compose %v3631, 3817748708
        %v3633 = vextract.low.u32 %v3632
        %v3634 = vextract.high.u32 %v3632
        %v3635 = vshrl.u32 %v3634, 4
        %v3636 = vmul.u32 %v3635, 18
        %v3637 = vsub.s32 %v3631, %v3636
        %v3638 = vsub.s32 0, %v3637
        %v3639 = vsel %vm3629, %v3638, %v3637
        %vm3640 = vcmp.lt.s32.totalorder %v3464, 0
        %v3641 = vsub.s32 0, %v3464
        %v3642 = vsel %vm3640, %v3641, %v3464
        %v3643 = vmul.u32.u64.compose %v3642, 3817748708
        %v3644 = vextract.low.u32 %v3643
        %v3645 = vextract.high.u32 %v3643
        %v3646 = vshrl.u32 %v3645, 4
        %v3647 = vmul.u32 %v3646, 18
        %v3648 = vsub.s32 %v3642, %v3647
        %v3649 = vsub.s32 0, %v3648
        %v3650 = vsel %vm3640, %v3649, %v3648
        %vm3651 = vcmp.lt.s32.totalorder %v3465, 0
        %v3652 = vsub.s32 0, %v3465
        %v3653 = vsel %vm3651, %v3652, %v3465
        %v3654 = vmul.u32.u64.compose %v3653, 3817748708
        %v3655 = vextract.low.u32 %v3654
        %v3656 = vextract.high.u32 %v3654
        %v3657 = vshrl.u32 %v3656, 4
        %v3658 = vmul.u32 %v3657, 18
        %v3659 = vsub.s32 %v3653, %v3658
        %v3660 = vsub.s32 0, %v3659
        %v3661 = vsel %vm3651, %v3660, %v3659
        %vm3662 = vcmp.lt.s32.totalorder %v3466, 0
        %v3663 = vsub.s32 0, %v3466
        %v3664 = vsel %vm3662, %v3663, %v3466
        %v3665 = vmul.u32.u64.compose %v3664, 3817748708
        %v3666 = vextract.low.u32 %v3665
        %v3667 = vextract.high.u32 %v3665
        %v3668 = vshrl.u32 %v3667, 4
        %v3669 = vmul.u32 %v3668, 18
        %v3670 = vsub.s32 %v3664, %v3669
        %v3671 = vsub.s32 0, %v3670
        %v3672 = vsel %vm3662, %v3671, %v3670
        %vm3673 = vcmp.lt.s32.totalorder %v3467, 0
        %v3674 = vsub.s32 0, %v3467
        %v3675 = vsel %vm3673, %v3674, %v3467
        %v3676 = vmul.u32.u64.compose %v3675, 3817748708
        %v3677 = vextract.low.u32 %v3676
        %v3678 = vextract.high.u32 %v3676
        %v3679 = vshrl.u32 %v3678, 4
        %v3680 = vmul.u32 %v3679, 18
        %v3681 = vsub.s32 %v3675, %v3680
        %v3682 = vsub.s32 0, %v3681
        %v3683 = vsel %vm3673, %v3682, %v3681
        %vm3684 = vcmp.lt.s32.totalorder %v3468, 0
        %v3685 = vsub.s32 0, %v3468
        %v3686 = vsel %vm3684, %v3685, %v3468
        %v3687 = vmul.u32.u64.compose %v3686, 3817748708
        %v3688 = vextract.low.u32 %v3687
        %v3689 = vextract.high.u32 %v3687
        %v3690 = vshrl.u32 %v3689, 4
        %v3691 = vmul.u32 %v3690, 18
        %v3692 = vsub.s32 %v3686, %v3691
        %v3693 = vsub.s32 0, %v3692
        %v3694 = vsel %vm3684, %v3693, %v3692
        %vm3695 = vcmp.lt.s32.totalorder %v3469, 0
        %v3696 = vsub.s32 0, %v3469
        %v3697 = vsel %vm3695, %v3696, %v3469
        %v3698 = vmul.u32.u64.compose %v3697, 3817748708
        %v3699 = vextract.low.u32 %v3698
        %v3700 = vextract.high.u32 %v3698
        %v3701 = vshrl.u32 %v3700, 4
        %v3702 = vmul.u32 %v3701, 18
        %v3703 = vsub.s32 %v3697, %v3702
        %v3704 = vsub.s32 0, %v3703
        %v3705 = vsel %vm3695, %v3704, %v3703
        %vm3706 = vcmp.lt.s32.totalorder %v3470, 0
        %v3707 = vsub.s32 0, %v3470
        %v3708 = vsel %vm3706, %v3707, %v3470
        %v3709 = vmul.u32.u64.compose %v3708, 3817748708
        %v3710 = vextract.low.u32 %v3709
        %v3711 = vextract.high.u32 %v3709
        %v3712 = vshrl.u32 %v3711, 4
        %v3713 = vmul.u32 %v3712, 18
        %v3714 = vsub.s32 %v3708, %v3713
        %v3715 = vsub.s32 0, %v3714
        %v3716 = vsel %vm3706, %v3715, %v3714
        %vm3717 = vcmp.lt.s32.totalorder %v3471, 0
        %v3718 = vsub.s32 0, %v3471
        %v3719 = vsel %vm3717, %v3718, %v3471
        %v3720 = vmul.u32.u64.compose %v3719, 3817748708
        %v3721 = vextract.low.u32 %v3720
        %v3722 = vextract.high.u32 %v3720
        %v3723 = vshrl.u32 %v3722, 4
        %v3724 = vmul.u32 %v3723, 18
        %v3725 = vsub.s32 %v3719, %v3724
        %v3726 = vsub.s32 0, %v3725
        %v3727 = vsel %vm3717, %v3726, %v3725
        %vm3728 = vcmp.lt.s32.totalorder %v3472, 0
        %v3729 = vsub.s32 0, %v3472
        %v3730 = vsel %vm3728, %v3729, %v3472
        %v3731 = vmul.u32.u64.compose %v3730, 3817748708
        %v3732 = vextract.low.u32 %v3731
        %v3733 = vextract.high.u32 %v3731
        %v3734 = vshrl.u32 %v3733, 4
        %v3735 = vmul.u32 %v3734, 18
        %v3736 = vsub.s32 %v3730, %v3735
        %v3737 = vsub.s32 0, %v3736
        %v3738 = vsel %vm3728, %v3737, %v3736
        %vm3739 = vcmp.lt.s32.totalorder %v3473, 0
        %v3740 = vsub.s32 0, %v3473
        %v3741 = vsel %vm3739, %v3740, %v3473
        %v3742 = vmul.u32.u64.compose %v3741, 3817748708
        %v3743 = vextract.low.u32 %v3742
        %v3744 = vextract.high.u32 %v3742
        %v3745 = vshrl.u32 %v3744, 4
        %v3746 = vmul.u32 %v3745, 18
        %v3747 = vsub.s32 %v3741, %v3746
        %v3748 = vsub.s32 0, %v3747
        %v3749 = vsel %vm3739, %v3748, %v3747
        %vm3750 = vcmp.lt.s32.totalorder %v3474, 0
        %v3751 = vsub.s32 0, %v3474
        %v3752 = vsel %vm3750, %v3751, %v3474
        %v3753 = vmul.u32.u64.compose %v3752, 3817748708
        %v3754 = vextract.low.u32 %v3753
        %v3755 = vextract.high.u32 %v3753
        %v3756 = vshrl.u32 %v3755, 4
        %v3757 = vmul.u32 %v3756, 18
        %v3758 = vsub.s32 %v3752, %v3757
        %v3759 = vsub.s32 0, %v3758
        %v3760 = vsel %vm3750, %v3759, %v3758
        %vm3761 = vcmp.lt.s32.totalorder %v3475, 0
        %v3762 = vsub.s32 0, %v3475
        %v3763 = vsel %vm3761, %v3762, %v3475
        %v3764 = vmul.u32.u64.compose %v3763, 3817748708
        %v3765 = vextract.low.u32 %v3764
        %v3766 = vextract.high.u32 %v3764
        %v3767 = vshrl.u32 %v3766, 4
        %v3768 = vmul.u32 %v3767, 18
        %v3769 = vsub.s32 %v3763, %v3768
        %v3770 = vsub.s32 0, %v3769
        %v3771 = vsel %vm3761, %v3770, %v3769
        %vm3772 = vcmp.lt.s32.totalorder %v3476, 0
        %v3773 = vsub.s32 0, %v3476
        %v3774 = vsel %vm3772, %v3773, %v3476
        %v3775 = vmul.u32.u64.compose %v3774, 3817748708
        %v3776 = vextract.low.u32 %v3775
        %v3777 = vextract.high.u32 %v3775
        %v3778 = vshrl.u32 %v3777, 4
        %v3779 = vmul.u32 %v3778, 18
        %v3780 = vsub.s32 %v3774, %v3779
        %v3781 = vsub.s32 0, %v3780
        %v3782 = vsel %vm3772, %v3781, %v3780
        %vm3783 = vcmp.lt.s32.totalorder %v3477, 0
        %v3784 = vsub.s32 0, %v3477
        %v3785 = vsel %vm3783, %v3784, %v3477
        %v3786 = vmul.u32.u64.compose %v3785, 3817748708
        %v3787 = vextract.low.u32 %v3786
        %v3788 = vextract.high.u32 %v3786
        %v3789 = vshrl.u32 %v3788, 4
        %v3790 = vmul.u32 %v3789, 18
        %v3791 = vsub.s32 %v3785, %v3790
        %v3792 = vsub.s32 0, %v3791
        %v3793 = vsel %vm3783, %v3792, %v3791
        %vm3794 = vcmp.lt.s32.totalorder %v3478, 0
        %v3795 = vsub.s32 0, %v3478
        %v3796 = vsel %vm3794, %v3795, %v3478
        %v3797 = vmul.u32.u64.compose %v3796, 3817748708
        %v3798 = vextract.low.u32 %v3797
        %v3799 = vextract.high.u32 %v3797
        %v3800 = vshrl.u32 %v3799, 4
        %v3801 = vmul.u32 %v3800, 18
        %v3802 = vsub.s32 %v3796, %v3801
        %v3803 = vsub.s32 0, %v3802
        %v3804 = vsel %vm3794, %v3803, %v3802
        %vm3805 = vcmp.lt.s32.totalorder %v3479, 0
        %v3806 = vsub.s32 0, %v3479
        %v3807 = vsel %vm3805, %v3806, %v3479
        %v3808 = vmul.u32.u64.compose %v3807, 3817748708
        %v3809 = vextract.low.u32 %v3808
        %v3810 = vextract.high.u32 %v3808
        %v3811 = vshrl.u32 %v3810, 4
        %v3812 = vmul.u32 %v3811, 18
        %v3813 = vsub.s32 %v3807, %v3812
        %v3814 = vsub.s32 0, %v3813
        %v3815 = vsel %vm3805, %v3814, %v3813
        %vm3816 = vcmp.lt.s32.totalorder %v3480, 0
        %v3817 = vsub.s32 0, %v3480
        %v3818 = vsel %vm3816, %v3817, %v3480
        %v3819 = vmul.u32.u64.compose %v3818, 3817748708
        %v3820 = vextract.low.u32 %v3819
        %v3821 = vextract.high.u32 %v3819
        %v3822 = vshrl.u32 %v3821, 4
        %v3823 = vmul.u32 %v3822, 18
        %v3824 = vsub.s32 %v3818, %v3823
        %v3825 = vsub.s32 0, %v3824
        %v3826 = vsel %vm3816, %v3825, %v3824
        %vm3827 = vcmp.lt.s32.totalorder %v3481, 0
        %v3828 = vsub.s32 0, %v3481
        %v3829 = vsel %vm3827, %v3828, %v3481
        %v3830 = vmul.u32.u64.compose %v3829, 3817748708
        %v3831 = vextract.low.u32 %v3830
        %v3832 = vextract.high.u32 %v3830
        %v3833 = vshrl.u32 %v3832, 4
        %v3834 = vmul.u32 %v3833, 18
        %v3835 = vsub.s32 %v3829, %v3834
        %v3836 = vsub.s32 0, %v3835
        %v3837 = vsel %vm3827, %v3836, %v3835
        %vm3838 = vcmp.lt.s32.totalorder %v3482, 0
        %v3839 = vsub.s32 0, %v3482
        %v3840 = vsel %vm3838, %v3839, %v3482
        %v3841 = vmul.u32.u64.compose %v3840, 3817748708
        %v3842 = vextract.low.u32 %v3841
        %v3843 = vextract.high.u32 %v3841
        %v3844 = vshrl.u32 %v3843, 4
        %v3845 = vmul.u32 %v3844, 18
        %v3846 = vsub.s32 %v3840, %v3845
        %v3847 = vsub.s32 0, %v3846
        %v3848 = vsel %vm3838, %v3847, %v3846
        %vm3849 = vcmp.lt.s32.totalorder %v3483, 0
        %v3850 = vsub.s32 0, %v3483
        %v3851 = vsel %vm3849, %v3850, %v3483
        %v3852 = vmul.u32.u64.compose %v3851, 3817748708
        %v3853 = vextract.low.u32 %v3852
        %v3854 = vextract.high.u32 %v3852
        %v3855 = vshrl.u32 %v3854, 4
        %v3856 = vmul.u32 %v3855, 18
        %v3857 = vsub.s32 %v3851, %v3856
        %v3858 = vsub.s32 0, %v3857
        %v3859 = vsel %vm3849, %v3858, %v3857
        %vm3860 = vcmp.lt.s32.totalorder %v3484, 0
        %v3861 = vsub.s32 0, %v3484
        %v3862 = vsel %vm3860, %v3861, %v3484
        %v3863 = vmul.u32.u64.compose %v3862, 3817748708
        %v3864 = vextract.low.u32 %v3863
        %v3865 = vextract.high.u32 %v3863
        %v3866 = vshrl.u32 %v3865, 4
        %v3867 = vmul.u32 %v3866, 18
        %v3868 = vsub.s32 %v3862, %v3867
        %v3869 = vsub.s32 0, %v3868
        %v3870 = vsel %vm3860, %v3869, %v3868
        %vm3871 = vcmp.lt.s32.totalorder %v3485, 0
        %v3872 = vsub.s32 0, %v3485
        %v3873 = vsel %vm3871, %v3872, %v3485
        %v3874 = vmul.u32.u64.compose %v3873, 3817748708
        %v3875 = vextract.low.u32 %v3874
        %v3876 = vextract.high.u32 %v3874
        %v3877 = vshrl.u32 %v3876, 4
        %v3878 = vmul.u32 %v3877, 18
        %v3879 = vsub.s32 %v3873, %v3878
        %v3880 = vsub.s32 0, %v3879
        %v3881 = vsel %vm3871, %v3880, %v3879
        %vm3882 = vcmp.ne.s32.totalorder %v3496, 0
        %vm3883 = vcmp.ne.s32.totalorder %v3507, 0
        %vm3884 = vcmp.ne.s32.totalorder %v3518, 0
        %vm3885 = vcmp.ne.s32.totalorder %v3529, 0
        %vm3886 = vcmp.ne.s32.totalorder %v3540, 0
        %vm3887 = vcmp.ne.s32.totalorder %v3551, 0
        %vm3888 = vcmp.ne.s32.totalorder %v3562, 0
        %vm3889 = vcmp.ne.s32.totalorder %v3573, 0
        %vm3890 = vcmp.ne.s32.totalorder %v3584, 0
        %vm3891 = vcmp.ne.s32.totalorder %v3595, 0
        %vm3892 = vcmp.ne.s32.totalorder %v3606, 0
        %vm3893 = vcmp.ne.s32.totalorder %v3617, 0
        %vm3894 = vcmp.ne.s32.totalorder %v3628, 0
        %vm3895 = vcmp.ne.s32.totalorder %v3639, 0
        %vm3896 = vcmp.ne.s32.totalorder %v3650, 0
        %vm3897 = vcmp.ne.s32.totalorder %v3661, 0
        %vm3898 = vcmp.ne.s32.totalorder %v3672, 0
        %vm3899 = vcmp.ne.s32.totalorder %v3683, 0
        %vm3900 = vcmp.ne.s32.totalorder %v3694, 0
        %vm3901 = vcmp.ne.s32.totalorder %v3705, 0
        %vm3902 = vcmp.ne.s32.totalorder %v3716, 0
        %vm3903 = vcmp.ne.s32.totalorder %v3727, 0
        %vm3904 = vcmp.ne.s32.totalorder %v3738, 0
        %vm3905 = vcmp.ne.s32.totalorder %v3749, 0
        %vm3906 = vcmp.ne.s32.totalorder %v3760, 0
        %vm3907 = vcmp.ne.s32.totalorder %v3771, 0
        %vm3908 = vcmp.ne.s32.totalorder %v3782, 0
        %vm3909 = vcmp.ne.s32.totalorder %v3793, 0
        %vm3910 = vcmp.ne.s32.totalorder %v3804, 0
        %vm3911 = vcmp.ne.s32.totalorder %v3815, 0
        %vm3912 = vcmp.ne.s32.totalorder %v3826, 0
        %vm3913 = vcmp.ne.s32.totalorder %v3837, 0
        %vm3914 = vcmp.ne.s32.totalorder %v3848, 0
        %vm3915 = vcmp.ne.s32.totalorder %v3859, 0
        %vm3916 = vcmp.ne.s32.totalorder %v3870, 0
        %vm3917 = vcmp.ne.s32.totalorder %v3881, 0
        %vm3918 = vcmp.lt.s32.totalorder %v3496, 0
        %vm3919 = vcmp.lt.s32.totalorder %v3507, 0
        %vm3920 = vcmp.lt.s32.totalorder %v3518, 0
        %vm3921 = vcmp.lt.s32.totalorder %v3529, 0
        %vm3922 = vcmp.lt.s32.totalorder %v3540, 0
        %vm3923 = vcmp.lt.s32.totalorder %v3551, 0
        %vm3924 = vcmp.lt.s32.totalorder %v3562, 0
        %vm3925 = vcmp.lt.s32.totalorder %v3573, 0
        %vm3926 = vcmp.lt.s32.totalorder %v3584, 0
        %vm3927 = vcmp.lt.s32.totalorder %v3595, 0
        %vm3928 = vcmp.lt.s32.totalorder %v3606, 0
        %vm3929 = vcmp.lt.s32.totalorder %v3617, 0
        %vm3930 = vcmp.lt.s32.totalorder %v3628, 0
        %vm3931 = vcmp.lt.s32.totalorder %v3639, 0
        %vm3932 = vcmp.lt.s32.totalorder %v3650, 0
        %vm3933 = vcmp.lt.s32.totalorder %v3661, 0
        %vm3934 = vcmp.lt.s32.totalorder %v3672, 0
        %vm3935 = vcmp.lt.s32.totalorder %v3683, 0
        %vm3936 = vcmp.lt.s32.totalorder %v3694, 0
        %vm3937 = vcmp.lt.s32.totalorder %v3705, 0
        %vm3938 = vcmp.lt.s32.totalorder %v3716, 0
        %vm3939 = vcmp.lt.s32.totalorder %v3727, 0
        %vm3940 = vcmp.lt.s32.totalorder %v3738, 0
        %vm3941 = vcmp.lt.s32.totalorder %v3749, 0
        %vm3942 = vcmp.lt.s32.totalorder %v3760, 0
        %vm3943 = vcmp.lt.s32.totalorder %v3771, 0
        %vm3944 = vcmp.lt.s32.totalorder %v3782, 0
        %vm3945 = vcmp.lt.s32.totalorder %v3793, 0
        %vm3946 = vcmp.lt.s32.totalorder %v3804, 0
        %vm3947 = vcmp.lt.s32.totalorder %v3815, 0
        %vm3948 = vcmp.lt.s32.totalorder %v3826, 0
        %vm3949 = vcmp.lt.s32.totalorder %v3837, 0
        %vm3950 = vcmp.lt.s32.totalorder %v3848, 0
        %vm3951 = vcmp.lt.s32.totalorder %v3859, 0
        %vm3952 = vcmp.lt.s32.totalorder %v3870, 0
        %vm3953 = vcmp.lt.s32.totalorder %v3881, 0
        %vm3954 = vmand %vm3918, %vm3882
        %vm3955 = vmand %vm3919, %vm3883
        %vm3956 = vmand %vm3920, %vm3884
        %vm3957 = vmand %vm3921, %vm3885
        %vm3958 = vmand %vm3922, %vm3886
        %vm3959 = vmand %vm3923, %vm3887
        %vm3960 = vmand %vm3924, %vm3888
        %vm3961 = vmand %vm3925, %vm3889
        %vm3962 = vmand %vm3926, %vm3890
        %vm3963 = vmand %vm3927, %vm3891
        %vm3964 = vmand %vm3928, %vm3892
        %vm3965 = vmand %vm3929, %vm3893
        %vm3966 = vmand %vm3930, %vm3894
        %vm3967 = vmand %vm3931, %vm3895
        %vm3968 = vmand %vm3932, %vm3896
        %vm3969 = vmand %vm3933, %vm3897
        %vm3970 = vmand %vm3934, %vm3898
        %vm3971 = vmand %vm3935, %vm3899
        %vm3972 = vmand %vm3936, %vm3900
        %vm3973 = vmand %vm3937, %vm3901
        %vm3974 = vmand %vm3938, %vm3902
        %vm3975 = vmand %vm3939, %vm3903
        %vm3976 = vmand %vm3940, %vm3904
        %vm3977 = vmand %vm3941, %vm3905
        %vm3978 = vmand %vm3942, %vm3906
        %vm3979 = vmand %vm3943, %vm3907
        %vm3980 = vmand %vm3944, %vm3908
        %vm3981 = vmand %vm3945, %vm3909
        %vm3982 = vmand %vm3946, %vm3910
        %vm3983 = vmand %vm3947, %vm3911
        %vm3984 = vmand %vm3948, %vm3912
        %vm3985 = vmand %vm3949, %vm3913
        %vm3986 = vmand %vm3950, %vm3914
        %vm3987 = vmand %vm3951, %vm3915
        %vm3988 = vmand %vm3952, %vm3916
        %vm3989 = vmand %vm3953, %vm3917
        %v3990 = vadd.s32 %v3496, 18
        %v3991 = vadd.s32 %v3507, 18
        %v3992 = vadd.s32 %v3518, 18
        %v3993 = vadd.s32 %v3529, 18
        %v3994 = vadd.s32 %v3540, 18
        %v3995 = vadd.s32 %v3551, 18
        %v3996 = vadd.s32 %v3562, 18
        %v3997 = vadd.s32 %v3573, 18
        %v3998 = vadd.s32 %v3584, 18
        %v3999 = vadd.s32 %v3595, 18
        %v4000 = vadd.s32 %v3606, 18
        %v4001 = vadd.s32 %v3617, 18
        %v4002 = vadd.s32 %v3628, 18
        %v4003 = vadd.s32 %v3639, 18
        %v4004 = vadd.s32 %v3650, 18
        %v4005 = vadd.s32 %v3661, 18
        %v4006 = vadd.s32 %v3672, 18
        %v4007 = vadd.s32 %v3683, 18
        %v4008 = vadd.s32 %v3694, 18
        %v4009 = vadd.s32 %v3705, 18
        %v4010 = vadd.s32 %v3716, 18
        %v4011 = vadd.s32 %v3727, 18
        %v4012 = vadd.s32 %v3738, 18
        %v4013 = vadd.s32 %v3749, 18
        %v4014 = vadd.s32 %v3760, 18
        %v4015 = vadd.s32 %v3771, 18
        %v4016 = vadd.s32 %v3782, 18
        %v4017 = vadd.s32 %v3793, 18
        %v4018 = vadd.s32 %v3804, 18
        %v4019 = vadd.s32 %v3815, 18
        %v4020 = vadd.s32 %v3826, 18
        %v4021 = vadd.s32 %v3837, 18
        %v4022 = vadd.s32 %v3848, 18
        %v4023 = vadd.s32 %v3859, 18
        %v4024 = vadd.s32 %v3870, 18
        %v4025 = vadd.s32 %v3881, 18
        %v4026 = vsel %vm3954, %v3990, %v3496
        %v4027 = vsel %vm3955, %v3991, %v3507
        %v4028 = vsel %vm3956, %v3992, %v3518
        %v4029 = vsel %vm3957, %v3993, %v3529
        %v4030 = vsel %vm3958, %v3994, %v3540
        %v4031 = vsel %vm3959, %v3995, %v3551
        %v4032 = vsel %vm3960, %v3996, %v3562
        %v4033 = vsel %vm3961, %v3997, %v3573
        %v4034 = vsel %vm3962, %v3998, %v3584
        %v4035 = vsel %vm3963, %v3999, %v3595
        %v4036 = vsel %vm3964, %v4000, %v3606
        %v4037 = vsel %vm3965, %v4001, %v3617
        %v4038 = vsel %vm3966, %v4002, %v3628
        %v4039 = vsel %vm3967, %v4003, %v3639
        %v4040 = vsel %vm3968, %v4004, %v3650
        %v4041 = vsel %vm3969, %v4005, %v3661
        %v4042 = vsel %vm3970, %v4006, %v3672
        %v4043 = vsel %vm3971, %v4007, %v3683
        %v4044 = vsel %vm3972, %v4008, %v3694
        %v4045 = vsel %vm3973, %v4009, %v3705
        %v4046 = vsel %vm3974, %v4010, %v3716
        %v4047 = vsel %vm3975, %v4011, %v3727
        %v4048 = vsel %vm3976, %v4012, %v3738
        %v4049 = vsel %vm3977, %v4013, %v3749
        %v4050 = vsel %vm3978, %v4014, %v3760
        %v4051 = vsel %vm3979, %v4015, %v3771
        %v4052 = vsel %vm3980, %v4016, %v3782
        %v4053 = vsel %vm3981, %v4017, %v3793
        %v4054 = vsel %vm3982, %v4018, %v3804
        %v4055 = vsel %vm3983, %v4019, %v3815
        %v4056 = vsel %vm3984, %v4020, %v3826
        %v4057 = vsel %vm3985, %v4021, %v3837
        %v4058 = vsel %vm3986, %v4022, %v3848
        %v4059 = vsel %vm3987, %v4023, %v3859
        %v4060 = vsel %vm3988, %v4024, %v3870
        %v4061 = vsel %vm3989, %v4025, %v3881
        %vm4062 = vcmp.lt.s32.totalorder %v4026, 16
        %vm4063 = vcmp.lt.s32.totalorder %v4027, 16
        %vm4064 = vcmp.lt.s32.totalorder %v4028, 16
        %vm4065 = vcmp.lt.s32.totalorder %v4029, 16
        %vm4066 = vcmp.lt.s32.totalorder %v4030, 16
        %vm4067 = vcmp.lt.s32.totalorder %v4031, 16
        %vm4068 = vcmp.lt.s32.totalorder %v4032, 16
        %vm4069 = vcmp.lt.s32.totalorder %v4033, 16
        %vm4070 = vcmp.lt.s32.totalorder %v4034, 16
        %vm4071 = vcmp.lt.s32.totalorder %v4035, 16
        %vm4072 = vcmp.lt.s32.totalorder %v4036, 16
        %vm4073 = vcmp.lt.s32.totalorder %v4037, 16
        %vm4074 = vcmp.lt.s32.totalorder %v4038, 16
        %vm4075 = vcmp.lt.s32.totalorder %v4039, 16
        %vm4076 = vcmp.lt.s32.totalorder %v4040, 16
        %vm4077 = vcmp.lt.s32.totalorder %v4041, 16
        %vm4078 = vcmp.lt.s32.totalorder %v4042, 16
        %vm4079 = vcmp.lt.s32.totalorder %v4043, 16
        %vm4080 = vcmp.lt.s32.totalorder %v4044, 16
        %vm4081 = vcmp.lt.s32.totalorder %v4045, 16
        %vm4082 = vcmp.lt.s32.totalorder %v4046, 16
        %vm4083 = vcmp.lt.s32.totalorder %v4047, 16
        %vm4084 = vcmp.lt.s32.totalorder %v4048, 16
        %vm4085 = vcmp.lt.s32.totalorder %v4049, 16
        %vm4086 = vcmp.lt.s32.totalorder %v4050, 16
        %vm4087 = vcmp.lt.s32.totalorder %v4051, 16
        %vm4088 = vcmp.lt.s32.totalorder %v4052, 16
        %vm4089 = vcmp.lt.s32.totalorder %v4053, 16
        %vm4090 = vcmp.lt.s32.totalorder %v4054, 16
        %vm4091 = vcmp.lt.s32.totalorder %v4055, 16
        %vm4092 = vcmp.lt.s32.totalorder %v4056, 16
        %vm4093 = vcmp.lt.s32.totalorder %v4057, 16
        %vm4094 = vcmp.lt.s32.totalorder %v4058, 16
        %vm4095 = vcmp.lt.s32.totalorder %v4059, 16
        %vm4096 = vcmp.lt.s32.totalorder %v4060, 16
        %vm4097 = vcmp.lt.s32.totalorder %v4061, 16
        %v4098 = vsel %vm4062, %v3413, 0.0
        %v4099 = vsel %vm4063, %v3414, 0.0
        %v4100 = vsel %vm4064, %v3415, 0.0
        %v4101 = vsel %vm4065, %v3416, 0.0
        %v4102 = vsel %vm4066, %v3417, 0.0
        %v4103 = vsel %vm4067, %v3418, 0.0
        %v4104 = vsel %vm4068, %v3419, 0.0
        %v4105 = vsel %vm4069, %v3420, 0.0
        %v4106 = vsel %vm4070, %v3421, 0.0
        %v4107 = vsel %vm4071, %v3422, 0.0
        %v4108 = vsel %vm4072, %v3423, 0.0
        %v4109 = vsel %vm4073, %v3424, 0.0
        %v4110 = vsel %vm4074, %v3425, 0.0
        %v4111 = vsel %vm4075, %v3426, 0.0
        %v4112 = vsel %vm4076, %v3427, 0.0
        %v4113 = vsel %vm4077, %v3428, 0.0
        %v4114 = vsel %vm4078, %v3429, 0.0
        %v4115 = vsel %vm4079, %v3430, 0.0
        %v4116 = vsel %vm4080, %v3431, 0.0
        %v4117 = vsel %vm4081, %v3432, 0.0
        %v4118 = vsel %vm4082, %v3433, 0.0
        %v4119 = vsel %vm4083, %v3434, 0.0
        %v4120 = vsel %vm4084, %v3435, 0.0
        %v4121 = vsel %vm4085, %v3436, 0.0
        %v4122 = vsel %vm4086, %v3437, 0.0
        %v4123 = vsel %vm4087, %v3438, 0.0
        %v4124 = vsel %vm4088, %v3439, 0.0
        %v4125 = vsel %vm4089, %v3440, 0.0
        %v4126 = vsel %vm4090, %v3441, 0.0
        %v4127 = vsel %vm4091, %v3442, 0.0
        %v4128 = vsel %vm4092, %v3443, 0.0
        %v4129 = vsel %vm4093, %v3444, 0.0
        %v4130 = vsel %vm4094, %v3445, 0.0
        %v4131 = vsel %vm4095, %v3446, 0.0
        %v4132 = vsel %vm4096, %v3447, 0.0
        %v4133 = vsel %vm4097, %v3448, 0.0
        %4134 = vst [vmem:[#allocation2] sm:$0xff] 0.0
        %4135 = vst [vmem:[#allocation2 + $0x8] sm:$0xff] 0.0
        %4136 = vst [vmem:[#allocation2 + $0x10] sm:$0xff] 0.0
        %4137 = vst [vmem:[#allocation2 + $0x138] sm:$0xff] 0.0
        %4138 = vst [vmem:[#allocation2 + $0x140] sm:$0xff] 0.0
        %4139 = vst [vmem:[#allocation2 + $0x148] sm:$0xff] 0.0
        %4140 = vst [vmem:[#allocation2 + $0x150] sm:$0xff] 0.0
        %4141 = vst [vmem:[#allocation2 + $0x158] sm:$0x7] 0.0
        %4142 = vst [vmem:[#allocation2 + $0x18] sm:$0xff] %v4098
        %4143 = vst [vmem:[#allocation2 + $0x20] sm:$0xff] %v4099
        %4144 = vst [vmem:[#allocation2 + $0x28] sm:$0xff] %v4100
        %4145 = vst [vmem:[#allocation2 + $0x30] sm:$0xff] %v4101
        %4146 = vst [vmem:[#allocation2 + $0x38] sm:$0xff] %v4102
        %4147 = vst [vmem:[#allocation2 + $0x40] sm:$0xff] %v4103
        %4148 = vst [vmem:[#allocation2 + $0x48] sm:$0xff] %v4104
        %4149 = vst [vmem:[#allocation2 + $0x50] sm:$0xff] %v4105
        %4150 = vst [vmem:[#allocation2 + $0x58] sm:$0xff] %v4106
        %4151 = vst [vmem:[#allocation2 + $0x60] sm:$0xff] %v4107
        %4152 = vst [vmem:[#allocation2 + $0x68] sm:$0xff] %v4108
        %4153 = vst [vmem:[#allocation2 + $0x70] sm:$0xff] %v4109
        %4154 = vst [vmem:[#allocation2 + $0x78] sm:$0xff] %v4110
        %4155 = vst [vmem:[#allocation2 + $0x80] sm:$0xff] %v4111
        %4156 = vst [vmem:[#allocation2 + $0x88] sm:$0xff] %v4112
        %4157 = vst [vmem:[#allocation2 + $0x90] sm:$0xff] %v4113
        %4158 = vst [vmem:[#allocation2 + $0x98] sm:$0xff] %v4114
        %4159 = vst [vmem:[#allocation2 + $0xa0] sm:$0xff] %v4115
        %4160 = vst [vmem:[#allocation2 + $0xa8] sm:$0xff] %v4116
        %4161 = vst [vmem:[#allocation2 + $0xb0] sm:$0xff] %v4117
        %4162 = vst [vmem:[#allocation2 + $0xb8] sm:$0xff] %v4118
        %4163 = vst [vmem:[#allocation2 + $0xc0] sm:$0xff] %v4119
        %4164 = vst [vmem:[#allocation2 + $0xc8] sm:$0xff] %v4120
        %4165 = vst [vmem:[#allocation2 + $0xd0] sm:$0xff] %v4121
        %4166 = vst [vmem:[#allocation2 + $0xd8] sm:$0xff] %v4122
        %4167 = vst [vmem:[#allocation2 + $0xe0] sm:$0xff] %v4123
        %4168 = vst [vmem:[#allocation2 + $0xe8] sm:$0xff] %v4124
        %4169 = vst [vmem:[#allocation2 + $0xf0] sm:$0xff] %v4125
        %4170 = vst [vmem:[#allocation2 + $0xf8] sm:$0xff] %v4126
        %4171 = vst [vmem:[#allocation2 + $0x100] sm:$0xff] %v4127
        %4172 = vst [vmem:[#allocation2 + $0x108] sm:$0xff] %v4128
        %4173 = vst [vmem:[#allocation2 + $0x110] sm:$0xff] %v4129
        %4174 = vst [vmem:[#allocation2 + $0x118] sm:$0xff] %v4130
        %4175 = vst [vmem:[#allocation2 + $0x120] sm:$0xff] %v4131
        %4176 = vst [vmem:[#allocation2 + $0x128] sm:$0xff] %v4132
        %4177 = vst [vmem:[#allocation2 + $0x130] sm:$0xff] %v4133
        %v4178 = vld [vmem:[#allocation2 + $0x5] sm:$0xff]
        %v4179 = vld [vmem:[#allocation2 + $0xd] sm:$0xff]
        %v4180 = vld [vmem:[#allocation2 + $0x15] sm:$0xff]
        %v4181 = vld [vmem:[#allocation2 + $0x1d] sm:$0xff]
        %v4182 = vld [vmem:[#allocation2 + $0x25] sm:$0xff]
        %v4183 = vld [vmem:[#allocation2 + $0x2d] sm:$0xff]
        %v4184 = vld [vmem:[#allocation2 + $0x35] sm:$0xff]
        %v4185 = vld [vmem:[#allocation2 + $0x3d] sm:$0xff]
        %v4186 = vld [vmem:[#allocation2 + $0x45] sm:$0xff]
        %v4187 = vld [vmem:[#allocation2 + $0x4d] sm:$0xff]
        %v4188 = vld [vmem:[#allocation2 + $0x55] sm:$0xff]
        %v4189 = vld [vmem:[#allocation2 + $0x5d] sm:$0xff]
        %v4190 = vld [vmem:[#allocation2 + $0x65] sm:$0xff]
        %v4191 = vld [vmem:[#allocation2 + $0x6d] sm:$0xff]
        %v4192 = vld [vmem:[#allocation2 + $0x75] sm:$0xff]
        %v4193 = vld [vmem:[#allocation2 + $0x7d] sm:$0xff]
        %v4194 = vld [vmem:[#allocation2 + $0x85] sm:$0xff]
        %v4195 = vld [vmem:[#allocation2 + $0x8d] sm:$0xff]
        %v4196 = vld [vmem:[#allocation2 + $0x95] sm:$0xff]
        %v4197 = vld [vmem:[#allocation2 + $0x9d] sm:$0xff]
        %v4198 = vld [vmem:[#allocation2 + $0xa5] sm:$0xff]
        %v4199 = vld [vmem:[#allocation2 + $0xad] sm:$0xff]
        %v4200 = vld [vmem:[#allocation2 + $0xb5] sm:$0xff]
        %v4201 = vld [vmem:[#allocation2 + $0xbd] sm:$0xff]
        %v4202 = vld [vmem:[#allocation2 + $0xc5] sm:$0xff]
        %v4203 = vld [vmem:[#allocation2 + $0xcd] sm:$0xff]
        %v4204 = vld [vmem:[#allocation2 + $0xd5] sm:$0xff]
        %v4205 = vld [vmem:[#allocation2 + $0xdd] sm:$0xff]
        %v4206 = vld [vmem:[#allocation2 + $0xe5] sm:$0xff]
        %v4207 = vld [vmem:[#allocation2 + $0xed] sm:$0xff]
        %v4208 = vld [vmem:[#allocation2 + $0xf5] sm:$0xff]
        %v4209 = vld [vmem:[#allocation2 + $0xfd] sm:$0xff]
        %v4210 = vld [vmem:[#allocation2 + $0x105] sm:$0xff]
        %v4211 = vld [vmem:[#allocation2 + $0x10d] sm:$0xff]
        %v4212 = vld [vmem:[#allocation2 + $0x115] sm:$0xff]
        %v4213 = vld [vmem:[#allocation2 + $0x11d] sm:$0xff]
        %v4214 = vld [vmem:[#allocation4] sm:$0xff]
        %v4215 = vld [vmem:[#allocation4 + $0x8] sm:$0xff]
        %v4216 = vld [vmem:[#allocation4 + $0x10] sm:$0xff]
        %v4217 = vld [vmem:[#allocation4 + $0x18] sm:$0xff]
        %v4218 = vld [vmem:[#allocation4 + $0x20] sm:$0xff]
        %v4219 = vld [vmem:[#allocation4 + $0x28] sm:$0xff]
        %v4220 = vld [vmem:[#allocation4 + $0x30] sm:$0xff]
        %v4221 = vld [vmem:[#allocation4 + $0x38] sm:$0xff]
        %v4222 = vld [vmem:[#allocation4 + $0x40] sm:$0xff]
        %v4223 = vld [vmem:[#allocation4 + $0x48] sm:$0xff]
        %v4224 = vld [vmem:[#allocation4 + $0x50] sm:$0xff]
        %v4225 = vld [vmem:[#allocation4 + $0x58] sm:$0xff]
        %v4226 = vld [vmem:[#allocation4 + $0x60] sm:$0xff]
        %v4227 = vld [vmem:[#allocation4 + $0x68] sm:$0xff]
        %v4228 = vld [vmem:[#allocation4 + $0x70] sm:$0xff]
        %v4229 = vld [vmem:[#allocation4 + $0x78] sm:$0xff]
        %v4230 = vld [vmem:[#allocation2 + $0x6] sm:$0xff]
        %v4231 = vld [vmem:[#allocation2 + $0xe] sm:$0xff]
        %v4232 = vld [vmem:[#allocation2 + $0x16] sm:$0xff]
        %v4233 = vld [vmem:[#allocation2 + $0x1e] sm:$0xff]
        %v4234 = vld [vmem:[#allocation2 + $0x26] sm:$0xff]
        %v4235 = vld [vmem:[#allocation2 + $0x2e] sm:$0xff]
        %v4236 = vld [vmem:[#allocation2 + $0x36] sm:$0xff]
        %v4237 = vld [vmem:[#allocation2 + $0x3e] sm:$0xff]
        %v4238 = vld [vmem:[#allocation2 + $0x46] sm:$0xff]
        %v4239 = vld [vmem:[#allocation2 + $0x4e] sm:$0xff]
        %v4240 = vld [vmem:[#allocation2 + $0x56] sm:$0xff]
        %v4241 = vld [vmem:[#allocation2 + $0x5e] sm:$0xff]
        %v4242 = vld [vmem:[#allocation2 + $0x66] sm:$0xff]
        %v4243 = vld [vmem:[#allocation2 + $0x6e] sm:$0xff]
        %v4244 = vld [vmem:[#allocation2 + $0x76] sm:$0xff]
        %v4245 = vld [vmem:[#allocation2 + $0x7e] sm:$0xff]
        %v4246 = vld [vmem:[#allocation2 + $0x86] sm:$0xff]
        %v4247 = vld [vmem:[#allocation2 + $0x8e] sm:$0xff]
        %v4248 = vld [vmem:[#allocation2 + $0x96] sm:$0xff]
        %v4249 = vld [vmem:[#allocation2 + $0x9e] sm:$0xff]
        %v4250 = vld [vmem:[#allocation2 + $0xa6] sm:$0xff]
        %v4251 = vld [vmem:[#allocation2 + $0xae] sm:$0xff]
        %v4252 = vld [vmem:[#allocation2 + $0xb6] sm:$0xff]
        %v4253 = vld [vmem:[#allocation2 + $0xbe] sm:$0xff]
        %v4254 = vld [vmem:[#allocation2 + $0xc6] sm:$0xff]
        %v4255 = vld [vmem:[#allocation2 + $0xce] sm:$0xff]
        %v4256 = vld [vmem:[#allocation2 + $0xd6] sm:$0xff]
        %v4257 = vld [vmem:[#allocation2 + $0xde] sm:$0xff]
        %v4258 = vld [vmem:[#allocation2 + $0xe6] sm:$0xff]
        %v4259 = vld [vmem:[#allocation2 + $0xee] sm:$0xff]
        %v4260 = vld [vmem:[#allocation2 + $0xf6] sm:$0xff]
        %v4261 = vld [vmem:[#allocation2 + $0xfe] sm:$0xff]
        %v4262 = vld [vmem:[#allocation2 + $0x106] sm:$0xff]
        %v4263 = vld [vmem:[#allocation2 + $0x10e] sm:$0xff]
        %v4264 = vld [vmem:[#allocation2 + $0x116] sm:$0xff]
        %v4265 = vld [vmem:[#allocation2 + $0x11e] sm:$0xff]
        %s4266 = scalar_lea.vmem [#allocation4], 128
        %v4267 = vld [vmem:[%s4266] sm:$0xff]
        %v4268 = vld [vmem:[%s4266 + $0x8] sm:$0xff]
        %v4269 = vld [vmem:[%s4266 + $0x10] sm:$0xff]
        %v4270 = vld [vmem:[%s4266 + $0x18] sm:$0xff]
        %v4271 = vld [vmem:[%s4266 + $0x20] sm:$0xff]
        %v4272 = vld [vmem:[%s4266 + $0x28] sm:$0xff]
        %v4273 = vld [vmem:[%s4266 + $0x30] sm:$0xff]
        %v4274 = vld [vmem:[%s4266 + $0x38] sm:$0xff]
        %v4275 = vld [vmem:[%s4266 + $0x40] sm:$0xff]
        %v4276 = vld [vmem:[%s4266 + $0x48] sm:$0xff]
        %v4277 = vld [vmem:[%s4266 + $0x50] sm:$0xff]
        %v4278 = vld [vmem:[%s4266 + $0x58] sm:$0xff]
        %v4279 = vld [vmem:[%s4266 + $0x60] sm:$0xff]
        %v4280 = vld [vmem:[%s4266 + $0x68] sm:$0xff]
        %v4281 = vld [vmem:[%s4266 + $0x70] sm:$0xff]
        %v4282 = vld [vmem:[%s4266 + $0x78] sm:$0xff]
        %4283 = vmatprep.subr.mxu0 0.0
        %4284 = vmatpush1.msra.mxu0 %v4282
        %4285 = vmatprep.subr.mxu0 0.0
        %4286 = vmatpush1.msra.mxu0 %v4281
        %4287 = vmatprep.subr.mxu0 0.0
        %4288 = vmatpush1.msra.mxu0 %v4280
        %4289 = vmatprep.subr.mxu0 0.0
        %4290 = vmatpush1.msra.mxu0 %v4279
        %4291 = vmatprep.subr.mxu0 0.0
        %4292 = vmatpush1.msra.mxu0 %v4278
        %4293 = vmatprep.subr.mxu0 0.0
        %4294 = vmatpush1.msra.mxu0 %v4277
        %4295 = vmatprep.subr.mxu0 0.0
        %4296 = vmatpush1.msra.mxu0 %v4276
        %4297 = vmatprep.subr.mxu0 0.0
        %4298 = vmatpush1.msra.mxu0 %v4275
        %4299 = vmatprep.subr.mxu0 0.0
        %4300 = vmatpush1.msra.mxu0 %v4274
        %4301 = vmatprep.subr.mxu0 0.0
        %4302 = vmatpush1.msra.mxu0 %v4273
        %4303 = vmatprep.subr.mxu0 0.0
        %4304 = vmatpush1.msra.mxu0 %v4272
        %4305 = vmatprep.subr.mxu0 0.0
        %4306 = vmatpush1.msra.mxu0 %v4271
        %4307 = vmatprep.subr.mxu0 0.0
        %4308 = vmatpush1.msra.mxu0 %v4270
        %4309 = vmatprep.subr.mxu0 0.0
        %4310 = vmatpush1.msra.mxu0 %v4269
        %4311 = vmatprep.subr.mxu0 0.0
        %4312 = vmatpush1.msra.mxu0 %v4268
        %4313 = vmatprep.subr.mxu0 0.0
        %4314 = vmatpush1.msra.mxu0 %v4267
        %4315 = vmatprep.subr.mxu0 0.0
        %4316 = vmatpush2.msra.mxu0 0.0
        %4317 = vmatprep.subr.mxu0 0.0
        %4318 = vmatpush2.msra.mxu0 0.0
        %4319 = vmatprep.subr.mxu0 0.0
        %4320 = vmatpush2.msra.mxu0 0.0
        %4321 = vmatprep.subr.mxu0 0.0
        %4322 = vmatpush2.msra.mxu0 0.0
        %4323 = vmatprep.subr.mxu0 0.0
        %4324 = vmatpush2.msra.mxu0 0.0
        %4325 = vmatprep.subr.mxu0 0.0
        %4326 = vmatpush2.msra.mxu0 0.0
        %4327 = vmatprep.subr.mxu0 0.0
        %4328 = vmatpush2.msra.mxu0 0.0
        %4329 = vmatprep.subr.mxu0 0.0
        %4330 = vmatpush2.msra.mxu0 0.0
        %4331 = vmatprep.subr.mxu0 0.0
        %4332 = vmatpush2.msra.mxu0 0.0
        %4333 = vmatprep.subr.mxu0 0.0
        %4334 = vmatpush2.msra.mxu0 0.0
        %4335 = vmatprep.subr.mxu0 0.0
        %4336 = vmatpush2.msra.mxu0 0.0
        %4337 = vmatprep.subr.mxu0 0.0
        %4338 = vmatpush2.msra.mxu0 0.0
        %4339 = vmatprep.subr.mxu0 0.0
        %4340 = vmatpush2.msra.mxu0 0.0
        %4341 = vmatprep.subr.mxu0 0.0
        %4342 = vmatpush2.msra.mxu0 0.0
        %4343 = vmatprep.subr.mxu0 0.0
        %4344 = vmatpush2.msra.mxu0 0.0
        %4345 = vmatprep.subr.mxu0 0.0
        %4346 = vmatpush2.msra.mxu0 0.0
        %4347 = vmatprep.mubr.f32.mxu0 0.0
        %4348 = vmatmul.mubr.f32.gmra.mxu0 %v4230
        %v4349 = vpop.f32.mrf.mxu0
        %v4350 = vadd.f32 0.0, %v4349
        %v4351 = vpop.f32.mrf.mxu0
        %4352 = vmatprep.mubr.f32.mxu0 0.0
        %4353 = vmatmul.mubr.f32.gmra.mxu0 %v4231
        %v4354 = vpop.f32.mrf.mxu0
        %v4355 = vadd.f32 0.0, %v4354
        %v4356 = vpop.f32.mrf.mxu0
        %4357 = vmatprep.mubr.f32.mxu0 0.0
        %4358 = vmatmul.mubr.f32.gmra.mxu0 %v4232
        %v4359 = vpop.f32.mrf.mxu0
        %v4360 = vadd.f32 0.0, %v4359
        %v4361 = vpop.f32.mrf.mxu0
        %4362 = vmatprep.mubr.f32.mxu0 0.0
        %4363 = vmatmul.mubr.f32.gmra.mxu0 %v4233
        %v4364 = vpop.f32.mrf.mxu0
        %v4365 = vadd.f32 0.0, %v4364
        %v4366 = vpop.f32.mrf.mxu0
        %4367 = vmatprep.mubr.f32.mxu0 0.0
        %4368 = vmatmul.mubr.f32.gmra.mxu0 %v4234
        %v4369 = vpop.f32.mrf.mxu0
        %v4370 = vadd.f32 0.0, %v4369
        %v4371 = vpop.f32.mrf.mxu0
        %4372 = vmatprep.mubr.f32.mxu0 0.0
        %4373 = vmatmul.mubr.f32.gmra.mxu0 %v4235
        %v4374 = vpop.f32.mrf.mxu0
        %v4375 = vadd.f32 0.0, %v4374
        %v4376 = vpop.f32.mrf.mxu0
        %4377 = vmatprep.mubr.f32.mxu0 0.0
        %4378 = vmatmul.mubr.f32.gmra.mxu0 %v4236
        %v4379 = vpop.f32.mrf.mxu0
        %v4380 = vadd.f32 0.0, %v4379
        %v4381 = vpop.f32.mrf.mxu0
        %4382 = vmatprep.mubr.f32.mxu0 0.0
        %4383 = vmatmul.mubr.f32.gmra.mxu0 %v4237
        %v4384 = vpop.f32.mrf.mxu0
        %v4385 = vadd.f32 0.0, %v4384
        %v4386 = vpop.f32.mrf.mxu0
        %4387 = vmatprep.mubr.f32.mxu0 0.0
        %4388 = vmatmul.mubr.f32.gmra.mxu0 %v4238
        %v4389 = vpop.f32.mrf.mxu0
        %v4390 = vadd.f32 0.0, %v4389
        %v4391 = vpop.f32.mrf.mxu0
        %4392 = vmatprep.mubr.f32.mxu0 0.0
        %4393 = vmatmul.mubr.f32.gmra.mxu0 %v4239
        %v4394 = vpop.f32.mrf.mxu0
        %v4395 = vadd.f32 0.0, %v4394
        %v4396 = vpop.f32.mrf.mxu0
        %4397 = vmatprep.mubr.f32.mxu0 0.0
        %4398 = vmatmul.mubr.f32.gmra.mxu0 %v4240
        %v4399 = vpop.f32.mrf.mxu0
        %v4400 = vadd.f32 0.0, %v4399
        %v4401 = vpop.f32.mrf.mxu0
        %4402 = vmatprep.mubr.f32.mxu0 0.0
        %4403 = vmatmul.mubr.f32.gmra.mxu0 %v4241
        %v4404 = vpop.f32.mrf.mxu0
        %v4405 = vadd.f32 0.0, %v4404
        %v4406 = vpop.f32.mrf.mxu0
        %4407 = vmatprep.mubr.f32.mxu0 0.0
        %4408 = vmatmul.mubr.f32.gmra.mxu0 %v4242
        %v4409 = vpop.f32.mrf.mxu0
        %v4410 = vadd.f32 0.0, %v4409
        %v4411 = vpop.f32.mrf.mxu0
        %4412 = vmatprep.mubr.f32.mxu0 0.0
        %4413 = vmatmul.mubr.f32.gmra.mxu0 %v4243
        %v4414 = vpop.f32.mrf.mxu0
        %v4415 = vadd.f32 0.0, %v4414
        %v4416 = vpop.f32.mrf.mxu0
        %4417 = vmatprep.mubr.f32.mxu0 0.0
        %4418 = vmatmul.mubr.f32.gmra.mxu0 %v4244
        %v4419 = vpop.f32.mrf.mxu0
        %v4420 = vadd.f32 0.0, %v4419
        %v4421 = vpop.f32.mrf.mxu0
        %4422 = vmatprep.mubr.f32.mxu0 0.0
        %4423 = vmatmul.mubr.f32.gmra.mxu0 %v4245
        %v4424 = vpop.f32.mrf.mxu0
        %v4425 = vadd.f32 0.0, %v4424
        %v4426 = vpop.f32.mrf.mxu0
        %4427 = vmatprep.mubr.f32.mxu0 0.0
        %4428 = vmatmul.mubr.f32.gmra.mxu0 %v4246
        %v4429 = vpop.f32.mrf.mxu0
        %v4430 = vadd.f32 0.0, %v4429
        %v4431 = vpop.f32.mrf.mxu0
        %4432 = vmatprep.mubr.f32.mxu0 0.0
        %4433 = vmatmul.mubr.f32.gmra.mxu0 %v4247
        %v4434 = vpop.f32.mrf.mxu0
        %v4435 = vadd.f32 0.0, %v4434
        %v4436 = vpop.f32.mrf.mxu0
        %4437 = vmatprep.mubr.f32.mxu0 0.0
        %4438 = vmatmul.mubr.f32.gmra.mxu0 %v4248
        %v4439 = vpop.f32.mrf.mxu0
        %v4440 = vadd.f32 0.0, %v4439
        %v4441 = vpop.f32.mrf.mxu0
        %4442 = vmatprep.mubr.f32.mxu0 0.0
        %4443 = vmatmul.mubr.f32.gmra.mxu0 %v4249
        %v4444 = vpop.f32.mrf.mxu0
        %v4445 = vadd.f32 0.0, %v4444
        %v4446 = vpop.f32.mrf.mxu0
        %4447 = vmatprep.mubr.f32.mxu0 0.0
        %4448 = vmatmul.mubr.f32.gmra.mxu0 %v4250
        %v4449 = vpop.f32.mrf.mxu0
        %v4450 = vadd.f32 0.0, %v4449
        %v4451 = vpop.f32.mrf.mxu0
        %4452 = vmatprep.mubr.f32.mxu0 0.0
        %4453 = vmatmul.mubr.f32.gmra.mxu0 %v4251
        %v4454 = vpop.f32.mrf.mxu0
        %v4455 = vadd.f32 0.0, %v4454
        %v4456 = vpop.f32.mrf.mxu0
        %4457 = vmatprep.mubr.f32.mxu0 0.0
        %4458 = vmatmul.mubr.f32.gmra.mxu0 %v4252
        %v4459 = vpop.f32.mrf.mxu0
        %v4460 = vadd.f32 0.0, %v4459
        %v4461 = vpop.f32.mrf.mxu0
        %4462 = vmatprep.mubr.f32.mxu0 0.0
        %4463 = vmatmul.mubr.f32.gmra.mxu0 %v4253
        %v4464 = vpop.f32.mrf.mxu0
        %v4465 = vadd.f32 0.0, %v4464
        %v4466 = vpop.f32.mrf.mxu0
        %4467 = vmatprep.mubr.f32.mxu0 0.0
        %4468 = vmatmul.mubr.f32.gmra.mxu0 %v4254
        %v4469 = vpop.f32.mrf.mxu0
        %v4470 = vadd.f32 0.0, %v4469
        %v4471 = vpop.f32.mrf.mxu0
        %4472 = vmatprep.mubr.f32.mxu0 0.0
        %4473 = vmatmul.mubr.f32.gmra.mxu0 %v4255
        %v4474 = vpop.f32.mrf.mxu0
        %v4475 = vadd.f32 0.0, %v4474
        %v4476 = vpop.f32.mrf.mxu0
        %4477 = vmatprep.mubr.f32.mxu0 0.0
        %4478 = vmatmul.mubr.f32.gmra.mxu0 %v4256
        %v4479 = vpop.f32.mrf.mxu0
        %v4480 = vadd.f32 0.0, %v4479
        %v4481 = vpop.f32.mrf.mxu0
        %4482 = vmatprep.mubr.f32.mxu0 0.0
        %4483 = vmatmul.mubr.f32.gmra.mxu0 %v4257
        %v4484 = vpop.f32.mrf.mxu0
        %v4485 = vadd.f32 0.0, %v4484
        %v4486 = vpop.f32.mrf.mxu0
        %4487 = vmatprep.mubr.f32.mxu0 0.0
        %4488 = vmatmul.mubr.f32.gmra.mxu0 %v4258
        %v4489 = vpop.f32.mrf.mxu0
        %v4490 = vadd.f32 0.0, %v4489
        %v4491 = vpop.f32.mrf.mxu0
        %4492 = vmatprep.mubr.f32.mxu0 0.0
        %4493 = vmatmul.mubr.f32.gmra.mxu0 %v4259
        %v4494 = vpop.f32.mrf.mxu0
        %v4495 = vadd.f32 0.0, %v4494
        %v4496 = vpop.f32.mrf.mxu0
        %4497 = vmatprep.mubr.f32.mxu0 0.0
        %4498 = vmatmul.mubr.f32.gmra.mxu0 %v4260
        %v4499 = vpop.f32.mrf.mxu0
        %v4500 = vadd.f32 0.0, %v4499
        %v4501 = vpop.f32.mrf.mxu0
        %4502 = vmatprep.mubr.f32.mxu0 0.0
        %4503 = vmatmul.mubr.f32.gmra.mxu0 %v4261
        %v4504 = vpop.f32.mrf.mxu0
        %v4505 = vadd.f32 0.0, %v4504
        %v4506 = vpop.f32.mrf.mxu0
        %4507 = vmatprep.mubr.f32.mxu0 0.0
        %4508 = vmatmul.mubr.f32.gmra.mxu0 %v4262
        %v4509 = vpop.f32.mrf.mxu0
        %v4510 = vadd.f32 0.0, %v4509
        %v4511 = vpop.f32.mrf.mxu0
        %4512 = vmatprep.mubr.f32.mxu0 0.0
        %4513 = vmatmul.mubr.f32.gmra.mxu0 %v4263
        %v4514 = vpop.f32.mrf.mxu0
        %v4515 = vadd.f32 0.0, %v4514
        %v4516 = vpop.f32.mrf.mxu0
        %4517 = vmatprep.mubr.f32.mxu0 0.0
        %4518 = vmatmul.mubr.f32.gmra.mxu0 %v4264
        %v4519 = vpop.f32.mrf.mxu0
        %v4520 = vadd.f32 0.0, %v4519
        %v4521 = vpop.f32.mrf.mxu0
        %4522 = vmatprep.mubr.f32.mxu0 0.0
        %4523 = vmatmul.mubr.f32.gmra.mxu0 %v4265
        %v4524 = vpop.f32.mrf.mxu0
        %v4525 = vadd.f32 0.0, %v4524
        %v4526 = vpop.f32.mrf.mxu0
        %4527 = vdwg.mxu0
        %4528 = vmatprep.subr.mxu0 0.0
        %4529 = vmatpush1.msra.mxu0 %v4229
        %4530 = vmatprep.subr.mxu0 0.0
        %4531 = vmatpush1.msra.mxu0 %v4228
        %4532 = vmatprep.subr.mxu0 0.0
        %4533 = vmatpush1.msra.mxu0 %v4227
        %4534 = vmatprep.subr.mxu0 0.0
        %4535 = vmatpush1.msra.mxu0 %v4226
        %4536 = vmatprep.subr.mxu0 0.0
        %4537 = vmatpush1.msra.mxu0 %v4225
        %4538 = vmatprep.subr.mxu0 0.0
        %4539 = vmatpush1.msra.mxu0 %v4224
        %4540 = vmatprep.subr.mxu0 0.0
        %4541 = vmatpush1.msra.mxu0 %v4223
        %4542 = vmatprep.subr.mxu0 0.0
        %4543 = vmatpush1.msra.mxu0 %v4222
        %4544 = vmatprep.subr.mxu0 0.0
        %4545 = vmatpush1.msra.mxu0 %v4221
        %4546 = vmatprep.subr.mxu0 0.0
        %4547 = vmatpush1.msra.mxu0 %v4220
        %4548 = vmatprep.subr.mxu0 0.0
        %4549 = vmatpush1.msra.mxu0 %v4219
        %4550 = vmatprep.subr.mxu0 0.0
        %4551 = vmatpush1.msra.mxu0 %v4218
        %4552 = vmatprep.subr.mxu0 0.0
        %4553 = vmatpush1.msra.mxu0 %v4217
        %4554 = vmatprep.subr.mxu0 0.0
        %4555 = vmatpush1.msra.mxu0 %v4216
        %4556 = vmatprep.subr.mxu0 0.0
        %4557 = vmatpush1.msra.mxu0 %v4215
        %4558 = vmatprep.subr.mxu0 0.0
        %4559 = vmatpush1.msra.mxu0 %v4214
        %4560 = vmatprep.subr.mxu0 0.0
        %4561 = vmatpush2.msra.mxu0 0.0
        %4562 = vmatprep.subr.mxu0 0.0
        %4563 = vmatpush2.msra.mxu0 0.0
        %4564 = vmatprep.subr.mxu0 0.0
        %4565 = vmatpush2.msra.mxu0 0.0
        %4566 = vmatprep.subr.mxu0 0.0
        %4567 = vmatpush2.msra.mxu0 0.0
        %4568 = vmatprep.subr.mxu0 0.0
        %4569 = vmatpush2.msra.mxu0 0.0
        %4570 = vmatprep.subr.mxu0 0.0
        %4571 = vmatpush2.msra.mxu0 0.0
        %4572 = vmatprep.subr.mxu0 0.0
        %4573 = vmatpush2.msra.mxu0 0.0
        %4574 = vmatprep.subr.mxu0 0.0
        %4575 = vmatpush2.msra.mxu0 0.0
        %4576 = vmatprep.subr.mxu0 0.0
        %4577 = vmatpush2.msra.mxu0 0.0
        %4578 = vmatprep.subr.mxu0 0.0
        %4579 = vmatpush2.msra.mxu0 0.0
        %4580 = vmatprep.subr.mxu0 0.0
        %4581 = vmatpush2.msra.mxu0 0.0
        %4582 = vmatprep.subr.mxu0 0.0
        %4583 = vmatpush2.msra.mxu0 0.0
        %4584 = vmatprep.subr.mxu0 0.0
        %4585 = vmatpush2.msra.mxu0 0.0
        %4586 = vmatprep.subr.mxu0 0.0
        %4587 = vmatpush2.msra.mxu0 0.0
        %4588 = vmatprep.subr.mxu0 0.0
        %4589 = vmatpush2.msra.mxu0 0.0
        %4590 = vmatprep.subr.mxu0 0.0
        %4591 = vmatpush2.msra.mxu0 0.0
        %4592 = vmatprep.mubr.f32.mxu0 0.0
        %4593 = vmatmul.mubr.f32.gmra.mxu0 %v4178
        %v4594 = vpop.f32.mrf.mxu0
        %v4595 = vadd.f32 %v4350, %v4594
        %v4596 = vpop.f32.mrf.mxu0
        %4597 = vmatprep.mubr.f32.mxu0 0.0
        %4598 = vmatmul.mubr.f32.gmra.mxu0 %v4179
        %v4599 = vpop.f32.mrf.mxu0
        %v4600 = vadd.f32 %v4355, %v4599
        %v4601 = vpop.f32.mrf.mxu0
        %4602 = vmatprep.mubr.f32.mxu0 0.0
        %4603 = vmatmul.mubr.f32.gmra.mxu0 %v4180
        %v4604 = vpop.f32.mrf.mxu0
        %v4605 = vadd.f32 %v4360, %v4604
        %v4606 = vpop.f32.mrf.mxu0
        %4607 = vmatprep.mubr.f32.mxu0 0.0
        %4608 = vmatmul.mubr.f32.gmra.mxu0 %v4181
        %v4609 = vpop.f32.mrf.mxu0
        %v4610 = vadd.f32 %v4365, %v4609
        %v4611 = vpop.f32.mrf.mxu0
        %4612 = vmatprep.mubr.f32.mxu0 0.0
        %4613 = vmatmul.mubr.f32.gmra.mxu0 %v4182
        %v4614 = vpop.f32.mrf.mxu0
        %v4615 = vadd.f32 %v4370, %v4614
        %v4616 = vpop.f32.mrf.mxu0
        %4617 = vmatprep.mubr.f32.mxu0 0.0
        %4618 = vmatmul.mubr.f32.gmra.mxu0 %v4183
        %v4619 = vpop.f32.mrf.mxu0
        %v4620 = vadd.f32 %v4375, %v4619
        %v4621 = vpop.f32.mrf.mxu0
        %4622 = vmatprep.mubr.f32.mxu0 0.0
        %4623 = vmatmul.mubr.f32.gmra.mxu0 %v4184
        %v4624 = vpop.f32.mrf.mxu0
        %v4625 = vadd.f32 %v4380, %v4624
        %v4626 = vpop.f32.mrf.mxu0
        %4627 = vmatprep.mubr.f32.mxu0 0.0
        %4628 = vmatmul.mubr.f32.gmra.mxu0 %v4185
        %v4629 = vpop.f32.mrf.mxu0
        %v4630 = vadd.f32 %v4385, %v4629
        %v4631 = vpop.f32.mrf.mxu0
        %4632 = vmatprep.mubr.f32.mxu0 0.0
        %4633 = vmatmul.mubr.f32.gmra.mxu0 %v4186
        %v4634 = vpop.f32.mrf.mxu0
        %v4635 = vadd.f32 %v4390, %v4634
        %v4636 = vpop.f32.mrf.mxu0
        %4637 = vmatprep.mubr.f32.mxu0 0.0
        %4638 = vmatmul.mubr.f32.gmra.mxu0 %v4187
        %v4639 = vpop.f32.mrf.mxu0
        %v4640 = vadd.f32 %v4395, %v4639
        %v4641 = vpop.f32.mrf.mxu0
        %4642 = vmatprep.mubr.f32.mxu0 0.0
        %4643 = vmatmul.mubr.f32.gmra.mxu0 %v4188
        %v4644 = vpop.f32.mrf.mxu0
        %v4645 = vadd.f32 %v4400, %v4644
        %v4646 = vpop.f32.mrf.mxu0
        %4647 = vmatprep.mubr.f32.mxu0 0.0
        %4648 = vmatmul.mubr.f32.gmra.mxu0 %v4189
        %v4649 = vpop.f32.mrf.mxu0
        %v4650 = vadd.f32 %v4405, %v4649
        %v4651 = vpop.f32.mrf.mxu0
        %4652 = vmatprep.mubr.f32.mxu0 0.0
        %4653 = vmatmul.mubr.f32.gmra.mxu0 %v4190
        %v4654 = vpop.f32.mrf.mxu0
        %v4655 = vadd.f32 %v4410, %v4654
        %v4656 = vpop.f32.mrf.mxu0
        %4657 = vmatprep.mubr.f32.mxu0 0.0
        %4658 = vmatmul.mubr.f32.gmra.mxu0 %v4191
        %v4659 = vpop.f32.mrf.mxu0
        %v4660 = vadd.f32 %v4415, %v4659
        %v4661 = vpop.f32.mrf.mxu0
        %4662 = vmatprep.mubr.f32.mxu0 0.0
        %4663 = vmatmul.mubr.f32.gmra.mxu0 %v4192
        %v4664 = vpop.f32.mrf.mxu0
        %v4665 = vadd.f32 %v4420, %v4664
        %v4666 = vpop.f32.mrf.mxu0
        %4667 = vmatprep.mubr.f32.mxu0 0.0
        %4668 = vmatmul.mubr.f32.gmra.mxu0 %v4193
        %v4669 = vpop.f32.mrf.mxu0
        %v4670 = vadd.f32 %v4425, %v4669
        %v4671 = vpop.f32.mrf.mxu0
        %4672 = vmatprep.mubr.f32.mxu0 0.0
        %4673 = vmatmul.mubr.f32.gmra.mxu0 %v4194
        %v4674 = vpop.f32.mrf.mxu0
        %v4675 = vadd.f32 %v4430, %v4674
        %v4676 = vpop.f32.mrf.mxu0
        %4677 = vmatprep.mubr.f32.mxu0 0.0
        %4678 = vmatmul.mubr.f32.gmra.mxu0 %v4195
        %v4679 = vpop.f32.mrf.mxu0
        %v4680 = vadd.f32 %v4435, %v4679
        %v4681 = vpop.f32.mrf.mxu0
        %4682 = vmatprep.mubr.f32.mxu0 0.0
        %4683 = vmatmul.mubr.f32.gmra.mxu0 %v4196
        %v4684 = vpop.f32.mrf.mxu0
        %v4685 = vadd.f32 %v4440, %v4684
        %v4686 = vpop.f32.mrf.mxu0
        %4687 = vmatprep.mubr.f32.mxu0 0.0
        %4688 = vmatmul.mubr.f32.gmra.mxu0 %v4197
        %v4689 = vpop.f32.mrf.mxu0
        %v4690 = vadd.f32 %v4445, %v4689
        %v4691 = vpop.f32.mrf.mxu0
        %4692 = vmatprep.mubr.f32.mxu0 0.0
        %4693 = vmatmul.mubr.f32.gmra.mxu0 %v4198
        %v4694 = vpop.f32.mrf.mxu0
        %v4695 = vadd.f32 %v4450, %v4694
        %v4696 = vpop.f32.mrf.mxu0
        %4697 = vmatprep.mubr.f32.mxu0 0.0
        %4698 = vmatmul.mubr.f32.gmra.mxu0 %v4199
        %v4699 = vpop.f32.mrf.mxu0
        %v4700 = vadd.f32 %v4455, %v4699
        %v4701 = vpop.f32.mrf.mxu0
        %4702 = vmatprep.mubr.f32.mxu0 0.0
        %4703 = vmatmul.mubr.f32.gmra.mxu0 %v4200
        %v4704 = vpop.f32.mrf.mxu0
        %v4705 = vadd.f32 %v4460, %v4704
        %v4706 = vpop.f32.mrf.mxu0
        %4707 = vmatprep.mubr.f32.mxu0 0.0
        %4708 = vmatmul.mubr.f32.gmra.mxu0 %v4201
        %v4709 = vpop.f32.mrf.mxu0
        %v4710 = vadd.f32 %v4465, %v4709
        %v4711 = vpop.f32.mrf.mxu0
        %4712 = vmatprep.mubr.f32.mxu0 0.0
        %4713 = vmatmul.mubr.f32.gmra.mxu0 %v4202
        %v4714 = vpop.f32.mrf.mxu0
        %v4715 = vadd.f32 %v4470, %v4714
        %v4716 = vpop.f32.mrf.mxu0
        %4717 = vmatprep.mubr.f32.mxu0 0.0
        %4718 = vmatmul.mubr.f32.gmra.mxu0 %v4203
        %v4719 = vpop.f32.mrf.mxu0
        %v4720 = vadd.f32 %v4475, %v4719
        %v4721 = vpop.f32.mrf.mxu0
        %4722 = vmatprep.mubr.f32.mxu0 0.0
        %4723 = vmatmul.mubr.f32.gmra.mxu0 %v4204
        %v4724 = vpop.f32.mrf.mxu0
        %v4725 = vadd.f32 %v4480, %v4724
        %v4726 = vpop.f32.mrf.mxu0
        %4727 = vmatprep.mubr.f32.mxu0 0.0
        %4728 = vmatmul.mubr.f32.gmra.mxu0 %v4205
        %v4729 = vpop.f32.mrf.mxu0
        %v4730 = vadd.f32 %v4485, %v4729
        %v4731 = vpop.f32.mrf.mxu0
        %4732 = vmatprep.mubr.f32.mxu0 0.0
        %4733 = vmatmul.mubr.f32.gmra.mxu0 %v4206
        %v4734 = vpop.f32.mrf.mxu0
        %v4735 = vadd.f32 %v4490, %v4734
        %v4736 = vpop.f32.mrf.mxu0
        %4737 = vmatprep.mubr.f32.mxu0 0.0
        %4738 = vmatmul.mubr.f32.gmra.mxu0 %v4207
        %v4739 = vpop.f32.mrf.mxu0
        %v4740 = vadd.f32 %v4495, %v4739
        %v4741 = vpop.f32.mrf.mxu0
        %4742 = vmatprep.mubr.f32.mxu0 0.0
        %4743 = vmatmul.mubr.f32.gmra.mxu0 %v4208
        %v4744 = vpop.f32.mrf.mxu0
        %v4745 = vadd.f32 %v4500, %v4744
        %v4746 = vpop.f32.mrf.mxu0
        %4747 = vmatprep.mubr.f32.mxu0 0.0
        %4748 = vmatmul.mubr.f32.gmra.mxu0 %v4209
        %v4749 = vpop.f32.mrf.mxu0
        %v4750 = vadd.f32 %v4505, %v4749
        %v4751 = vpop.f32.mrf.mxu0
        %4752 = vmatprep.mubr.f32.mxu0 0.0
        %4753 = vmatmul.mubr.f32.gmra.mxu0 %v4210
        %v4754 = vpop.f32.mrf.mxu0
        %v4755 = vadd.f32 %v4510, %v4754
        %v4756 = vpop.f32.mrf.mxu0
        %4757 = vmatprep.mubr.f32.mxu0 0.0
        %4758 = vmatmul.mubr.f32.gmra.mxu0 %v4211
        %v4759 = vpop.f32.mrf.mxu0
        %v4760 = vadd.f32 %v4515, %v4759
        %v4761 = vpop.f32.mrf.mxu0
        %4762 = vmatprep.mubr.f32.mxu0 0.0
        %4763 = vmatmul.mubr.f32.gmra.mxu0 %v4212
        %v4764 = vpop.f32.mrf.mxu0
        %v4765 = vadd.f32 %v4520, %v4764
        %v4766 = vpop.f32.mrf.mxu0
        %4767 = vmatprep.mubr.f32.mxu0 0.0
        %4768 = vmatmul.mubr.f32.gmra.mxu0 %v4213
        %v4769 = vpop.f32.mrf.mxu0
        %v4770 = vadd.f32 %v4525, %v4769
        %v4771 = vpop.f32.mrf.mxu0
        %4772 = vdwg.mxu0
        %v4773 = vld [vmem:[#allocation2 + $0x7] sm:$0xff]
        %v4774 = vld [vmem:[#allocation2 + $0xf] sm:$0xff]
        %v4775 = vld [vmem:[#allocation2 + $0x17] sm:$0xff]
        %v4776 = vld [vmem:[#allocation2 + $0x1f] sm:$0xff]
        %v4777 = vld [vmem:[#allocation2 + $0x27] sm:$0xff]
        %v4778 = vld [vmem:[#allocation2 + $0x2f] sm:$0xff]
        %v4779 = vld [vmem:[#allocation2 + $0x37] sm:$0xff]
        %v4780 = vld [vmem:[#allocation2 + $0x3f] sm:$0xff]
        %v4781 = vld [vmem:[#allocation2 + $0x47] sm:$0xff]
        %v4782 = vld [vmem:[#allocation2 + $0x4f] sm:$0xff]
        %v4783 = vld [vmem:[#allocation2 + $0x57] sm:$0xff]
        %v4784 = vld [vmem:[#allocation2 + $0x5f] sm:$0xff]
        %v4785 = vld [vmem:[#allocation2 + $0x67] sm:$0xff]
        %v4786 = vld [vmem:[#allocation2 + $0x6f] sm:$0xff]
        %v4787 = vld [vmem:[#allocation2 + $0x77] sm:$0xff]
        %v4788 = vld [vmem:[#allocation2 + $0x7f] sm:$0xff]
        %v4789 = vld [vmem:[#allocation2 + $0x87] sm:$0xff]
        %v4790 = vld [vmem:[#allocation2 + $0x8f] sm:$0xff]
        %v4791 = vld [vmem:[#allocation2 + $0x97] sm:$0xff]
        %v4792 = vld [vmem:[#allocation2 + $0x9f] sm:$0xff]
        %v4793 = vld [vmem:[#allocation2 + $0xa7] sm:$0xff]
        %v4794 = vld [vmem:[#allocation2 + $0xaf] sm:$0xff]
        %v4795 = vld [vmem:[#allocation2 + $0xb7] sm:$0xff]
        %v4796 = vld [vmem:[#allocation2 + $0xbf] sm:$0xff]
        %v4797 = vld [vmem:[#allocation2 + $0xc7] sm:$0xff]
        %v4798 = vld [vmem:[#allocation2 + $0xcf] sm:$0xff]
        %v4799 = vld [vmem:[#allocation2 + $0xd7] sm:$0xff]
        %v4800 = vld [vmem:[#allocation2 + $0xdf] sm:$0xff]
        %v4801 = vld [vmem:[#allocation2 + $0xe7] sm:$0xff]
        %v4802 = vld [vmem:[#allocation2 + $0xef] sm:$0xff]
        %v4803 = vld [vmem:[#allocation2 + $0xf7] sm:$0xff]
        %v4804 = vld [vmem:[#allocation2 + $0xff] sm:$0xff]
        %v4805 = vld [vmem:[#allocation2 + $0x107] sm:$0xff]
        %v4806 = vld [vmem:[#allocation2 + $0x10f] sm:$0xff]
        %v4807 = vld [vmem:[#allocation2 + $0x117] sm:$0xff]
        %v4808 = vld [vmem:[#allocation2 + $0x11f] sm:$0xff]
        %s4809 = scalar_lea.vmem [#allocation4], 256
        %v4810 = vld [vmem:[%s4809] sm:$0xff]
        %v4811 = vld [vmem:[%s4809 + $0x8] sm:$0xff]
        %v4812 = vld [vmem:[%s4809 + $0x10] sm:$0xff]
        %v4813 = vld [vmem:[%s4809 + $0x18] sm:$0xff]
        %v4814 = vld [vmem:[%s4809 + $0x20] sm:$0xff]
        %v4815 = vld [vmem:[%s4809 + $0x28] sm:$0xff]
        %v4816 = vld [vmem:[%s4809 + $0x30] sm:$0xff]
        %v4817 = vld [vmem:[%s4809 + $0x38] sm:$0xff]
        %v4818 = vld [vmem:[%s4809 + $0x40] sm:$0xff]
        %v4819 = vld [vmem:[%s4809 + $0x48] sm:$0xff]
        %v4820 = vld [vmem:[%s4809 + $0x50] sm:$0xff]
        %v4821 = vld [vmem:[%s4809 + $0x58] sm:$0xff]
        %v4822 = vld [vmem:[%s4809 + $0x60] sm:$0xff]
        %v4823 = vld [vmem:[%s4809 + $0x68] sm:$0xff]
        %v4824 = vld [vmem:[%s4809 + $0x70] sm:$0xff]
        %v4825 = vld [vmem:[%s4809 + $0x78] sm:$0xff]
        %4826 = vmatprep.subr.mxu0 0.0
        %4827 = vmatpush1.msra.mxu0 %v4825
        %4828 = vmatprep.subr.mxu0 0.0
        %4829 = vmatpush1.msra.mxu0 %v4824
        %4830 = vmatprep.subr.mxu0 0.0
        %4831 = vmatpush1.msra.mxu0 %v4823
        %4832 = vmatprep.subr.mxu0 0.0
        %4833 = vmatpush1.msra.mxu0 %v4822
        %4834 = vmatprep.subr.mxu0 0.0
        %4835 = vmatpush1.msra.mxu0 %v4821
        %4836 = vmatprep.subr.mxu0 0.0
        %4837 = vmatpush1.msra.mxu0 %v4820
        %4838 = vmatprep.subr.mxu0 0.0
        %4839 = vmatpush1.msra.mxu0 %v4819
        %4840 = vmatprep.subr.mxu0 0.0
        %4841 = vmatpush1.msra.mxu0 %v4818
        %4842 = vmatprep.subr.mxu0 0.0
        %4843 = vmatpush1.msra.mxu0 %v4817
        %4844 = vmatprep.subr.mxu0 0.0
        %4845 = vmatpush1.msra.mxu0 %v4816
        %4846 = vmatprep.subr.mxu0 0.0
        %4847 = vmatpush1.msra.mxu0 %v4815
        %4848 = vmatprep.subr.mxu0 0.0
        %4849 = vmatpush1.msra.mxu0 %v4814
        %4850 = vmatprep.subr.mxu0 0.0
        %4851 = vmatpush1.msra.mxu0 %v4813
        %4852 = vmatprep.subr.mxu0 0.0
        %4853 = vmatpush1.msra.mxu0 %v4812
        %4854 = vmatprep.subr.mxu0 0.0
        %4855 = vmatpush1.msra.mxu0 %v4811
        %4856 = vmatprep.subr.mxu0 0.0
        %4857 = vmatpush1.msra.mxu0 %v4810
        %4858 = vmatprep.subr.mxu0 0.0
        %4859 = vmatpush2.msra.mxu0 0.0
        %4860 = vmatprep.subr.mxu0 0.0
        %4861 = vmatpush2.msra.mxu0 0.0
        %4862 = vmatprep.subr.mxu0 0.0
        %4863 = vmatpush2.msra.mxu0 0.0
        %4864 = vmatprep.subr.mxu0 0.0
        %4865 = vmatpush2.msra.mxu0 0.0
        %4866 = vmatprep.subr.mxu0 0.0
        %4867 = vmatpush2.msra.mxu0 0.0
        %4868 = vmatprep.subr.mxu0 0.0
        %4869 = vmatpush2.msra.mxu0 0.0
        %4870 = vmatprep.subr.mxu0 0.0
        %4871 = vmatpush2.msra.mxu0 0.0
        %4872 = vmatprep.subr.mxu0 0.0
        %4873 = vmatpush2.msra.mxu0 0.0
        %4874 = vmatprep.subr.mxu0 0.0
        %4875 = vmatpush2.msra.mxu0 0.0
        %4876 = vmatprep.subr.mxu0 0.0
        %4877 = vmatpush2.msra.mxu0 0.0
        %4878 = vmatprep.subr.mxu0 0.0
        %4879 = vmatpush2.msra.mxu0 0.0
        %4880 = vmatprep.subr.mxu0 0.0
        %4881 = vmatpush2.msra.mxu0 0.0
        %4882 = vmatprep.subr.mxu0 0.0
        %4883 = vmatpush2.msra.mxu0 0.0
        %4884 = vmatprep.subr.mxu0 0.0
        %4885 = vmatpush2.msra.mxu0 0.0
        %4886 = vmatprep.subr.mxu0 0.0
        %4887 = vmatpush2.msra.mxu0 0.0
        %4888 = vmatprep.subr.mxu0 0.0
        %4889 = vmatpush2.msra.mxu0 0.0
        %4890 = vmatprep.mubr.f32.mxu0 0.0
        %4891 = vmatmul.mubr.f32.gmra.mxu0 %v4773
        %v4892 = vpop.f32.mrf.mxu0
        %v4893 = vadd.f32 0.0, %v4892
        %v4894 = vpop.f32.mrf.mxu0
        %4895 = vmatprep.mubr.f32.mxu0 0.0
        %4896 = vmatmul.mubr.f32.gmra.mxu0 %v4774
        %v4897 = vpop.f32.mrf.mxu0
        %v4898 = vadd.f32 0.0, %v4897
        %v4899 = vpop.f32.mrf.mxu0
        %4900 = vmatprep.mubr.f32.mxu0 0.0
        %4901 = vmatmul.mubr.f32.gmra.mxu0 %v4775
        %v4902 = vpop.f32.mrf.mxu0
        %v4903 = vadd.f32 0.0, %v4902
        %v4904 = vpop.f32.mrf.mxu0
        %4905 = vmatprep.mubr.f32.mxu0 0.0
        %4906 = vmatmul.mubr.f32.gmra.mxu0 %v4776
        %v4907 = vpop.f32.mrf.mxu0
        %v4908 = vadd.f32 0.0, %v4907
        %v4909 = vpop.f32.mrf.mxu0
        %4910 = vmatprep.mubr.f32.mxu0 0.0
        %4911 = vmatmul.mubr.f32.gmra.mxu0 %v4777
        %v4912 = vpop.f32.mrf.mxu0
        %v4913 = vadd.f32 0.0, %v4912
        %v4914 = vpop.f32.mrf.mxu0
        %4915 = vmatprep.mubr.f32.mxu0 0.0
        %4916 = vmatmul.mubr.f32.gmra.mxu0 %v4778
        %v4917 = vpop.f32.mrf.mxu0
        %v4918 = vadd.f32 0.0, %v4917
        %v4919 = vpop.f32.mrf.mxu0
        %4920 = vmatprep.mubr.f32.mxu0 0.0
        %4921 = vmatmul.mubr.f32.gmra.mxu0 %v4779
        %v4922 = vpop.f32.mrf.mxu0
        %v4923 = vadd.f32 0.0, %v4922
        %v4924 = vpop.f32.mrf.mxu0
        %4925 = vmatprep.mubr.f32.mxu0 0.0
        %4926 = vmatmul.mubr.f32.gmra.mxu0 %v4780
        %v4927 = vpop.f32.mrf.mxu0
        %v4928 = vadd.f32 0.0, %v4927
        %v4929 = vpop.f32.mrf.mxu0
        %4930 = vmatprep.mubr.f32.mxu0 0.0
        %4931 = vmatmul.mubr.f32.gmra.mxu0 %v4781
        %v4932 = vpop.f32.mrf.mxu0
        %v4933 = vadd.f32 0.0, %v4932
        %v4934 = vpop.f32.mrf.mxu0
        %4935 = vmatprep.mubr.f32.mxu0 0.0
        %4936 = vmatmul.mubr.f32.gmra.mxu0 %v4782
        %v4937 = vpop.f32.mrf.mxu0
        %v4938 = vadd.f32 0.0, %v4937
        %v4939 = vpop.f32.mrf.mxu0
        %4940 = vmatprep.mubr.f32.mxu0 0.0
        %4941 = vmatmul.mubr.f32.gmra.mxu0 %v4783
        %v4942 = vpop.f32.mrf.mxu0
        %v4943 = vadd.f32 0.0, %v4942
        %v4944 = vpop.f32.mrf.mxu0
        %4945 = vmatprep.mubr.f32.mxu0 0.0
        %4946 = vmatmul.mubr.f32.gmra.mxu0 %v4784
        %v4947 = vpop.f32.mrf.mxu0
        %v4948 = vadd.f32 0.0, %v4947
        %v4949 = vpop.f32.mrf.mxu0
        %4950 = vmatprep.mubr.f32.mxu0 0.0
        %4951 = vmatmul.mubr.f32.gmra.mxu0 %v4785
        %v4952 = vpop.f32.mrf.mxu0
        %v4953 = vadd.f32 0.0, %v4952
        %v4954 = vpop.f32.mrf.mxu0
        %4955 = vmatprep.mubr.f32.mxu0 0.0
        %4956 = vmatmul.mubr.f32.gmra.mxu0 %v4786
        %v4957 = vpop.f32.mrf.mxu0
        %v4958 = vadd.f32 0.0, %v4957
        %v4959 = vpop.f32.mrf.mxu0
        %4960 = vmatprep.mubr.f32.mxu0 0.0
        %4961 = vmatmul.mubr.f32.gmra.mxu0 %v4787
        %v4962 = vpop.f32.mrf.mxu0
        %v4963 = vadd.f32 0.0, %v4962
        %v4964 = vpop.f32.mrf.mxu0
        %4965 = vmatprep.mubr.f32.mxu0 0.0
        %4966 = vmatmul.mubr.f32.gmra.mxu0 %v4788
        %v4967 = vpop.f32.mrf.mxu0
        %v4968 = vadd.f32 0.0, %v4967
        %v4969 = vpop.f32.mrf.mxu0
        %4970 = vmatprep.mubr.f32.mxu0 0.0
        %4971 = vmatmul.mubr.f32.gmra.mxu0 %v4789
        %v4972 = vpop.f32.mrf.mxu0
        %v4973 = vadd.f32 0.0, %v4972
        %v4974 = vpop.f32.mrf.mxu0
        %4975 = vmatprep.mubr.f32.mxu0 0.0
        %4976 = vmatmul.mubr.f32.gmra.mxu0 %v4790
        %v4977 = vpop.f32.mrf.mxu0
        %v4978 = vadd.f32 0.0, %v4977
        %v4979 = vpop.f32.mrf.mxu0
        %4980 = vmatprep.mubr.f32.mxu0 0.0
        %4981 = vmatmul.mubr.f32.gmra.mxu0 %v4791
        %v4982 = vpop.f32.mrf.mxu0
        %v4983 = vadd.f32 0.0, %v4982
        %v4984 = vpop.f32.mrf.mxu0
        %4985 = vmatprep.mubr.f32.mxu0 0.0
        %4986 = vmatmul.mubr.f32.gmra.mxu0 %v4792
        %v4987 = vpop.f32.mrf.mxu0
        %v4988 = vadd.f32 0.0, %v4987
        %v4989 = vpop.f32.mrf.mxu0
        %4990 = vmatprep.mubr.f32.mxu0 0.0
        %4991 = vmatmul.mubr.f32.gmra.mxu0 %v4793
        %v4992 = vpop.f32.mrf.mxu0
        %v4993 = vadd.f32 0.0, %v4992
        %v4994 = vpop.f32.mrf.mxu0
        %4995 = vmatprep.mubr.f32.mxu0 0.0
        %4996 = vmatmul.mubr.f32.gmra.mxu0 %v4794
        %v4997 = vpop.f32.mrf.mxu0
        %v4998 = vadd.f32 0.0, %v4997
        %v4999 = vpop.f32.mrf.mxu0
        %5000 = vmatprep.mubr.f32.mxu0 0.0
        %5001 = vmatmul.mubr.f32.gmra.mxu0 %v4795
        %v5002 = vpop.f32.mrf.mxu0
        %v5003 = vadd.f32 0.0, %v5002
        %v5004 = vpop.f32.mrf.mxu0
        %5005 = vmatprep.mubr.f32.mxu0 0.0
        %5006 = vmatmul.mubr.f32.gmra.mxu0 %v4796
        %v5007 = vpop.f32.mrf.mxu0
        %v5008 = vadd.f32 0.0, %v5007
        %v5009 = vpop.f32.mrf.mxu0
        %5010 = vmatprep.mubr.f32.mxu0 0.0
        %5011 = vmatmul.mubr.f32.gmra.mxu0 %v4797
        %v5012 = vpop.f32.mrf.mxu0
        %v5013 = vadd.f32 0.0, %v5012
        %v5014 = vpop.f32.mrf.mxu0
        %5015 = vmatprep.mubr.f32.mxu0 0.0
        %5016 = vmatmul.mubr.f32.gmra.mxu0 %v4798
        %v5017 = vpop.f32.mrf.mxu0
        %v5018 = vadd.f32 0.0, %v5017
        %v5019 = vpop.f32.mrf.mxu0
        %5020 = vmatprep.mubr.f32.mxu0 0.0
        %5021 = vmatmul.mubr.f32.gmra.mxu0 %v4799
        %v5022 = vpop.f32.mrf.mxu0
        %v5023 = vadd.f32 0.0, %v5022
        %v5024 = vpop.f32.mrf.mxu0
        %5025 = vmatprep.mubr.f32.mxu0 0.0
        %5026 = vmatmul.mubr.f32.gmra.mxu0 %v4800
        %v5027 = vpop.f32.mrf.mxu0
        %v5028 = vadd.f32 0.0, %v5027
        %v5029 = vpop.f32.mrf.mxu0
        %5030 = vmatprep.mubr.f32.mxu0 0.0
        %5031 = vmatmul.mubr.f32.gmra.mxu0 %v4801
        %v5032 = vpop.f32.mrf.mxu0
        %v5033 = vadd.f32 0.0, %v5032
        %v5034 = vpop.f32.mrf.mxu0
        %5035 = vmatprep.mubr.f32.mxu0 0.0
        %5036 = vmatmul.mubr.f32.gmra.mxu0 %v4802
        %v5037 = vpop.f32.mrf.mxu0
        %v5038 = vadd.f32 0.0, %v5037
        %v5039 = vpop.f32.mrf.mxu0
        %5040 = vmatprep.mubr.f32.mxu0 0.0
        %5041 = vmatmul.mubr.f32.gmra.mxu0 %v4803
        %v5042 = vpop.f32.mrf.mxu0
        %v5043 = vadd.f32 0.0, %v5042
        %v5044 = vpop.f32.mrf.mxu0
        %5045 = vmatprep.mubr.f32.mxu0 0.0
        %5046 = vmatmul.mubr.f32.gmra.mxu0 %v4804
        %v5047 = vpop.f32.mrf.mxu0
        %v5048 = vadd.f32 0.0, %v5047
        %v5049 = vpop.f32.mrf.mxu0
        %5050 = vmatprep.mubr.f32.mxu0 0.0
        %5051 = vmatmul.mubr.f32.gmra.mxu0 %v4805
        %v5052 = vpop.f32.mrf.mxu0
        %v5053 = vadd.f32 0.0, %v5052
        %v5054 = vpop.f32.mrf.mxu0
        %5055 = vmatprep.mubr.f32.mxu0 0.0
        %5056 = vmatmul.mubr.f32.gmra.mxu0 %v4806
        %v5057 = vpop.f32.mrf.mxu0
        %v5058 = vadd.f32 0.0, %v5057
        %v5059 = vpop.f32.mrf.mxu0
        %5060 = vmatprep.mubr.f32.mxu0 0.0
        %5061 = vmatmul.mubr.f32.gmra.mxu0 %v4807
        %v5062 = vpop.f32.mrf.mxu0
        %v5063 = vadd.f32 0.0, %v5062
        %v5064 = vpop.f32.mrf.mxu0
        %5065 = vmatprep.mubr.f32.mxu0 0.0
        %5066 = vmatmul.mubr.f32.gmra.mxu0 %v4808
        %v5067 = vpop.f32.mrf.mxu0
        %v5068 = vadd.f32 0.0, %v5067
        %v5069 = vpop.f32.mrf.mxu0
        %5070 = vdwg.mxu0
        %v5071 = vadd.f32 %v4595, %v4893
        %v5072 = vadd.f32 %v4600, %v4898
        %v5073 = vadd.f32 %v4605, %v4903
        %v5074 = vadd.f32 %v4610, %v4908
        %v5075 = vadd.f32 %v4615, %v4913
        %v5076 = vadd.f32 %v4620, %v4918
        %v5077 = vadd.f32 %v4625, %v4923
        %v5078 = vadd.f32 %v4630, %v4928
        %v5079 = vadd.f32 %v4635, %v4933
        %v5080 = vadd.f32 %v4640, %v4938
        %v5081 = vadd.f32 %v4645, %v4943
        %v5082 = vadd.f32 %v4650, %v4948
        %v5083 = vadd.f32 %v4655, %v4953
        %v5084 = vadd.f32 %v4660, %v4958
        %v5085 = vadd.f32 %v4665, %v4963
        %v5086 = vadd.f32 %v4670, %v4968
        %v5087 = vadd.f32 %v4675, %v4973
        %v5088 = vadd.f32 %v4680, %v4978
        %v5089 = vadd.f32 %v4685, %v4983
        %v5090 = vadd.f32 %v4690, %v4988
        %v5091 = vadd.f32 %v4695, %v4993
        %v5092 = vadd.f32 %v4700, %v4998
        %v5093 = vadd.f32 %v4705, %v5003
        %v5094 = vadd.f32 %v4710, %v5008
        %v5095 = vadd.f32 %v4715, %v5013
        %v5096 = vadd.f32 %v4720, %v5018
        %v5097 = vadd.f32 %v4725, %v5023
        %v5098 = vadd.f32 %v4730, %v5028
        %v5099 = vadd.f32 %v4735, %v5033
        %v5100 = vadd.f32 %v4740, %v5038
        %v5101 = vadd.f32 %v4745, %v5043
        %v5102 = vadd.f32 %v4750, %v5048
        %v5103 = vadd.f32 %v4755, %v5053
        %v5104 = vadd.f32 %v4760, %v5058
        %v5105 = vadd.f32 %v4765, %v5063
        %v5106 = vadd.f32 %v4770, %v5068
        %v5107 = vld [vmem:[#allocation2 + $0x17] sm:$0xff]
        %v5108 = vld [vmem:[#allocation2 + $0x1f] sm:$0xff]
        %v5109 = vld [vmem:[#allocation2 + $0x27] sm:$0xff]
        %v5110 = vld [vmem:[#allocation2 + $0x2f] sm:$0xff]
        %v5111 = vld [vmem:[#allocation2 + $0x37] sm:$0xff]
        %v5112 = vld [vmem:[#allocation2 + $0x3f] sm:$0xff]
        %v5113 = vld [vmem:[#allocation2 + $0x47] sm:$0xff]
        %v5114 = vld [vmem:[#allocation2 + $0x4f] sm:$0xff]
        %v5115 = vld [vmem:[#allocation2 + $0x57] sm:$0xff]
        %v5116 = vld [vmem:[#allocation2 + $0x5f] sm:$0xff]
        %v5117 = vld [vmem:[#allocation2 + $0x67] sm:$0xff]
        %v5118 = vld [vmem:[#allocation2 + $0x6f] sm:$0xff]
        %v5119 = vld [vmem:[#allocation2 + $0x77] sm:$0xff]
        %v5120 = vld [vmem:[#allocation2 + $0x7f] sm:$0xff]
        %v5121 = vld [vmem:[#allocation2 + $0x87] sm:$0xff]
        %v5122 = vld [vmem:[#allocation2 + $0x8f] sm:$0xff]
        %v5123 = vld [vmem:[#allocation2 + $0x97] sm:$0xff]
        %v5124 = vld [vmem:[#allocation2 + $0x9f] sm:$0xff]
        %v5125 = vld [vmem:[#allocation2 + $0xa7] sm:$0xff]
        %v5126 = vld [vmem:[#allocation2 + $0xaf] sm:$0xff]
        %v5127 = vld [vmem:[#allocation2 + $0xb7] sm:$0xff]
        %v5128 = vld [vmem:[#allocation2 + $0xbf] sm:$0xff]
        %v5129 = vld [vmem:[#allocation2 + $0xc7] sm:$0xff]
        %v5130 = vld [vmem:[#allocation2 + $0xcf] sm:$0xff]
        %v5131 = vld [vmem:[#allocation2 + $0xd7] sm:$0xff]
        %v5132 = vld [vmem:[#allocation2 + $0xdf] sm:$0xff]
        %v5133 = vld [vmem:[#allocation2 + $0xe7] sm:$0xff]
        %v5134 = vld [vmem:[#allocation2 + $0xef] sm:$0xff]
        %v5135 = vld [vmem:[#allocation2 + $0xf7] sm:$0xff]
        %v5136 = vld [vmem:[#allocation2 + $0xff] sm:$0xff]
        %v5137 = vld [vmem:[#allocation2 + $0x107] sm:$0xff]
        %v5138 = vld [vmem:[#allocation2 + $0x10f] sm:$0xff]
        %v5139 = vld [vmem:[#allocation2 + $0x117] sm:$0xff]
        %v5140 = vld [vmem:[#allocation2 + $0x11f] sm:$0xff]
        %v5141 = vld [vmem:[#allocation2 + $0x127] sm:$0xff]
        %v5142 = vld [vmem:[#allocation2 + $0x12f] sm:$0xff]
        %s5143 = scalar_lea.vmem [#allocation4], 384
        %v5144 = vld [vmem:[%s5143] sm:$0xff]
        %v5145 = vld [vmem:[%s5143 + $0x8] sm:$0xff]
        %v5146 = vld [vmem:[%s5143 + $0x10] sm:$0xff]
        %v5147 = vld [vmem:[%s5143 + $0x18] sm:$0xff]
        %v5148 = vld [vmem:[%s5143 + $0x20] sm:$0xff]
        %v5149 = vld [vmem:[%s5143 + $0x28] sm:$0xff]
        %v5150 = vld [vmem:[%s5143 + $0x30] sm:$0xff]
        %v5151 = vld [vmem:[%s5143 + $0x38] sm:$0xff]
        %v5152 = vld [vmem:[%s5143 + $0x40] sm:$0xff]
        %v5153 = vld [vmem:[%s5143 + $0x48] sm:$0xff]
        %v5154 = vld [vmem:[%s5143 + $0x50] sm:$0xff]
        %v5155 = vld [vmem:[%s5143 + $0x58] sm:$0xff]
        %v5156 = vld [vmem:[%s5143 + $0x60] sm:$0xff]
        %v5157 = vld [vmem:[%s5143 + $0x68] sm:$0xff]
        %v5158 = vld [vmem:[%s5143 + $0x70] sm:$0xff]
        %v5159 = vld [vmem:[%s5143 + $0x78] sm:$0xff]
        %5160 = vmatprep.subr.mxu0 0.0
        %5161 = vmatpush1.msra.mxu0 %v5159
        %5162 = vmatprep.subr.mxu0 0.0
        %5163 = vmatpush1.msra.mxu0 %v5158
        %5164 = vmatprep.subr.mxu0 0.0
        %5165 = vmatpush1.msra.mxu0 %v5157
        %5166 = vmatprep.subr.mxu0 0.0
        %5167 = vmatpush1.msra.mxu0 %v5156
        %5168 = vmatprep.subr.mxu0 0.0
        %5169 = vmatpush1.msra.mxu0 %v5155
        %5170 = vmatprep.subr.mxu0 0.0
        %5171 = vmatpush1.msra.mxu0 %v5154
        %5172 = vmatprep.subr.mxu0 0.0
        %5173 = vmatpush1.msra.mxu0 %v5153
        %5174 = vmatprep.subr.mxu0 0.0
        %5175 = vmatpush1.msra.mxu0 %v5152
        %5176 = vmatprep.subr.mxu0 0.0
        %5177 = vmatpush1.msra.mxu0 %v5151
        %5178 = vmatprep.subr.mxu0 0.0
        %5179 = vmatpush1.msra.mxu0 %v5150
        %5180 = vmatprep.subr.mxu0 0.0
        %5181 = vmatpush1.msra.mxu0 %v5149
        %5182 = vmatprep.subr.mxu0 0.0
        %5183 = vmatpush1.msra.mxu0 %v5148
        %5184 = vmatprep.subr.mxu0 0.0
        %5185 = vmatpush1.msra.mxu0 %v5147
        %5186 = vmatprep.subr.mxu0 0.0
        %5187 = vmatpush1.msra.mxu0 %v5146
        %5188 = vmatprep.subr.mxu0 0.0
        %5189 = vmatpush1.msra.mxu0 %v5145
        %5190 = vmatprep.subr.mxu0 0.0
        %5191 = vmatpush1.msra.mxu0 %v5144
        %5192 = vmatprep.subr.mxu0 0.0
        %5193 = vmatpush2.msra.mxu0 0.0
        %5194 = vmatprep.subr.mxu0 0.0
        %5195 = vmatpush2.msra.mxu0 0.0
        %5196 = vmatprep.subr.mxu0 0.0
        %5197 = vmatpush2.msra.mxu0 0.0
        %5198 = vmatprep.subr.mxu0 0.0
        %5199 = vmatpush2.msra.mxu0 0.0
        %5200 = vmatprep.subr.mxu0 0.0
        %5201 = vmatpush2.msra.mxu0 0.0
        %5202 = vmatprep.subr.mxu0 0.0
        %5203 = vmatpush2.msra.mxu0 0.0
        %5204 = vmatprep.subr.mxu0 0.0
        %5205 = vmatpush2.msra.mxu0 0.0
        %5206 = vmatprep.subr.mxu0 0.0
        %5207 = vmatpush2.msra.mxu0 0.0
        %5208 = vmatprep.subr.mxu0 0.0
        %5209 = vmatpush2.msra.mxu0 0.0
        %5210 = vmatprep.subr.mxu0 0.0
        %5211 = vmatpush2.msra.mxu0 0.0
        %5212 = vmatprep.subr.mxu0 0.0
        %5213 = vmatpush2.msra.mxu0 0.0
        %5214 = vmatprep.subr.mxu0 0.0
        %5215 = vmatpush2.msra.mxu0 0.0
        %5216 = vmatprep.subr.mxu0 0.0
        %5217 = vmatpush2.msra.mxu0 0.0
        %5218 = vmatprep.subr.mxu0 0.0
        %5219 = vmatpush2.msra.mxu0 0.0
        %5220 = vmatprep.subr.mxu0 0.0
        %5221 = vmatpush2.msra.mxu0 0.0
        %5222 = vmatprep.subr.mxu0 0.0
        %5223 = vmatpush2.msra.mxu0 0.0
        %5224 = vmatprep.mubr.f32.mxu0 0.0
        %5225 = vmatmul.mubr.f32.gmra.mxu0 %v5107
        %v5226 = vpop.f32.mrf.mxu0
        %v5227 = vadd.f32 0.0, %v5226
        %v5228 = vpop.f32.mrf.mxu0
        %5229 = vmatprep.mubr.f32.mxu0 0.0
        %5230 = vmatmul.mubr.f32.gmra.mxu0 %v5108
        %v5231 = vpop.f32.mrf.mxu0
        %v5232 = vadd.f32 0.0, %v5231
        %v5233 = vpop.f32.mrf.mxu0
        %5234 = vmatprep.mubr.f32.mxu0 0.0
        %5235 = vmatmul.mubr.f32.gmra.mxu0 %v5109
        %v5236 = vpop.f32.mrf.mxu0
        %v5237 = vadd.f32 0.0, %v5236
        %v5238 = vpop.f32.mrf.mxu0
        %5239 = vmatprep.mubr.f32.mxu0 0.0
        %5240 = vmatmul.mubr.f32.gmra.mxu0 %v5110
        %v5241 = vpop.f32.mrf.mxu0
        %v5242 = vadd.f32 0.0, %v5241
        %v5243 = vpop.f32.mrf.mxu0
        %5244 = vmatprep.mubr.f32.mxu0 0.0
        %5245 = vmatmul.mubr.f32.gmra.mxu0 %v5111
        %v5246 = vpop.f32.mrf.mxu0
        %v5247 = vadd.f32 0.0, %v5246
        %v5248 = vpop.f32.mrf.mxu0
        %5249 = vmatprep.mubr.f32.mxu0 0.0
        %5250 = vmatmul.mubr.f32.gmra.mxu0 %v5112
        %v5251 = vpop.f32.mrf.mxu0
        %v5252 = vadd.f32 0.0, %v5251
        %v5253 = vpop.f32.mrf.mxu0
        %5254 = vmatprep.mubr.f32.mxu0 0.0
        %5255 = vmatmul.mubr.f32.gmra.mxu0 %v5113
        %v5256 = vpop.f32.mrf.mxu0
        %v5257 = vadd.f32 0.0, %v5256
        %v5258 = vpop.f32.mrf.mxu0
        %5259 = vmatprep.mubr.f32.mxu0 0.0
        %5260 = vmatmul.mubr.f32.gmra.mxu0 %v5114
        %v5261 = vpop.f32.mrf.mxu0
        %v5262 = vadd.f32 0.0, %v5261
        %v5263 = vpop.f32.mrf.mxu0
        %5264 = vmatprep.mubr.f32.mxu0 0.0
        %5265 = vmatmul.mubr.f32.gmra.mxu0 %v5115
        %v5266 = vpop.f32.mrf.mxu0
        %v5267 = vadd.f32 0.0, %v5266
        %v5268 = vpop.f32.mrf.mxu0
        %5269 = vmatprep.mubr.f32.mxu0 0.0
        %5270 = vmatmul.mubr.f32.gmra.mxu0 %v5116
        %v5271 = vpop.f32.mrf.mxu0
        %v5272 = vadd.f32 0.0, %v5271
        %v5273 = vpop.f32.mrf.mxu0
        %5274 = vmatprep.mubr.f32.mxu0 0.0
        %5275 = vmatmul.mubr.f32.gmra.mxu0 %v5117
        %v5276 = vpop.f32.mrf.mxu0
        %v5277 = vadd.f32 0.0, %v5276
        %v5278 = vpop.f32.mrf.mxu0
        %5279 = vmatprep.mubr.f32.mxu0 0.0
        %5280 = vmatmul.mubr.f32.gmra.mxu0 %v5118
        %v5281 = vpop.f32.mrf.mxu0
        %v5282 = vadd.f32 0.0, %v5281
        %v5283 = vpop.f32.mrf.mxu0
        %5284 = vmatprep.mubr.f32.mxu0 0.0
        %5285 = vmatmul.mubr.f32.gmra.mxu0 %v5119
        %v5286 = vpop.f32.mrf.mxu0
        %v5287 = vadd.f32 0.0, %v5286
        %v5288 = vpop.f32.mrf.mxu0
        %5289 = vmatprep.mubr.f32.mxu0 0.0
        %5290 = vmatmul.mubr.f32.gmra.mxu0 %v5120
        %v5291 = vpop.f32.mrf.mxu0
        %v5292 = vadd.f32 0.0, %v5291
        %v5293 = vpop.f32.mrf.mxu0
        %5294 = vmatprep.mubr.f32.mxu0 0.0
        %5295 = vmatmul.mubr.f32.gmra.mxu0 %v5121
        %v5296 = vpop.f32.mrf.mxu0
        %v5297 = vadd.f32 0.0, %v5296
        %v5298 = vpop.f32.mrf.mxu0
        %5299 = vmatprep.mubr.f32.mxu0 0.0
        %5300 = vmatmul.mubr.f32.gmra.mxu0 %v5122
        %v5301 = vpop.f32.mrf.mxu0
        %v5302 = vadd.f32 0.0, %v5301
        %v5303 = vpop.f32.mrf.mxu0
        %5304 = vmatprep.mubr.f32.mxu0 0.0
        %5305 = vmatmul.mubr.f32.gmra.mxu0 %v5123
        %v5306 = vpop.f32.mrf.mxu0
        %v5307 = vadd.f32 0.0, %v5306
        %v5308 = vpop.f32.mrf.mxu0
        %5309 = vmatprep.mubr.f32.mxu0 0.0
        %5310 = vmatmul.mubr.f32.gmra.mxu0 %v5124
        %v5311 = vpop.f32.mrf.mxu0
        %v5312 = vadd.f32 0.0, %v5311
        %v5313 = vpop.f32.mrf.mxu0
        %5314 = vmatprep.mubr.f32.mxu0 0.0
        %5315 = vmatmul.mubr.f32.gmra.mxu0 %v5125
        %v5316 = vpop.f32.mrf.mxu0
        %v5317 = vadd.f32 0.0, %v5316
        %v5318 = vpop.f32.mrf.mxu0
        %5319 = vmatprep.mubr.f32.mxu0 0.0
        %5320 = vmatmul.mubr.f32.gmra.mxu0 %v5126
        %v5321 = vpop.f32.mrf.mxu0
        %v5322 = vadd.f32 0.0, %v5321
        %v5323 = vpop.f32.mrf.mxu0
        %5324 = vmatprep.mubr.f32.mxu0 0.0
        %5325 = vmatmul.mubr.f32.gmra.mxu0 %v5127
        %v5326 = vpop.f32.mrf.mxu0
        %v5327 = vadd.f32 0.0, %v5326
        %v5328 = vpop.f32.mrf.mxu0
        %5329 = vmatprep.mubr.f32.mxu0 0.0
        %5330 = vmatmul.mubr.f32.gmra.mxu0 %v5128
        %v5331 = vpop.f32.mrf.mxu0
        %v5332 = vadd.f32 0.0, %v5331
        %v5333 = vpop.f32.mrf.mxu0
        %5334 = vmatprep.mubr.f32.mxu0 0.0
        %5335 = vmatmul.mubr.f32.gmra.mxu0 %v5129
        %v5336 = vpop.f32.mrf.mxu0
        %v5337 = vadd.f32 0.0, %v5336
        %v5338 = vpop.f32.mrf.mxu0
        %5339 = vmatprep.mubr.f32.mxu0 0.0
        %5340 = vmatmul.mubr.f32.gmra.mxu0 %v5130
        %v5341 = vpop.f32.mrf.mxu0
        %v5342 = vadd.f32 0.0, %v5341
        %v5343 = vpop.f32.mrf.mxu0
        %5344 = vmatprep.mubr.f32.mxu0 0.0
        %5345 = vmatmul.mubr.f32.gmra.mxu0 %v5131
        %v5346 = vpop.f32.mrf.mxu0
        %v5347 = vadd.f32 0.0, %v5346
        %v5348 = vpop.f32.mrf.mxu0
        %5349 = vmatprep.mubr.f32.mxu0 0.0
        %5350 = vmatmul.mubr.f32.gmra.mxu0 %v5132
        %v5351 = vpop.f32.mrf.mxu0
        %v5352 = vadd.f32 0.0, %v5351
        %v5353 = vpop.f32.mrf.mxu0
        %5354 = vmatprep.mubr.f32.mxu0 0.0
        %5355 = vmatmul.mubr.f32.gmra.mxu0 %v5133
        %v5356 = vpop.f32.mrf.mxu0
        %v5357 = vadd.f32 0.0, %v5356
        %v5358 = vpop.f32.mrf.mxu0
        %5359 = vmatprep.mubr.f32.mxu0 0.0
        %5360 = vmatmul.mubr.f32.gmra.mxu0 %v5134
        %v5361 = vpop.f32.mrf.mxu0
        %v5362 = vadd.f32 0.0, %v5361
        %v5363 = vpop.f32.mrf.mxu0
        %5364 = vmatprep.mubr.f32.mxu0 0.0
        %5365 = vmatmul.mubr.f32.gmra.mxu0 %v5135
        %v5366 = vpop.f32.mrf.mxu0
        %v5367 = vadd.f32 0.0, %v5366
        %v5368 = vpop.f32.mrf.mxu0
        %5369 = vmatprep.mubr.f32.mxu0 0.0
        %5370 = vmatmul.mubr.f32.gmra.mxu0 %v5136
        %v5371 = vpop.f32.mrf.mxu0
        %v5372 = vadd.f32 0.0, %v5371
        %v5373 = vpop.f32.mrf.mxu0
        %5374 = vmatprep.mubr.f32.mxu0 0.0
        %5375 = vmatmul.mubr.f32.gmra.mxu0 %v5137
        %v5376 = vpop.f32.mrf.mxu0
        %v5377 = vadd.f32 0.0, %v5376
        %v5378 = vpop.f32.mrf.mxu0
        %5379 = vmatprep.mubr.f32.mxu0 0.0
        %5380 = vmatmul.mubr.f32.gmra.mxu0 %v5138
        %v5381 = vpop.f32.mrf.mxu0
        %v5382 = vadd.f32 0.0, %v5381
        %v5383 = vpop.f32.mrf.mxu0
        %5384 = vmatprep.mubr.f32.mxu0 0.0
        %5385 = vmatmul.mubr.f32.gmra.mxu0 %v5139
        %v5386 = vpop.f32.mrf.mxu0
        %v5387 = vadd.f32 0.0, %v5386
        %v5388 = vpop.f32.mrf.mxu0
        %5389 = vmatprep.mubr.f32.mxu0 0.0
        %5390 = vmatmul.mubr.f32.gmra.mxu0 %v5140
        %v5391 = vpop.f32.mrf.mxu0
        %v5392 = vadd.f32 0.0, %v5391
        %v5393 = vpop.f32.mrf.mxu0
        %5394 = vmatprep.mubr.f32.mxu0 0.0
        %5395 = vmatmul.mubr.f32.gmra.mxu0 %v5141
        %v5396 = vpop.f32.mrf.mxu0
        %v5397 = vadd.f32 0.0, %v5396
        %v5398 = vpop.f32.mrf.mxu0
        %5399 = vmatprep.mubr.f32.mxu0 0.0
        %5400 = vmatmul.mubr.f32.gmra.mxu0 %v5142
        %v5401 = vpop.f32.mrf.mxu0
        %v5402 = vadd.f32 0.0, %v5401
        %v5403 = vpop.f32.mrf.mxu0
        %5404 = vdwg.mxu0
        %v5405 = vadd.f32 %v5071, %v5227
        %v5406 = vadd.f32 %v5072, %v5232
        %v5407 = vadd.f32 %v5073, %v5237
        %v5408 = vadd.f32 %v5074, %v5242
        %v5409 = vadd.f32 %v5075, %v5247
        %v5410 = vadd.f32 %v5076, %v5252
        %v5411 = vadd.f32 %v5077, %v5257
        %v5412 = vadd.f32 %v5078, %v5262
        %v5413 = vadd.f32 %v5079, %v5267
        %v5414 = vadd.f32 %v5080, %v5272
        %v5415 = vadd.f32 %v5081, %v5277
        %v5416 = vadd.f32 %v5082, %v5282
        %v5417 = vadd.f32 %v5083, %v5287
        %v5418 = vadd.f32 %v5084, %v5292
        %v5419 = vadd.f32 %v5085, %v5297
        %v5420 = vadd.f32 %v5086, %v5302
        %v5421 = vadd.f32 %v5087, %v5307
        %v5422 = vadd.f32 %v5088, %v5312
        %v5423 = vadd.f32 %v5089, %v5317
        %v5424 = vadd.f32 %v5090, %v5322
        %v5425 = vadd.f32 %v5091, %v5327
        %v5426 = vadd.f32 %v5092, %v5332
        %v5427 = vadd.f32 %v5093, %v5337
        %v5428 = vadd.f32 %v5094, %v5342
        %v5429 = vadd.f32 %v5095, %v5347
        %v5430 = vadd.f32 %v5096, %v5352
        %v5431 = vadd.f32 %v5097, %v5357
        %v5432 = vadd.f32 %v5098, %v5362
        %v5433 = vadd.f32 %v5099, %v5367
        %v5434 = vadd.f32 %v5100, %v5372
        %v5435 = vadd.f32 %v5101, %v5377
        %v5436 = vadd.f32 %v5102, %v5382
        %v5437 = vadd.f32 %v5103, %v5387
        %v5438 = vadd.f32 %v5104, %v5392
        %v5439 = vadd.f32 %v5105, %v5397
        %v5440 = vadd.f32 %v5106, %v5402
        %v5441 = vld [vmem:[#allocation2 + $0x18] sm:$0xff]
        %v5442 = vld [vmem:[#allocation2 + $0x20] sm:$0xff]
        %v5443 = vld [vmem:[#allocation2 + $0x28] sm:$0xff]
        %v5444 = vld [vmem:[#allocation2 + $0x30] sm:$0xff]
        %v5445 = vld [vmem:[#allocation2 + $0x38] sm:$0xff]
        %v5446 = vld [vmem:[#allocation2 + $0x40] sm:$0xff]
        %v5447 = vld [vmem:[#allocation2 + $0x48] sm:$0xff]
        %v5448 = vld [vmem:[#allocation2 + $0x50] sm:$0xff]
        %v5449 = vld [vmem:[#allocation2 + $0x58] sm:$0xff]
        %v5450 = vld [vmem:[#allocation2 + $0x60] sm:$0xff]
        %v5451 = vld [vmem:[#allocation2 + $0x68] sm:$0xff]
        %v5452 = vld [vmem:[#allocation2 + $0x70] sm:$0xff]
        %v5453 = vld [vmem:[#allocation2 + $0x78] sm:$0xff]
        %v5454 = vld [vmem:[#allocation2 + $0x80] sm:$0xff]
        %v5455 = vld [vmem:[#allocation2 + $0x88] sm:$0xff]
        %v5456 = vld [vmem:[#allocation2 + $0x90] sm:$0xff]
        %v5457 = vld [vmem:[#allocation2 + $0x98] sm:$0xff]
        %v5458 = vld [vmem:[#allocation2 + $0xa0] sm:$0xff]
        %v5459 = vld [vmem:[#allocation2 + $0xa8] sm:$0xff]
        %v5460 = vld [vmem:[#allocation2 + $0xb0] sm:$0xff]
        %v5461 = vld [vmem:[#allocation2 + $0xb8] sm:$0xff]
        %v5462 = vld [vmem:[#allocation2 + $0xc0] sm:$0xff]
        %v5463 = vld [vmem:[#allocation2 + $0xc8] sm:$0xff]
        %v5464 = vld [vmem:[#allocation2 + $0xd0] sm:$0xff]
        %v5465 = vld [vmem:[#allocation2 + $0xd8] sm:$0xff]
        %v5466 = vld [vmem:[#allocation2 + $0xe0] sm:$0xff]
        %v5467 = vld [vmem:[#allocation2 + $0xe8] sm:$0xff]
        %v5468 = vld [vmem:[#allocation2 + $0xf0] sm:$0xff]
        %v5469 = vld [vmem:[#allocation2 + $0xf8] sm:$0xff]
        %v5470 = vld [vmem:[#allocation2 + $0x100] sm:$0xff]
        %v5471 = vld [vmem:[#allocation2 + $0x108] sm:$0xff]
        %v5472 = vld [vmem:[#allocation2 + $0x110] sm:$0xff]
        %v5473 = vld [vmem:[#allocation2 + $0x118] sm:$0xff]
        %v5474 = vld [vmem:[#allocation2 + $0x120] sm:$0xff]
        %v5475 = vld [vmem:[#allocation2 + $0x128] sm:$0xff]
        %v5476 = vld [vmem:[#allocation2 + $0x130] sm:$0xff]
        %s5477 = scalar_lea.vmem [#allocation4], 512
        %v5478 = vld [vmem:[%s5477] sm:$0xff]
        %v5479 = vld [vmem:[%s5477 + $0x8] sm:$0xff]
        %v5480 = vld [vmem:[%s5477 + $0x10] sm:$0xff]
        %v5481 = vld [vmem:[%s5477 + $0x18] sm:$0xff]
        %v5482 = vld [vmem:[%s5477 + $0x20] sm:$0xff]
        %v5483 = vld [vmem:[%s5477 + $0x28] sm:$0xff]
        %v5484 = vld [vmem:[%s5477 + $0x30] sm:$0xff]
        %v5485 = vld [vmem:[%s5477 + $0x38] sm:$0xff]
        %v5486 = vld [vmem:[%s5477 + $0x40] sm:$0xff]
        %v5487 = vld [vmem:[%s5477 + $0x48] sm:$0xff]
        %v5488 = vld [vmem:[%s5477 + $0x50] sm:$0xff]
        %v5489 = vld [vmem:[%s5477 + $0x58] sm:$0xff]
        %v5490 = vld [vmem:[%s5477 + $0x60] sm:$0xff]
        %v5491 = vld [vmem:[%s5477 + $0x68] sm:$0xff]
        %v5492 = vld [vmem:[%s5477 + $0x70] sm:$0xff]
        %v5493 = vld [vmem:[%s5477 + $0x78] sm:$0xff]
        %5494 = vmatprep.subr.mxu0 0.0
        %5495 = vmatpush1.msra.mxu0 %v5493
        %5496 = vmatprep.subr.mxu0 0.0
        %5497 = vmatpush1.msra.mxu0 %v5492
        %5498 = vmatprep.subr.mxu0 0.0
        %5499 = vmatpush1.msra.mxu0 %v5491
        %5500 = vmatprep.subr.mxu0 0.0
        %5501 = vmatpush1.msra.mxu0 %v5490
        %5502 = vmatprep.subr.mxu0 0.0
        %5503 = vmatpush1.msra.mxu0 %v5489
        %5504 = vmatprep.subr.mxu0 0.0
        %5505 = vmatpush1.msra.mxu0 %v5488
        %5506 = vmatprep.subr.mxu0 0.0
        %5507 = vmatpush1.msra.mxu0 %v5487
        %5508 = vmatprep.subr.mxu0 0.0
        %5509 = vmatpush1.msra.mxu0 %v5486
        %5510 = vmatprep.subr.mxu0 0.0
        %5511 = vmatpush1.msra.mxu0 %v5485
        %5512 = vmatprep.subr.mxu0 0.0
        %5513 = vmatpush1.msra.mxu0 %v5484
        %5514 = vmatprep.subr.mxu0 0.0
        %5515 = vmatpush1.msra.mxu0 %v5483
        %5516 = vmatprep.subr.mxu0 0.0
        %5517 = vmatpush1.msra.mxu0 %v5482
        %5518 = vmatprep.subr.mxu0 0.0
        %5519 = vmatpush1.msra.mxu0 %v5481
        %5520 = vmatprep.subr.mxu0 0.0
        %5521 = vmatpush1.msra.mxu0 %v5480
        %5522 = vmatprep.subr.mxu0 0.0
        %5523 = vmatpush1.msra.mxu0 %v5479
        %5524 = vmatprep.subr.mxu0 0.0
        %5525 = vmatpush1.msra.mxu0 %v5478
        %5526 = vmatprep.subr.mxu0 0.0
        %5527 = vmatpush2.msra.mxu0 0.0
        %5528 = vmatprep.subr.mxu0 0.0
        %5529 = vmatpush2.msra.mxu0 0.0
        %5530 = vmatprep.subr.mxu0 0.0
        %5531 = vmatpush2.msra.mxu0 0.0
        %5532 = vmatprep.subr.mxu0 0.0
        %5533 = vmatpush2.msra.mxu0 0.0
        %5534 = vmatprep.subr.mxu0 0.0
        %5535 = vmatpush2.msra.mxu0 0.0
        %5536 = vmatprep.subr.mxu0 0.0
        %5537 = vmatpush2.msra.mxu0 0.0
        %5538 = vmatprep.subr.mxu0 0.0
        %5539 = vmatpush2.msra.mxu0 0.0
        %5540 = vmatprep.subr.mxu0 0.0
        %5541 = vmatpush2.msra.mxu0 0.0
        %5542 = vmatprep.subr.mxu0 0.0
        %5543 = vmatpush2.msra.mxu0 0.0
        %5544 = vmatprep.subr.mxu0 0.0
        %5545 = vmatpush2.msra.mxu0 0.0
        %5546 = vmatprep.subr.mxu0 0.0
        %5547 = vmatpush2.msra.mxu0 0.0
        %5548 = vmatprep.subr.mxu0 0.0
        %5549 = vmatpush2.msra.mxu0 0.0
        %5550 = vmatprep.subr.mxu0 0.0
        %5551 = vmatpush2.msra.mxu0 0.0
        %5552 = vmatprep.subr.mxu0 0.0
        %5553 = vmatpush2.msra.mxu0 0.0
        %5554 = vmatprep.subr.mxu0 0.0
        %5555 = vmatpush2.msra.mxu0 0.0
        %5556 = vmatprep.subr.mxu0 0.0
        %5557 = vmatpush2.msra.mxu0 0.0
        %5558 = vmatprep.mubr.f32.mxu0 0.0
        %5559 = vmatmul.mubr.f32.gmra.mxu0 %v5441
        %v5560 = vpop.f32.mrf.mxu0
        %v5561 = vadd.f32 0.0, %v5560
        %v5562 = vpop.f32.mrf.mxu0
        %5563 = vmatprep.mubr.f32.mxu0 0.0
        %5564 = vmatmul.mubr.f32.gmra.mxu0 %v5442
        %v5565 = vpop.f32.mrf.mxu0
        %v5566 = vadd.f32 0.0, %v5565
        %v5567 = vpop.f32.mrf.mxu0
        %5568 = vmatprep.mubr.f32.mxu0 0.0
        %5569 = vmatmul.mubr.f32.gmra.mxu0 %v5443
        %v5570 = vpop.f32.mrf.mxu0
        %v5571 = vadd.f32 0.0, %v5570
        %v5572 = vpop.f32.mrf.mxu0
        %5573 = vmatprep.mubr.f32.mxu0 0.0
        %5574 = vmatmul.mubr.f32.gmra.mxu0 %v5444
        %v5575 = vpop.f32.mrf.mxu0
        %v5576 = vadd.f32 0.0, %v5575
        %v5577 = vpop.f32.mrf.mxu0
        %5578 = vmatprep.mubr.f32.mxu0 0.0
        %5579 = vmatmul.mubr.f32.gmra.mxu0 %v5445
        %v5580 = vpop.f32.mrf.mxu0
        %v5581 = vadd.f32 0.0, %v5580
        %v5582 = vpop.f32.mrf.mxu0
        %5583 = vmatprep.mubr.f32.mxu0 0.0
        %5584 = vmatmul.mubr.f32.gmra.mxu0 %v5446
        %v5585 = vpop.f32.mrf.mxu0
        %v5586 = vadd.f32 0.0, %v5585
        %v5587 = vpop.f32.mrf.mxu0
        %5588 = vmatprep.mubr.f32.mxu0 0.0
        %5589 = vmatmul.mubr.f32.gmra.mxu0 %v5447
        %v5590 = vpop.f32.mrf.mxu0
        %v5591 = vadd.f32 0.0, %v5590
        %v5592 = vpop.f32.mrf.mxu0
        %5593 = vmatprep.mubr.f32.mxu0 0.0
        %5594 = vmatmul.mubr.f32.gmra.mxu0 %v5448
        %v5595 = vpop.f32.mrf.mxu0
        %v5596 = vadd.f32 0.0, %v5595
        %v5597 = vpop.f32.mrf.mxu0
        %5598 = vmatprep.mubr.f32.mxu0 0.0
        %5599 = vmatmul.mubr.f32.gmra.mxu0 %v5449
        %v5600 = vpop.f32.mrf.mxu0
        %v5601 = vadd.f32 0.0, %v5600
        %v5602 = vpop.f32.mrf.mxu0
        %5603 = vmatprep.mubr.f32.mxu0 0.0
        %5604 = vmatmul.mubr.f32.gmra.mxu0 %v5450
        %v5605 = vpop.f32.mrf.mxu0
        %v5606 = vadd.f32 0.0, %v5605
        %v5607 = vpop.f32.mrf.mxu0
        %5608 = vmatprep.mubr.f32.mxu0 0.0
        %5609 = vmatmul.mubr.f32.gmra.mxu0 %v5451
        %v5610 = vpop.f32.mrf.mxu0
        %v5611 = vadd.f32 0.0, %v5610
        %v5612 = vpop.f32.mrf.mxu0
        %5613 = vmatprep.mubr.f32.mxu0 0.0
        %5614 = vmatmul.mubr.f32.gmra.mxu0 %v5452
        %v5615 = vpop.f32.mrf.mxu0
        %v5616 = vadd.f32 0.0, %v5615
        %v5617 = vpop.f32.mrf.mxu0
        %5618 = vmatprep.mubr.f32.mxu0 0.0
        %5619 = vmatmul.mubr.f32.gmra.mxu0 %v5453
        %v5620 = vpop.f32.mrf.mxu0
        %v5621 = vadd.f32 0.0, %v5620
        %v5622 = vpop.f32.mrf.mxu0
        %5623 = vmatprep.mubr.f32.mxu0 0.0
        %5624 = vmatmul.mubr.f32.gmra.mxu0 %v5454
        %v5625 = vpop.f32.mrf.mxu0
        %v5626 = vadd.f32 0.0, %v5625
        %v5627 = vpop.f32.mrf.mxu0
        %5628 = vmatprep.mubr.f32.mxu0 0.0
        %5629 = vmatmul.mubr.f32.gmra.mxu0 %v5455
        %v5630 = vpop.f32.mrf.mxu0
        %v5631 = vadd.f32 0.0, %v5630
        %v5632 = vpop.f32.mrf.mxu0
        %5633 = vmatprep.mubr.f32.mxu0 0.0
        %5634 = vmatmul.mubr.f32.gmra.mxu0 %v5456
        %v5635 = vpop.f32.mrf.mxu0
        %v5636 = vadd.f32 0.0, %v5635
        %v5637 = vpop.f32.mrf.mxu0
        %5638 = vmatprep.mubr.f32.mxu0 0.0
        %5639 = vmatmul.mubr.f32.gmra.mxu0 %v5457
        %v5640 = vpop.f32.mrf.mxu0
        %v5641 = vadd.f32 0.0, %v5640
        %v5642 = vpop.f32.mrf.mxu0
        %5643 = vmatprep.mubr.f32.mxu0 0.0
        %5644 = vmatmul.mubr.f32.gmra.mxu0 %v5458
        %v5645 = vpop.f32.mrf.mxu0
        %v5646 = vadd.f32 0.0, %v5645
        %v5647 = vpop.f32.mrf.mxu0
        %5648 = vmatprep.mubr.f32.mxu0 0.0
        %5649 = vmatmul.mubr.f32.gmra.mxu0 %v5459
        %v5650 = vpop.f32.mrf.mxu0
        %v5651 = vadd.f32 0.0, %v5650
        %v5652 = vpop.f32.mrf.mxu0
        %5653 = vmatprep.mubr.f32.mxu0 0.0
        %5654 = vmatmul.mubr.f32.gmra.mxu0 %v5460
        %v5655 = vpop.f32.mrf.mxu0
        %v5656 = vadd.f32 0.0, %v5655
        %v5657 = vpop.f32.mrf.mxu0
        %5658 = vmatprep.mubr.f32.mxu0 0.0
        %5659 = vmatmul.mubr.f32.gmra.mxu0 %v5461
        %v5660 = vpop.f32.mrf.mxu0
        %v5661 = vadd.f32 0.0, %v5660
        %v5662 = vpop.f32.mrf.mxu0
        %5663 = vmatprep.mubr.f32.mxu0 0.0
        %5664 = vmatmul.mubr.f32.gmra.mxu0 %v5462
        %v5665 = vpop.f32.mrf.mxu0
        %v5666 = vadd.f32 0.0, %v5665
        %v5667 = vpop.f32.mrf.mxu0
        %5668 = vmatprep.mubr.f32.mxu0 0.0
        %5669 = vmatmul.mubr.f32.gmra.mxu0 %v5463
        %v5670 = vpop.f32.mrf.mxu0
        %v5671 = vadd.f32 0.0, %v5670
        %v5672 = vpop.f32.mrf.mxu0
        %5673 = vmatprep.mubr.f32.mxu0 0.0
        %5674 = vmatmul.mubr.f32.gmra.mxu0 %v5464
        %v5675 = vpop.f32.mrf.mxu0
        %v5676 = vadd.f32 0.0, %v5675
        %v5677 = vpop.f32.mrf.mxu0
        %5678 = vmatprep.mubr.f32.mxu0 0.0
        %5679 = vmatmul.mubr.f32.gmra.mxu0 %v5465
        %v5680 = vpop.f32.mrf.mxu0
        %v5681 = vadd.f32 0.0, %v5680
        %v5682 = vpop.f32.mrf.mxu0
        %5683 = vmatprep.mubr.f32.mxu0 0.0
        %5684 = vmatmul.mubr.f32.gmra.mxu0 %v5466
        %v5685 = vpop.f32.mrf.mxu0
        %v5686 = vadd.f32 0.0, %v5685
        %v5687 = vpop.f32.mrf.mxu0
        %5688 = vmatprep.mubr.f32.mxu0 0.0
        %5689 = vmatmul.mubr.f32.gmra.mxu0 %v5467
        %v5690 = vpop.f32.mrf.mxu0
        %v5691 = vadd.f32 0.0, %v5690
        %v5692 = vpop.f32.mrf.mxu0
        %5693 = vmatprep.mubr.f32.mxu0 0.0
        %5694 = vmatmul.mubr.f32.gmra.mxu0 %v5468
        %v5695 = vpop.f32.mrf.mxu0
        %v5696 = vadd.f32 0.0, %v5695
        %v5697 = vpop.f32.mrf.mxu0
        %5698 = vmatprep.mubr.f32.mxu0 0.0
        %5699 = vmatmul.mubr.f32.gmra.mxu0 %v5469
        %v5700 = vpop.f32.mrf.mxu0
        %v5701 = vadd.f32 0.0, %v5700
        %v5702 = vpop.f32.mrf.mxu0
        %5703 = vmatprep.mubr.f32.mxu0 0.0
        %5704 = vmatmul.mubr.f32.gmra.mxu0 %v5470
        %v5705 = vpop.f32.mrf.mxu0
        %v5706 = vadd.f32 0.0, %v5705
        %v5707 = vpop.f32.mrf.mxu0
        %5708 = vmatprep.mubr.f32.mxu0 0.0
        %5709 = vmatmul.mubr.f32.gmra.mxu0 %v5471
        %v5710 = vpop.f32.mrf.mxu0
        %v5711 = vadd.f32 0.0, %v5710
        %v5712 = vpop.f32.mrf.mxu0
        %5713 = vmatprep.mubr.f32.mxu0 0.0
        %5714 = vmatmul.mubr.f32.gmra.mxu0 %v5472
        %v5715 = vpop.f32.mrf.mxu0
        %v5716 = vadd.f32 0.0, %v5715
        %v5717 = vpop.f32.mrf.mxu0
        %5718 = vmatprep.mubr.f32.mxu0 0.0
        %5719 = vmatmul.mubr.f32.gmra.mxu0 %v5473
        %v5720 = vpop.f32.mrf.mxu0
        %v5721 = vadd.f32 0.0, %v5720
        %v5722 = vpop.f32.mrf.mxu0
        %5723 = vmatprep.mubr.f32.mxu0 0.0
        %5724 = vmatmul.mubr.f32.gmra.mxu0 %v5474
        %v5725 = vpop.f32.mrf.mxu0
        %v5726 = vadd.f32 0.0, %v5725
        %v5727 = vpop.f32.mrf.mxu0
        %5728 = vmatprep.mubr.f32.mxu0 0.0
        %5729 = vmatmul.mubr.f32.gmra.mxu0 %v5475
        %v5730 = vpop.f32.mrf.mxu0
        %v5731 = vadd.f32 0.0, %v5730
        %v5732 = vpop.f32.mrf.mxu0
        %5733 = vmatprep.mubr.f32.mxu0 0.0
        %5734 = vmatmul.mubr.f32.gmra.mxu0 %v5476
        %v5735 = vpop.f32.mrf.mxu0
        %v5736 = vadd.f32 0.0, %v5735
        %v5737 = vpop.f32.mrf.mxu0
        %5738 = vdwg.mxu0
        %v5739 = vadd.f32 %v5405, %v5561
        %v5740 = vadd.f32 %v5406, %v5566
        %v5741 = vadd.f32 %v5407, %v5571
        %v5742 = vadd.f32 %v5408, %v5576
        %v5743 = vadd.f32 %v5409, %v5581
        %v5744 = vadd.f32 %v5410, %v5586
        %v5745 = vadd.f32 %v5411, %v5591
        %v5746 = vadd.f32 %v5412, %v5596
        %v5747 = vadd.f32 %v5413, %v5601
        %v5748 = vadd.f32 %v5414, %v5606
        %v5749 = vadd.f32 %v5415, %v5611
        %v5750 = vadd.f32 %v5416, %v5616
        %v5751 = vadd.f32 %v5417, %v5621
        %v5752 = vadd.f32 %v5418, %v5626
        %v5753 = vadd.f32 %v5419, %v5631
        %v5754 = vadd.f32 %v5420, %v5636
        %v5755 = vadd.f32 %v5421, %v5641
        %v5756 = vadd.f32 %v5422, %v5646
        %v5757 = vadd.f32 %v5423, %v5651
        %v5758 = vadd.f32 %v5424, %v5656
        %v5759 = vadd.f32 %v5425, %v5661
        %v5760 = vadd.f32 %v5426, %v5666
        %v5761 = vadd.f32 %v5427, %v5671
        %v5762 = vadd.f32 %v5428, %v5676
        %v5763 = vadd.f32 %v5429, %v5681
        %v5764 = vadd.f32 %v5430, %v5686
        %v5765 = vadd.f32 %v5431, %v5691
        %v5766 = vadd.f32 %v5432, %v5696
        %v5767 = vadd.f32 %v5433, %v5701
        %v5768 = vadd.f32 %v5434, %v5706
        %v5769 = vadd.f32 %v5435, %v5711
        %v5770 = vadd.f32 %v5436, %v5716
        %v5771 = vadd.f32 %v5437, %v5721
        %v5772 = vadd.f32 %v5438, %v5726
        %v5773 = vadd.f32 %v5439, %v5731
        %v5774 = vadd.f32 %v5440, %v5736
        %v5775 = vld [vmem:[#allocation2 + $0x19] sm:$0xff]
        %v5776 = vld [vmem:[#allocation2 + $0x21] sm:$0xff]
        %v5777 = vld [vmem:[#allocation2 + $0x29] sm:$0xff]
        %v5778 = vld [vmem:[#allocation2 + $0x31] sm:$0xff]
        %v5779 = vld [vmem:[#allocation2 + $0x39] sm:$0xff]
        %v5780 = vld [vmem:[#allocation2 + $0x41] sm:$0xff]
        %v5781 = vld [vmem:[#allocation2 + $0x49] sm:$0xff]
        %v5782 = vld [vmem:[#allocation2 + $0x51] sm:$0xff]
        %v5783 = vld [vmem:[#allocation2 + $0x59] sm:$0xff]
        %v5784 = vld [vmem:[#allocation2 + $0x61] sm:$0xff]
        %v5785 = vld [vmem:[#allocation2 + $0x69] sm:$0xff]
        %v5786 = vld [vmem:[#allocation2 + $0x71] sm:$0xff]
        %v5787 = vld [vmem:[#allocation2 + $0x79] sm:$0xff]
        %v5788 = vld [vmem:[#allocation2 + $0x81] sm:$0xff]
        %v5789 = vld [vmem:[#allocation2 + $0x89] sm:$0xff]
        %v5790 = vld [vmem:[#allocation2 + $0x91] sm:$0xff]
        %v5791 = vld [vmem:[#allocation2 + $0x99] sm:$0xff]
        %v5792 = vld [vmem:[#allocation2 + $0xa1] sm:$0xff]
        %v5793 = vld [vmem:[#allocation2 + $0xa9] sm:$0xff]
        %v5794 = vld [vmem:[#allocation2 + $0xb1] sm:$0xff]
        %v5795 = vld [vmem:[#allocation2 + $0xb9] sm:$0xff]
        %v5796 = vld [vmem:[#allocation2 + $0xc1] sm:$0xff]
        %v5797 = vld [vmem:[#allocation2 + $0xc9] sm:$0xff]
        %v5798 = vld [vmem:[#allocation2 + $0xd1] sm:$0xff]
        %v5799 = vld [vmem:[#allocation2 + $0xd9] sm:$0xff]
        %v5800 = vld [vmem:[#allocation2 + $0xe1] sm:$0xff]
        %v5801 = vld [vmem:[#allocation2 + $0xe9] sm:$0xff]
        %v5802 = vld [vmem:[#allocation2 + $0xf1] sm:$0xff]
        %v5803 = vld [vmem:[#allocation2 + $0xf9] sm:$0xff]
        %v5804 = vld [vmem:[#allocation2 + $0x101] sm:$0xff]
        %v5805 = vld [vmem:[#allocation2 + $0x109] sm:$0xff]
        %v5806 = vld [vmem:[#allocation2 + $0x111] sm:$0xff]
        %v5807 = vld [vmem:[#allocation2 + $0x119] sm:$0xff]
        %v5808 = vld [vmem:[#allocation2 + $0x121] sm:$0xff]
        %v5809 = vld [vmem:[#allocation2 + $0x129] sm:$0xff]
        %v5810 = vld [vmem:[#allocation2 + $0x131] sm:$0xff]
        %s5811 = scalar_lea.vmem [#allocation4], 640
        %v5812 = vld [vmem:[%s5811] sm:$0xff]
        %v5813 = vld [vmem:[%s5811 + $0x8] sm:$0xff]
        %v5814 = vld [vmem:[%s5811 + $0x10] sm:$0xff]
        %v5815 = vld [vmem:[%s5811 + $0x18] sm:$0xff]
        %v5816 = vld [vmem:[%s5811 + $0x20] sm:$0xff]
        %v5817 = vld [vmem:[%s5811 + $0x28] sm:$0xff]
        %v5818 = vld [vmem:[%s5811 + $0x30] sm:$0xff]
        %v5819 = vld [vmem:[%s5811 + $0x38] sm:$0xff]
        %v5820 = vld [vmem:[%s5811 + $0x40] sm:$0xff]
        %v5821 = vld [vmem:[%s5811 + $0x48] sm:$0xff]
        %v5822 = vld [vmem:[%s5811 + $0x50] sm:$0xff]
        %v5823 = vld [vmem:[%s5811 + $0x58] sm:$0xff]
        %v5824 = vld [vmem:[%s5811 + $0x60] sm:$0xff]
        %v5825 = vld [vmem:[%s5811 + $0x68] sm:$0xff]
        %v5826 = vld [vmem:[%s5811 + $0x70] sm:$0xff]
        %v5827 = vld [vmem:[%s5811 + $0x78] sm:$0xff]
        %5828 = vmatprep.subr.mxu0 0.0
        %5829 = vmatpush1.msra.mxu0 %v5827
        %5830 = vmatprep.subr.mxu0 0.0
        %5831 = vmatpush1.msra.mxu0 %v5826
        %5832 = vmatprep.subr.mxu0 0.0
        %5833 = vmatpush1.msra.mxu0 %v5825
        %5834 = vmatprep.subr.mxu0 0.0
        %5835 = vmatpush1.msra.mxu0 %v5824
        %5836 = vmatprep.subr.mxu0 0.0
        %5837 = vmatpush1.msra.mxu0 %v5823
        %5838 = vmatprep.subr.mxu0 0.0
        %5839 = vmatpush1.msra.mxu0 %v5822
        %5840 = vmatprep.subr.mxu0 0.0
        %5841 = vmatpush1.msra.mxu0 %v5821
        %5842 = vmatprep.subr.mxu0 0.0
        %5843 = vmatpush1.msra.mxu0 %v5820
        %5844 = vmatprep.subr.mxu0 0.0
        %5845 = vmatpush1.msra.mxu0 %v5819
        %5846 = vmatprep.subr.mxu0 0.0
        %5847 = vmatpush1.msra.mxu0 %v5818
        %5848 = vmatprep.subr.mxu0 0.0
        %5849 = vmatpush1.msra.mxu0 %v5817
        %5850 = vmatprep.subr.mxu0 0.0
        %5851 = vmatpush1.msra.mxu0 %v5816
        %5852 = vmatprep.subr.mxu0 0.0
        %5853 = vmatpush1.msra.mxu0 %v5815
        %5854 = vmatprep.subr.mxu0 0.0
        %5855 = vmatpush1.msra.mxu0 %v5814
        %5856 = vmatprep.subr.mxu0 0.0
        %5857 = vmatpush1.msra.mxu0 %v5813
        %5858 = vmatprep.subr.mxu0 0.0
        %5859 = vmatpush1.msra.mxu0 %v5812
        %5860 = vmatprep.subr.mxu0 0.0
        %5861 = vmatpush2.msra.mxu0 0.0
        %5862 = vmatprep.subr.mxu0 0.0
        %5863 = vmatpush2.msra.mxu0 0.0
        %5864 = vmatprep.subr.mxu0 0.0
        %5865 = vmatpush2.msra.mxu0 0.0
        %5866 = vmatprep.subr.mxu0 0.0
        %5867 = vmatpush2.msra.mxu0 0.0
        %5868 = vmatprep.subr.mxu0 0.0
        %5869 = vmatpush2.msra.mxu0 0.0
        %5870 = vmatprep.subr.mxu0 0.0
        %5871 = vmatpush2.msra.mxu0 0.0
        %5872 = vmatprep.subr.mxu0 0.0
        %5873 = vmatpush2.msra.mxu0 0.0
        %5874 = vmatprep.subr.mxu0 0.0
        %5875 = vmatpush2.msra.mxu0 0.0
        %5876 = vmatprep.subr.mxu0 0.0
        %5877 = vmatpush2.msra.mxu0 0.0
        %5878 = vmatprep.subr.mxu0 0.0
        %5879 = vmatpush2.msra.mxu0 0.0
        %5880 = vmatprep.subr.mxu0 0.0
        %5881 = vmatpush2.msra.mxu0 0.0
        %5882 = vmatprep.subr.mxu0 0.0
        %5883 = vmatpush2.msra.mxu0 0.0
        %5884 = vmatprep.subr.mxu0 0.0
        %5885 = vmatpush2.msra.mxu0 0.0
        %5886 = vmatprep.subr.mxu0 0.0
        %5887 = vmatpush2.msra.mxu0 0.0
        %5888 = vmatprep.subr.mxu0 0.0
        %5889 = vmatpush2.msra.mxu0 0.0
        %5890 = vmatprep.subr.mxu0 0.0
        %5891 = vmatpush2.msra.mxu0 0.0
        %5892 = vmatprep.mubr.f32.mxu0 0.0
        %5893 = vmatmul.mubr.f32.gmra.mxu0 %v5775
        %v5894 = vpop.f32.mrf.mxu0
        %v5895 = vadd.f32 0.0, %v5894
        %v5896 = vpop.f32.mrf.mxu0
        %5897 = vmatprep.mubr.f32.mxu0 0.0
        %5898 = vmatmul.mubr.f32.gmra.mxu0 %v5776
        %v5899 = vpop.f32.mrf.mxu0
        %v5900 = vadd.f32 0.0, %v5899
        %v5901 = vpop.f32.mrf.mxu0
        %5902 = vmatprep.mubr.f32.mxu0 0.0
        %5903 = vmatmul.mubr.f32.gmra.mxu0 %v5777
        %v5904 = vpop.f32.mrf.mxu0
        %v5905 = vadd.f32 0.0, %v5904
        %v5906 = vpop.f32.mrf.mxu0
        %5907 = vmatprep.mubr.f32.mxu0 0.0
        %5908 = vmatmul.mubr.f32.gmra.mxu0 %v5778
        %v5909 = vpop.f32.mrf.mxu0
        %v5910 = vadd.f32 0.0, %v5909
        %v5911 = vpop.f32.mrf.mxu0
        %5912 = vmatprep.mubr.f32.mxu0 0.0
        %5913 = vmatmul.mubr.f32.gmra.mxu0 %v5779
        %v5914 = vpop.f32.mrf.mxu0
        %v5915 = vadd.f32 0.0, %v5914
        %v5916 = vpop.f32.mrf.mxu0
        %5917 = vmatprep.mubr.f32.mxu0 0.0
        %5918 = vmatmul.mubr.f32.gmra.mxu0 %v5780
        %v5919 = vpop.f32.mrf.mxu0
        %v5920 = vadd.f32 0.0, %v5919
        %v5921 = vpop.f32.mrf.mxu0
        %5922 = vmatprep.mubr.f32.mxu0 0.0
        %5923 = vmatmul.mubr.f32.gmra.mxu0 %v5781
        %v5924 = vpop.f32.mrf.mxu0
        %v5925 = vadd.f32 0.0, %v5924
        %v5926 = vpop.f32.mrf.mxu0
        %5927 = vmatprep.mubr.f32.mxu0 0.0
        %5928 = vmatmul.mubr.f32.gmra.mxu0 %v5782
        %v5929 = vpop.f32.mrf.mxu0
        %v5930 = vadd.f32 0.0, %v5929
        %v5931 = vpop.f32.mrf.mxu0
        %5932 = vmatprep.mubr.f32.mxu0 0.0
        %5933 = vmatmul.mubr.f32.gmra.mxu0 %v5783
        %v5934 = vpop.f32.mrf.mxu0
        %v5935 = vadd.f32 0.0, %v5934
        %v5936 = vpop.f32.mrf.mxu0
        %5937 = vmatprep.mubr.f32.mxu0 0.0
        %5938 = vmatmul.mubr.f32.gmra.mxu0 %v5784
        %v5939 = vpop.f32.mrf.mxu0
        %v5940 = vadd.f32 0.0, %v5939
        %v5941 = vpop.f32.mrf.mxu0
        %5942 = vmatprep.mubr.f32.mxu0 0.0
        %5943 = vmatmul.mubr.f32.gmra.mxu0 %v5785
        %v5944 = vpop.f32.mrf.mxu0
        %v5945 = vadd.f32 0.0, %v5944
        %v5946 = vpop.f32.mrf.mxu0
        %5947 = vmatprep.mubr.f32.mxu0 0.0
        %5948 = vmatmul.mubr.f32.gmra.mxu0 %v5786
        %v5949 = vpop.f32.mrf.mxu0
        %v5950 = vadd.f32 0.0, %v5949
        %v5951 = vpop.f32.mrf.mxu0
        %5952 = vmatprep.mubr.f32.mxu0 0.0
        %5953 = vmatmul.mubr.f32.gmra.mxu0 %v5787
        %v5954 = vpop.f32.mrf.mxu0
        %v5955 = vadd.f32 0.0, %v5954
        %v5956 = vpop.f32.mrf.mxu0
        %5957 = vmatprep.mubr.f32.mxu0 0.0
        %5958 = vmatmul.mubr.f32.gmra.mxu0 %v5788
        %v5959 = vpop.f32.mrf.mxu0
        %v5960 = vadd.f32 0.0, %v5959
        %v5961 = vpop.f32.mrf.mxu0
        %5962 = vmatprep.mubr.f32.mxu0 0.0
        %5963 = vmatmul.mubr.f32.gmra.mxu0 %v5789
        %v5964 = vpop.f32.mrf.mxu0
        %v5965 = vadd.f32 0.0, %v5964
        %v5966 = vpop.f32.mrf.mxu0
        %5967 = vmatprep.mubr.f32.mxu0 0.0
        %5968 = vmatmul.mubr.f32.gmra.mxu0 %v5790
        %v5969 = vpop.f32.mrf.mxu0
        %v5970 = vadd.f32 0.0, %v5969
        %v5971 = vpop.f32.mrf.mxu0
        %5972 = vmatprep.mubr.f32.mxu0 0.0
        %5973 = vmatmul.mubr.f32.gmra.mxu0 %v5791
        %v5974 = vpop.f32.mrf.mxu0
        %v5975 = vadd.f32 0.0, %v5974
        %v5976 = vpop.f32.mrf.mxu0
        %5977 = vmatprep.mubr.f32.mxu0 0.0
        %5978 = vmatmul.mubr.f32.gmra.mxu0 %v5792
        %v5979 = vpop.f32.mrf.mxu0
        %v5980 = vadd.f32 0.0, %v5979
        %v5981 = vpop.f32.mrf.mxu0
        %5982 = vmatprep.mubr.f32.mxu0 0.0
        %5983 = vmatmul.mubr.f32.gmra.mxu0 %v5793
        %v5984 = vpop.f32.mrf.mxu0
        %v5985 = vadd.f32 0.0, %v5984
        %v5986 = vpop.f32.mrf.mxu0
        %5987 = vmatprep.mubr.f32.mxu0 0.0
        %5988 = vmatmul.mubr.f32.gmra.mxu0 %v5794
        %v5989 = vpop.f32.mrf.mxu0
        %v5990 = vadd.f32 0.0, %v5989
        %v5991 = vpop.f32.mrf.mxu0
        %5992 = vmatprep.mubr.f32.mxu0 0.0
        %5993 = vmatmul.mubr.f32.gmra.mxu0 %v5795
        %v5994 = vpop.f32.mrf.mxu0
        %v5995 = vadd.f32 0.0, %v5994
        %v5996 = vpop.f32.mrf.mxu0
        %5997 = vmatprep.mubr.f32.mxu0 0.0
        %5998 = vmatmul.mubr.f32.gmra.mxu0 %v5796
        %v5999 = vpop.f32.mrf.mxu0
        %v6000 = vadd.f32 0.0, %v5999
        %v6001 = vpop.f32.mrf.mxu0
        %6002 = vmatprep.mubr.f32.mxu0 0.0
        %6003 = vmatmul.mubr.f32.gmra.mxu0 %v5797
        %v6004 = vpop.f32.mrf.mxu0
        %v6005 = vadd.f32 0.0, %v6004
        %v6006 = vpop.f32.mrf.mxu0
        %6007 = vmatprep.mubr.f32.mxu0 0.0
        %6008 = vmatmul.mubr.f32.gmra.mxu0 %v5798
        %v6009 = vpop.f32.mrf.mxu0
        %v6010 = vadd.f32 0.0, %v6009
        %v6011 = vpop.f32.mrf.mxu0
        %6012 = vmatprep.mubr.f32.mxu0 0.0
        %6013 = vmatmul.mubr.f32.gmra.mxu0 %v5799
        %v6014 = vpop.f32.mrf.mxu0
        %v6015 = vadd.f32 0.0, %v6014
        %v6016 = vpop.f32.mrf.mxu0
        %6017 = vmatprep.mubr.f32.mxu0 0.0
        %6018 = vmatmul.mubr.f32.gmra.mxu0 %v5800
        %v6019 = vpop.f32.mrf.mxu0
        %v6020 = vadd.f32 0.0, %v6019
        %v6021 = vpop.f32.mrf.mxu0
        %6022 = vmatprep.mubr.f32.mxu0 0.0
        %6023 = vmatmul.mubr.f32.gmra.mxu0 %v5801
        %v6024 = vpop.f32.mrf.mxu0
        %v6025 = vadd.f32 0.0, %v6024
        %v6026 = vpop.f32.mrf.mxu0
        %6027 = vmatprep.mubr.f32.mxu0 0.0
        %6028 = vmatmul.mubr.f32.gmra.mxu0 %v5802
        %v6029 = vpop.f32.mrf.mxu0
        %v6030 = vadd.f32 0.0, %v6029
        %v6031 = vpop.f32.mrf.mxu0
        %6032 = vmatprep.mubr.f32.mxu0 0.0
        %6033 = vmatmul.mubr.f32.gmra.mxu0 %v5803
        %v6034 = vpop.f32.mrf.mxu0
        %v6035 = vadd.f32 0.0, %v6034
        %v6036 = vpop.f32.mrf.mxu0
        %6037 = vmatprep.mubr.f32.mxu0 0.0
        %6038 = vmatmul.mubr.f32.gmra.mxu0 %v5804
        %v6039 = vpop.f32.mrf.mxu0
        %v6040 = vadd.f32 0.0, %v6039
        %v6041 = vpop.f32.mrf.mxu0
        %6042 = vmatprep.mubr.f32.mxu0 0.0
        %6043 = vmatmul.mubr.f32.gmra.mxu0 %v5805
        %v6044 = vpop.f32.mrf.mxu0
        %v6045 = vadd.f32 0.0, %v6044
        %v6046 = vpop.f32.mrf.mxu0
        %6047 = vmatprep.mubr.f32.mxu0 0.0
        %6048 = vmatmul.mubr.f32.gmra.mxu0 %v5806
        %v6049 = vpop.f32.mrf.mxu0
        %v6050 = vadd.f32 0.0, %v6049
        %v6051 = vpop.f32.mrf.mxu0
        %6052 = vmatprep.mubr.f32.mxu0 0.0
        %6053 = vmatmul.mubr.f32.gmra.mxu0 %v5807
        %v6054 = vpop.f32.mrf.mxu0
        %v6055 = vadd.f32 0.0, %v6054
        %v6056 = vpop.f32.mrf.mxu0
        %6057 = vmatprep.mubr.f32.mxu0 0.0
        %6058 = vmatmul.mubr.f32.gmra.mxu0 %v5808
        %v6059 = vpop.f32.mrf.mxu0
        %v6060 = vadd.f32 0.0, %v6059
        %v6061 = vpop.f32.mrf.mxu0
        %6062 = vmatprep.mubr.f32.mxu0 0.0
        %6063 = vmatmul.mubr.f32.gmra.mxu0 %v5809
        %v6064 = vpop.f32.mrf.mxu0
        %v6065 = vadd.f32 0.0, %v6064
        %v6066 = vpop.f32.mrf.mxu0
        %6067 = vmatprep.mubr.f32.mxu0 0.0
        %6068 = vmatmul.mubr.f32.gmra.mxu0 %v5810
        %v6069 = vpop.f32.mrf.mxu0
        %v6070 = vadd.f32 0.0, %v6069
        %v6071 = vpop.f32.mrf.mxu0
        %6072 = vdwg.mxu0
        %v6073 = vadd.f32 %v5739, %v5895
        %v6074 = vadd.f32 %v5740, %v5900
        %v6075 = vadd.f32 %v5741, %v5905
        %v6076 = vadd.f32 %v5742, %v5910
        %v6077 = vadd.f32 %v5743, %v5915
        %v6078 = vadd.f32 %v5744, %v5920
        %v6079 = vadd.f32 %v5745, %v5925
        %v6080 = vadd.f32 %v5746, %v5930
        %v6081 = vadd.f32 %v5747, %v5935
        %v6082 = vadd.f32 %v5748, %v5940
        %v6083 = vadd.f32 %v5749, %v5945
        %v6084 = vadd.f32 %v5750, %v5950
        %v6085 = vadd.f32 %v5751, %v5955
        %v6086 = vadd.f32 %v5752, %v5960
        %v6087 = vadd.f32 %v5753, %v5965
        %v6088 = vadd.f32 %v5754, %v5970
        %v6089 = vadd.f32 %v5755, %v5975
        %v6090 = vadd.f32 %v5756, %v5980
        %v6091 = vadd.f32 %v5757, %v5985
        %v6092 = vadd.f32 %v5758, %v5990
        %v6093 = vadd.f32 %v5759, %v5995
        %v6094 = vadd.f32 %v5760, %v6000
        %v6095 = vadd.f32 %v5761, %v6005
        %v6096 = vadd.f32 %v5762, %v6010
        %v6097 = vadd.f32 %v5763, %v6015
        %v6098 = vadd.f32 %v5764, %v6020
        %v6099 = vadd.f32 %v5765, %v6025
        %v6100 = vadd.f32 %v5766, %v6030
        %v6101 = vadd.f32 %v5767, %v6035
        %v6102 = vadd.f32 %v5768, %v6040
        %v6103 = vadd.f32 %v5769, %v6045
        %v6104 = vadd.f32 %v5770, %v6050
        %v6105 = vadd.f32 %v5771, %v6055
        %v6106 = vadd.f32 %v5772, %v6060
        %v6107 = vadd.f32 %v5773, %v6065
        %v6108 = vadd.f32 %v5774, %v6070
        %v6109 = vld [vmem:[#allocation2 + $0x29] sm:$0xff]
        %v6110 = vld [vmem:[#allocation2 + $0x31] sm:$0xff]
        %v6111 = vld [vmem:[#allocation2 + $0x39] sm:$0xff]
        %v6112 = vld [vmem:[#allocation2 + $0x41] sm:$0xff]
        %v6113 = vld [vmem:[#allocation2 + $0x49] sm:$0xff]
        %v6114 = vld [vmem:[#allocation2 + $0x51] sm:$0xff]
        %v6115 = vld [vmem:[#allocation2 + $0x59] sm:$0xff]
        %v6116 = vld [vmem:[#allocation2 + $0x61] sm:$0xff]
        %v6117 = vld [vmem:[#allocation2 + $0x69] sm:$0xff]
        %v6118 = vld [vmem:[#allocation2 + $0x71] sm:$0xff]
        %v6119 = vld [vmem:[#allocation2 + $0x79] sm:$0xff]
        %v6120 = vld [vmem:[#allocation2 + $0x81] sm:$0xff]
        %v6121 = vld [vmem:[#allocation2 + $0x89] sm:$0xff]
        %v6122 = vld [vmem:[#allocation2 + $0x91] sm:$0xff]
        %v6123 = vld [vmem:[#allocation2 + $0x99] sm:$0xff]
        %v6124 = vld [vmem:[#allocation2 + $0xa1] sm:$0xff]
        %v6125 = vld [vmem:[#allocation2 + $0xa9] sm:$0xff]
        %v6126 = vld [vmem:[#allocation2 + $0xb1] sm:$0xff]
        %v6127 = vld [vmem:[#allocation2 + $0xb9] sm:$0xff]
        %v6128 = vld [vmem:[#allocation2 + $0xc1] sm:$0xff]
        %v6129 = vld [vmem:[#allocation2 + $0xc9] sm:$0xff]
        %v6130 = vld [vmem:[#allocation2 + $0xd1] sm:$0xff]
        %v6131 = vld [vmem:[#allocation2 + $0xd9] sm:$0xff]
        %v6132 = vld [vmem:[#allocation2 + $0xe1] sm:$0xff]
        %v6133 = vld [vmem:[#allocation2 + $0xe9] sm:$0xff]
        %v6134 = vld [vmem:[#allocation2 + $0xf1] sm:$0xff]
        %v6135 = vld [vmem:[#allocation2 + $0xf9] sm:$0xff]
        %v6136 = vld [vmem:[#allocation2 + $0x101] sm:$0xff]
        %v6137 = vld [vmem:[#allocation2 + $0x109] sm:$0xff]
        %v6138 = vld [vmem:[#allocation2 + $0x111] sm:$0xff]
        %v6139 = vld [vmem:[#allocation2 + $0x119] sm:$0xff]
        %v6140 = vld [vmem:[#allocation2 + $0x121] sm:$0xff]
        %v6141 = vld [vmem:[#allocation2 + $0x129] sm:$0xff]
        %v6142 = vld [vmem:[#allocation2 + $0x131] sm:$0xff]
        %v6143 = vld [vmem:[#allocation2 + $0x139] sm:$0xff]
        %v6144 = vld [vmem:[#allocation2 + $0x141] sm:$0xff]
        %s6145 = scalar_lea.vmem [#allocation4], 768
        %v6146 = vld [vmem:[%s6145] sm:$0xff]
        %v6147 = vld [vmem:[%s6145 + $0x8] sm:$0xff]
        %v6148 = vld [vmem:[%s6145 + $0x10] sm:$0xff]
        %v6149 = vld [vmem:[%s6145 + $0x18] sm:$0xff]
        %v6150 = vld [vmem:[%s6145 + $0x20] sm:$0xff]
        %v6151 = vld [vmem:[%s6145 + $0x28] sm:$0xff]
        %v6152 = vld [vmem:[%s6145 + $0x30] sm:$0xff]
        %v6153 = vld [vmem:[%s6145 + $0x38] sm:$0xff]
        %v6154 = vld [vmem:[%s6145 + $0x40] sm:$0xff]
        %v6155 = vld [vmem:[%s6145 + $0x48] sm:$0xff]
        %v6156 = vld [vmem:[%s6145 + $0x50] sm:$0xff]
        %v6157 = vld [vmem:[%s6145 + $0x58] sm:$0xff]
        %v6158 = vld [vmem:[%s6145 + $0x60] sm:$0xff]
        %v6159 = vld [vmem:[%s6145 + $0x68] sm:$0xff]
        %v6160 = vld [vmem:[%s6145 + $0x70] sm:$0xff]
        %v6161 = vld [vmem:[%s6145 + $0x78] sm:$0xff]
        %6162 = vmatprep.subr.mxu0 0.0
        %6163 = vmatpush1.msra.mxu0 %v6161
        %6164 = vmatprep.subr.mxu0 0.0
        %6165 = vmatpush1.msra.mxu0 %v6160
        %6166 = vmatprep.subr.mxu0 0.0
        %6167 = vmatpush1.msra.mxu0 %v6159
        %6168 = vmatprep.subr.mxu0 0.0
        %6169 = vmatpush1.msra.mxu0 %v6158
        %6170 = vmatprep.subr.mxu0 0.0
        %6171 = vmatpush1.msra.mxu0 %v6157
        %6172 = vmatprep.subr.mxu0 0.0
        %6173 = vmatpush1.msra.mxu0 %v6156
        %6174 = vmatprep.subr.mxu0 0.0
        %6175 = vmatpush1.msra.mxu0 %v6155
        %6176 = vmatprep.subr.mxu0 0.0
        %6177 = vmatpush1.msra.mxu0 %v6154
        %6178 = vmatprep.subr.mxu0 0.0
        %6179 = vmatpush1.msra.mxu0 %v6153
        %6180 = vmatprep.subr.mxu0 0.0
        %6181 = vmatpush1.msra.mxu0 %v6152
        %6182 = vmatprep.subr.mxu0 0.0
        %6183 = vmatpush1.msra.mxu0 %v6151
        %6184 = vmatprep.subr.mxu0 0.0
        %6185 = vmatpush1.msra.mxu0 %v6150
        %6186 = vmatprep.subr.mxu0 0.0
        %6187 = vmatpush1.msra.mxu0 %v6149
        %6188 = vmatprep.subr.mxu0 0.0
        %6189 = vmatpush1.msra.mxu0 %v6148
        %6190 = vmatprep.subr.mxu0 0.0
        %6191 = vmatpush1.msra.mxu0 %v6147
        %6192 = vmatprep.subr.mxu0 0.0
        %6193 = vmatpush1.msra.mxu0 %v6146
        %6194 = vmatprep.subr.mxu0 0.0
        %6195 = vmatpush2.msra.mxu0 0.0
        %6196 = vmatprep.subr.mxu0 0.0
        %6197 = vmatpush2.msra.mxu0 0.0
        %6198 = vmatprep.subr.mxu0 0.0
        %6199 = vmatpush2.msra.mxu0 0.0
        %6200 = vmatprep.subr.mxu0 0.0
        %6201 = vmatpush2.msra.mxu0 0.0
        %6202 = vmatprep.subr.mxu0 0.0
        %6203 = vmatpush2.msra.mxu0 0.0
        %6204 = vmatprep.subr.mxu0 0.0
        %6205 = vmatpush2.msra.mxu0 0.0
        %6206 = vmatprep.subr.mxu0 0.0
        %6207 = vmatpush2.msra.mxu0 0.0
        %6208 = vmatprep.subr.mxu0 0.0
        %6209 = vmatpush2.msra.mxu0 0.0
        %6210 = vmatprep.subr.mxu0 0.0
        %6211 = vmatpush2.msra.mxu0 0.0
        %6212 = vmatprep.subr.mxu0 0.0
        %6213 = vmatpush2.msra.mxu0 0.0
        %6214 = vmatprep.subr.mxu0 0.0
        %6215 = vmatpush2.msra.mxu0 0.0
        %6216 = vmatprep.subr.mxu0 0.0
        %6217 = vmatpush2.msra.mxu0 0.0
        %6218 = vmatprep.subr.mxu0 0.0
        %6219 = vmatpush2.msra.mxu0 0.0
        %6220 = vmatprep.subr.mxu0 0.0
        %6221 = vmatpush2.msra.mxu0 0.0
        %6222 = vmatprep.subr.mxu0 0.0
        %6223 = vmatpush2.msra.mxu0 0.0
        %6224 = vmatprep.subr.mxu0 0.0
        %6225 = vmatpush2.msra.mxu0 0.0
        %6226 = vmatprep.mubr.f32.mxu0 0.0
        %6227 = vmatmul.mubr.f32.gmra.mxu0 %v6109
        %v6228 = vpop.f32.mrf.mxu0
        %v6229 = vadd.f32 0.0, %v6228
        %v6230 = vpop.f32.mrf.mxu0
        %6231 = vmatprep.mubr.f32.mxu0 0.0
        %6232 = vmatmul.mubr.f32.gmra.mxu0 %v6110
        %v6233 = vpop.f32.mrf.mxu0
        %v6234 = vadd.f32 0.0, %v6233
        %v6235 = vpop.f32.mrf.mxu0
        %6236 = vmatprep.mubr.f32.mxu0 0.0
        %6237 = vmatmul.mubr.f32.gmra.mxu0 %v6111
        %v6238 = vpop.f32.mrf.mxu0
        %v6239 = vadd.f32 0.0, %v6238
        %v6240 = vpop.f32.mrf.mxu0
        %6241 = vmatprep.mubr.f32.mxu0 0.0
        %6242 = vmatmul.mubr.f32.gmra.mxu0 %v6112
        %v6243 = vpop.f32.mrf.mxu0
        %v6244 = vadd.f32 0.0, %v6243
        %v6245 = vpop.f32.mrf.mxu0
        %6246 = vmatprep.mubr.f32.mxu0 0.0
        %6247 = vmatmul.mubr.f32.gmra.mxu0 %v6113
        %v6248 = vpop.f32.mrf.mxu0
        %v6249 = vadd.f32 0.0, %v6248
        %v6250 = vpop.f32.mrf.mxu0
        %6251 = vmatprep.mubr.f32.mxu0 0.0
        %6252 = vmatmul.mubr.f32.gmra.mxu0 %v6114
        %v6253 = vpop.f32.mrf.mxu0
        %v6254 = vadd.f32 0.0, %v6253
        %v6255 = vpop.f32.mrf.mxu0
        %6256 = vmatprep.mubr.f32.mxu0 0.0
        %6257 = vmatmul.mubr.f32.gmra.mxu0 %v6115
        %v6258 = vpop.f32.mrf.mxu0
        %v6259 = vadd.f32 0.0, %v6258
        %v6260 = vpop.f32.mrf.mxu0
        %6261 = vmatprep.mubr.f32.mxu0 0.0
        %6262 = vmatmul.mubr.f32.gmra.mxu0 %v6116
        %v6263 = vpop.f32.mrf.mxu0
        %v6264 = vadd.f32 0.0, %v6263
        %v6265 = vpop.f32.mrf.mxu0
        %6266 = vmatprep.mubr.f32.mxu0 0.0
        %6267 = vmatmul.mubr.f32.gmra.mxu0 %v6117
        %v6268 = vpop.f32.mrf.mxu0
        %v6269 = vadd.f32 0.0, %v6268
        %v6270 = vpop.f32.mrf.mxu0
        %6271 = vmatprep.mubr.f32.mxu0 0.0
        %6272 = vmatmul.mubr.f32.gmra.mxu0 %v6118
        %v6273 = vpop.f32.mrf.mxu0
        %v6274 = vadd.f32 0.0, %v6273
        %v6275 = vpop.f32.mrf.mxu0
        %6276 = vmatprep.mubr.f32.mxu0 0.0
        %6277 = vmatmul.mubr.f32.gmra.mxu0 %v6119
        %v6278 = vpop.f32.mrf.mxu0
        %v6279 = vadd.f32 0.0, %v6278
        %v6280 = vpop.f32.mrf.mxu0
        %6281 = vmatprep.mubr.f32.mxu0 0.0
        %6282 = vmatmul.mubr.f32.gmra.mxu0 %v6120
        %v6283 = vpop.f32.mrf.mxu0
        %v6284 = vadd.f32 0.0, %v6283
        %v6285 = vpop.f32.mrf.mxu0
        %6286 = vmatprep.mubr.f32.mxu0 0.0
        %6287 = vmatmul.mubr.f32.gmra.mxu0 %v6121
        %v6288 = vpop.f32.mrf.mxu0
        %v6289 = vadd.f32 0.0, %v6288
        %v6290 = vpop.f32.mrf.mxu0
        %6291 = vmatprep.mubr.f32.mxu0 0.0
        %6292 = vmatmul.mubr.f32.gmra.mxu0 %v6122
        %v6293 = vpop.f32.mrf.mxu0
        %v6294 = vadd.f32 0.0, %v6293
        %v6295 = vpop.f32.mrf.mxu0
        %6296 = vmatprep.mubr.f32.mxu0 0.0
        %6297 = vmatmul.mubr.f32.gmra.mxu0 %v6123
        %v6298 = vpop.f32.mrf.mxu0
        %v6299 = vadd.f32 0.0, %v6298
        %v6300 = vpop.f32.mrf.mxu0
        %6301 = vmatprep.mubr.f32.mxu0 0.0
        %6302 = vmatmul.mubr.f32.gmra.mxu0 %v6124
        %v6303 = vpop.f32.mrf.mxu0
        %v6304 = vadd.f32 0.0, %v6303
        %v6305 = vpop.f32.mrf.mxu0
        %6306 = vmatprep.mubr.f32.mxu0 0.0
        %6307 = vmatmul.mubr.f32.gmra.mxu0 %v6125
        %v6308 = vpop.f32.mrf.mxu0
        %v6309 = vadd.f32 0.0, %v6308
        %v6310 = vpop.f32.mrf.mxu0
        %6311 = vmatprep.mubr.f32.mxu0 0.0
        %6312 = vmatmul.mubr.f32.gmra.mxu0 %v6126
        %v6313 = vpop.f32.mrf.mxu0
        %v6314 = vadd.f32 0.0, %v6313
        %v6315 = vpop.f32.mrf.mxu0
        %6316 = vmatprep.mubr.f32.mxu0 0.0
        %6317 = vmatmul.mubr.f32.gmra.mxu0 %v6127
        %v6318 = vpop.f32.mrf.mxu0
        %v6319 = vadd.f32 0.0, %v6318
        %v6320 = vpop.f32.mrf.mxu0
        %6321 = vmatprep.mubr.f32.mxu0 0.0
        %6322 = vmatmul.mubr.f32.gmra.mxu0 %v6128
        %v6323 = vpop.f32.mrf.mxu0
        %v6324 = vadd.f32 0.0, %v6323
        %v6325 = vpop.f32.mrf.mxu0
        %6326 = vmatprep.mubr.f32.mxu0 0.0
        %6327 = vmatmul.mubr.f32.gmra.mxu0 %v6129
        %v6328 = vpop.f32.mrf.mxu0
        %v6329 = vadd.f32 0.0, %v6328
        %v6330 = vpop.f32.mrf.mxu0
        %6331 = vmatprep.mubr.f32.mxu0 0.0
        %6332 = vmatmul.mubr.f32.gmra.mxu0 %v6130
        %v6333 = vpop.f32.mrf.mxu0
        %v6334 = vadd.f32 0.0, %v6333
        %v6335 = vpop.f32.mrf.mxu0
        %6336 = vmatprep.mubr.f32.mxu0 0.0
        %6337 = vmatmul.mubr.f32.gmra.mxu0 %v6131
        %v6338 = vpop.f32.mrf.mxu0
        %v6339 = vadd.f32 0.0, %v6338
        %v6340 = vpop.f32.mrf.mxu0
        %6341 = vmatprep.mubr.f32.mxu0 0.0
        %6342 = vmatmul.mubr.f32.gmra.mxu0 %v6132
        %v6343 = vpop.f32.mrf.mxu0
        %v6344 = vadd.f32 0.0, %v6343
        %v6345 = vpop.f32.mrf.mxu0
        %6346 = vmatprep.mubr.f32.mxu0 0.0
        %6347 = vmatmul.mubr.f32.gmra.mxu0 %v6133
        %v6348 = vpop.f32.mrf.mxu0
        %v6349 = vadd.f32 0.0, %v6348
        %v6350 = vpop.f32.mrf.mxu0
        %6351 = vmatprep.mubr.f32.mxu0 0.0
        %6352 = vmatmul.mubr.f32.gmra.mxu0 %v6134
        %v6353 = vpop.f32.mrf.mxu0
        %v6354 = vadd.f32 0.0, %v6353
        %v6355 = vpop.f32.mrf.mxu0
        %6356 = vmatprep.mubr.f32.mxu0 0.0
        %6357 = vmatmul.mubr.f32.gmra.mxu0 %v6135
        %v6358 = vpop.f32.mrf.mxu0
        %v6359 = vadd.f32 0.0, %v6358
        %v6360 = vpop.f32.mrf.mxu0
        %6361 = vmatprep.mubr.f32.mxu0 0.0
        %6362 = vmatmul.mubr.f32.gmra.mxu0 %v6136
        %v6363 = vpop.f32.mrf.mxu0
        %v6364 = vadd.f32 0.0, %v6363
        %v6365 = vpop.f32.mrf.mxu0
        %6366 = vmatprep.mubr.f32.mxu0 0.0
        %6367 = vmatmul.mubr.f32.gmra.mxu0 %v6137
        %v6368 = vpop.f32.mrf.mxu0
        %v6369 = vadd.f32 0.0, %v6368
        %v6370 = vpop.f32.mrf.mxu0
        %6371 = vmatprep.mubr.f32.mxu0 0.0
        %6372 = vmatmul.mubr.f32.gmra.mxu0 %v6138
        %v6373 = vpop.f32.mrf.mxu0
        %v6374 = vadd.f32 0.0, %v6373
        %v6375 = vpop.f32.mrf.mxu0
        %6376 = vmatprep.mubr.f32.mxu0 0.0
        %6377 = vmatmul.mubr.f32.gmra.mxu0 %v6139
        %v6378 = vpop.f32.mrf.mxu0
        %v6379 = vadd.f32 0.0, %v6378
        %v6380 = vpop.f32.mrf.mxu0
        %6381 = vmatprep.mubr.f32.mxu0 0.0
        %6382 = vmatmul.mubr.f32.gmra.mxu0 %v6140
        %v6383 = vpop.f32.mrf.mxu0
        %v6384 = vadd.f32 0.0, %v6383
        %v6385 = vpop.f32.mrf.mxu0
        %6386 = vmatprep.mubr.f32.mxu0 0.0
        %6387 = vmatmul.mubr.f32.gmra.mxu0 %v6141
        %v6388 = vpop.f32.mrf.mxu0
        %v6389 = vadd.f32 0.0, %v6388
        %v6390 = vpop.f32.mrf.mxu0
        %6391 = vmatprep.mubr.f32.mxu0 0.0
        %6392 = vmatmul.mubr.f32.gmra.mxu0 %v6142
        %v6393 = vpop.f32.mrf.mxu0
        %v6394 = vadd.f32 0.0, %v6393
        %v6395 = vpop.f32.mrf.mxu0
        %6396 = vmatprep.mubr.f32.mxu0 0.0
        %6397 = vmatmul.mubr.f32.gmra.mxu0 %v6143
        %v6398 = vpop.f32.mrf.mxu0
        %v6399 = vadd.f32 0.0, %v6398
        %v6400 = vpop.f32.mrf.mxu0
        %6401 = vmatprep.mubr.f32.mxu0 0.0
        %6402 = vmatmul.mubr.f32.gmra.mxu0 %v6144
        %v6403 = vpop.f32.mrf.mxu0
        %v6404 = vadd.f32 0.0, %v6403
        %v6405 = vpop.f32.mrf.mxu0
        %6406 = vdwg.mxu0
        %v6407 = vadd.f32 %v6073, %v6229
        %v6408 = vadd.f32 %v6074, %v6234
        %v6409 = vadd.f32 %v6075, %v6239
        %v6410 = vadd.f32 %v6076, %v6244
        %v6411 = vadd.f32 %v6077, %v6249
        %v6412 = vadd.f32 %v6078, %v6254
        %v6413 = vadd.f32 %v6079, %v6259
        %v6414 = vadd.f32 %v6080, %v6264
        %v6415 = vadd.f32 %v6081, %v6269
        %v6416 = vadd.f32 %v6082, %v6274
        %v6417 = vadd.f32 %v6083, %v6279
        %v6418 = vadd.f32 %v6084, %v6284
        %v6419 = vadd.f32 %v6085, %v6289
        %v6420 = vadd.f32 %v6086, %v6294
        %v6421 = vadd.f32 %v6087, %v6299
        %v6422 = vadd.f32 %v6088, %v6304
        %v6423 = vadd.f32 %v6089, %v6309
        %v6424 = vadd.f32 %v6090, %v6314
        %v6425 = vadd.f32 %v6091, %v6319
        %v6426 = vadd.f32 %v6092, %v6324
        %v6427 = vadd.f32 %v6093, %v6329
        %v6428 = vadd.f32 %v6094, %v6334
        %v6429 = vadd.f32 %v6095, %v6339
        %v6430 = vadd.f32 %v6096, %v6344
        %v6431 = vadd.f32 %v6097, %v6349
        %v6432 = vadd.f32 %v6098, %v6354
        %v6433 = vadd.f32 %v6099, %v6359
        %v6434 = vadd.f32 %v6100, %v6364
        %v6435 = vadd.f32 %v6101, %v6369
        %v6436 = vadd.f32 %v6102, %v6374
        %v6437 = vadd.f32 %v6103, %v6379
        %v6438 = vadd.f32 %v6104, %v6384
        %v6439 = vadd.f32 %v6105, %v6389
        %v6440 = vadd.f32 %v6106, %v6394
        %v6441 = vadd.f32 %v6107, %v6399
        %v6442 = vadd.f32 %v6108, %v6404
        %v6443 = vld [vmem:[#allocation2 + $0x2a] sm:$0xff]
        %v6444 = vld [vmem:[#allocation2 + $0x32] sm:$0xff]
        %v6445 = vld [vmem:[#allocation2 + $0x3a] sm:$0xff]
        %v6446 = vld [vmem:[#allocation2 + $0x42] sm:$0xff]
        %v6447 = vld [vmem:[#allocation2 + $0x4a] sm:$0xff]
        %v6448 = vld [vmem:[#allocation2 + $0x52] sm:$0xff]
        %v6449 = vld [vmem:[#allocation2 + $0x5a] sm:$0xff]
        %v6450 = vld [vmem:[#allocation2 + $0x62] sm:$0xff]
        %v6451 = vld [vmem:[#allocation2 + $0x6a] sm:$0xff]
        %v6452 = vld [vmem:[#allocation2 + $0x72] sm:$0xff]
        %v6453 = vld [vmem:[#allocation2 + $0x7a] sm:$0xff]
        %v6454 = vld [vmem:[#allocation2 + $0x82] sm:$0xff]
        %v6455 = vld [vmem:[#allocation2 + $0x8a] sm:$0xff]
        %v6456 = vld [vmem:[#allocation2 + $0x92] sm:$0xff]
        %v6457 = vld [vmem:[#allocation2 + $0x9a] sm:$0xff]
        %v6458 = vld [vmem:[#allocation2 + $0xa2] sm:$0xff]
        %v6459 = vld [vmem:[#allocation2 + $0xaa] sm:$0xff]
        %v6460 = vld [vmem:[#allocation2 + $0xb2] sm:$0xff]
        %v6461 = vld [vmem:[#allocation2 + $0xba] sm:$0xff]
        %v6462 = vld [vmem:[#allocation2 + $0xc2] sm:$0xff]
        %v6463 = vld [vmem:[#allocation2 + $0xca] sm:$0xff]
        %v6464 = vld [vmem:[#allocation2 + $0xd2] sm:$0xff]
        %v6465 = vld [vmem:[#allocation2 + $0xda] sm:$0xff]
        %v6466 = vld [vmem:[#allocation2 + $0xe2] sm:$0xff]
        %v6467 = vld [vmem:[#allocation2 + $0xea] sm:$0xff]
        %v6468 = vld [vmem:[#allocation2 + $0xf2] sm:$0xff]
        %v6469 = vld [vmem:[#allocation2 + $0xfa] sm:$0xff]
        %v6470 = vld [vmem:[#allocation2 + $0x102] sm:$0xff]
        %v6471 = vld [vmem:[#allocation2 + $0x10a] sm:$0xff]
        %v6472 = vld [vmem:[#allocation2 + $0x112] sm:$0xff]
        %v6473 = vld [vmem:[#allocation2 + $0x11a] sm:$0xff]
        %v6474 = vld [vmem:[#allocation2 + $0x122] sm:$0xff]
        %v6475 = vld [vmem:[#allocation2 + $0x12a] sm:$0xff]
        %v6476 = vld [vmem:[#allocation2 + $0x132] sm:$0xff]
        %v6477 = vld [vmem:[#allocation2 + $0x13a] sm:$0xff]
        %v6478 = vld [vmem:[#allocation2 + $0x142] sm:$0xff]
        %s6479 = scalar_lea.vmem [#allocation4], 896
        %v6480 = vld [vmem:[%s6479] sm:$0xff]
        %v6481 = vld [vmem:[%s6479 + $0x8] sm:$0xff]
        %v6482 = vld [vmem:[%s6479 + $0x10] sm:$0xff]
        %v6483 = vld [vmem:[%s6479 + $0x18] sm:$0xff]
        %v6484 = vld [vmem:[%s6479 + $0x20] sm:$0xff]
        %v6485 = vld [vmem:[%s6479 + $0x28] sm:$0xff]
        %v6486 = vld [vmem:[%s6479 + $0x30] sm:$0xff]
        %v6487 = vld [vmem:[%s6479 + $0x38] sm:$0xff]
        %v6488 = vld [vmem:[%s6479 + $0x40] sm:$0xff]
        %v6489 = vld [vmem:[%s6479 + $0x48] sm:$0xff]
        %v6490 = vld [vmem:[%s6479 + $0x50] sm:$0xff]
        %v6491 = vld [vmem:[%s6479 + $0x58] sm:$0xff]
        %v6492 = vld [vmem:[%s6479 + $0x60] sm:$0xff]
        %v6493 = vld [vmem:[%s6479 + $0x68] sm:$0xff]
        %v6494 = vld [vmem:[%s6479 + $0x70] sm:$0xff]
        %v6495 = vld [vmem:[%s6479 + $0x78] sm:$0xff]
        %6496 = vmatprep.subr.mxu0 0.0
        %6497 = vmatpush1.msra.mxu0 %v6495
        %6498 = vmatprep.subr.mxu0 0.0
        %6499 = vmatpush1.msra.mxu0 %v6494
        %6500 = vmatprep.subr.mxu0 0.0
        %6501 = vmatpush1.msra.mxu0 %v6493
        %6502 = vmatprep.subr.mxu0 0.0
        %6503 = vmatpush1.msra.mxu0 %v6492
        %6504 = vmatprep.subr.mxu0 0.0
        %6505 = vmatpush1.msra.mxu0 %v6491
        %6506 = vmatprep.subr.mxu0 0.0
        %6507 = vmatpush1.msra.mxu0 %v6490
        %6508 = vmatprep.subr.mxu0 0.0
        %6509 = vmatpush1.msra.mxu0 %v6489
        %6510 = vmatprep.subr.mxu0 0.0
        %6511 = vmatpush1.msra.mxu0 %v6488
        %6512 = vmatprep.subr.mxu0 0.0
        %6513 = vmatpush1.msra.mxu0 %v6487
        %6514 = vmatprep.subr.mxu0 0.0
        %6515 = vmatpush1.msra.mxu0 %v6486
        %6516 = vmatprep.subr.mxu0 0.0
        %6517 = vmatpush1.msra.mxu0 %v6485
        %6518 = vmatprep.subr.mxu0 0.0
        %6519 = vmatpush1.msra.mxu0 %v6484
        %6520 = vmatprep.subr.mxu0 0.0
        %6521 = vmatpush1.msra.mxu0 %v6483
        %6522 = vmatprep.subr.mxu0 0.0
        %6523 = vmatpush1.msra.mxu0 %v6482
        %6524 = vmatprep.subr.mxu0 0.0
        %6525 = vmatpush1.msra.mxu0 %v6481
        %6526 = vmatprep.subr.mxu0 0.0
        %6527 = vmatpush1.msra.mxu0 %v6480
        %6528 = vmatprep.subr.mxu0 0.0
        %6529 = vmatpush2.msra.mxu0 0.0
        %6530 = vmatprep.subr.mxu0 0.0
        %6531 = vmatpush2.msra.mxu0 0.0
        %6532 = vmatprep.subr.mxu0 0.0
        %6533 = vmatpush2.msra.mxu0 0.0
        %6534 = vmatprep.subr.mxu0 0.0
        %6535 = vmatpush2.msra.mxu0 0.0
        %6536 = vmatprep.subr.mxu0 0.0
        %6537 = vmatpush2.msra.mxu0 0.0
        %6538 = vmatprep.subr.mxu0 0.0
        %6539 = vmatpush2.msra.mxu0 0.0
        %6540 = vmatprep.subr.mxu0 0.0
        %6541 = vmatpush2.msra.mxu0 0.0
        %6542 = vmatprep.subr.mxu0 0.0
        %6543 = vmatpush2.msra.mxu0 0.0
        %6544 = vmatprep.subr.mxu0 0.0
        %6545 = vmatpush2.msra.mxu0 0.0
        %6546 = vmatprep.subr.mxu0 0.0
        %6547 = vmatpush2.msra.mxu0 0.0
        %6548 = vmatprep.subr.mxu0 0.0
        %6549 = vmatpush2.msra.mxu0 0.0
        %6550 = vmatprep.subr.mxu0 0.0
        %6551 = vmatpush2.msra.mxu0 0.0
        %6552 = vmatprep.subr.mxu0 0.0
        %6553 = vmatpush2.msra.mxu0 0.0
        %6554 = vmatprep.subr.mxu0 0.0
        %6555 = vmatpush2.msra.mxu0 0.0
        %6556 = vmatprep.subr.mxu0 0.0
        %6557 = vmatpush2.msra.mxu0 0.0
        %6558 = vmatprep.subr.mxu0 0.0
        %6559 = vmatpush2.msra.mxu0 0.0
        %6560 = vmatprep.mubr.f32.mxu0 0.0
        %6561 = vmatmul.mubr.f32.gmra.mxu0 %v6443
        %v6562 = vpop.f32.mrf.mxu0
        %v6563 = vadd.f32 0.0, %v6562
        %v6564 = vpop.f32.mrf.mxu0
        %6565 = vmatprep.mubr.f32.mxu0 0.0
        %6566 = vmatmul.mubr.f32.gmra.mxu0 %v6444
        %v6567 = vpop.f32.mrf.mxu0
        %v6568 = vadd.f32 0.0, %v6567
        %v6569 = vpop.f32.mrf.mxu0
        %6570 = vmatprep.mubr.f32.mxu0 0.0
        %6571 = vmatmul.mubr.f32.gmra.mxu0 %v6445
        %v6572 = vpop.f32.mrf.mxu0
        %v6573 = vadd.f32 0.0, %v6572
        %v6574 = vpop.f32.mrf.mxu0
        %6575 = vmatprep.mubr.f32.mxu0 0.0
        %6576 = vmatmul.mubr.f32.gmra.mxu0 %v6446
        %v6577 = vpop.f32.mrf.mxu0
        %v6578 = vadd.f32 0.0, %v6577
        %v6579 = vpop.f32.mrf.mxu0
        %6580 = vmatprep.mubr.f32.mxu0 0.0
        %6581 = vmatmul.mubr.f32.gmra.mxu0 %v6447
        %v6582 = vpop.f32.mrf.mxu0
        %v6583 = vadd.f32 0.0, %v6582
        %v6584 = vpop.f32.mrf.mxu0
        %6585 = vmatprep.mubr.f32.mxu0 0.0
        %6586 = vmatmul.mubr.f32.gmra.mxu0 %v6448
        %v6587 = vpop.f32.mrf.mxu0
        %v6588 = vadd.f32 0.0, %v6587
        %v6589 = vpop.f32.mrf.mxu0
        %6590 = vmatprep.mubr.f32.mxu0 0.0
        %6591 = vmatmul.mubr.f32.gmra.mxu0 %v6449
        %v6592 = vpop.f32.mrf.mxu0
        %v6593 = vadd.f32 0.0, %v6592
        %v6594 = vpop.f32.mrf.mxu0
        %6595 = vmatprep.mubr.f32.mxu0 0.0
        %6596 = vmatmul.mubr.f32.gmra.mxu0 %v6450
        %v6597 = vpop.f32.mrf.mxu0
        %v6598 = vadd.f32 0.0, %v6597
        %v6599 = vpop.f32.mrf.mxu0
        %6600 = vmatprep.mubr.f32.mxu0 0.0
        %6601 = vmatmul.mubr.f32.gmra.mxu0 %v6451
        %v6602 = vpop.f32.mrf.mxu0
        %v6603 = vadd.f32 0.0, %v6602
        %v6604 = vpop.f32.mrf.mxu0
        %6605 = vmatprep.mubr.f32.mxu0 0.0
        %6606 = vmatmul.mubr.f32.gmra.mxu0 %v6452
        %v6607 = vpop.f32.mrf.mxu0
        %v6608 = vadd.f32 0.0, %v6607
        %v6609 = vpop.f32.mrf.mxu0
        %6610 = vmatprep.mubr.f32.mxu0 0.0
        %6611 = vmatmul.mubr.f32.gmra.mxu0 %v6453
        %v6612 = vpop.f32.mrf.mxu0
        %v6613 = vadd.f32 0.0, %v6612
        %v6614 = vpop.f32.mrf.mxu0
        %6615 = vmatprep.mubr.f32.mxu0 0.0
        %6616 = vmatmul.mubr.f32.gmra.mxu0 %v6454
        %v6617 = vpop.f32.mrf.mxu0
        %v6618 = vadd.f32 0.0, %v6617
        %v6619 = vpop.f32.mrf.mxu0
        %6620 = vmatprep.mubr.f32.mxu0 0.0
        %6621 = vmatmul.mubr.f32.gmra.mxu0 %v6455
        %v6622 = vpop.f32.mrf.mxu0
        %v6623 = vadd.f32 0.0, %v6622
        %v6624 = vpop.f32.mrf.mxu0
        %6625 = vmatprep.mubr.f32.mxu0 0.0
        %6626 = vmatmul.mubr.f32.gmra.mxu0 %v6456
        %v6627 = vpop.f32.mrf.mxu0
        %v6628 = vadd.f32 0.0, %v6627
        %v6629 = vpop.f32.mrf.mxu0
        %6630 = vmatprep.mubr.f32.mxu0 0.0
        %6631 = vmatmul.mubr.f32.gmra.mxu0 %v6457
        %v6632 = vpop.f32.mrf.mxu0
        %v6633 = vadd.f32 0.0, %v6632
        %v6634 = vpop.f32.mrf.mxu0
        %6635 = vmatprep.mubr.f32.mxu0 0.0
        %6636 = vmatmul.mubr.f32.gmra.mxu0 %v6458
        %v6637 = vpop.f32.mrf.mxu0
        %v6638 = vadd.f32 0.0, %v6637
        %v6639 = vpop.f32.mrf.mxu0
        %6640 = vmatprep.mubr.f32.mxu0 0.0
        %6641 = vmatmul.mubr.f32.gmra.mxu0 %v6459
        %v6642 = vpop.f32.mrf.mxu0
        %v6643 = vadd.f32 0.0, %v6642
        %v6644 = vpop.f32.mrf.mxu0
        %6645 = vmatprep.mubr.f32.mxu0 0.0
        %6646 = vmatmul.mubr.f32.gmra.mxu0 %v6460
        %v6647 = vpop.f32.mrf.mxu0
        %v6648 = vadd.f32 0.0, %v6647
        %v6649 = vpop.f32.mrf.mxu0
        %6650 = vmatprep.mubr.f32.mxu0 0.0
        %6651 = vmatmul.mubr.f32.gmra.mxu0 %v6461
        %v6652 = vpop.f32.mrf.mxu0
        %v6653 = vadd.f32 0.0, %v6652
        %v6654 = vpop.f32.mrf.mxu0
        %6655 = vmatprep.mubr.f32.mxu0 0.0
        %6656 = vmatmul.mubr.f32.gmra.mxu0 %v6462
        %v6657 = vpop.f32.mrf.mxu0
        %v6658 = vadd.f32 0.0, %v6657
        %v6659 = vpop.f32.mrf.mxu0
        %6660 = vmatprep.mubr.f32.mxu0 0.0
        %6661 = vmatmul.mubr.f32.gmra.mxu0 %v6463
        %v6662 = vpop.f32.mrf.mxu0
        %v6663 = vadd.f32 0.0, %v6662
        %v6664 = vpop.f32.mrf.mxu0
        %6665 = vmatprep.mubr.f32.mxu0 0.0
        %6666 = vmatmul.mubr.f32.gmra.mxu0 %v6464
        %v6667 = vpop.f32.mrf.mxu0
        %v6668 = vadd.f32 0.0, %v6667
        %v6669 = vpop.f32.mrf.mxu0
        %6670 = vmatprep.mubr.f32.mxu0 0.0
        %6671 = vmatmul.mubr.f32.gmra.mxu0 %v6465
        %v6672 = vpop.f32.mrf.mxu0
        %v6673 = vadd.f32 0.0, %v6672
        %v6674 = vpop.f32.mrf.mxu0
        %6675 = vmatprep.mubr.f32.mxu0 0.0
        %6676 = vmatmul.mubr.f32.gmra.mxu0 %v6466
        %v6677 = vpop.f32.mrf.mxu0
        %v6678 = vadd.f32 0.0, %v6677
        %v6679 = vpop.f32.mrf.mxu0
        %6680 = vmatprep.mubr.f32.mxu0 0.0
        %6681 = vmatmul.mubr.f32.gmra.mxu0 %v6467
        %v6682 = vpop.f32.mrf.mxu0
        %v6683 = vadd.f32 0.0, %v6682
        %v6684 = vpop.f32.mrf.mxu0
        %6685 = vmatprep.mubr.f32.mxu0 0.0
        %6686 = vmatmul.mubr.f32.gmra.mxu0 %v6468
        %v6687 = vpop.f32.mrf.mxu0
        %v6688 = vadd.f32 0.0, %v6687
        %v6689 = vpop.f32.mrf.mxu0
        %6690 = vmatprep.mubr.f32.mxu0 0.0
        %6691 = vmatmul.mubr.f32.gmra.mxu0 %v6469
        %v6692 = vpop.f32.mrf.mxu0
        %v6693 = vadd.f32 0.0, %v6692
        %v6694 = vpop.f32.mrf.mxu0
        %6695 = vmatprep.mubr.f32.mxu0 0.0
        %6696 = vmatmul.mubr.f32.gmra.mxu0 %v6470
        %v6697 = vpop.f32.mrf.mxu0
        %v6698 = vadd.f32 0.0, %v6697
        %v6699 = vpop.f32.mrf.mxu0
        %6700 = vmatprep.mubr.f32.mxu0 0.0
        %6701 = vmatmul.mubr.f32.gmra.mxu0 %v6471
        %v6702 = vpop.f32.mrf.mxu0
        %v6703 = vadd.f32 0.0, %v6702
        %v6704 = vpop.f32.mrf.mxu0
        %6705 = vmatprep.mubr.f32.mxu0 0.0
        %6706 = vmatmul.mubr.f32.gmra.mxu0 %v6472
        %v6707 = vpop.f32.mrf.mxu0
        %v6708 = vadd.f32 0.0, %v6707
        %v6709 = vpop.f32.mrf.mxu0
        %6710 = vmatprep.mubr.f32.mxu0 0.0
        %6711 = vmatmul.mubr.f32.gmra.mxu0 %v6473
        %v6712 = vpop.f32.mrf.mxu0
        %v6713 = vadd.f32 0.0, %v6712
        %v6714 = vpop.f32.mrf.mxu0
        %6715 = vmatprep.mubr.f32.mxu0 0.0
        %6716 = vmatmul.mubr.f32.gmra.mxu0 %v6474
        %v6717 = vpop.f32.mrf.mxu0
        %v6718 = vadd.f32 0.0, %v6717
        %v6719 = vpop.f32.mrf.mxu0
        %6720 = vmatprep.mubr.f32.mxu0 0.0
        %6721 = vmatmul.mubr.f32.gmra.mxu0 %v6475
        %v6722 = vpop.f32.mrf.mxu0
        %v6723 = vadd.f32 0.0, %v6722
        %v6724 = vpop.f32.mrf.mxu0
        %6725 = vmatprep.mubr.f32.mxu0 0.0
        %6726 = vmatmul.mubr.f32.gmra.mxu0 %v6476
        %v6727 = vpop.f32.mrf.mxu0
        %v6728 = vadd.f32 0.0, %v6727
        %v6729 = vpop.f32.mrf.mxu0
        %6730 = vmatprep.mubr.f32.mxu0 0.0
        %6731 = vmatmul.mubr.f32.gmra.mxu0 %v6477
        %v6732 = vpop.f32.mrf.mxu0
        %v6733 = vadd.f32 0.0, %v6732
        %v6734 = vpop.f32.mrf.mxu0
        %6735 = vmatprep.mubr.f32.mxu0 0.0
        %6736 = vmatmul.mubr.f32.gmra.mxu0 %v6478
        %v6737 = vpop.f32.mrf.mxu0
        %v6738 = vadd.f32 0.0, %v6737
        %v6739 = vpop.f32.mrf.mxu0
        %6740 = vdwg.mxu0
        %v6741 = vadd.f32 %v6407, %v6563
        %v6742 = vadd.f32 %v6408, %v6568
        %v6743 = vadd.f32 %v6409, %v6573
        %v6744 = vadd.f32 %v6410, %v6578
        %v6745 = vadd.f32 %v6411, %v6583
        %v6746 = vadd.f32 %v6412, %v6588
        %v6747 = vadd.f32 %v6413, %v6593
        %v6748 = vadd.f32 %v6414, %v6598
        %v6749 = vadd.f32 %v6415, %v6603
        %v6750 = vadd.f32 %v6416, %v6608
        %v6751 = vadd.f32 %v6417, %v6613
        %v6752 = vadd.f32 %v6418, %v6618
        %v6753 = vadd.f32 %v6419, %v6623
        %v6754 = vadd.f32 %v6420, %v6628
        %v6755 = vadd.f32 %v6421, %v6633
        %v6756 = vadd.f32 %v6422, %v6638
        %v6757 = vadd.f32 %v6423, %v6643
        %v6758 = vadd.f32 %v6424, %v6648
        %v6759 = vadd.f32 %v6425, %v6653
        %v6760 = vadd.f32 %v6426, %v6658
        %v6761 = vadd.f32 %v6427, %v6663
        %v6762 = vadd.f32 %v6428, %v6668
        %v6763 = vadd.f32 %v6429, %v6673
        %v6764 = vadd.f32 %v6430, %v6678
        %v6765 = vadd.f32 %v6431, %v6683
        %v6766 = vadd.f32 %v6432, %v6688
        %v6767 = vadd.f32 %v6433, %v6693
        %v6768 = vadd.f32 %v6434, %v6698
        %v6769 = vadd.f32 %v6435, %v6703
        %v6770 = vadd.f32 %v6436, %v6708
        %v6771 = vadd.f32 %v6437, %v6713
        %v6772 = vadd.f32 %v6438, %v6718
        %v6773 = vadd.f32 %v6439, %v6723
        %v6774 = vadd.f32 %v6440, %v6728
        %v6775 = vadd.f32 %v6441, %v6733
        %v6776 = vadd.f32 %v6442, %v6738
        %v6777 = vld [vmem:[#allocation2 + $0x2b] sm:$0xff]
        %v6778 = vld [vmem:[#allocation2 + $0x33] sm:$0xff]
        %v6779 = vld [vmem:[#allocation2 + $0x3b] sm:$0xff]
        %v6780 = vld [vmem:[#allocation2 + $0x43] sm:$0xff]
        %v6781 = vld [vmem:[#allocation2 + $0x4b] sm:$0xff]
        %v6782 = vld [vmem:[#allocation2 + $0x53] sm:$0xff]
        %v6783 = vld [vmem:[#allocation2 + $0x5b] sm:$0xff]
        %v6784 = vld [vmem:[#allocation2 + $0x63] sm:$0xff]
        %v6785 = vld [vmem:[#allocation2 + $0x6b] sm:$0xff]
        %v6786 = vld [vmem:[#allocation2 + $0x73] sm:$0xff]
        %v6787 = vld [vmem:[#allocation2 + $0x7b] sm:$0xff]
        %v6788 = vld [vmem:[#allocation2 + $0x83] sm:$0xff]
        %v6789 = vld [vmem:[#allocation2 + $0x8b] sm:$0xff]
        %v6790 = vld [vmem:[#allocation2 + $0x93] sm:$0xff]
        %v6791 = vld [vmem:[#allocation2 + $0x9b] sm:$0xff]
        %v6792 = vld [vmem:[#allocation2 + $0xa3] sm:$0xff]
        %v6793 = vld [vmem:[#allocation2 + $0xab] sm:$0xff]
        %v6794 = vld [vmem:[#allocation2 + $0xb3] sm:$0xff]
        %v6795 = vld [vmem:[#allocation2 + $0xbb] sm:$0xff]
        %v6796 = vld [vmem:[#allocation2 + $0xc3] sm:$0xff]
        %v6797 = vld [vmem:[#allocation2 + $0xcb] sm:$0xff]
        %v6798 = vld [vmem:[#allocation2 + $0xd3] sm:$0xff]
        %v6799 = vld [vmem:[#allocation2 + $0xdb] sm:$0xff]
        %v6800 = vld [vmem:[#allocation2 + $0xe3] sm:$0xff]
        %v6801 = vld [vmem:[#allocation2 + $0xeb] sm:$0xff]
        %v6802 = vld [vmem:[#allocation2 + $0xf3] sm:$0xff]
        %v6803 = vld [vmem:[#allocation2 + $0xfb] sm:$0xff]
        %v6804 = vld [vmem:[#allocation2 + $0x103] sm:$0xff]
        %v6805 = vld [vmem:[#allocation2 + $0x10b] sm:$0xff]
        %v6806 = vld [vmem:[#allocation2 + $0x113] sm:$0xff]
        %v6807 = vld [vmem:[#allocation2 + $0x11b] sm:$0xff]
        %v6808 = vld [vmem:[#allocation2 + $0x123] sm:$0xff]
        %v6809 = vld [vmem:[#allocation2 + $0x12b] sm:$0xff]
        %v6810 = vld [vmem:[#allocation2 + $0x133] sm:$0xff]
        %v6811 = vld [vmem:[#allocation2 + $0x13b] sm:$0xff]
        %v6812 = vld [vmem:[#allocation2 + $0x143] sm:$0xff]
        %s6813 = scalar_lea.vmem [#allocation4], 1024
        %v6814 = vld [vmem:[%s6813] sm:$0xff]
        %v6815 = vld [vmem:[%s6813 + $0x8] sm:$0xff]
        %v6816 = vld [vmem:[%s6813 + $0x10] sm:$0xff]
        %v6817 = vld [vmem:[%s6813 + $0x18] sm:$0xff]
        %v6818 = vld [vmem:[%s6813 + $0x20] sm:$0xff]
        %v6819 = vld [vmem:[%s6813 + $0x28] sm:$0xff]
        %v6820 = vld [vmem:[%s6813 + $0x30] sm:$0xff]
        %v6821 = vld [vmem:[%s6813 + $0x38] sm:$0xff]
        %v6822 = vld [vmem:[%s6813 + $0x40] sm:$0xff]
        %v6823 = vld [vmem:[%s6813 + $0x48] sm:$0xff]
        %v6824 = vld [vmem:[%s6813 + $0x50] sm:$0xff]
        %v6825 = vld [vmem:[%s6813 + $0x58] sm:$0xff]
        %v6826 = vld [vmem:[%s6813 + $0x60] sm:$0xff]
        %v6827 = vld [vmem:[%s6813 + $0x68] sm:$0xff]
        %v6828 = vld [vmem:[%s6813 + $0x70] sm:$0xff]
        %v6829 = vld [vmem:[%s6813 + $0x78] sm:$0xff]
        %6830 = vmatprep.subr.mxu0 0.0
        %6831 = vmatpush1.msra.mxu0 %v6829
        %6832 = vmatprep.subr.mxu0 0.0
        %6833 = vmatpush1.msra.mxu0 %v6828
        %6834 = vmatprep.subr.mxu0 0.0
        %6835 = vmatpush1.msra.mxu0 %v6827
        %6836 = vmatprep.subr.mxu0 0.0
        %6837 = vmatpush1.msra.mxu0 %v6826
        %6838 = vmatprep.subr.mxu0 0.0
        %6839 = vmatpush1.msra.mxu0 %v6825
        %6840 = vmatprep.subr.mxu0 0.0
        %6841 = vmatpush1.msra.mxu0 %v6824
        %6842 = vmatprep.subr.mxu0 0.0
        %6843 = vmatpush1.msra.mxu0 %v6823
        %6844 = vmatprep.subr.mxu0 0.0
        %6845 = vmatpush1.msra.mxu0 %v6822
        %6846 = vmatprep.subr.mxu0 0.0
        %6847 = vmatpush1.msra.mxu0 %v6821
        %6848 = vmatprep.subr.mxu0 0.0
        %6849 = vmatpush1.msra.mxu0 %v6820
        %6850 = vmatprep.subr.mxu0 0.0
        %6851 = vmatpush1.msra.mxu0 %v6819
        %6852 = vmatprep.subr.mxu0 0.0
        %6853 = vmatpush1.msra.mxu0 %v6818
        %6854 = vmatprep.subr.mxu0 0.0
        %6855 = vmatpush1.msra.mxu0 %v6817
        %6856 = vmatprep.subr.mxu0 0.0
        %6857 = vmatpush1.msra.mxu0 %v6816
        %6858 = vmatprep.subr.mxu0 0.0
        %6859 = vmatpush1.msra.mxu0 %v6815
        %6860 = vmatprep.subr.mxu0 0.0
        %6861 = vmatpush1.msra.mxu0 %v6814
        %6862 = vmatprep.subr.mxu0 0.0
        %6863 = vmatpush2.msra.mxu0 0.0
        %6864 = vmatprep.subr.mxu0 0.0
        %6865 = vmatpush2.msra.mxu0 0.0
        %6866 = vmatprep.subr.mxu0 0.0
        %6867 = vmatpush2.msra.mxu0 0.0
        %6868 = vmatprep.subr.mxu0 0.0
        %6869 = vmatpush2.msra.mxu0 0.0
        %6870 = vmatprep.subr.mxu0 0.0
        %6871 = vmatpush2.msra.mxu0 0.0
        %6872 = vmatprep.subr.mxu0 0.0
        %6873 = vmatpush2.msra.mxu0 0.0
        %6874 = vmatprep.subr.mxu0 0.0
        %6875 = vmatpush2.msra.mxu0 0.0
        %6876 = vmatprep.subr.mxu0 0.0
        %6877 = vmatpush2.msra.mxu0 0.0
        %6878 = vmatprep.subr.mxu0 0.0
        %6879 = vmatpush2.msra.mxu0 0.0
        %6880 = vmatprep.subr.mxu0 0.0
        %6881 = vmatpush2.msra.mxu0 0.0
        %6882 = vmatprep.subr.mxu0 0.0
        %6883 = vmatpush2.msra.mxu0 0.0
        %6884 = vmatprep.subr.mxu0 0.0
        %6885 = vmatpush2.msra.mxu0 0.0
        %6886 = vmatprep.subr.mxu0 0.0
        %6887 = vmatpush2.msra.mxu0 0.0
        %6888 = vmatprep.subr.mxu0 0.0
        %6889 = vmatpush2.msra.mxu0 0.0
        %6890 = vmatprep.subr.mxu0 0.0
        %6891 = vmatpush2.msra.mxu0 0.0
        %6892 = vmatprep.subr.mxu0 0.0
        %6893 = vmatpush2.msra.mxu0 0.0
        %6894 = vmatprep.mubr.f32.mxu0 0.0
        %6895 = vmatmul.mubr.f32.gmra.mxu0 %v6777
        %v6896 = vpop.f32.mrf.mxu0
        %v6897 = vadd.f32 0.0, %v6896
        %v6898 = vpop.f32.mrf.mxu0
        %6899 = vmatprep.mubr.f32.mxu0 0.0
        %6900 = vmatmul.mubr.f32.gmra.mxu0 %v6778
        %v6901 = vpop.f32.mrf.mxu0
        %v6902 = vadd.f32 0.0, %v6901
        %v6903 = vpop.f32.mrf.mxu0
        %6904 = vmatprep.mubr.f32.mxu0 0.0
        %6905 = vmatmul.mubr.f32.gmra.mxu0 %v6779
        %v6906 = vpop.f32.mrf.mxu0
        %v6907 = vadd.f32 0.0, %v6906
        %v6908 = vpop.f32.mrf.mxu0
        %6909 = vmatprep.mubr.f32.mxu0 0.0
        %6910 = vmatmul.mubr.f32.gmra.mxu0 %v6780
        %v6911 = vpop.f32.mrf.mxu0
        %v6912 = vadd.f32 0.0, %v6911
        %v6913 = vpop.f32.mrf.mxu0
        %6914 = vmatprep.mubr.f32.mxu0 0.0
        %6915 = vmatmul.mubr.f32.gmra.mxu0 %v6781
        %v6916 = vpop.f32.mrf.mxu0
        %v6917 = vadd.f32 0.0, %v6916
        %v6918 = vpop.f32.mrf.mxu0
        %6919 = vmatprep.mubr.f32.mxu0 0.0
        %6920 = vmatmul.mubr.f32.gmra.mxu0 %v6782
        %v6921 = vpop.f32.mrf.mxu0
        %v6922 = vadd.f32 0.0, %v6921
        %v6923 = vpop.f32.mrf.mxu0
        %6924 = vmatprep.mubr.f32.mxu0 0.0
        %6925 = vmatmul.mubr.f32.gmra.mxu0 %v6783
        %v6926 = vpop.f32.mrf.mxu0
        %v6927 = vadd.f32 0.0, %v6926
        %v6928 = vpop.f32.mrf.mxu0
        %6929 = vmatprep.mubr.f32.mxu0 0.0
        %6930 = vmatmul.mubr.f32.gmra.mxu0 %v6784
        %v6931 = vpop.f32.mrf.mxu0
        %v6932 = vadd.f32 0.0, %v6931
        %v6933 = vpop.f32.mrf.mxu0
        %6934 = vmatprep.mubr.f32.mxu0 0.0
        %6935 = vmatmul.mubr.f32.gmra.mxu0 %v6785
        %v6936 = vpop.f32.mrf.mxu0
        %v6937 = vadd.f32 0.0, %v6936
        %v6938 = vpop.f32.mrf.mxu0
        %6939 = vmatprep.mubr.f32.mxu0 0.0
        %6940 = vmatmul.mubr.f32.gmra.mxu0 %v6786
        %v6941 = vpop.f32.mrf.mxu0
        %v6942 = vadd.f32 0.0, %v6941
        %v6943 = vpop.f32.mrf.mxu0
        %6944 = vmatprep.mubr.f32.mxu0 0.0
        %6945 = vmatmul.mubr.f32.gmra.mxu0 %v6787
        %v6946 = vpop.f32.mrf.mxu0
        %v6947 = vadd.f32 0.0, %v6946
        %v6948 = vpop.f32.mrf.mxu0
        %6949 = vmatprep.mubr.f32.mxu0 0.0
        %6950 = vmatmul.mubr.f32.gmra.mxu0 %v6788
        %v6951 = vpop.f32.mrf.mxu0
        %v6952 = vadd.f32 0.0, %v6951
        %v6953 = vpop.f32.mrf.mxu0
        %6954 = vmatprep.mubr.f32.mxu0 0.0
        %6955 = vmatmul.mubr.f32.gmra.mxu0 %v6789
        %v6956 = vpop.f32.mrf.mxu0
        %v6957 = vadd.f32 0.0, %v6956
        %v6958 = vpop.f32.mrf.mxu0
        %6959 = vmatprep.mubr.f32.mxu0 0.0
        %6960 = vmatmul.mubr.f32.gmra.mxu0 %v6790
        %v6961 = vpop.f32.mrf.mxu0
        %v6962 = vadd.f32 0.0, %v6961
        %v6963 = vpop.f32.mrf.mxu0
        %6964 = vmatprep.mubr.f32.mxu0 0.0
        %6965 = vmatmul.mubr.f32.gmra.mxu0 %v6791
        %v6966 = vpop.f32.mrf.mxu0
        %v6967 = vadd.f32 0.0, %v6966
        %v6968 = vpop.f32.mrf.mxu0
        %6969 = vmatprep.mubr.f32.mxu0 0.0
        %6970 = vmatmul.mubr.f32.gmra.mxu0 %v6792
        %v6971 = vpop.f32.mrf.mxu0
        %v6972 = vadd.f32 0.0, %v6971
        %v6973 = vpop.f32.mrf.mxu0
        %6974 = vmatprep.mubr.f32.mxu0 0.0
        %6975 = vmatmul.mubr.f32.gmra.mxu0 %v6793
        %v6976 = vpop.f32.mrf.mxu0
        %v6977 = vadd.f32 0.0, %v6976
        %v6978 = vpop.f32.mrf.mxu0
        %6979 = vmatprep.mubr.f32.mxu0 0.0
        %6980 = vmatmul.mubr.f32.gmra.mxu0 %v6794
        %v6981 = vpop.f32.mrf.mxu0
        %v6982 = vadd.f32 0.0, %v6981
        %v6983 = vpop.f32.mrf.mxu0
        %6984 = vmatprep.mubr.f32.mxu0 0.0
        %6985 = vmatmul.mubr.f32.gmra.mxu0 %v6795
        %v6986 = vpop.f32.mrf.mxu0
        %v6987 = vadd.f32 0.0, %v6986
        %v6988 = vpop.f32.mrf.mxu0
        %6989 = vmatprep.mubr.f32.mxu0 0.0
        %6990 = vmatmul.mubr.f32.gmra.mxu0 %v6796
        %v6991 = vpop.f32.mrf.mxu0
        %v6992 = vadd.f32 0.0, %v6991
        %v6993 = vpop.f32.mrf.mxu0
        %6994 = vmatprep.mubr.f32.mxu0 0.0
        %6995 = vmatmul.mubr.f32.gmra.mxu0 %v6797
        %v6996 = vpop.f32.mrf.mxu0
        %v6997 = vadd.f32 0.0, %v6996
        %v6998 = vpop.f32.mrf.mxu0
        %6999 = vmatprep.mubr.f32.mxu0 0.0
        %7000 = vmatmul.mubr.f32.gmra.mxu0 %v6798
        %v7001 = vpop.f32.mrf.mxu0
        %v7002 = vadd.f32 0.0, %v7001
        %v7003 = vpop.f32.mrf.mxu0
        %7004 = vmatprep.mubr.f32.mxu0 0.0
        %7005 = vmatmul.mubr.f32.gmra.mxu0 %v6799
        %v7006 = vpop.f32.mrf.mxu0
        %v7007 = vadd.f32 0.0, %v7006
        %v7008 = vpop.f32.mrf.mxu0
        %7009 = vmatprep.mubr.f32.mxu0 0.0
        %7010 = vmatmul.mubr.f32.gmra.mxu0 %v6800
        %v7011 = vpop.f32.mrf.mxu0
        %v7012 = vadd.f32 0.0, %v7011
        %v7013 = vpop.f32.mrf.mxu0
        %7014 = vmatprep.mubr.f32.mxu0 0.0
        %7015 = vmatmul.mubr.f32.gmra.mxu0 %v6801
        %v7016 = vpop.f32.mrf.mxu0
        %v7017 = vadd.f32 0.0, %v7016
        %v7018 = vpop.f32.mrf.mxu0
        %7019 = vmatprep.mubr.f32.mxu0 0.0
        %7020 = vmatmul.mubr.f32.gmra.mxu0 %v6802
        %v7021 = vpop.f32.mrf.mxu0
        %v7022 = vadd.f32 0.0, %v7021
        %v7023 = vpop.f32.mrf.mxu0
        %7024 = vmatprep.mubr.f32.mxu0 0.0
        %7025 = vmatmul.mubr.f32.gmra.mxu0 %v6803
        %v7026 = vpop.f32.mrf.mxu0
        %v7027 = vadd.f32 0.0, %v7026
        %v7028 = vpop.f32.mrf.mxu0
        %7029 = vmatprep.mubr.f32.mxu0 0.0
        %7030 = vmatmul.mubr.f32.gmra.mxu0 %v6804
        %v7031 = vpop.f32.mrf.mxu0
        %v7032 = vadd.f32 0.0, %v7031
        %v7033 = vpop.f32.mrf.mxu0
        %7034 = vmatprep.mubr.f32.mxu0 0.0
        %7035 = vmatmul.mubr.f32.gmra.mxu0 %v6805
        %v7036 = vpop.f32.mrf.mxu0
        %v7037 = vadd.f32 0.0, %v7036
        %v7038 = vpop.f32.mrf.mxu0
        %7039 = vmatprep.mubr.f32.mxu0 0.0
        %7040 = vmatmul.mubr.f32.gmra.mxu0 %v6806
        %v7041 = vpop.f32.mrf.mxu0
        %v7042 = vadd.f32 0.0, %v7041
        %v7043 = vpop.f32.mrf.mxu0
        %7044 = vmatprep.mubr.f32.mxu0 0.0
        %7045 = vmatmul.mubr.f32.gmra.mxu0 %v6807
        %v7046 = vpop.f32.mrf.mxu0
        %v7047 = vadd.f32 0.0, %v7046
        %v7048 = vpop.f32.mrf.mxu0
        %7049 = vmatprep.mubr.f32.mxu0 0.0
        %7050 = vmatmul.mubr.f32.gmra.mxu0 %v6808
        %v7051 = vpop.f32.mrf.mxu0
        %v7052 = vadd.f32 0.0, %v7051
        %v7053 = vpop.f32.mrf.mxu0
        %7054 = vmatprep.mubr.f32.mxu0 0.0
        %7055 = vmatmul.mubr.f32.gmra.mxu0 %v6809
        %v7056 = vpop.f32.mrf.mxu0
        %v7057 = vadd.f32 0.0, %v7056
        %v7058 = vpop.f32.mrf.mxu0
        %7059 = vmatprep.mubr.f32.mxu0 0.0
        %7060 = vmatmul.mubr.f32.gmra.mxu0 %v6810
        %v7061 = vpop.f32.mrf.mxu0
        %v7062 = vadd.f32 0.0, %v7061
        %v7063 = vpop.f32.mrf.mxu0
        %7064 = vmatprep.mubr.f32.mxu0 0.0
        %7065 = vmatmul.mubr.f32.gmra.mxu0 %v6811
        %v7066 = vpop.f32.mrf.mxu0
        %v7067 = vadd.f32 0.0, %v7066
        %v7068 = vpop.f32.mrf.mxu0
        %7069 = vmatprep.mubr.f32.mxu0 0.0
        %7070 = vmatmul.mubr.f32.gmra.mxu0 %v6812
        %v7071 = vpop.f32.mrf.mxu0
        %v7072 = vadd.f32 0.0, %v7071
        %v7073 = vpop.f32.mrf.mxu0
        %7074 = vdwg.mxu0
        %v7075 = vadd.f32 %v6741, %v6897
        %v7076 = vadd.f32 %v6742, %v6902
        %v7077 = vadd.f32 %v6743, %v6907
        %v7078 = vadd.f32 %v6744, %v6912
        %v7079 = vadd.f32 %v6745, %v6917
        %v7080 = vadd.f32 %v6746, %v6922
        %v7081 = vadd.f32 %v6747, %v6927
        %v7082 = vadd.f32 %v6748, %v6932
        %v7083 = vadd.f32 %v6749, %v6937
        %v7084 = vadd.f32 %v6750, %v6942
        %v7085 = vadd.f32 %v6751, %v6947
        %v7086 = vadd.f32 %v6752, %v6952
        %v7087 = vadd.f32 %v6753, %v6957
        %v7088 = vadd.f32 %v6754, %v6962
        %v7089 = vadd.f32 %v6755, %v6967
        %v7090 = vadd.f32 %v6756, %v6972
        %v7091 = vadd.f32 %v6757, %v6977
        %v7092 = vadd.f32 %v6758, %v6982
        %v7093 = vadd.f32 %v6759, %v6987
        %v7094 = vadd.f32 %v6760, %v6992
        %v7095 = vadd.f32 %v6761, %v6997
        %v7096 = vadd.f32 %v6762, %v7002
        %v7097 = vadd.f32 %v6763, %v7007
        %v7098 = vadd.f32 %v6764, %v7012
        %v7099 = vadd.f32 %v6765, %v7017
        %v7100 = vadd.f32 %v6766, %v7022
        %v7101 = vadd.f32 %v6767, %v7027
        %v7102 = vadd.f32 %v6768, %v7032
        %v7103 = vadd.f32 %v6769, %v7037
        %v7104 = vadd.f32 %v6770, %v7042
        %v7105 = vadd.f32 %v6771, %v7047
        %v7106 = vadd.f32 %v6772, %v7052
        %v7107 = vadd.f32 %v6773, %v7057
        %v7108 = vadd.f32 %v6774, %v7062
        %v7109 = vadd.f32 %v6775, %v7067
        %v7110 = vadd.f32 %v6776, %v7072
        %v7111 = vld [vmem:[%s5] sm:$0x1]
        %v7113 = vlaneseq
        %v7114 = vshrl.u32 %v7113, 7
        %v7115 = vsub.s32 0, %v7114
        %v7116 = vrot.slane %v7111, %v7115
        %v7118 = vmul.f32 %v7075, %v7116
        %v7119 = vmul.f32 %v7076, %v7116
        %v7120 = vmul.f32 %v7077, %v7116
        %v7121 = vmul.f32 %v7078, %v7116
        %v7122 = vmul.f32 %v7079, %v7116
        %v7123 = vmul.f32 %v7080, %v7116
        %v7124 = vmul.f32 %v7081, %v7116
        %v7125 = vmul.f32 %v7082, %v7116
        %v7126 = vmul.f32 %v7083, %v7116
        %v7127 = vmul.f32 %v7084, %v7116
        %v7128 = vmul.f32 %v7085, %v7116
        %v7129 = vmul.f32 %v7086, %v7116
        %v7130 = vmul.f32 %v7087, %v7116
        %v7131 = vmul.f32 %v7088, %v7116
        %v7132 = vmul.f32 %v7089, %v7116
        %v7133 = vmul.f32 %v7090, %v7116
        %v7134 = vmul.f32 %v7091, %v7116
        %v7135 = vmul.f32 %v7092, %v7116
        %v7136 = vmul.f32 %v7093, %v7116
        %v7137 = vmul.f32 %v7094, %v7116
        %v7138 = vmul.f32 %v7095, %v7116
        %v7139 = vmul.f32 %v7096, %v7116
        %v7140 = vmul.f32 %v7097, %v7116
        %v7141 = vmul.f32 %v7098, %v7116
        %v7142 = vmul.f32 %v7099, %v7116
        %v7143 = vmul.f32 %v7100, %v7116
        %v7144 = vmul.f32 %v7101, %v7116
        %v7145 = vmul.f32 %v7102, %v7116
        %v7146 = vmul.f32 %v7103, %v7116
        %v7147 = vmul.f32 %v7104, %v7116
        %v7148 = vmul.f32 %v7105, %v7116
        %v7149 = vmul.f32 %v7106, %v7116
        %v7150 = vmul.f32 %v7107, %v7116
        %v7151 = vmul.f32 %v7108, %v7116
        %v7152 = vmul.f32 %v7109, %v7116
        %v7153 = vmul.f32 %v7110, %v7116
        %v7154 = vld [vmem:[%s6] sm:$0x1]
        %v7156 = vlaneseq
        %v7157 = vshrl.u32 %v7156, 7
        %v7158 = vsub.s32 0, %v7157
        %v7159 = vrot.slane %v7154, %v7158
        %v7161 = vadd.f32 %v7118, %v7159
        %v7162 = vadd.f32 %v7119, %v7159
        %v7163 = vadd.f32 %v7120, %v7159
        %v7164 = vadd.f32 %v7121, %v7159
        %v7165 = vadd.f32 %v7122, %v7159
        %v7166 = vadd.f32 %v7123, %v7159
        %v7167 = vadd.f32 %v7124, %v7159
        %v7168 = vadd.f32 %v7125, %v7159
        %v7169 = vadd.f32 %v7126, %v7159
        %v7170 = vadd.f32 %v7127, %v7159
        %v7171 = vadd.f32 %v7128, %v7159
        %v7172 = vadd.f32 %v7129, %v7159
        %v7173 = vadd.f32 %v7130, %v7159
        %v7174 = vadd.f32 %v7131, %v7159
        %v7175 = vadd.f32 %v7132, %v7159
        %v7176 = vadd.f32 %v7133, %v7159
        %v7177 = vadd.f32 %v7134, %v7159
        %v7178 = vadd.f32 %v7135, %v7159
        %v7179 = vadd.f32 %v7136, %v7159
        %v7180 = vadd.f32 %v7137, %v7159
        %v7181 = vadd.f32 %v7138, %v7159
        %v7182 = vadd.f32 %v7139, %v7159
        %v7183 = vadd.f32 %v7140, %v7159
        %v7184 = vadd.f32 %v7141, %v7159
        %v7185 = vadd.f32 %v7142, %v7159
        %v7186 = vadd.f32 %v7143, %v7159
        %v7187 = vadd.f32 %v7144, %v7159
        %v7188 = vadd.f32 %v7145, %v7159
        %v7189 = vadd.f32 %v7146, %v7159
        %v7190 = vadd.f32 %v7147, %v7159
        %v7191 = vadd.f32 %v7148, %v7159
        %v7192 = vadd.f32 %v7149, %v7159
        %v7193 = vadd.f32 %v7150, %v7159
        %v7194 = vadd.f32 %v7151, %v7159
        %v7195 = vadd.f32 %v7152, %v7159
        %v7196 = vadd.f32 %v7153, %v7159
        %v7197 = vld [vmem:[%s319 + $0x13] sm:$0xff]
        %v7198 = vld [vmem:[%s319 + $0x1b] sm:$0xff]
        %v7199 = vld [vmem:[%s319 + $0x23] sm:$0xff]
        %v7200 = vld [vmem:[%s319 + $0x2b] sm:$0xff]
        %v7201 = vld [vmem:[%s319 + $0x33] sm:$0xff]
        %v7202 = vld [vmem:[%s319 + $0x3b] sm:$0xff]
        %v7203 = vld [vmem:[%s319 + $0x43] sm:$0xff]
        %v7204 = vld [vmem:[%s319 + $0x4b] sm:$0xff]
        %v7205 = vld [vmem:[%s319 + $0x53] sm:$0xff]
        %v7206 = vld [vmem:[%s319 + $0x5b] sm:$0xff]
        %v7207 = vld [vmem:[%s319 + $0x63] sm:$0xff]
        %v7208 = vld [vmem:[%s319 + $0x6b] sm:$0xff]
        %v7209 = vld [vmem:[%s319 + $0x73] sm:$0xff]
        %v7210 = vld [vmem:[%s319 + $0x7b] sm:$0xff]
        %v7211 = vld [vmem:[%s319 + $0x83] sm:$0xff]
        %v7212 = vld [vmem:[%s319 + $0x8b] sm:$0xff]
        %v7213 = vld [vmem:[%s319 + $0x93] sm:$0xff]
        %v7214 = vld [vmem:[%s319 + $0x9b] sm:$0xff]
        %v7215 = vld [vmem:[%s319 + $0xa3] sm:$0xff]
        %v7216 = vld [vmem:[%s319 + $0xab] sm:$0xff]
        %v7217 = vld [vmem:[%s319 + $0xb3] sm:$0xff]
        %v7218 = vld [vmem:[%s319 + $0xbb] sm:$0xff]
        %v7219 = vld [vmem:[%s319 + $0xc3] sm:$0xff]
        %v7220 = vld [vmem:[%s319 + $0xcb] sm:$0xff]
        %v7221 = vld [vmem:[%s319 + $0xd3] sm:$0xff]
        %v7222 = vld [vmem:[%s319 + $0xdb] sm:$0xff]
        %v7223 = vld [vmem:[%s319 + $0xe3] sm:$0xff]
        %v7224 = vld [vmem:[%s319 + $0xeb] sm:$0xff]
        %v7225 = vld [vmem:[%s319 + $0xf3] sm:$0xff]
        %v7226 = vld [vmem:[%s319 + $0xfb] sm:$0xff]
        %v7227 = vld [vmem:[%s319 + $0x103] sm:$0xff]
        %v7228 = vld [vmem:[%s319 + $0x10b] sm:$0xff]
        %v7229 = vld [vmem:[%s319 + $0x113] sm:$0xff]
        %v7230 = vld [vmem:[%s319 + $0x11b] sm:$0xff]
        %v7231 = vld [vmem:[%s319 + $0x123] sm:$0xff]
        %v7232 = vld [vmem:[%s319 + $0x12b] sm:$0xff]
        %v7233 = vadd.f32 %v7197, %v7161
        %v7234 = vadd.f32 %v7198, %v7162
        %v7235 = vadd.f32 %v7199, %v7163
        %v7236 = vadd.f32 %v7200, %v7164
        %v7237 = vadd.f32 %v7201, %v7165
        %v7238 = vadd.f32 %v7202, %v7166
        %v7239 = vadd.f32 %v7203, %v7167
        %v7240 = vadd.f32 %v7204, %v7168
        %v7241 = vadd.f32 %v7205, %v7169
        %v7242 = vadd.f32 %v7206, %v7170
        %v7243 = vadd.f32 %v7207, %v7171
        %v7244 = vadd.f32 %v7208, %v7172
        %v7245 = vadd.f32 %v7209, %v7173
        %v7246 = vadd.f32 %v7210, %v7174
        %v7247 = vadd.f32 %v7211, %v7175
        %v7248 = vadd.f32 %v7212, %v7176
        %v7249 = vadd.f32 %v7213, %v7177
        %v7250 = vadd.f32 %v7214, %v7178
        %v7251 = vadd.f32 %v7215, %v7179
        %v7252 = vadd.f32 %v7216, %v7180
        %v7253 = vadd.f32 %v7217, %v7181
        %v7254 = vadd.f32 %v7218, %v7182
        %v7255 = vadd.f32 %v7219, %v7183
        %v7256 = vadd.f32 %v7220, %v7184
        %v7257 = vadd.f32 %v7221, %v7185
        %v7258 = vadd.f32 %v7222, %v7186
        %v7259 = vadd.f32 %v7223, %v7187
        %v7260 = vadd.f32 %v7224, %v7188
        %v7261 = vadd.f32 %v7225, %v7189
        %v7262 = vadd.f32 %v7226, %v7190
        %v7263 = vadd.f32 %v7227, %v7191
        %v7264 = vadd.f32 %v7228, %v7192
        %v7265 = vadd.f32 %v7229, %v7193
        %v7266 = vadd.f32 %v7230, %v7194
        %v7267 = vadd.f32 %v7231, %v7195
        %v7268 = vadd.f32 %v7232, %v7196
        %7269 = vst [vmem:[%s314] sm:$0xff] %v7233
        %7270 = vst [vmem:[%s314 + $0x8] sm:$0xff] %v7234
        %7271 = vst [vmem:[%s314 + $0x10] sm:$0xff] %v7235
        %7272 = vst [vmem:[%s314 + $0x18] sm:$0xff] %v7236
        %7273 = vst [vmem:[%s314 + $0x20] sm:$0xff] %v7237
        %7274 = vst [vmem:[%s314 + $0x28] sm:$0xff] %v7238
        %7275 = vst [vmem:[%s314 + $0x30] sm:$0xff] %v7239
        %7276 = vst [vmem:[%s314 + $0x38] sm:$0xff] %v7240
        %7277 = vst [vmem:[%s314 + $0x40] sm:$0xff] %v7241
        %7278 = vst [vmem:[%s314 + $0x48] sm:$0xff] %v7242
        %7279 = vst [vmem:[%s314 + $0x50] sm:$0xff] %v7243
        %7280 = vst [vmem:[%s314 + $0x58] sm:$0xff] %v7244
        %7281 = vst [vmem:[%s314 + $0x60] sm:$0xff] %v7245
        %7282 = vst [vmem:[%s314 + $0x68] sm:$0xff] %v7246
        %7283 = vst [vmem:[%s314 + $0x70] sm:$0xff] %v7247
        %7284 = vst [vmem:[%s314 + $0x78] sm:$0xff] %v7248
        %7285 = vst [vmem:[%s314 + $0x80] sm:$0xff] %v7249
        %7286 = vst [vmem:[%s314 + $0x88] sm:$0xff] %v7250
        %7287 = vst [vmem:[%s314 + $0x90] sm:$0xff] %v7251
        %7288 = vst [vmem:[%s314 + $0x98] sm:$0xff] %v7252
        %7289 = vst [vmem:[%s314 + $0xa0] sm:$0xff] %v7253
        %7290 = vst [vmem:[%s314 + $0xa8] sm:$0xff] %v7254
        %7291 = vst [vmem:[%s314 + $0xb0] sm:$0xff] %v7255
        %7292 = vst [vmem:[%s314 + $0xb8] sm:$0xff] %v7256
        %7293 = vst [vmem:[%s314 + $0xc0] sm:$0xff] %v7257
        %7294 = vst [vmem:[%s314 + $0xc8] sm:$0xff] %v7258
        %7295 = vst [vmem:[%s314 + $0xd0] sm:$0xff] %v7259
        %7296 = vst [vmem:[%s314 + $0xd8] sm:$0xff] %v7260
        %7297 = vst [vmem:[%s314 + $0xe0] sm:$0xff] %v7261
        %7298 = vst [vmem:[%s314 + $0xe8] sm:$0xff] %v7262
        %7299 = vst [vmem:[%s314 + $0xf0] sm:$0xff] %v7263
        %7300 = vst [vmem:[%s314 + $0xf8] sm:$0xff] %v7264
        %7301 = vst [vmem:[%s314 + $0x100] sm:$0xff] %v7265
        %7302 = vst [vmem:[%s314 + $0x108] sm:$0xff] %v7266
        %7303 = vst [vmem:[%s314 + $0x110] sm:$0xff] %v7267
        %7304 = vst [vmem:[%s314 + $0x118] sm:$0xff] %v7268
        %s7305 = sand.u32 %s205, 1
        %s7306 = scalar_lea.sflag [#allocation6], %s7305
        %s7307 = sand.u32 %s205, 1
        %s7308 = smul.addr %s7307, 288
        %s7309 = scalar_lea.vmem [#allocation7], %s7308
        // Predicated region
        $region57: #{tpu_custom_call.1} parent=51 // pred_check
          %p7310 = pneg %p215
        $region58: #{tpu_custom_call.1} parent=51 // pred_check_branch
          %7312 = sbr.rel (%p7310) target = $region60
        $region59: #{tpu_custom_call.1} parent=51 // pred_region
          %s7314 = ssub.s32 4608, 4608
          %7315 = vsyncadd %s7306, %s7314
          %s7316 = smul.addr %s24, 36
          %s7317 = smul.addr %s7316, 128
          %s7318 = scalar_lea.hbm %s8, %s7317
          %s7319 = sshll.u32 %s7309, 4
          %s7320 = int_to_ptr.vmem [resolvable:$true] %s7319
          %7325 = dma.vmem_to_hbm [thread:$0]  %s7320, 4608, %s7318, %s7306, 128, 128, 8
        $region60: #{tpu_custom_call.1} parent=51 // pred_fallthru
          _
      $region52: #{tpu_custom_call.1} parent=5 // pred_fallthru
        _
      %p7326 = scmp.le.s32.totalorder 2, %s19
      // Predicated region
      $region61: #{tpu_custom_call.1} parent=5 // pred_check
        %p7327 = pneg %p7326
      $region62: #{tpu_custom_call.1} parent=5 // pred_check_branch
        %7329 = sbr.rel (%p7327) target = $region64
      $region63: #{tpu_custom_call.1} parent=5 // pred_region
        %s7330 = ssub.s32 %s19, 2
        // Predicated region
        $region65: #{tpu_custom_call.1} parent=63 // pred_check
          %p7331 = pneg %p221
        $region66: #{tpu_custom_call.1} parent=63 // pred_check_branch
          %7333 = sbr.rel (%p7331) target = $region68
        $region67: #{tpu_custom_call.1} parent=63 // pred_region
          %s7334 = sand.u32 %s206, 1
          %s7335 = scalar_lea.sflag [#allocation6], %s7334
          %s7336 = sand.u32 %s206, 1
          %s7337 = smul.addr %s7336, 288
          %s7338 = scalar_lea.vmem [#allocation7], %s7337
          %7339 = dma.done %s7335, 4608
        $region68: #{tpu_custom_call.1} parent=63 // pred_fallthru
          _
      $region64: #{tpu_custom_call.1} parent=5 // pred_fallthru
        _
    $region6: #{tpu_custom_call.1} parent=1 // loop_footer
      %s23 = sadd.s32 1, %s19
    $region7: #{tpu_custom_call.1} parent=1 // loop_footer_branch
      %18 = sbr.rel target = $region3
    $region8: #{tpu_custom_call.1} parent=1 // loop_exit
      _
    %7340 = vsyncpa [#allocation5], 1
    %s7341 = scalar_lea.sflag [#allocation5], 1
    %7342 = vsyncpa %s7341, 1
    %7343 = vsyncpa [#allocation6], 1
    %s7344 = scalar_lea.sflag [#allocation6], 1
    %7345 = vsyncpa %s7344, 1

</llo_original>
